<compile_context>
chip_gen: v7x
topology: tpu7x:2x2x1
jax: 0.10.0
libtpu: 0.0.40
codegen_flags: <defaults>
</compile_context>

<pallas_src>
import functools
import math

import numpy as np
import jax
import jax.numpy as jnp
from jax import lax
from jax.experimental import pallas as pl
from jax.experimental.pallas import tpu as pltpu


def _gelu(x):
    # tanh-approx GELU (PyTorch default nn.GELU uses the erf form).
    c = math.sqrt(2.0 / math.pi)
    return 0.5 * x * (1.0 + jnp.tanh(c * (x + 0.044715 * x * x * x)))


# ---------------------------------------------------------------------------
# Host-side constant builders
# ---------------------------------------------------------------------------
def _bicubic_weight_matrix(n_in, n_out, a=-0.75):
    """PyTorch bicubic (A=-0.75), align_corners=True, border-clamped taps."""
    M = np.zeros((n_out, n_in), dtype=np.float32)
    if n_in == 1:
        M[:, 0] = 1.0
        return M
    scale = (n_in - 1) / (n_out - 1)

    def cubic(t):
        t = abs(t)
        if t <= 1.0:
            return (a + 2.0) * t ** 3 - (a + 3.0) * t ** 2 + 1.0
        if t < 2.0:
            return a * t ** 3 - 5.0 * a * t ** 2 + 8.0 * a * t - 4.0 * a
        return 0.0

    for i in range(n_out):
        xsrc = i * scale
        x0 = int(np.floor(xsrc))
        t = xsrc - x0
        for k in range(-1, 3):
            idx = min(max(x0 + k, 0), n_in - 1)
            M[i, idx] += cubic(t - k)
    return M


def _shift_matrices(H, W):
    """9 (HW, HW) 0/1 matrices: tap_k(v) = v @ S_k gives the replicate-padded
    3x3 neighbourhood tap k = (di+1)*3 + (dj+1) on the flattened HW axis."""
    HW = H * W
    S = np.zeros((9, HW, HW), dtype=np.float32)
    k = 0
    for di in (-1, 0, 1):
        for dj in (-1, 0, 1):
            for i in range(H):
                si = min(max(i + di, 0), H - 1)
                for j in range(W):
                    sj = min(max(j + dj, 0), W - 1)
                    S[k, si * W + sj, i * W + j] = 1.0
            k += 1
    return S


def rearrange_patches(x, p):
    # einops 'b c (h p1) (w p2) -> b (p2 p1 c) (h w)'  (layout-only, wrapper)
    b, c, H, W = x.shape
    h, w = H // p, W // p
    x = x.reshape(b, c, h, p, w, p)            # b c h p1 w p2
    x = jnp.transpose(x, (0, 5, 3, 1, 2, 4))   # b p2 p1 c h w
    return x.reshape(b, p * p * c, h * w)


# ---------------------------------------------------------------------------
# The single fused kernel (one grid step per batch element)
# ---------------------------------------------------------------------------
def _mlpm_kernel(
    patches_ref, lin_wt_ref, lin_b_ref,
    ln1_g_ref, ln1_b_ref, c_w1_ref, c_b1_ref, c_w2_ref, c_b2_ref,
    ln2_g_ref, ln2_b_ref, t_w1t_ref, t_b1_ref, t_w2t_ref, t_b2_ref,
    up_ref, shift_ref,
    w0_ref, b0_ref, w1a_ref, w1b_ref, b1_ref,
    norm_g_ref, norm_b_ref, wo_a_ref, wo_b0_ref, wo_b1_ref,
    out_ref, *, depth, eps):

    def bdot(a, b):   # bf16 MXU inputs, f32 accumulation
        return jnp.dot(a.astype(jnp.bfloat16), b.astype(jnp.bfloat16),
                       preferred_element_type=jnp.float32)

    def ln(v):        # row-wise LayerNorm over the last (lane) axis, f32
        mu = jnp.mean(v, axis=-1, keepdims=True)
        var = jnp.mean(jnp.square(v - mu), axis=-1, keepdims=True)
        return (v - mu) * lax.rsqrt(var + eps)

    # ---- Linear(num_patches -> dim) -------------------------------------
    x = bdot(patches_ref[0], lin_wt_ref[...]) + lin_b_ref[...]        # (C0, D)

    # ---- Mixer blocks (depth statically unrolled, stacked weights) ------
    for d in range(depth):
        xn = ln(x) * ln1_g_ref[d] + ln1_b_ref[d]
        h = _gelu(bdot(c_w1_ref[d], xn) + c_b1_ref[d])                # (Hc, D)
        x = bdot(c_w2_ref[d], h) + c_b2_ref[d] + x                    # (C0, D)
        xn = ln(x) * ln2_g_ref[d] + ln2_b_ref[d]
        h = _gelu(bdot(xn, t_w1t_ref[d]) + t_b1_ref[d])               # (C0, Hd)
        x = bdot(h, t_w2t_ref[d]) + t_b2_ref[d] + x                   # (C0, D)

    # ---- bicubic x4 upsample (align_corners=True) as one matmul ---------
    xu = bdot(x, up_ref[...])                                         # (C0, HW)

    # ---- ConvConca: two 3x3 replicate-pad convs, taps via 0/1 shift
    #      matmuls in VMEM; conv1 reuses the taps of xu (its first C0 input
    #      channels are exactly xu, ConvConca only concatenates). ----------
    F0 = w0_ref.shape[1]
    F1 = w1a_ref.shape[1]
    HW = xu.shape[-1]
    acc0 = jnp.zeros((F0, HW), jnp.float32)
    acc1 = jnp.zeros((F1, HW), jnp.float32)
    for k in range(9):
        t = bdot(xu, shift_ref[k])                                    # (C0, HW)
        acc0 = acc0 + bdot(w0_ref[k], t)
        acc1 = acc1 + bdot(w1a_ref[k], t)
    y0 = _gelu(acc0 + b0_ref[...])                                    # (F0, HW)
    for k in range(9):
        ty = bdot(y0, shift_ref[k])                                   # (F0, HW)
        acc1 = acc1 + bdot(w1b_ref[k], ty)
    y1 = _gelu(acc1 + b1_ref[...])                                    # (F1, HW)

    # ---- LayerNorm([H, W]) (per-channel over HW, shared affine) + 1x1
    #      conv_out.  LN is per-row, so applying it group-wise and summing
    #      the group-wise 1x1 convs is exactly norm(concat(...)) @ Wout. ----
    g = norm_g_ref[...]
    b = norm_b_ref[...]
    o = (bdot(wo_a_ref[...], ln(xu) * g + b)
         + bdot(wo_b0_ref[...], ln(y0) * g + b)
         + bdot(wo_b1_ref[...], ln(y1) * g + b))                      # (2, HW)
    out_ref[0] = o.astype(out_ref.dtype)


def _mlpm_fused_pallas(params, patches, img):
    B, C0, P = patches.shape
    D = params["lin_wt"].shape[1]
    depth = params["c_w1"].shape[0]
    Hc = params["c_w1"].shape[1]
    Hd = params["t_w1t"].shape[2]
    HW = img * img
    F0 = params["w0_9"].shape[1]
    F1 = params["w1a_9"].shape[1]
    Ct = C0 + F0 + F1

    def bspec(a):  # full-array block, same block every grid step
        n = a.ndim
        return pl.BlockSpec(a.shape, lambda i: (0,) * n)

    ins = [
        params["lin_wt"], params["lin_b"],
        params["ln1_g"], params["ln1_b"], params["c_w1"], params["c_b1"],
        params["c_w2"], params["c_b2"],
        params["ln2_g"], params["ln2_b"], params["t_w1t"], params["t_b1"],
        params["t_w2t"], params["t_b2"],
        params["up_mt"], params["shift9"],
        params["w0_9"], params["b0"], params["w1a_9"], params["w1b_9"],
        params["b1"],
        params["norm_g"], params["norm_b"],
        params["wo_a"], params["wo_b0"], params["wo_b1"],
    ]
    in_specs = [pl.BlockSpec((1, C0, P), lambda i: (i, 0, 0))]
    in_specs += [bspec(a) for a in ins]

    flops = 2 * B * (
        C0 * P * D
        + depth * (2 * Hc * C0 * D + 2 * C0 * D * Hd)
        + C0 * D * HW
        + 9 * HW * HW * (C0 + F0)
        + 9 * HW * (F0 * C0 + F1 * C0 + F1 * F0)
        + 2 * Ct * HW)
    transcendentals = B * (depth * (Hc * D + C0 * Hd) + (F0 + F1) * HW)
    bytes_accessed = int(
        sum(int(a.size) * a.dtype.itemsize for a in [patches] + ins)
        + B * 2 * HW * 4)

    kern = functools.partial(_mlpm_kernel, depth=depth, eps=1e-5)
    return pl.pallas_call(
        kern,
        out_shape=jax.ShapeDtypeStruct((B, 2, HW), jnp.float32),
        grid_spec=pltpu.PrefetchScalarGridSpec(
            num_scalar_prefetch=0,
            grid=(B,),
            in_specs=in_specs,
            out_specs=pl.BlockSpec((1, 2, HW), lambda i: (i, 0, 0)),
        ),
        compiler_params=pltpu.CompilerParams(
            dimension_semantics=("parallel",),
            vmem_limit_bytes=32 * 1024 * 1024,
        ),
        cost_estimate=pl.CostEstimate(flops=flops,
                                      transcendentals=transcendentals,
                                      bytes_accessed=bytes_accessed),
    )(patches, *ins)


# ---------------------------------------------------------------------------
# Parameters
# ---------------------------------------------------------------------------
def init_params(key, *, image_size, patch_size, dim, depth, filters_num,
                expansion_factor, in_channels):
    assert in_channels + 1 == 3, "MLPm assumes 3 channels after RandomConcat"
    assert len(filters_num) == 2, "ConvConca bookkeeping (as in the module)"
    assert image_size % patch_size == 0
    brear = int(math.isqrt(dim))
    assert brear * brear == dim, "dim must be a square number"
    assert 4 * brear == image_size, "x4 upsample must restore image_size"

    num_patches = (image_size // patch_size) ** 2
    ini_chan = 3 * patch_size ** 2
    Hc = ini_chan * expansion_factor
    Hd = dim * expansion_factor
    HW = image_size * image_size
    F0, F1 = filters_num
    f32, bf16 = jnp.float32, jnp.bfloat16

    def nrm(k, shape, scale):
        return scale * jax.random.normal(k, shape, dtype=f32)

    ks = iter(jax.random.split(key, 64))
    p = {}
    p["lin_wt"] = nrm(next(ks), (num_patches, dim),
                      1.0 / math.sqrt(num_patches)).astype(bf16)
    p["lin_b"] = nrm(next(ks), (1, dim), 0.02)

    ln1_g, ln1_b, ln2_g, ln2_b = [], [], [], []
    c_w1, c_b1, c_w2, c_b2 = [], [], [], []
    t_w1t, t_b1, t_w2t, t_b2 = [], [], [], []
    for _ in range(depth):
        ln1_g.append(jnp.ones((1, dim), f32) + 0.1 * nrm(next(ks), (1, dim), 1.0))
        ln1_b.append(nrm(next(ks), (1, dim), 0.02))
        c_w1.append(nrm(next(ks), (Hc, ini_chan), 1.0 / math.sqrt(ini_chan)))
        c_b1.append(nrm(next(ks), (Hc, 1), 0.02))
        c_w2.append(nrm(next(ks), (ini_chan, Hc), 1.0 / math.sqrt(Hc)))
        c_b2.append(nrm(next(ks), (ini_chan, 1), 0.02))
        ln2_g.append(jnp.ones((1, dim), f32) + 0.1 * nrm(next(ks), (1, dim), 1.0))
        ln2_b.append(nrm(next(ks), (1, dim), 0.02))
        w1 = nrm(next(ks), (Hd, dim), 1.0 / math.sqrt(dim))
        t_w1t.append(w1.T)
        t_b1.append(nrm(next(ks), (1, Hd), 0.02))
        w2 = nrm(next(ks), (dim, Hd), 1.0 / math.sqrt(Hd))
        t_w2t.append(w2.T)
        t_b2.append(nrm(next(ks), (1, dim), 0.02))

    p["ln1_g"] = jnp.stack(ln1_g); p["ln1_b"] = jnp.stack(ln1_b)
    p["ln2_g"] = jnp.stack(ln2_g); p["ln2_b"] = jnp.stack(ln2_b)
    p["c_w1"] = jnp.stack(c_w1).astype(bf16); p["c_b1"] = jnp.stack(c_b1)
    p["c_w2"] = jnp.stack(c_w2).astype(bf16); p["c_b2"] = jnp.stack(c_b2)
    p["t_w1t"] = jnp.stack(t_w1t).astype(bf16); p["t_b1"] = jnp.stack(t_b1)
    p["t_w2t"] = jnp.stack(t_w2t).astype(bf16); p["t_b2"] = jnp.stack(t_b2)

    # bicubic x4, align_corners=True, separable -> kron over the flat HW axis
    A = _bicubic_weight_matrix(brear, image_size)
    p["up_mt"] = jnp.asarray(np.kron(A, A).T, dtype=f32).astype(bf16)  # (dim, HW)

    # 9 replicate-pad 3x3 shift matrices (0/1, bf16-exact)
    p["shift9"] = jnp.asarray(_shift_matrices(image_size, image_size)).astype(bf16)

    # ConvConca weights, re-laid out to (9, Cout, Cin) and split by input group
    def to9(w):
        return jnp.transpose(w, (2, 3, 0, 1)).reshape(9, w.shape[0], w.shape[1])

    w0 = nrm(next(ks), (F0, ini_chan, 3, 3), 1.0 / math.sqrt(ini_chan * 9))
    b0 = nrm(next(ks), (F0, 1), 0.02)
    w1 = nrm(next(ks), (F1, ini_chan + F0, 3, 3),
             1.0 / math.sqrt((ini_chan + F0) * 9))
    b1 = nrm(next(ks), (F1, 1), 0.02)
    p["w0_9"] = to9(w0).astype(bf16)
    p["b0"] = b0
    p["w1a_9"] = to9(w1[:, :ini_chan]).astype(bf16)
    p["w1b_9"] = to9(w1[:, ini_chan:]).astype(bf16)
    p["b1"] = b1

    p["norm_g"] = jnp.ones((1, HW), f32) + 0.1 * nrm(next(ks), (1, HW), 1.0)
    p["norm_b"] = nrm(next(ks), (1, HW), 0.02)

    Ct = ini_chan + F0 + F1
    wo = nrm(next(ks), (2, Ct), 1.0 / math.sqrt(Ct))
    p["wo_a"] = wo[:, :ini_chan].astype(bf16)
    p["wo_b0"] = wo[:, ini_chan:ini_chan + F0].astype(bf16)
    p["wo_b1"] = wo[:, ini_chan + F0:].astype(bf16)
    return p


# ---------------------------------------------------------------------------
# Forward (Pallas) — only layout-only ops stay in the wrapper
# ---------------------------------------------------------------------------
def mlpm_forward(params, x, cfg, rng_key):
    B = x.shape[0]
    img = cfg["image_size"]
    # RandomConcatLayer(dim=1) + einops rearrange are pure layout plumbing.
    r = jax.random.uniform(rng_key, (B, 1) + x.shape[2:], dtype=x.dtype)
    patches = rearrange_patches(jnp.concatenate([x, r], axis=1),
                                cfg["patch_size"])
    out = _mlpm_fused_pallas(params, patches, img)
    return out.reshape(B, 2, img, img)


# ---------------------------------------------------------------------------
# Pure-JAX reference (independent formulation: pad-based im2col, einsums;
# mirrors the kernel's bf16-input / f32-accumulate convention)
# ---------------------------------------------------------------------------
def _conv3x3_replicate_ref(x, w9, bias):
    B, C, H, W = x.shape
    xp = jnp.pad(x, ((0, 0), (0, 0), (1, 1), (1, 1)), mode="edge")
    y = jnp.zeros((B, w9.shape[1], H * W), jnp.float32)
    k = 0
    for di in range(3):
        for dj in range(3):
            tap = xp[:, :, di:di + H, dj:dj + W].reshape(B, C, H * W)
            y = y + jnp.einsum("fc,bcl->bfl",
                               w9[k].astype(jnp.bfloat16),
                               tap.astype(jnp.bfloat16),
                               preferred_element_type=jnp.float32)
            k += 1
    return _gelu(y + bias[None])


def mlpm_forward_ref(params, x, cfg, rng_key):
    B = x.shape[0]
    img = cfg["image_size"]
    psz = cfg["patch_size"]
    depth = params["c_w1"].shape[0]
    eps = 1e-5
    bf16, f32 = jnp.bfloat16, jnp.float32

    def bmm(eq, a, b):
        return jnp.einsum(eq, a.astype(bf16), b.astype(bf16),
                          preferred_element_type=f32)

    def ln(v):
        mu = jnp.mean(v, axis=-1, keepdims=True)
        var = jnp.mean(jnp.square(v - mu), axis=-1, keepdims=True)
        return (v - mu) * lax.rsqrt(var + eps)

    r = jax.random.uniform(rng_key, (B, 1) + x.shape[2:], dtype=x.dtype)
    z = rearrange_patches(jnp.concatenate([x, r], axis=1), psz)
    z = bmm("bcp,pd->bcd", z, params["lin_wt"]) + params["lin_b"]
    for d in range(depth):
        zn = ln(z) * params["ln1_g"][d] + params["ln1_b"][d]
        h = _gelu(bmm("oc,bcd->bod", params["c_w1"][d], zn) + params["c_b1"][d])
        z = bmm("co,bod->bcd", params["c_w2"][d], h) + params["c_b2"][d] + z
        zn = ln(z) * params["ln2_g"][d] + params["ln2_b"][d]
        h = _gelu(bmm("bcd,dh->bch", zn, params["t_w1t"][d]) + params["t_b1"][d])
        z = bmm("bch,hd->bcd", h, params["t_w2t"][d]) + params["t_b2"][d] + z

    xu = bmm("bcd,dl->bcl", z, params["up_mt"])              # (B, C0, HW)
    xu4 = xu.reshape(B, -1, img, img)
    y0 = _conv3x3_replicate_ref(xu4, params["w0_9"], params["b0"])
    x1 = jnp.concatenate([xu4, y0.reshape(B, -1, img, img)], axis=1)
    w1_9 = jnp.concatenate([params["w1a_9"], params["w1b_9"]], axis=2)
    y1 = _conv3x3_replicate_ref(x1, w1_9, params["b1"])

    slab = jnp.concatenate([xu, y0, y1], axis=1)             # (B, Ct, HW)
    slab = ln(slab) * params["norm_g"] + params["norm_b"]
    wo = jnp.concatenate([params["wo_a"], params["wo_b0"], params["wo_b1"]],
                         axis=1)
    out = bmm("oc,bcl->bol", wo, slab)
    return out.reshape(B, 2, img, img)


if __name__ == "__main__":
    cfg = dict(image_size=16, patch_size=4, dim=16, depth=2,
               filters_num=(4, 8), expansion_factor=3, in_channels=2)

    key = jax.random.PRNGKey(0)
    pkey, xkey, rkey = jax.random.split(key, 3)
    params = init_params(pkey, **cfg)
    x = jax.random.normal(
        xkey, (2, cfg["in_channels"], cfg["image_size"], cfg["image_size"]),
        dtype=jnp.float32)

    fwd = jax.jit(lambda p_, x_, k_: mlpm_forward(p_, x_, cfg, k_))
    out = jax.block_until_ready(fwd(params, x, rkey))

    ref = jax.block_until_ready(mlpm_forward_ref(params, x, cfg, rkey))
    assert out.shape == ref.shape == (2, 2, 16, 16)
    assert bool(jnp.all(jnp.isfinite(out)))
    max_err = float(jnp.max(jnp.abs(out - ref)))
    assert jnp.allclose(out, ref, atol=5e-3, rtol=5e-3), f"max |diff| = {max_err}"

    print("KERNEL_OK")
</pallas_src>

<mosaic_0001>
module attributes {stable_mosaic.version = 11 : i64} {
  func.func @_mlpm_kernel(%arg0: i32, %arg1: memref<1x48x16xf32, #tpu.memory_space<vmem>>, %arg2: memref<16x16xbf16, #tpu.memory_space<vmem>>, %arg3: memref<1x16xf32, #tpu.memory_space<vmem>>, %arg4: memref<2x1x16xf32, #tpu.memory_space<vmem>>, %arg5: memref<2x1x16xf32, #tpu.memory_space<vmem>>, %arg6: memref<2x144x48xbf16, #tpu.memory_space<vmem>>, %arg7: memref<2x144x1xf32, #tpu.memory_space<vmem>>, %arg8: memref<2x48x144xbf16, #tpu.memory_space<vmem>>, %arg9: memref<2x48x1xf32, #tpu.memory_space<vmem>>, %arg10: memref<2x1x16xf32, #tpu.memory_space<vmem>>, %arg11: memref<2x1x16xf32, #tpu.memory_space<vmem>>, %arg12: memref<2x16x48xbf16, #tpu.memory_space<vmem>>, %arg13: memref<2x1x48xf32, #tpu.memory_space<vmem>>, %arg14: memref<2x48x16xbf16, #tpu.memory_space<vmem>>, %arg15: memref<2x1x16xf32, #tpu.memory_space<vmem>>, %arg16: memref<16x256xbf16, #tpu.memory_space<vmem>>, %arg17: memref<9x256x256xbf16, #tpu.memory_space<vmem>>, %arg18: memref<9x4x48xbf16, #tpu.memory_space<vmem>>, %arg19: memref<4x1xf32, #tpu.memory_space<vmem>>, %arg20: memref<9x8x48xbf16, #tpu.memory_space<vmem>>, %arg21: memref<9x8x4xbf16, #tpu.memory_space<vmem>>, %arg22: memref<8x1xf32, #tpu.memory_space<vmem>>, %arg23: memref<1x256xf32, #tpu.memory_space<vmem>>, %arg24: memref<1x256xf32, #tpu.memory_space<vmem>>, %arg25: memref<2x48xbf16, #tpu.memory_space<vmem>>, %arg26: memref<2x4xbf16, #tpu.memory_space<vmem>>, %arg27: memref<2x8xbf16, #tpu.memory_space<vmem>>, %arg28: memref<1x2x256xf32, #tpu.memory_space<vmem>>) attributes {dimension_semantics = [#tpu.dimension_semantics<parallel>], iteration_bounds = array<i64: 2>, scalar_prefetch = 0 : i64, scratch_operands = 0 : i64, tpu.core_type = #tpu.core_type<tc>, window_params = [{transform_indices = @transform_0, window_bounds = array<i64: 1, 48, 16>}, {pipeline_mode = #tpu.pipeline_mode<synchronous>, transform_indices = @transform_1, window_bounds = array<i64: 16, 16>}, {pipeline_mode = #tpu.pipeline_mode<synchronous>, transform_indices = @transform_2, window_bounds = array<i64: 1, 16>}, {pipeline_mode = #tpu.pipeline_mode<synchronous>, transform_indices = @transform_3, window_bounds = array<i64: 2, 1, 16>}, {pipeline_mode = #tpu.pipeline_mode<synchronous>, transform_indices = @transform_4, window_bounds = array<i64: 2, 1, 16>}, {pipeline_mode = #tpu.pipeline_mode<synchronous>, transform_indices = @transform_5, window_bounds = array<i64: 2, 144, 48>}, {pipeline_mode = #tpu.pipeline_mode<synchronous>, transform_indices = @transform_6, window_bounds = array<i64: 2, 144, 1>}, {pipeline_mode = #tpu.pipeline_mode<synchronous>, transform_indices = @transform_7, window_bounds = array<i64: 2, 48, 144>}, {pipeline_mode = #tpu.pipeline_mode<synchronous>, transform_indices = @transform_8, window_bounds = array<i64: 2, 48, 1>}, {pipeline_mode = #tpu.pipeline_mode<synchronous>, transform_indices = @transform_9, window_bounds = array<i64: 2, 1, 16>}, {pipeline_mode = #tpu.pipeline_mode<synchronous>, transform_indices = @transform_10, window_bounds = array<i64: 2, 1, 16>}, {pipeline_mode = #tpu.pipeline_mode<synchronous>, transform_indices = @transform_11, window_bounds = array<i64: 2, 16, 48>}, {pipeline_mode = #tpu.pipeline_mode<synchronous>, transform_indices = @transform_12, window_bounds = array<i64: 2, 1, 48>}, {pipeline_mode = #tpu.pipeline_mode<synchronous>, transform_indices = @transform_13, window_bounds = array<i64: 2, 48, 16>}, {pipeline_mode = #tpu.pipeline_mode<synchronous>, transform_indices = @transform_14, window_bounds = array<i64: 2, 1, 16>}, {pipeline_mode = #tpu.pipeline_mode<synchronous>, transform_indices = @transform_15, window_bounds = array<i64: 16, 256>}, {pipeline_mode = #tpu.pipeline_mode<synchronous>, transform_indices = @transform_16, window_bounds = array<i64: 9, 256, 256>}, {pipeline_mode = #tpu.pipeline_mode<synchronous>, transform_indices = @transform_17, window_bounds = array<i64: 9, 4, 48>}, {pipeline_mode = #tpu.pipeline_mode<synchronous>, transform_indices = @transform_18, window_bounds = array<i64: 4, 1>}, {pipeline_mode = #tpu.pipeline_mode<synchronous>, transform_indices = @transform_19, window_bounds = array<i64: 9, 8, 48>}, {pipeline_mode = #tpu.pipeline_mode<synchronous>, transform_indices = @transform_20, window_bounds = array<i64: 9, 8, 4>}, {pipeline_mode = #tpu.pipeline_mode<synchronous>, transform_indices = @transform_21, window_bounds = array<i64: 8, 1>}, {pipeline_mode = #tpu.pipeline_mode<synchronous>, transform_indices = @transform_22, window_bounds = array<i64: 1, 256>}, {pipeline_mode = #tpu.pipeline_mode<synchronous>, transform_indices = @transform_23, window_bounds = array<i64: 1, 256>}, {pipeline_mode = #tpu.pipeline_mode<synchronous>, transform_indices = @transform_24, window_bounds = array<i64: 2, 48>}, {pipeline_mode = #tpu.pipeline_mode<synchronous>, transform_indices = @transform_25, window_bounds = array<i64: 2, 4>}, {pipeline_mode = #tpu.pipeline_mode<synchronous>, transform_indices = @transform_26, window_bounds = array<i64: 2, 8>}, {transform_indices = @transform_27, window_bounds = array<i64: 1, 2, 256>}]} {
    %c0 = arith.constant 0 : index
    %c0_0 = arith.constant 0 : index
    %c0_1 = arith.constant 0 : index
    %0 = vector.load %arg1[%c0, %c0_0, %c0_1] : memref<1x48x16xf32, #tpu.memory_space<vmem>>, vector<1x48x16xf32>
    %1 = vector.shape_cast %0 : vector<1x48x16xf32> to vector<48x16xf32>
    %c0_2 = arith.constant 0 : index
    %c0_3 = arith.constant 0 : index
    %2 = vector.load %arg2[%c0_2, %c0_3] : memref<16x16xbf16, #tpu.memory_space<vmem>>, vector<16x16xbf16>
    %3 = arith.truncf %1 : vector<48x16xf32> to vector<48x16xbf16>
    %cst = arith.constant dense<0.000000e+00> : vector<48x16xf32>
    %4 = tpu.matmul %3, %2, %cst {dimension_numbers = #tpu.dot_dimension_numbers<[1], [0], [0], [1], [0, 0, 1, 1], [], []>} : vector<48x16xbf16>, vector<16x16xbf16>, vector<48x16xf32> -> vector<48x16xf32>
    %c0_4 = arith.constant 0 : index
    %c0_5 = arith.constant 0 : index
    %5 = vector.load %arg3[%c0_4, %c0_5] : memref<1x16xf32, #tpu.memory_space<vmem>>, vector<1x16xf32>
    %6 = vector.broadcast %5 : vector<1x16xf32> to vector<48x16xf32>
    %7 = arith.addf %4, %6 : vector<48x16xf32>
    %cst_6 = arith.constant dense<0.000000e+00> : vector<48xf32>
    %8 = vector.multi_reduction <add>, %7, %cst_6 [1] : vector<48x16xf32> to vector<48xf32>
    %9 = vector.shape_cast %8 : vector<48xf32> to vector<48x1xf32>
    %cst_7 = arith.constant 1.600000e+01 : f32
    %10 = vector.broadcast %cst_7 : f32 to vector<48x1xf32>
    %11 = arith.divf %9, %10 : vector<48x1xf32>
    %12 = vector.broadcast %11 : vector<48x1xf32> to vector<48x16xf32>
    %13 = arith.subf %7, %12 : vector<48x16xf32>
    %14 = arith.mulf %13, %13 : vector<48x16xf32>
    %cst_8 = arith.constant dense<0.000000e+00> : vector<48xf32>
    %15 = vector.multi_reduction <add>, %14, %cst_8 [1] : vector<48x16xf32> to vector<48xf32>
    %16 = vector.shape_cast %15 : vector<48xf32> to vector<48x1xf32>
    %cst_9 = arith.constant 1.600000e+01 : f32
    %17 = vector.broadcast %cst_9 : f32 to vector<48x1xf32>
    %18 = arith.divf %16, %17 : vector<48x1xf32>
    %19 = vector.broadcast %11 : vector<48x1xf32> to vector<48x16xf32>
    %20 = arith.subf %7, %19 : vector<48x16xf32>
    %cst_10 = arith.constant 9.99999974E-6 : f32
    %21 = vector.broadcast %cst_10 : f32 to vector<48x1xf32>
    %22 = arith.addf %18, %21 : vector<48x1xf32>
    %23 = math.rsqrt %22 : vector<48x1xf32>
    %24 = vector.broadcast %23 : vector<48x1xf32> to vector<48x16xf32>
    %25 = arith.mulf %20, %24 : vector<48x16xf32>
    %c0_11 = arith.constant 0 : index
    %c0_12 = arith.constant 0 : index
    %c0_13 = arith.constant 0 : index
    %26 = vector.load %arg4[%c0_11, %c0_12, %c0_13] : memref<2x1x16xf32, #tpu.memory_space<vmem>>, vector<1x1x16xf32>
    %27 = vector.shape_cast %26 : vector<1x1x16xf32> to vector<1x16xf32>
    %28 = vector.broadcast %27 : vector<1x16xf32> to vector<48x16xf32>
    %29 = arith.mulf %25, %28 : vector<48x16xf32>
    %c0_14 = arith.constant 0 : index
    %c0_15 = arith.constant 0 : index
    %c0_16 = arith.constant 0 : index
    %30 = vector.load %arg5[%c0_14, %c0_15, %c0_16] : memref<2x1x16xf32, #tpu.memory_space<vmem>>, vector<1x1x16xf32>
    %31 = vector.shape_cast %30 : vector<1x1x16xf32> to vector<1x16xf32>
    %32 = vector.broadcast %31 : vector<1x16xf32> to vector<48x16xf32>
    %33 = arith.addf %29, %32 : vector<48x16xf32>
    %c0_17 = arith.constant 0 : index
    %c0_18 = arith.constant 0 : index
    %c0_19 = arith.constant 0 : index
    %34 = vector.load %arg6[%c0_17, %c0_18, %c0_19] : memref<2x144x48xbf16, #tpu.memory_space<vmem>>, vector<1x144x48xbf16>
    %35 = vector.shape_cast %34 : vector<1x144x48xbf16> to vector<144x48xbf16>
    %36 = arith.truncf %33 : vector<48x16xf32> to vector<48x16xbf16>
    %cst_20 = arith.constant dense<0.000000e+00> : vector<144x16xf32>
    %37 = tpu.matmul %35, %36, %cst_20 {dimension_numbers = #tpu.dot_dimension_numbers<[1], [0], [0], [1], [0, 0, 1, 1], [], []>} : vector<144x48xbf16>, vector<48x16xbf16>, vector<144x16xf32> -> vector<144x16xf32>
    %c0_21 = arith.constant 0 : index
    %c0_22 = arith.constant 0 : index
    %c0_23 = arith.constant 0 : index
    %38 = vector.load %arg7[%c0_21, %c0_22, %c0_23] : memref<2x144x1xf32, #tpu.memory_space<vmem>>, vector<1x144x1xf32>
    %39 = vector.shape_cast %38 : vector<1x144x1xf32> to vector<144x1xf32>
    %40 = vector.broadcast %39 : vector<144x1xf32> to vector<144x16xf32>
    %41 = arith.addf %37, %40 : vector<144x16xf32>
    %cst_24 = arith.constant 5.000000e-01 : f32
    %42 = vector.broadcast %cst_24 : f32 to vector<144x16xf32>
    %43 = arith.mulf %42, %41 : vector<144x16xf32>
    %cst_25 = arith.constant 4.471500e-02 : f32
    %44 = vector.broadcast %cst_25 : f32 to vector<144x16xf32>
    %45 = arith.mulf %44, %41 : vector<144x16xf32>
    %46 = arith.mulf %45, %41 : vector<144x16xf32>
    %47 = arith.mulf %46, %41 : vector<144x16xf32>
    %48 = arith.addf %41, %47 : vector<144x16xf32>
    %cst_26 = arith.constant 0.797884583 : f32
    %49 = vector.broadcast %cst_26 : f32 to vector<144x16xf32>
    %50 = arith.mulf %49, %48 : vector<144x16xf32>
    %51 = math.tanh %50 : vector<144x16xf32>
    %cst_27 = arith.constant 1.000000e+00 : f32
    %52 = vector.broadcast %cst_27 : f32 to vector<144x16xf32>
    %53 = arith.addf %52, %51 : vector<144x16xf32>
    %54 = arith.mulf %43, %53 : vector<144x16xf32>
    %c0_28 = arith.constant 0 : index
    %c0_29 = arith.constant 0 : index
    %c0_30 = arith.constant 0 : index
    %55 = vector.load %arg8[%c0_28, %c0_29, %c0_30] : memref<2x48x144xbf16, #tpu.memory_space<vmem>>, vector<1x48x144xbf16>
    %56 = vector.shape_cast %55 : vector<1x48x144xbf16> to vector<48x144xbf16>
    %57 = arith.truncf %54 : vector<144x16xf32> to vector<144x16xbf16>
    %cst_31 = arith.constant dense<0.000000e+00> : vector<48x16xf32>
    %58 = tpu.matmul %56, %57, %cst_31 {dimension_numbers = #tpu.dot_dimension_numbers<[1], [0], [0], [1], [0, 0, 1, 1], [], []>} : vector<48x144xbf16>, vector<144x16xbf16>, vector<48x16xf32> -> vector<48x16xf32>
    %c0_32 = arith.constant 0 : index
    %c0_33 = arith.constant 0 : index
    %c0_34 = arith.constant 0 : index
    %59 = vector.load %arg9[%c0_32, %c0_33, %c0_34] : memref<2x48x1xf32, #tpu.memory_space<vmem>>, vector<1x48x1xf32>
    %60 = vector.shape_cast %59 : vector<1x48x1xf32> to vector<48x1xf32>
    %61 = vector.broadcast %60 : vector<48x1xf32> to vector<48x16xf32>
    %62 = arith.addf %58, %61 : vector<48x16xf32>
    %63 = arith.addf %62, %7 : vector<48x16xf32>
    %cst_35 = arith.constant dense<0.000000e+00> : vector<48xf32>
    %64 = vector.multi_reduction <add>, %63, %cst_35 [1] : vector<48x16xf32> to vector<48xf32>
    %65 = vector.shape_cast %64 : vector<48xf32> to vector<48x1xf32>
    %cst_36 = arith.constant 1.600000e+01 : f32
    %66 = vector.broadcast %cst_36 : f32 to vector<48x1xf32>
    %67 = arith.divf %65, %66 : vector<48x1xf32>
    %68 = vector.broadcast %67 : vector<48x1xf32> to vector<48x16xf32>
    %69 = arith.subf %63, %68 : vector<48x16xf32>
    %70 = arith.mulf %69, %69 : vector<48x16xf32>
    %cst_37 = arith.constant dense<0.000000e+00> : vector<48xf32>
    %71 = vector.multi_reduction <add>, %70, %cst_37 [1] : vector<48x16xf32> to vector<48xf32>
    %72 = vector.shape_cast %71 : vector<48xf32> to vector<48x1xf32>
    %cst_38 = arith.constant 1.600000e+01 : f32
    %73 = vector.broadcast %cst_38 : f32 to vector<48x1xf32>
    %74 = arith.divf %72, %73 : vector<48x1xf32>
    %75 = vector.broadcast %67 : vector<48x1xf32> to vector<48x16xf32>
    %76 = arith.subf %63, %75 : vector<48x16xf32>
    %cst_39 = arith.constant 9.99999974E-6 : f32
    %77 = vector.broadcast %cst_39 : f32 to vector<48x1xf32>
    %78 = arith.addf %74, %77 : vector<48x1xf32>
    %79 = math.rsqrt %78 : vector<48x1xf32>
    %80 = vector.broadcast %79 : vector<48x1xf32> to vector<48x16xf32>
    %81 = arith.mulf %76, %80 : vector<48x16xf32>
    %c0_40 = arith.constant 0 : index
    %c0_41 = arith.constant 0 : index
    %c0_42 = arith.constant 0 : index
    %82 = vector.load %arg10[%c0_40, %c0_41, %c0_42] : memref<2x1x16xf32, #tpu.memory_space<vmem>>, vector<1x1x16xf32>
    %83 = vector.shape_cast %82 : vector<1x1x16xf32> to vector<1x16xf32>
    %84 = vector.broadcast %83 : vector<1x16xf32> to vector<48x16xf32>
    %85 = arith.mulf %81, %84 : vector<48x16xf32>
    %c0_43 = arith.constant 0 : index
    %c0_44 = arith.constant 0 : index
    %c0_45 = arith.constant 0 : index
    %86 = vector.load %arg11[%c0_43, %c0_44, %c0_45] : memref<2x1x16xf32, #tpu.memory_space<vmem>>, vector<1x1x16xf32>
    %87 = vector.shape_cast %86 : vector<1x1x16xf32> to vector<1x16xf32>
    %88 = vector.broadcast %87 : vector<1x16xf32> to vector<48x16xf32>
    %89 = arith.addf %85, %88 : vector<48x16xf32>
    %c0_46 = arith.constant 0 : index
    %c0_47 = arith.constant 0 : index
    %c0_48 = arith.constant 0 : index
    %90 = vector.load %arg12[%c0_46, %c0_47, %c0_48] : memref<2x16x48xbf16, #tpu.memory_space<vmem>>, vector<1x16x48xbf16>
    %91 = vector.shape_cast %90 : vector<1x16x48xbf16> to vector<16x48xbf16>
    %92 = arith.truncf %89 : vector<48x16xf32> to vector<48x16xbf16>
    %cst_49 = arith.constant dense<0.000000e+00> : vector<48x48xf32>
    %93 = tpu.matmul %92, %91, %cst_49 {dimension_numbers = #tpu.dot_dimension_numbers<[1], [0], [0], [1], [0, 0, 1, 1], [], []>} : vector<48x16xbf16>, vector<16x48xbf16>, vector<48x48xf32> -> vector<48x48xf32>
    %c0_50 = arith.constant 0 : index
    %c0_51 = arith.constant 0 : index
    %c0_52 = arith.constant 0 : index
    %94 = vector.load %arg13[%c0_50, %c0_51, %c0_52] : memref<2x1x48xf32, #tpu.memory_space<vmem>>, vector<1x1x48xf32>
    %95 = vector.shape_cast %94 : vector<1x1x48xf32> to vector<1x48xf32>
    %96 = vector.broadcast %95 : vector<1x48xf32> to vector<48x48xf32>
    %97 = arith.addf %93, %96 : vector<48x48xf32>
    %cst_53 = arith.constant 5.000000e-01 : f32
    %98 = vector.broadcast %cst_53 : f32 to vector<48x48xf32>
    %99 = arith.mulf %98, %97 : vector<48x48xf32>
    %cst_54 = arith.constant 4.471500e-02 : f32
    %100 = vector.broadcast %cst_54 : f32 to vector<48x48xf32>
    %101 = arith.mulf %100, %97 : vector<48x48xf32>
    %102 = arith.mulf %101, %97 : vector<48x48xf32>
    %103 = arith.mulf %102, %97 : vector<48x48xf32>
    %104 = arith.addf %97, %103 : vector<48x48xf32>
    %cst_55 = arith.constant 0.797884583 : f32
    %105 = vector.broadcast %cst_55 : f32 to vector<48x48xf32>
    %106 = arith.mulf %105, %104 : vector<48x48xf32>
    %107 = math.tanh %106 : vector<48x48xf32>
    %cst_56 = arith.constant 1.000000e+00 : f32
    %108 = vector.broadcast %cst_56 : f32 to vector<48x48xf32>
    %109 = arith.addf %108, %107 : vector<48x48xf32>
    %110 = arith.mulf %99, %109 : vector<48x48xf32>
    %c0_57 = arith.constant 0 : index
    %c0_58 = arith.constant 0 : index
    %c0_59 = arith.constant 0 : index
    %111 = vector.load %arg14[%c0_57, %c0_58, %c0_59] : memref<2x48x16xbf16, #tpu.memory_space<vmem>>, vector<1x48x16xbf16>
    %112 = vector.shape_cast %111 : vector<1x48x16xbf16> to vector<48x16xbf16>
    %113 = arith.truncf %110 : vector<48x48xf32> to vector<48x48xbf16>
    %cst_60 = arith.constant dense<0.000000e+00> : vector<48x16xf32>
    %114 = tpu.matmul %113, %112, %cst_60 {dimension_numbers = #tpu.dot_dimension_numbers<[1], [0], [0], [1], [0, 0, 1, 1], [], []>} : vector<48x48xbf16>, vector<48x16xbf16>, vector<48x16xf32> -> vector<48x16xf32>
    %c0_61 = arith.constant 0 : index
    %c0_62 = arith.constant 0 : index
    %c0_63 = arith.constant 0 : index
    %115 = vector.load %arg15[%c0_61, %c0_62, %c0_63] : memref<2x1x16xf32, #tpu.memory_space<vmem>>, vector<1x1x16xf32>
    %116 = vector.shape_cast %115 : vector<1x1x16xf32> to vector<1x16xf32>
    %117 = vector.broadcast %116 : vector<1x16xf32> to vector<48x16xf32>
    %118 = arith.addf %114, %117 : vector<48x16xf32>
    %119 = arith.addf %118, %63 : vector<48x16xf32>
    %cst_64 = arith.constant dense<0.000000e+00> : vector<48xf32>
    %120 = vector.multi_reduction <add>, %119, %cst_64 [1] : vector<48x16xf32> to vector<48xf32>
    %121 = vector.shape_cast %120 : vector<48xf32> to vector<48x1xf32>
    %cst_65 = arith.constant 1.600000e+01 : f32
    %122 = vector.broadcast %cst_65 : f32 to vector<48x1xf32>
    %123 = arith.divf %121, %122 : vector<48x1xf32>
    %124 = vector.broadcast %123 : vector<48x1xf32> to vector<48x16xf32>
    %125 = arith.subf %119, %124 : vector<48x16xf32>
    %126 = arith.mulf %125, %125 : vector<48x16xf32>
    %cst_66 = arith.constant dense<0.000000e+00> : vector<48xf32>
    %127 = vector.multi_reduction <add>, %126, %cst_66 [1] : vector<48x16xf32> to vector<48xf32>
    %128 = vector.shape_cast %127 : vector<48xf32> to vector<48x1xf32>
    %cst_67 = arith.constant 1.600000e+01 : f32
    %129 = vector.broadcast %cst_67 : f32 to vector<48x1xf32>
    %130 = arith.divf %128, %129 : vector<48x1xf32>
    %131 = vector.broadcast %123 : vector<48x1xf32> to vector<48x16xf32>
    %132 = arith.subf %119, %131 : vector<48x16xf32>
    %cst_68 = arith.constant 9.99999974E-6 : f32
    %133 = vector.broadcast %cst_68 : f32 to vector<48x1xf32>
    %134 = arith.addf %130, %133 : vector<48x1xf32>
    %135 = math.rsqrt %134 : vector<48x1xf32>
    %136 = vector.broadcast %135 : vector<48x1xf32> to vector<48x16xf32>
    %137 = arith.mulf %132, %136 : vector<48x16xf32>
    %c1 = arith.constant 1 : index
    %c0_69 = arith.constant 0 : index
    %c0_70 = arith.constant 0 : index
    %138 = vector.load %arg4[%c1, %c0_69, %c0_70] : memref<2x1x16xf32, #tpu.memory_space<vmem>>, vector<1x1x16xf32>
    %139 = vector.shape_cast %138 : vector<1x1x16xf32> to vector<1x16xf32>
    %140 = vector.broadcast %139 : vector<1x16xf32> to vector<48x16xf32>
    %141 = arith.mulf %137, %140 : vector<48x16xf32>
    %c1_71 = arith.constant 1 : index
    %c0_72 = arith.constant 0 : index
    %c0_73 = arith.constant 0 : index
    %142 = vector.load %arg5[%c1_71, %c0_72, %c0_73] : memref<2x1x16xf32, #tpu.memory_space<vmem>>, vector<1x1x16xf32>
    %143 = vector.shape_cast %142 : vector<1x1x16xf32> to vector<1x16xf32>
    %144 = vector.broadcast %143 : vector<1x16xf32> to vector<48x16xf32>
    %145 = arith.addf %141, %144 : vector<48x16xf32>
    %c1_74 = arith.constant 1 : index
    %c0_75 = arith.constant 0 : index
    %c0_76 = arith.constant 0 : index
    %146 = vector.load %arg6[%c1_74, %c0_75, %c0_76] : memref<2x144x48xbf16, #tpu.memory_space<vmem>>, vector<1x144x48xbf16>
    %147 = vector.shape_cast %146 : vector<1x144x48xbf16> to vector<144x48xbf16>
    %148 = arith.truncf %145 : vector<48x16xf32> to vector<48x16xbf16>
    %cst_77 = arith.constant dense<0.000000e+00> : vector<144x16xf32>
    %149 = tpu.matmul %147, %148, %cst_77 {dimension_numbers = #tpu.dot_dimension_numbers<[1], [0], [0], [1], [0, 0, 1, 1], [], []>} : vector<144x48xbf16>, vector<48x16xbf16>, vector<144x16xf32> -> vector<144x16xf32>
    %c1_78 = arith.constant 1 : index
    %c0_79 = arith.constant 0 : index
    %c0_80 = arith.constant 0 : index
    %150 = vector.load %arg7[%c1_78, %c0_79, %c0_80] : memref<2x144x1xf32, #tpu.memory_space<vmem>>, vector<1x144x1xf32>
    %151 = vector.shape_cast %150 : vector<1x144x1xf32> to vector<144x1xf32>
    %152 = vector.broadcast %151 : vector<144x1xf32> to vector<144x16xf32>
    %153 = arith.addf %149, %152 : vector<144x16xf32>
    %cst_81 = arith.constant 5.000000e-01 : f32
    %154 = vector.broadcast %cst_81 : f32 to vector<144x16xf32>
    %155 = arith.mulf %154, %153 : vector<144x16xf32>
    %cst_82 = arith.constant 4.471500e-02 : f32
    %156 = vector.broadcast %cst_82 : f32 to vector<144x16xf32>
    %157 = arith.mulf %156, %153 : vector<144x16xf32>
    %158 = arith.mulf %157, %153 : vector<144x16xf32>
    %159 = arith.mulf %158, %153 : vector<144x16xf32>
    %160 = arith.addf %153, %159 : vector<144x16xf32>
    %cst_83 = arith.constant 0.797884583 : f32
    %161 = vector.broadcast %cst_83 : f32 to vector<144x16xf32>
    %162 = arith.mulf %161, %160 : vector<144x16xf32>
    %163 = math.tanh %162 : vector<144x16xf32>
    %cst_84 = arith.constant 1.000000e+00 : f32
    %164 = vector.broadcast %cst_84 : f32 to vector<144x16xf32>
    %165 = arith.addf %164, %163 : vector<144x16xf32>
    %166 = arith.mulf %155, %165 : vector<144x16xf32>
    %c1_85 = arith.constant 1 : index
    %c0_86 = arith.constant 0 : index
    %c0_87 = arith.constant 0 : index
    %167 = vector.load %arg8[%c1_85, %c0_86, %c0_87] : memref<2x48x144xbf16, #tpu.memory_space<vmem>>, vector<1x48x144xbf16>
    %168 = vector.shape_cast %167 : vector<1x48x144xbf16> to vector<48x144xbf16>
    %169 = arith.truncf %166 : vector<144x16xf32> to vector<144x16xbf16>
    %cst_88 = arith.constant dense<0.000000e+00> : vector<48x16xf32>
    %170 = tpu.matmul %168, %169, %cst_88 {dimension_numbers = #tpu.dot_dimension_numbers<[1], [0], [0], [1], [0, 0, 1, 1], [], []>} : vector<48x144xbf16>, vector<144x16xbf16>, vector<48x16xf32> -> vector<48x16xf32>
    %c1_89 = arith.constant 1 : index
    %c0_90 = arith.constant 0 : index
    %c0_91 = arith.constant 0 : index
    %171 = vector.load %arg9[%c1_89, %c0_90, %c0_91] : memref<2x48x1xf32, #tpu.memory_space<vmem>>, vector<1x48x1xf32>
    %172 = vector.shape_cast %171 : vector<1x48x1xf32> to vector<48x1xf32>
    %173 = vector.broadcast %172 : vector<48x1xf32> to vector<48x16xf32>
    %174 = arith.addf %170, %173 : vector<48x16xf32>
    %175 = arith.addf %174, %119 : vector<48x16xf32>
    %cst_92 = arith.constant dense<0.000000e+00> : vector<48xf32>
    %176 = vector.multi_reduction <add>, %175, %cst_92 [1] : vector<48x16xf32> to vector<48xf32>
    %177 = vector.shape_cast %176 : vector<48xf32> to vector<48x1xf32>
    %cst_93 = arith.constant 1.600000e+01 : f32
    %178 = vector.broadcast %cst_93 : f32 to vector<48x1xf32>
    %179 = arith.divf %177, %178 : vector<48x1xf32>
    %180 = vector.broadcast %179 : vector<48x1xf32> to vector<48x16xf32>
    %181 = arith.subf %175, %180 : vector<48x16xf32>
    %182 = arith.mulf %181, %181 : vector<48x16xf32>
    %cst_94 = arith.constant dense<0.000000e+00> : vector<48xf32>
    %183 = vector.multi_reduction <add>, %182, %cst_94 [1] : vector<48x16xf32> to vector<48xf32>
    %184 = vector.shape_cast %183 : vector<48xf32> to vector<48x1xf32>
    %cst_95 = arith.constant 1.600000e+01 : f32
    %185 = vector.broadcast %cst_95 : f32 to vector<48x1xf32>
    %186 = arith.divf %184, %185 : vector<48x1xf32>
    %187 = vector.broadcast %179 : vector<48x1xf32> to vector<48x16xf32>
    %188 = arith.subf %175, %187 : vector<48x16xf32>
    %cst_96 = arith.constant 9.99999974E-6 : f32
    %189 = vector.broadcast %cst_96 : f32 to vector<48x1xf32>
    %190 = arith.addf %186, %189 : vector<48x1xf32>
    %191 = math.rsqrt %190 : vector<48x1xf32>
    %192 = vector.broadcast %191 : vector<48x1xf32> to vector<48x16xf32>
    %193 = arith.mulf %188, %192 : vector<48x16xf32>
    %c1_97 = arith.constant 1 : index
    %c0_98 = arith.constant 0 : index
    %c0_99 = arith.constant 0 : index
    %194 = vector.load %arg10[%c1_97, %c0_98, %c0_99] : memref<2x1x16xf32, #tpu.memory_space<vmem>>, vector<1x1x16xf32>
    %195 = vector.shape_cast %194 : vector<1x1x16xf32> to vector<1x16xf32>
    %196 = vector.broadcast %195 : vector<1x16xf32> to vector<48x16xf32>
    %197 = arith.mulf %193, %196 : vector<48x16xf32>
    %c1_100 = arith.constant 1 : index
    %c0_101 = arith.constant 0 : index
    %c0_102 = arith.constant 0 : index
    %198 = vector.load %arg11[%c1_100, %c0_101, %c0_102] : memref<2x1x16xf32, #tpu.memory_space<vmem>>, vector<1x1x16xf32>
    %199 = vector.shape_cast %198 : vector<1x1x16xf32> to vector<1x16xf32>
    %200 = vector.broadcast %199 : vector<1x16xf32> to vector<48x16xf32>
    %201 = arith.addf %197, %200 : vector<48x16xf32>
    %c1_103 = arith.constant 1 : index
    %c0_104 = arith.constant 0 : index
    %c0_105 = arith.constant 0 : index
    %202 = vector.load %arg12[%c1_103, %c0_104, %c0_105] : memref<2x16x48xbf16, #tpu.memory_space<vmem>>, vector<1x16x48xbf16>
    %203 = vector.shape_cast %202 : vector<1x16x48xbf16> to vector<16x48xbf16>
    %204 = arith.truncf %201 : vector<48x16xf32> to vector<48x16xbf16>
    %cst_106 = arith.constant dense<0.000000e+00> : vector<48x48xf32>
    %205 = tpu.matmul %204, %203, %cst_106 {dimension_numbers = #tpu.dot_dimension_numbers<[1], [0], [0], [1], [0, 0, 1, 1], [], []>} : vector<48x16xbf16>, vector<16x48xbf16>, vector<48x48xf32> -> vector<48x48xf32>
    %c1_107 = arith.constant 1 : index
    %c0_108 = arith.constant 0 : index
    %c0_109 = arith.constant 0 : index
    %206 = vector.load %arg13[%c1_107, %c0_108, %c0_109] : memref<2x1x48xf32, #tpu.memory_space<vmem>>, vector<1x1x48xf32>
    %207 = vector.shape_cast %206 : vector<1x1x48xf32> to vector<1x48xf32>
    %208 = vector.broadcast %207 : vector<1x48xf32> to vector<48x48xf32>
    %209 = arith.addf %205, %208 : vector<48x48xf32>
    %cst_110 = arith.constant 5.000000e-01 : f32
    %210 = vector.broadcast %cst_110 : f32 to vector<48x48xf32>
    %211 = arith.mulf %210, %209 : vector<48x48xf32>
    %cst_111 = arith.constant 4.471500e-02 : f32
    %212 = vector.broadcast %cst_111 : f32 to vector<48x48xf32>
    %213 = arith.mulf %212, %209 : vector<48x48xf32>
    %214 = arith.mulf %213, %209 : vector<48x48xf32>
    %215 = arith.mulf %214, %209 : vector<48x48xf32>
    %216 = arith.addf %209, %215 : vector<48x48xf32>
    %cst_112 = arith.constant 0.797884583 : f32
    %217 = vector.broadcast %cst_112 : f32 to vector<48x48xf32>
    %218 = arith.mulf %217, %216 : vector<48x48xf32>
    %219 = math.tanh %218 : vector<48x48xf32>
    %cst_113 = arith.constant 1.000000e+00 : f32
    %220 = vector.broadcast %cst_113 : f32 to vector<48x48xf32>
    %221 = arith.addf %220, %219 : vector<48x48xf32>
    %222 = arith.mulf %211, %221 : vector<48x48xf32>
    %c1_114 = arith.constant 1 : index
    %c0_115 = arith.constant 0 : index
    %c0_116 = arith.constant 0 : index
    %223 = vector.load %arg14[%c1_114, %c0_115, %c0_116] : memref<2x48x16xbf16, #tpu.memory_space<vmem>>, vector<1x48x16xbf16>
    %224 = vector.shape_cast %223 : vector<1x48x16xbf16> to vector<48x16xbf16>
    %225 = arith.truncf %222 : vector<48x48xf32> to vector<48x48xbf16>
    %cst_117 = arith.constant dense<0.000000e+00> : vector<48x16xf32>
    %226 = tpu.matmul %225, %224, %cst_117 {dimension_numbers = #tpu.dot_dimension_numbers<[1], [0], [0], [1], [0, 0, 1, 1], [], []>} : vector<48x48xbf16>, vector<48x16xbf16>, vector<48x16xf32> -> vector<48x16xf32>
    %c1_118 = arith.constant 1 : index
    %c0_119 = arith.constant 0 : index
    %c0_120 = arith.constant 0 : index
    %227 = vector.load %arg15[%c1_118, %c0_119, %c0_120] : memref<2x1x16xf32, #tpu.memory_space<vmem>>, vector<1x1x16xf32>
    %228 = vector.shape_cast %227 : vector<1x1x16xf32> to vector<1x16xf32>
    %229 = vector.broadcast %228 : vector<1x16xf32> to vector<48x16xf32>
    %230 = arith.addf %226, %229 : vector<48x16xf32>
    %231 = arith.addf %230, %175 : vector<48x16xf32>
    %c0_121 = arith.constant 0 : index
    %c0_122 = arith.constant 0 : index
    %232 = vector.load %arg16[%c0_121, %c0_122] : memref<16x256xbf16, #tpu.memory_space<vmem>>, vector<16x256xbf16>
    %233 = arith.truncf %231 : vector<48x16xf32> to vector<48x16xbf16>
    %cst_123 = arith.constant dense<0.000000e+00> : vector<48x256xf32>
    %234 = tpu.matmul %233, %232, %cst_123 {dimension_numbers = #tpu.dot_dimension_numbers<[1], [0], [0], [1], [0, 0, 1, 1], [], []>} : vector<48x16xbf16>, vector<16x256xbf16>, vector<48x256xf32> -> vector<48x256xf32>
    %cst_124 = arith.constant 0.000000e+00 : f32
    %235 = vector.broadcast %cst_124 : f32 to vector<4x256xf32>
    %cst_125 = arith.constant 0.000000e+00 : f32
    %236 = vector.broadcast %cst_125 : f32 to vector<8x256xf32>
    %c0_126 = arith.constant 0 : index
    %c0_127 = arith.constant 0 : index
    %c0_128 = arith.constant 0 : index
    %237 = vector.load %arg17[%c0_126, %c0_127, %c0_128] : memref<9x256x256xbf16, #tpu.memory_space<vmem>>, vector<1x256x256xbf16>
    %238 = vector.shape_cast %237 : vector<1x256x256xbf16> to vector<256x256xbf16>
    %239 = arith.truncf %234 : vector<48x256xf32> to vector<48x256xbf16>
    %cst_129 = arith.constant dense<0.000000e+00> : vector<48x256xf32>
    %240 = tpu.matmul %239, %238, %cst_129 {dimension_numbers = #tpu.dot_dimension_numbers<[1], [0], [0], [1], [0, 0, 1, 1], [], []>} : vector<48x256xbf16>, vector<256x256xbf16>, vector<48x256xf32> -> vector<48x256xf32>
    %c0_130 = arith.constant 0 : index
    %c0_131 = arith.constant 0 : index
    %c0_132 = arith.constant 0 : index
    %241 = vector.load %arg18[%c0_130, %c0_131, %c0_132] : memref<9x4x48xbf16, #tpu.memory_space<vmem>>, vector<1x4x48xbf16>
    %242 = vector.shape_cast %241 : vector<1x4x48xbf16> to vector<4x48xbf16>
    %243 = arith.truncf %240 : vector<48x256xf32> to vector<48x256xbf16>
    %cst_133 = arith.constant dense<0.000000e+00> : vector<4x256xf32>
    %244 = tpu.matmul %242, %243, %cst_133 {dimension_numbers = #tpu.dot_dimension_numbers<[1], [0], [0], [1], [0, 0, 1, 1], [], []>} : vector<4x48xbf16>, vector<48x256xbf16>, vector<4x256xf32> -> vector<4x256xf32>
    %245 = arith.addf %235, %244 : vector<4x256xf32>
    %c0_134 = arith.constant 0 : index
    %c0_135 = arith.constant 0 : index
    %c0_136 = arith.constant 0 : index
    %246 = vector.load %arg20[%c0_134, %c0_135, %c0_136] : memref<9x8x48xbf16, #tpu.memory_space<vmem>>, vector<1x8x48xbf16>
    %247 = vector.shape_cast %246 : vector<1x8x48xbf16> to vector<8x48xbf16>
    %248 = arith.truncf %240 : vector<48x256xf32> to vector<48x256xbf16>
    %cst_137 = arith.constant dense<0.000000e+00> : vector<8x256xf32>
    %249 = tpu.matmul %247, %248, %cst_137 {dimension_numbers = #tpu.dot_dimension_numbers<[1], [0], [0], [1], [0, 0, 1, 1], [], []>} : vector<8x48xbf16>, vector<48x256xbf16>, vector<8x256xf32> -> vector<8x256xf32>
    %250 = arith.addf %236, %249 : vector<8x256xf32>
    %c1_138 = arith.constant 1 : index
    %c0_139 = arith.constant 0 : index
    %c0_140 = arith.constant 0 : index
    %251 = vector.load %arg17[%c1_138, %c0_139, %c0_140] : memref<9x256x256xbf16, #tpu.memory_space<vmem>>, vector<1x256x256xbf16>
    %252 = vector.shape_cast %251 : vector<1x256x256xbf16> to vector<256x256xbf16>
    %253 = arith.truncf %234 : vector<48x256xf32> to vector<48x256xbf16>
    %cst_141 = arith.constant dense<0.000000e+00> : vector<48x256xf32>
    %254 = tpu.matmul %253, %252, %cst_141 {dimension_numbers = #tpu.dot_dimension_numbers<[1], [0], [0], [1], [0, 0, 1, 1], [], []>} : vector<48x256xbf16>, vector<256x256xbf16>, vector<48x256xf32> -> vector<48x256xf32>
    %c1_142 = arith.constant 1 : index
    %c0_143 = arith.constant 0 : index
    %c0_144 = arith.constant 0 : index
    %255 = vector.load %arg18[%c1_142, %c0_143, %c0_144] : memref<9x4x48xbf16, #tpu.memory_space<vmem>>, vector<1x4x48xbf16>
    %256 = vector.shape_cast %255 : vector<1x4x48xbf16> to vector<4x48xbf16>
    %257 = arith.truncf %254 : vector<48x256xf32> to vector<48x256xbf16>
    %cst_145 = arith.constant dense<0.000000e+00> : vector<4x256xf32>
    %258 = tpu.matmul %256, %257, %cst_145 {dimension_numbers = #tpu.dot_dimension_numbers<[1], [0], [0], [1], [0, 0, 1, 1], [], []>} : vector<4x48xbf16>, vector<48x256xbf16>, vector<4x256xf32> -> vector<4x256xf32>
    %259 = arith.addf %245, %258 : vector<4x256xf32>
    %c1_146 = arith.constant 1 : index
    %c0_147 = arith.constant 0 : index
    %c0_148 = arith.constant 0 : index
    %260 = vector.load %arg20[%c1_146, %c0_147, %c0_148] : memref<9x8x48xbf16, #tpu.memory_space<vmem>>, vector<1x8x48xbf16>
    %261 = vector.shape_cast %260 : vector<1x8x48xbf16> to vector<8x48xbf16>
    %262 = arith.truncf %254 : vector<48x256xf32> to vector<48x256xbf16>
    %cst_149 = arith.constant dense<0.000000e+00> : vector<8x256xf32>
    %263 = tpu.matmul %261, %262, %cst_149 {dimension_numbers = #tpu.dot_dimension_numbers<[1], [0], [0], [1], [0, 0, 1, 1], [], []>} : vector<8x48xbf16>, vector<48x256xbf16>, vector<8x256xf32> -> vector<8x256xf32>
    %264 = arith.addf %250, %263 : vector<8x256xf32>
    %c2 = arith.constant 2 : index
    %c0_150 = arith.constant 0 : index
    %c0_151 = arith.constant 0 : index
    %265 = vector.load %arg17[%c2, %c0_150, %c0_151] : memref<9x256x256xbf16, #tpu.memory_space<vmem>>, vector<1x256x256xbf16>
    %266 = vector.shape_cast %265 : vector<1x256x256xbf16> to vector<256x256xbf16>
    %267 = arith.truncf %234 : vector<48x256xf32> to vector<48x256xbf16>
    %cst_152 = arith.constant dense<0.000000e+00> : vector<48x256xf32>
    %268 = tpu.matmul %267, %266, %cst_152 {dimension_numbers = #tpu.dot_dimension_numbers<[1], [0], [0], [1], [0, 0, 1, 1], [], []>} : vector<48x256xbf16>, vector<256x256xbf16>, vector<48x256xf32> -> vector<48x256xf32>
    %c2_153 = arith.constant 2 : index
    %c0_154 = arith.constant 0 : index
    %c0_155 = arith.constant 0 : index
    %269 = vector.load %arg18[%c2_153, %c0_154, %c0_155] : memref<9x4x48xbf16, #tpu.memory_space<vmem>>, vector<1x4x48xbf16>
    %270 = vector.shape_cast %269 : vector<1x4x48xbf16> to vector<4x48xbf16>
    %271 = arith.truncf %268 : vector<48x256xf32> to vector<48x256xbf16>
    %cst_156 = arith.constant dense<0.000000e+00> : vector<4x256xf32>
    %272 = tpu.matmul %270, %271, %cst_156 {dimension_numbers = #tpu.dot_dimension_numbers<[1], [0], [0], [1], [0, 0, 1, 1], [], []>} : vector<4x48xbf16>, vector<48x256xbf16>, vector<4x256xf32> -> vector<4x256xf32>
    %273 = arith.addf %259, %272 : vector<4x256xf32>
    %c2_157 = arith.constant 2 : index
    %c0_158 = arith.constant 0 : index
    %c0_159 = arith.constant 0 : index
    %274 = vector.load %arg20[%c2_157, %c0_158, %c0_159] : memref<9x8x48xbf16, #tpu.memory_space<vmem>>, vector<1x8x48xbf16>
    %275 = vector.shape_cast %274 : vector<1x8x48xbf16> to vector<8x48xbf16>
    %276 = arith.truncf %268 : vector<48x256xf32> to vector<48x256xbf16>
    %cst_160 = arith.constant dense<0.000000e+00> : vector<8x256xf32>
    %277 = tpu.matmul %275, %276, %cst_160 {dimension_numbers = #tpu.dot_dimension_numbers<[1], [0], [0], [1], [0, 0, 1, 1], [], []>} : vector<8x48xbf16>, vector<48x256xbf16>, vector<8x256xf32> -> vector<8x256xf32>
    %278 = arith.addf %264, %277 : vector<8x256xf32>
    %c3 = arith.constant 3 : index
    %c0_161 = arith.constant 0 : index
    %c0_162 = arith.constant 0 : index
    %279 = vector.load %arg17[%c3, %c0_161, %c0_162] : memref<9x256x256xbf16, #tpu.memory_space<vmem>>, vector<1x256x256xbf16>
    %280 = vector.shape_cast %279 : vector<1x256x256xbf16> to vector<256x256xbf16>
    %281 = arith.truncf %234 : vector<48x256xf32> to vector<48x256xbf16>
    %cst_163 = arith.constant dense<0.000000e+00> : vector<48x256xf32>
    %282 = tpu.matmul %281, %280, %cst_163 {dimension_numbers = #tpu.dot_dimension_numbers<[1], [0], [0], [1], [0, 0, 1, 1], [], []>} : vector<48x256xbf16>, vector<256x256xbf16>, vector<48x256xf32> -> vector<48x256xf32>
    %c3_164 = arith.constant 3 : index
    %c0_165 = arith.constant 0 : index
    %c0_166 = arith.constant 0 : index
    %283 = vector.load %arg18[%c3_164, %c0_165, %c0_166] : memref<9x4x48xbf16, #tpu.memory_space<vmem>>, vector<1x4x48xbf16>
    %284 = vector.shape_cast %283 : vector<1x4x48xbf16> to vector<4x48xbf16>
    %285 = arith.truncf %282 : vector<48x256xf32> to vector<48x256xbf16>
    %cst_167 = arith.constant dense<0.000000e+00> : vector<4x256xf32>
    %286 = tpu.matmul %284, %285, %cst_167 {dimension_numbers = #tpu.dot_dimension_numbers<[1], [0], [0], [1], [0, 0, 1, 1], [], []>} : vector<4x48xbf16>, vector<48x256xbf16>, vector<4x256xf32> -> vector<4x256xf32>
    %287 = arith.addf %273, %286 : vector<4x256xf32>
    %c3_168 = arith.constant 3 : index
    %c0_169 = arith.constant 0 : index
    %c0_170 = arith.constant 0 : index
    %288 = vector.load %arg20[%c3_168, %c0_169, %c0_170] : memref<9x8x48xbf16, #tpu.memory_space<vmem>>, vector<1x8x48xbf16>
    %289 = vector.shape_cast %288 : vector<1x8x48xbf16> to vector<8x48xbf16>
    %290 = arith.truncf %282 : vector<48x256xf32> to vector<48x256xbf16>
    %cst_171 = arith.constant dense<0.000000e+00> : vector<8x256xf32>
    %291 = tpu.matmul %289, %290, %cst_171 {dimension_numbers = #tpu.dot_dimension_numbers<[1], [0], [0], [1], [0, 0, 1, 1], [], []>} : vector<8x48xbf16>, vector<48x256xbf16>, vector<8x256xf32> -> vector<8x256xf32>
    %292 = arith.addf %278, %291 : vector<8x256xf32>
    %c4 = arith.constant 4 : index
    %c0_172 = arith.constant 0 : index
    %c0_173 = arith.constant 0 : index
    %293 = vector.load %arg17[%c4, %c0_172, %c0_173] : memref<9x256x256xbf16, #tpu.memory_space<vmem>>, vector<1x256x256xbf16>
    %294 = vector.shape_cast %293 : vector<1x256x256xbf16> to vector<256x256xbf16>
    %295 = arith.truncf %234 : vector<48x256xf32> to vector<48x256xbf16>
    %cst_174 = arith.constant dense<0.000000e+00> : vector<48x256xf32>
    %296 = tpu.matmul %295, %294, %cst_174 {dimension_numbers = #tpu.dot_dimension_numbers<[1], [0], [0], [1], [0, 0, 1, 1], [], []>} : vector<48x256xbf16>, vector<256x256xbf16>, vector<48x256xf32> -> vector<48x256xf32>
    %c4_175 = arith.constant 4 : index
    %c0_176 = arith.constant 0 : index
    %c0_177 = arith.constant 0 : index
    %297 = vector.load %arg18[%c4_175, %c0_176, %c0_177] : memref<9x4x48xbf16, #tpu.memory_space<vmem>>, vector<1x4x48xbf16>
    %298 = vector.shape_cast %297 : vector<1x4x48xbf16> to vector<4x48xbf16>
    %299 = arith.truncf %296 : vector<48x256xf32> to vector<48x256xbf16>
    %cst_178 = arith.constant dense<0.000000e+00> : vector<4x256xf32>
    %300 = tpu.matmul %298, %299, %cst_178 {dimension_numbers = #tpu.dot_dimension_numbers<[1], [0], [0], [1], [0, 0, 1, 1], [], []>} : vector<4x48xbf16>, vector<48x256xbf16>, vector<4x256xf32> -> vector<4x256xf32>
    %301 = arith.addf %287, %300 : vector<4x256xf32>
    %c4_179 = arith.constant 4 : index
    %c0_180 = arith.constant 0 : index
    %c0_181 = arith.constant 0 : index
    %302 = vector.load %arg20[%c4_179, %c0_180, %c0_181] : memref<9x8x48xbf16, #tpu.memory_space<vmem>>, vector<1x8x48xbf16>
    %303 = vector.shape_cast %302 : vector<1x8x48xbf16> to vector<8x48xbf16>
    %304 = arith.truncf %296 : vector<48x256xf32> to vector<48x256xbf16>
    %cst_182 = arith.constant dense<0.000000e+00> : vector<8x256xf32>
    %305 = tpu.matmul %303, %304, %cst_182 {dimension_numbers = #tpu.dot_dimension_numbers<[1], [0], [0], [1], [0, 0, 1, 1], [], []>} : vector<8x48xbf16>, vector<48x256xbf16>, vector<8x256xf32> -> vector<8x256xf32>
    %306 = arith.addf %292, %305 : vector<8x256xf32>
    %c5 = arith.constant 5 : index
    %c0_183 = arith.constant 0 : index
    %c0_184 = arith.constant 0 : index
    %307 = vector.load %arg17[%c5, %c0_183, %c0_184] : memref<9x256x256xbf16, #tpu.memory_space<vmem>>, vector<1x256x256xbf16>
    %308 = vector.shape_cast %307 : vector<1x256x256xbf16> to vector<256x256xbf16>
    %309 = arith.truncf %234 : vector<48x256xf32> to vector<48x256xbf16>
    %cst_185 = arith.constant dense<0.000000e+00> : vector<48x256xf32>
    %310 = tpu.matmul %309, %308, %cst_185 {dimension_numbers = #tpu.dot_dimension_numbers<[1], [0], [0], [1], [0, 0, 1, 1], [], []>} : vector<48x256xbf16>, vector<256x256xbf16>, vector<48x256xf32> -> vector<48x256xf32>
    %c5_186 = arith.constant 5 : index
    %c0_187 = arith.constant 0 : index
    %c0_188 = arith.constant 0 : index
    %311 = vector.load %arg18[%c5_186, %c0_187, %c0_188] : memref<9x4x48xbf16, #tpu.memory_space<vmem>>, vector<1x4x48xbf16>
    %312 = vector.shape_cast %311 : vector<1x4x48xbf16> to vector<4x48xbf16>
    %313 = arith.truncf %310 : vector<48x256xf32> to vector<48x256xbf16>
    %cst_189 = arith.constant dense<0.000000e+00> : vector<4x256xf32>
    %314 = tpu.matmul %312, %313, %cst_189 {dimension_numbers = #tpu.dot_dimension_numbers<[1], [0], [0], [1], [0, 0, 1, 1], [], []>} : vector<4x48xbf16>, vector<48x256xbf16>, vector<4x256xf32> -> vector<4x256xf32>
    %315 = arith.addf %301, %314 : vector<4x256xf32>
    %c5_190 = arith.constant 5 : index
    %c0_191 = arith.constant 0 : index
    %c0_192 = arith.constant 0 : index
    %316 = vector.load %arg20[%c5_190, %c0_191, %c0_192] : memref<9x8x48xbf16, #tpu.memory_space<vmem>>, vector<1x8x48xbf16>
    %317 = vector.shape_cast %316 : vector<1x8x48xbf16> to vector<8x48xbf16>
    %318 = arith.truncf %310 : vector<48x256xf32> to vector<48x256xbf16>
    %cst_193 = arith.constant dense<0.000000e+00> : vector<8x256xf32>
    %319 = tpu.matmul %317, %318, %cst_193 {dimension_numbers = #tpu.dot_dimension_numbers<[1], [0], [0], [1], [0, 0, 1, 1], [], []>} : vector<8x48xbf16>, vector<48x256xbf16>, vector<8x256xf32> -> vector<8x256xf32>
    %320 = arith.addf %306, %319 : vector<8x256xf32>
    %c6 = arith.constant 6 : index
    %c0_194 = arith.constant 0 : index
    %c0_195 = arith.constant 0 : index
    %321 = vector.load %arg17[%c6, %c0_194, %c0_195] : memref<9x256x256xbf16, #tpu.memory_space<vmem>>, vector<1x256x256xbf16>
    %322 = vector.shape_cast %321 : vector<1x256x256xbf16> to vector<256x256xbf16>
    %323 = arith.truncf %234 : vector<48x256xf32> to vector<48x256xbf16>
    %cst_196 = arith.constant dense<0.000000e+00> : vector<48x256xf32>
    %324 = tpu.matmul %323, %322, %cst_196 {dimension_numbers = #tpu.dot_dimension_numbers<[1], [0], [0], [1], [0, 0, 1, 1], [], []>} : vector<48x256xbf16>, vector<256x256xbf16>, vector<48x256xf32> -> vector<48x256xf32>
    %c6_197 = arith.constant 6 : index
    %c0_198 = arith.constant 0 : index
    %c0_199 = arith.constant 0 : index
    %325 = vector.load %arg18[%c6_197, %c0_198, %c0_199] : memref<9x4x48xbf16, #tpu.memory_space<vmem>>, vector<1x4x48xbf16>
    %326 = vector.shape_cast %325 : vector<1x4x48xbf16> to vector<4x48xbf16>
    %327 = arith.truncf %324 : vector<48x256xf32> to vector<48x256xbf16>
    %cst_200 = arith.constant dense<0.000000e+00> : vector<4x256xf32>
    %328 = tpu.matmul %326, %327, %cst_200 {dimension_numbers = #tpu.dot_dimension_numbers<[1], [0], [0], [1], [0, 0, 1, 1], [], []>} : vector<4x48xbf16>, vector<48x256xbf16>, vector<4x256xf32> -> vector<4x256xf32>
    %329 = arith.addf %315, %328 : vector<4x256xf32>
    %c6_201 = arith.constant 6 : index
    %c0_202 = arith.constant 0 : index
    %c0_203 = arith.constant 0 : index
    %330 = vector.load %arg20[%c6_201, %c0_202, %c0_203] : memref<9x8x48xbf16, #tpu.memory_space<vmem>>, vector<1x8x48xbf16>
    %331 = vector.shape_cast %330 : vector<1x8x48xbf16> to vector<8x48xbf16>
    %332 = arith.truncf %324 : vector<48x256xf32> to vector<48x256xbf16>
    %cst_204 = arith.constant dense<0.000000e+00> : vector<8x256xf32>
    %333 = tpu.matmul %331, %332, %cst_204 {dimension_numbers = #tpu.dot_dimension_numbers<[1], [0], [0], [1], [0, 0, 1, 1], [], []>} : vector<8x48xbf16>, vector<48x256xbf16>, vector<8x256xf32> -> vector<8x256xf32>
    %334 = arith.addf %320, %333 : vector<8x256xf32>
    %c7 = arith.constant 7 : index
    %c0_205 = arith.constant 0 : index
    %c0_206 = arith.constant 0 : index
    %335 = vector.load %arg17[%c7, %c0_205, %c0_206] : memref<9x256x256xbf16, #tpu.memory_space<vmem>>, vector<1x256x256xbf16>
    %336 = vector.shape_cast %335 : vector<1x256x256xbf16> to vector<256x256xbf16>
    %337 = arith.truncf %234 : vector<48x256xf32> to vector<48x256xbf16>
    %cst_207 = arith.constant dense<0.000000e+00> : vector<48x256xf32>
    %338 = tpu.matmul %337, %336, %cst_207 {dimension_numbers = #tpu.dot_dimension_numbers<[1], [0], [0], [1], [0, 0, 1, 1], [], []>} : vector<48x256xbf16>, vector<256x256xbf16>, vector<48x256xf32> -> vector<48x256xf32>
    %c7_208 = arith.constant 7 : index
    %c0_209 = arith.constant 0 : index
    %c0_210 = arith.constant 0 : index
    %339 = vector.load %arg18[%c7_208, %c0_209, %c0_210] : memref<9x4x48xbf16, #tpu.memory_space<vmem>>, vector<1x4x48xbf16>
    %340 = vector.shape_cast %339 : vector<1x4x48xbf16> to vector<4x48xbf16>
    %341 = arith.truncf %338 : vector<48x256xf32> to vector<48x256xbf16>
    %cst_211 = arith.constant dense<0.000000e+00> : vector<4x256xf32>
    %342 = tpu.matmul %340, %341, %cst_211 {dimension_numbers = #tpu.dot_dimension_numbers<[1], [0], [0], [1], [0, 0, 1, 1], [], []>} : vector<4x48xbf16>, vector<48x256xbf16>, vector<4x256xf32> -> vector<4x256xf32>
    %343 = arith.addf %329, %342 : vector<4x256xf32>
    %c7_212 = arith.constant 7 : index
    %c0_213 = arith.constant 0 : index
    %c0_214 = arith.constant 0 : index
    %344 = vector.load %arg20[%c7_212, %c0_213, %c0_214] : memref<9x8x48xbf16, #tpu.memory_space<vmem>>, vector<1x8x48xbf16>
    %345 = vector.shape_cast %344 : vector<1x8x48xbf16> to vector<8x48xbf16>
    %346 = arith.truncf %338 : vector<48x256xf32> to vector<48x256xbf16>
    %cst_215 = arith.constant dense<0.000000e+00> : vector<8x256xf32>
    %347 = tpu.matmul %345, %346, %cst_215 {dimension_numbers = #tpu.dot_dimension_numbers<[1], [0], [0], [1], [0, 0, 1, 1], [], []>} : vector<8x48xbf16>, vector<48x256xbf16>, vector<8x256xf32> -> vector<8x256xf32>
    %348 = arith.addf %334, %347 : vector<8x256xf32>
    %c8 = arith.constant 8 : index
    %c0_216 = arith.constant 0 : index
    %c0_217 = arith.constant 0 : index
    %349 = vector.load %arg17[%c8, %c0_216, %c0_217] : memref<9x256x256xbf16, #tpu.memory_space<vmem>>, vector<1x256x256xbf16>
    %350 = vector.shape_cast %349 : vector<1x256x256xbf16> to vector<256x256xbf16>
    %351 = arith.truncf %234 : vector<48x256xf32> to vector<48x256xbf16>
    %cst_218 = arith.constant dense<0.000000e+00> : vector<48x256xf32>
    %352 = tpu.matmul %351, %350, %cst_218 {dimension_numbers = #tpu.dot_dimension_numbers<[1], [0], [0], [1], [0, 0, 1, 1], [], []>} : vector<48x256xbf16>, vector<256x256xbf16>, vector<48x256xf32> -> vector<48x256xf32>
    %c8_219 = arith.constant 8 : index
    %c0_220 = arith.constant 0 : index
    %c0_221 = arith.constant 0 : index
    %353 = vector.load %arg18[%c8_219, %c0_220, %c0_221] : memref<9x4x48xbf16, #tpu.memory_space<vmem>>, vector<1x4x48xbf16>
    %354 = vector.shape_cast %353 : vector<1x4x48xbf16> to vector<4x48xbf16>
    %355 = arith.truncf %352 : vector<48x256xf32> to vector<48x256xbf16>
    %cst_222 = arith.constant dense<0.000000e+00> : vector<4x256xf32>
    %356 = tpu.matmul %354, %355, %cst_222 {dimension_numbers = #tpu.dot_dimension_numbers<[1], [0], [0], [1], [0, 0, 1, 1], [], []>} : vector<4x48xbf16>, vector<48x256xbf16>, vector<4x256xf32> -> vector<4x256xf32>
    %357 = arith.addf %343, %356 : vector<4x256xf32>
    %c8_223 = arith.constant 8 : index
    %c0_224 = arith.constant 0 : index
    %c0_225 = arith.constant 0 : index
    %358 = vector.load %arg20[%c8_223, %c0_224, %c0_225] : memref<9x8x48xbf16, #tpu.memory_space<vmem>>, vector<1x8x48xbf16>
    %359 = vector.shape_cast %358 : vector<1x8x48xbf16> to vector<8x48xbf16>
    %360 = arith.truncf %352 : vector<48x256xf32> to vector<48x256xbf16>
    %cst_226 = arith.constant dense<0.000000e+00> : vector<8x256xf32>
    %361 = tpu.matmul %359, %360, %cst_226 {dimension_numbers = #tpu.dot_dimension_numbers<[1], [0], [0], [1], [0, 0, 1, 1], [], []>} : vector<8x48xbf16>, vector<48x256xbf16>, vector<8x256xf32> -> vector<8x256xf32>
    %362 = arith.addf %348, %361 : vector<8x256xf32>
    %c0_227 = arith.constant 0 : index
    %c0_228 = arith.constant 0 : index
    %363 = vector.load %arg19[%c0_227, %c0_228] : memref<4x1xf32, #tpu.memory_space<vmem>>, vector<4x1xf32>
    %364 = vector.broadcast %363 : vector<4x1xf32> to vector<4x256xf32>
    %365 = arith.addf %357, %364 : vector<4x256xf32>
    %cst_229 = arith.constant 5.000000e-01 : f32
    %366 = vector.broadcast %cst_229 : f32 to vector<4x256xf32>
    %367 = arith.mulf %366, %365 : vector<4x256xf32>
    %cst_230 = arith.constant 4.471500e-02 : f32
    %368 = vector.broadcast %cst_230 : f32 to vector<4x256xf32>
    %369 = arith.mulf %368, %365 : vector<4x256xf32>
    %370 = arith.mulf %369, %365 : vector<4x256xf32>
    %371 = arith.mulf %370, %365 : vector<4x256xf32>
    %372 = arith.addf %365, %371 : vector<4x256xf32>
    %cst_231 = arith.constant 0.797884583 : f32
    %373 = vector.broadcast %cst_231 : f32 to vector<4x256xf32>
    %374 = arith.mulf %373, %372 : vector<4x256xf32>
    %375 = math.tanh %374 : vector<4x256xf32>
    %cst_232 = arith.constant 1.000000e+00 : f32
    %376 = vector.broadcast %cst_232 : f32 to vector<4x256xf32>
    %377 = arith.addf %376, %375 : vector<4x256xf32>
    %378 = arith.mulf %367, %377 : vector<4x256xf32>
    %c0_233 = arith.constant 0 : index
    %c0_234 = arith.constant 0 : index
    %c0_235 = arith.constant 0 : index
    %379 = vector.load %arg17[%c0_233, %c0_234, %c0_235] : memref<9x256x256xbf16, #tpu.memory_space<vmem>>, vector<1x256x256xbf16>
    %380 = vector.shape_cast %379 : vector<1x256x256xbf16> to vector<256x256xbf16>
    %381 = arith.truncf %378 : vector<4x256xf32> to vector<4x256xbf16>
    %cst_236 = arith.constant dense<0.000000e+00> : vector<4x256xf32>
    %382 = tpu.matmul %381, %380, %cst_236 {dimension_numbers = #tpu.dot_dimension_numbers<[1], [0], [0], [1], [0, 0, 1, 1], [], []>} : vector<4x256xbf16>, vector<256x256xbf16>, vector<4x256xf32> -> vector<4x256xf32>
    %c0_237 = arith.constant 0 : index
    %c0_238 = arith.constant 0 : index
    %c0_239 = arith.constant 0 : index
    %383 = vector.load %arg21[%c0_237, %c0_238, %c0_239] : memref<9x8x4xbf16, #tpu.memory_space<vmem>>, vector<1x8x4xbf16>
    %384 = vector.shape_cast %383 : vector<1x8x4xbf16> to vector<8x4xbf16>
    %385 = arith.truncf %382 : vector<4x256xf32> to vector<4x256xbf16>
    %cst_240 = arith.constant dense<0.000000e+00> : vector<8x256xf32>
    %386 = tpu.matmul %384, %385, %cst_240 {dimension_numbers = #tpu.dot_dimension_numbers<[1], [0], [0], [1], [0, 0, 1, 1], [], []>} : vector<8x4xbf16>, vector<4x256xbf16>, vector<8x256xf32> -> vector<8x256xf32>
    %387 = arith.addf %362, %386 : vector<8x256xf32>
    %c1_241 = arith.constant 1 : index
    %c0_242 = arith.constant 0 : index
    %c0_243 = arith.constant 0 : index
    %388 = vector.load %arg17[%c1_241, %c0_242, %c0_243] : memref<9x256x256xbf16, #tpu.memory_space<vmem>>, vector<1x256x256xbf16>
    %389 = vector.shape_cast %388 : vector<1x256x256xbf16> to vector<256x256xbf16>
    %390 = arith.truncf %378 : vector<4x256xf32> to vector<4x256xbf16>
    %cst_244 = arith.constant dense<0.000000e+00> : vector<4x256xf32>
    %391 = tpu.matmul %390, %389, %cst_244 {dimension_numbers = #tpu.dot_dimension_numbers<[1], [0], [0], [1], [0, 0, 1, 1], [], []>} : vector<4x256xbf16>, vector<256x256xbf16>, vector<4x256xf32> -> vector<4x256xf32>
    %c1_245 = arith.constant 1 : index
    %c0_246 = arith.constant 0 : index
    %c0_247 = arith.constant 0 : index
    %392 = vector.load %arg21[%c1_245, %c0_246, %c0_247] : memref<9x8x4xbf16, #tpu.memory_space<vmem>>, vector<1x8x4xbf16>
    %393 = vector.shape_cast %392 : vector<1x8x4xbf16> to vector<8x4xbf16>
    %394 = arith.truncf %391 : vector<4x256xf32> to vector<4x256xbf16>
    %cst_248 = arith.constant dense<0.000000e+00> : vector<8x256xf32>
    %395 = tpu.matmul %393, %394, %cst_248 {dimension_numbers = #tpu.dot_dimension_numbers<[1], [0], [0], [1], [0, 0, 1, 1], [], []>} : vector<8x4xbf16>, vector<4x256xbf16>, vector<8x256xf32> -> vector<8x256xf32>
    %396 = arith.addf %387, %395 : vector<8x256xf32>
    %c2_249 = arith.constant 2 : index
    %c0_250 = arith.constant 0 : index
    %c0_251 = arith.constant 0 : index
    %397 = vector.load %arg17[%c2_249, %c0_250, %c0_251] : memref<9x256x256xbf16, #tpu.memory_space<vmem>>, vector<1x256x256xbf16>
    %398 = vector.shape_cast %397 : vector<1x256x256xbf16> to vector<256x256xbf16>
    %399 = arith.truncf %378 : vector<4x256xf32> to vector<4x256xbf16>
    %cst_252 = arith.constant dense<0.000000e+00> : vector<4x256xf32>
    %400 = tpu.matmul %399, %398, %cst_252 {dimension_numbers = #tpu.dot_dimension_numbers<[1], [0], [0], [1], [0, 0, 1, 1], [], []>} : vector<4x256xbf16>, vector<256x256xbf16>, vector<4x256xf32> -> vector<4x256xf32>
    %c2_253 = arith.constant 2 : index
    %c0_254 = arith.constant 0 : index
    %c0_255 = arith.constant 0 : index
    %401 = vector.load %arg21[%c2_253, %c0_254, %c0_255] : memref<9x8x4xbf16, #tpu.memory_space<vmem>>, vector<1x8x4xbf16>
    %402 = vector.shape_cast %401 : vector<1x8x4xbf16> to vector<8x4xbf16>
    %403 = arith.truncf %400 : vector<4x256xf32> to vector<4x256xbf16>
    %cst_256 = arith.constant dense<0.000000e+00> : vector<8x256xf32>
    %404 = tpu.matmul %402, %403, %cst_256 {dimension_numbers = #tpu.dot_dimension_numbers<[1], [0], [0], [1], [0, 0, 1, 1], [], []>} : vector<8x4xbf16>, vector<4x256xbf16>, vector<8x256xf32> -> vector<8x256xf32>
    %405 = arith.addf %396, %404 : vector<8x256xf32>
    %c3_257 = arith.constant 3 : index
    %c0_258 = arith.constant 0 : index
    %c0_259 = arith.constant 0 : index
    %406 = vector.load %arg17[%c3_257, %c0_258, %c0_259] : memref<9x256x256xbf16, #tpu.memory_space<vmem>>, vector<1x256x256xbf16>
    %407 = vector.shape_cast %406 : vector<1x256x256xbf16> to vector<256x256xbf16>
    %408 = arith.truncf %378 : vector<4x256xf32> to vector<4x256xbf16>
    %cst_260 = arith.constant dense<0.000000e+00> : vector<4x256xf32>
    %409 = tpu.matmul %408, %407, %cst_260 {dimension_numbers = #tpu.dot_dimension_numbers<[1], [0], [0], [1], [0, 0, 1, 1], [], []>} : vector<4x256xbf16>, vector<256x256xbf16>, vector<4x256xf32> -> vector<4x256xf32>
    %c3_261 = arith.constant 3 : index
    %c0_262 = arith.constant 0 : index
    %c0_263 = arith.constant 0 : index
    %410 = vector.load %arg21[%c3_261, %c0_262, %c0_263] : memref<9x8x4xbf16, #tpu.memory_space<vmem>>, vector<1x8x4xbf16>
    %411 = vector.shape_cast %410 : vector<1x8x4xbf16> to vector<8x4xbf16>
    %412 = arith.truncf %409 : vector<4x256xf32> to vector<4x256xbf16>
    %cst_264 = arith.constant dense<0.000000e+00> : vector<8x256xf32>
    %413 = tpu.matmul %411, %412, %cst_264 {dimension_numbers = #tpu.dot_dimension_numbers<[1], [0], [0], [1], [0, 0, 1, 1], [], []>} : vector<8x4xbf16>, vector<4x256xbf16>, vector<8x256xf32> -> vector<8x256xf32>
    %414 = arith.addf %405, %413 : vector<8x256xf32>
    %c4_265 = arith.constant 4 : index
    %c0_266 = arith.constant 0 : index
    %c0_267 = arith.constant 0 : index
    %415 = vector.load %arg17[%c4_265, %c0_266, %c0_267] : memref<9x256x256xbf16, #tpu.memory_space<vmem>>, vector<1x256x256xbf16>
    %416 = vector.shape_cast %415 : vector<1x256x256xbf16> to vector<256x256xbf16>
    %417 = arith.truncf %378 : vector<4x256xf32> to vector<4x256xbf16>
    %cst_268 = arith.constant dense<0.000000e+00> : vector<4x256xf32>
    %418 = tpu.matmul %417, %416, %cst_268 {dimension_numbers = #tpu.dot_dimension_numbers<[1], [0], [0], [1], [0, 0, 1, 1], [], []>} : vector<4x256xbf16>, vector<256x256xbf16>, vector<4x256xf32> -> vector<4x256xf32>
    %c4_269 = arith.constant 4 : index
    %c0_270 = arith.constant 0 : index
    %c0_271 = arith.constant 0 : index
    %419 = vector.load %arg21[%c4_269, %c0_270, %c0_271] : memref<9x8x4xbf16, #tpu.memory_space<vmem>>, vector<1x8x4xbf16>
    %420 = vector.shape_cast %419 : vector<1x8x4xbf16> to vector<8x4xbf16>
    %421 = arith.truncf %418 : vector<4x256xf32> to vector<4x256xbf16>
    %cst_272 = arith.constant dense<0.000000e+00> : vector<8x256xf32>
    %422 = tpu.matmul %420, %421, %cst_272 {dimension_numbers = #tpu.dot_dimension_numbers<[1], [0], [0], [1], [0, 0, 1, 1], [], []>} : vector<8x4xbf16>, vector<4x256xbf16>, vector<8x256xf32> -> vector<8x256xf32>
    %423 = arith.addf %414, %422 : vector<8x256xf32>
    %c5_273 = arith.constant 5 : index
    %c0_274 = arith.constant 0 : index
    %c0_275 = arith.constant 0 : index
    %424 = vector.load %arg17[%c5_273, %c0_274, %c0_275] : memref<9x256x256xbf16, #tpu.memory_space<vmem>>, vector<1x256x256xbf16>
    %425 = vector.shape_cast %424 : vector<1x256x256xbf16> to vector<256x256xbf16>
    %426 = arith.truncf %378 : vector<4x256xf32> to vector<4x256xbf16>
    %cst_276 = arith.constant dense<0.000000e+00> : vector<4x256xf32>
    %427 = tpu.matmul %426, %425, %cst_276 {dimension_numbers = #tpu.dot_dimension_numbers<[1], [0], [0], [1], [0, 0, 1, 1], [], []>} : vector<4x256xbf16>, vector<256x256xbf16>, vector<4x256xf32> -> vector<4x256xf32>
    %c5_277 = arith.constant 5 : index
    %c0_278 = arith.constant 0 : index
    %c0_279 = arith.constant 0 : index
    %428 = vector.load %arg21[%c5_277, %c0_278, %c0_279] : memref<9x8x4xbf16, #tpu.memory_space<vmem>>, vector<1x8x4xbf16>
    %429 = vector.shape_cast %428 : vector<1x8x4xbf16> to vector<8x4xbf16>
    %430 = arith.truncf %427 : vector<4x256xf32> to vector<4x256xbf16>
    %cst_280 = arith.constant dense<0.000000e+00> : vector<8x256xf32>
    %431 = tpu.matmul %429, %430, %cst_280 {dimension_numbers = #tpu.dot_dimension_numbers<[1], [0], [0], [1], [0, 0, 1, 1], [], []>} : vector<8x4xbf16>, vector<4x256xbf16>, vector<8x256xf32> -> vector<8x256xf32>
    %432 = arith.addf %423, %431 : vector<8x256xf32>
    %c6_281 = arith.constant 6 : index
    %c0_282 = arith.constant 0 : index
    %c0_283 = arith.constant 0 : index
    %433 = vector.load %arg17[%c6_281, %c0_282, %c0_283] : memref<9x256x256xbf16, #tpu.memory_space<vmem>>, vector<1x256x256xbf16>
    %434 = vector.shape_cast %433 : vector<1x256x256xbf16> to vector<256x256xbf16>
    %435 = arith.truncf %378 : vector<4x256xf32> to vector<4x256xbf16>
    %cst_284 = arith.constant dense<0.000000e+00> : vector<4x256xf32>
    %436 = tpu.matmul %435, %434, %cst_284 {dimension_numbers = #tpu.dot_dimension_numbers<[1], [0], [0], [1], [0, 0, 1, 1], [], []>} : vector<4x256xbf16>, vector<256x256xbf16>, vector<4x256xf32> -> vector<4x256xf32>
    %c6_285 = arith.constant 6 : index
    %c0_286 = arith.constant 0 : index
    %c0_287 = arith.constant 0 : index
    %437 = vector.load %arg21[%c6_285, %c0_286, %c0_287] : memref<9x8x4xbf16, #tpu.memory_space<vmem>>, vector<1x8x4xbf16>
    %438 = vector.shape_cast %437 : vector<1x8x4xbf16> to vector<8x4xbf16>
    %439 = arith.truncf %436 : vector<4x256xf32> to vector<4x256xbf16>
    %cst_288 = arith.constant dense<0.000000e+00> : vector<8x256xf32>
    %440 = tpu.matmul %438, %439, %cst_288 {dimension_numbers = #tpu.dot_dimension_numbers<[1], [0], [0], [1], [0, 0, 1, 1], [], []>} : vector<8x4xbf16>, vector<4x256xbf16>, vector<8x256xf32> -> vector<8x256xf32>
    %441 = arith.addf %432, %440 : vector<8x256xf32>
    %c7_289 = arith.constant 7 : index
    %c0_290 = arith.constant 0 : index
    %c0_291 = arith.constant 0 : index
    %442 = vector.load %arg17[%c7_289, %c0_290, %c0_291] : memref<9x256x256xbf16, #tpu.memory_space<vmem>>, vector<1x256x256xbf16>
    %443 = vector.shape_cast %442 : vector<1x256x256xbf16> to vector<256x256xbf16>
    %444 = arith.truncf %378 : vector<4x256xf32> to vector<4x256xbf16>
    %cst_292 = arith.constant dense<0.000000e+00> : vector<4x256xf32>
    %445 = tpu.matmul %444, %443, %cst_292 {dimension_numbers = #tpu.dot_dimension_numbers<[1], [0], [0], [1], [0, 0, 1, 1], [], []>} : vector<4x256xbf16>, vector<256x256xbf16>, vector<4x256xf32> -> vector<4x256xf32>
    %c7_293 = arith.constant 7 : index
    %c0_294 = arith.constant 0 : index
    %c0_295 = arith.constant 0 : index
    %446 = vector.load %arg21[%c7_293, %c0_294, %c0_295] : memref<9x8x4xbf16, #tpu.memory_space<vmem>>, vector<1x8x4xbf16>
    %447 = vector.shape_cast %446 : vector<1x8x4xbf16> to vector<8x4xbf16>
    %448 = arith.truncf %445 : vector<4x256xf32> to vector<4x256xbf16>
    %cst_296 = arith.constant dense<0.000000e+00> : vector<8x256xf32>
    %449 = tpu.matmul %447, %448, %cst_296 {dimension_numbers = #tpu.dot_dimension_numbers<[1], [0], [0], [1], [0, 0, 1, 1], [], []>} : vector<8x4xbf16>, vector<4x256xbf16>, vector<8x256xf32> -> vector<8x256xf32>
    %450 = arith.addf %441, %449 : vector<8x256xf32>
    %c8_297 = arith.constant 8 : index
    %c0_298 = arith.constant 0 : index
    %c0_299 = arith.constant 0 : index
    %451 = vector.load %arg17[%c8_297, %c0_298, %c0_299] : memref<9x256x256xbf16, #tpu.memory_space<vmem>>, vector<1x256x256xbf16>
    %452 = vector.shape_cast %451 : vector<1x256x256xbf16> to vector<256x256xbf16>
    %453 = arith.truncf %378 : vector<4x256xf32> to vector<4x256xbf16>
    %cst_300 = arith.constant dense<0.000000e+00> : vector<4x256xf32>
    %454 = tpu.matmul %453, %452, %cst_300 {dimension_numbers = #tpu.dot_dimension_numbers<[1], [0], [0], [1], [0, 0, 1, 1], [], []>} : vector<4x256xbf16>, vector<256x256xbf16>, vector<4x256xf32> -> vector<4x256xf32>
    %c8_301 = arith.constant 8 : index
    %c0_302 = arith.constant 0 : index
    %c0_303 = arith.constant 0 : index
    %455 = vector.load %arg21[%c8_301, %c0_302, %c0_303] : memref<9x8x4xbf16, #tpu.memory_space<vmem>>, vector<1x8x4xbf16>
    %456 = vector.shape_cast %455 : vector<1x8x4xbf16> to vector<8x4xbf16>
    %457 = arith.truncf %454 : vector<4x256xf32> to vector<4x256xbf16>
    %cst_304 = arith.constant dense<0.000000e+00> : vector<8x256xf32>
    %458 = tpu.matmul %456, %457, %cst_304 {dimension_numbers = #tpu.dot_dimension_numbers<[1], [0], [0], [1], [0, 0, 1, 1], [], []>} : vector<8x4xbf16>, vector<4x256xbf16>, vector<8x256xf32> -> vector<8x256xf32>
    %459 = arith.addf %450, %458 : vector<8x256xf32>
    %c0_305 = arith.constant 0 : index
    %c0_306 = arith.constant 0 : index
    %460 = vector.load %arg22[%c0_305, %c0_306] : memref<8x1xf32, #tpu.memory_space<vmem>>, vector<8x1xf32>
    %461 = vector.broadcast %460 : vector<8x1xf32> to vector<8x256xf32>
    %462 = arith.addf %459, %461 : vector<8x256xf32>
    %cst_307 = arith.constant 5.000000e-01 : f32
    %463 = vector.broadcast %cst_307 : f32 to vector<8x256xf32>
    %464 = arith.mulf %463, %462 : vector<8x256xf32>
    %cst_308 = arith.constant 4.471500e-02 : f32
    %465 = vector.broadcast %cst_308 : f32 to vector<8x256xf32>
    %466 = arith.mulf %465, %462 : vector<8x256xf32>
    %467 = arith.mulf %466, %462 : vector<8x256xf32>
    %468 = arith.mulf %467, %462 : vector<8x256xf32>
    %469 = arith.addf %462, %468 : vector<8x256xf32>
    %cst_309 = arith.constant 0.797884583 : f32
    %470 = vector.broadcast %cst_309 : f32 to vector<8x256xf32>
    %471 = arith.mulf %470, %469 : vector<8x256xf32>
    %472 = math.tanh %471 : vector<8x256xf32>
    %cst_310 = arith.constant 1.000000e+00 : f32
    %473 = vector.broadcast %cst_310 : f32 to vector<8x256xf32>
    %474 = arith.addf %473, %472 : vector<8x256xf32>
    %475 = arith.mulf %464, %474 : vector<8x256xf32>
    %c0_311 = arith.constant 0 : index
    %c0_312 = arith.constant 0 : index
    %476 = vector.load %arg23[%c0_311, %c0_312] : memref<1x256xf32, #tpu.memory_space<vmem>>, vector<1x256xf32>
    %c0_313 = arith.constant 0 : index
    %c0_314 = arith.constant 0 : index
    %477 = vector.load %arg24[%c0_313, %c0_314] : memref<1x256xf32, #tpu.memory_space<vmem>>, vector<1x256xf32>
    %c0_315 = arith.constant 0 : index
    %c0_316 = arith.constant 0 : index
    %478 = vector.load %arg25[%c0_315, %c0_316] : memref<2x48xbf16, #tpu.memory_space<vmem>>, vector<2x48xbf16>
    %cst_317 = arith.constant dense<0.000000e+00> : vector<48xf32>
    %479 = vector.multi_reduction <add>, %234, %cst_317 [1] : vector<48x256xf32> to vector<48xf32>
    %480 = vector.shape_cast %479 : vector<48xf32> to vector<48x1xf32>
    %cst_318 = arith.constant 2.560000e+02 : f32
    %481 = vector.broadcast %cst_318 : f32 to vector<48x1xf32>
    %482 = arith.divf %480, %481 : vector<48x1xf32>
    %483 = vector.broadcast %482 : vector<48x1xf32> to vector<48x256xf32>
    %484 = arith.subf %234, %483 : vector<48x256xf32>
    %485 = arith.mulf %484, %484 : vector<48x256xf32>
    %cst_319 = arith.constant dense<0.000000e+00> : vector<48xf32>
    %486 = vector.multi_reduction <add>, %485, %cst_319 [1] : vector<48x256xf32> to vector<48xf32>
    %487 = vector.shape_cast %486 : vector<48xf32> to vector<48x1xf32>
    %cst_320 = arith.constant 2.560000e+02 : f32
    %488 = vector.broadcast %cst_320 : f32 to vector<48x1xf32>
    %489 = arith.divf %487, %488 : vector<48x1xf32>
    %490 = vector.broadcast %482 : vector<48x1xf32> to vector<48x256xf32>
    %491 = arith.subf %234, %490 : vector<48x256xf32>
    %cst_321 = arith.constant 9.99999974E-6 : f32
    %492 = vector.broadcast %cst_321 : f32 to vector<48x1xf32>
    %493 = arith.addf %489, %492 : vector<48x1xf32>
    %494 = math.rsqrt %493 : vector<48x1xf32>
    %495 = vector.broadcast %494 : vector<48x1xf32> to vector<48x256xf32>
    %496 = arith.mulf %491, %495 : vector<48x256xf32>
    %497 = vector.broadcast %476 : vector<1x256xf32> to vector<48x256xf32>
    %498 = arith.mulf %496, %497 : vector<48x256xf32>
    %499 = vector.broadcast %477 : vector<1x256xf32> to vector<48x256xf32>
    %500 = arith.addf %498, %499 : vector<48x256xf32>
    %501 = arith.truncf %500 : vector<48x256xf32> to vector<48x256xbf16>
    %cst_322 = arith.constant dense<0.000000e+00> : vector<2x256xf32>
    %502 = tpu.matmul %478, %501, %cst_322 {dimension_numbers = #tpu.dot_dimension_numbers<[1], [0], [0], [1], [0, 0, 1, 1], [], []>} : vector<2x48xbf16>, vector<48x256xbf16>, vector<2x256xf32> -> vector<2x256xf32>
    %c0_323 = arith.constant 0 : index
    %c0_324 = arith.constant 0 : index
    %503 = vector.load %arg26[%c0_323, %c0_324] : memref<2x4xbf16, #tpu.memory_space<vmem>>, vector<2x4xbf16>
    %cst_325 = arith.constant dense<0.000000e+00> : vector<4xf32>
    %504 = vector.multi_reduction <add>, %378, %cst_325 [1] : vector<4x256xf32> to vector<4xf32>
    %505 = vector.shape_cast %504 : vector<4xf32> to vector<4x1xf32>
    %cst_326 = arith.constant 2.560000e+02 : f32
    %506 = vector.broadcast %cst_326 : f32 to vector<4x1xf32>
    %507 = arith.divf %505, %506 : vector<4x1xf32>
    %508 = vector.broadcast %507 : vector<4x1xf32> to vector<4x256xf32>
    %509 = arith.subf %378, %508 : vector<4x256xf32>
    %510 = arith.mulf %509, %509 : vector<4x256xf32>
    %cst_327 = arith.constant dense<0.000000e+00> : vector<4xf32>
    %511 = vector.multi_reduction <add>, %510, %cst_327 [1] : vector<4x256xf32> to vector<4xf32>
    %512 = vector.shape_cast %511 : vector<4xf32> to vector<4x1xf32>
    %cst_328 = arith.constant 2.560000e+02 : f32
    %513 = vector.broadcast %cst_328 : f32 to vector<4x1xf32>
    %514 = arith.divf %512, %513 : vector<4x1xf32>
    %515 = vector.broadcast %507 : vector<4x1xf32> to vector<4x256xf32>
    %516 = arith.subf %378, %515 : vector<4x256xf32>
    %cst_329 = arith.constant 9.99999974E-6 : f32
    %517 = vector.broadcast %cst_329 : f32 to vector<4x1xf32>
    %518 = arith.addf %514, %517 : vector<4x1xf32>
    %519 = math.rsqrt %518 : vector<4x1xf32>
    %520 = vector.broadcast %519 : vector<4x1xf32> to vector<4x256xf32>
    %521 = arith.mulf %516, %520 : vector<4x256xf32>
    %522 = vector.broadcast %476 : vector<1x256xf32> to vector<4x256xf32>
    %523 = arith.mulf %521, %522 : vector<4x256xf32>
    %524 = vector.broadcast %477 : vector<1x256xf32> to vector<4x256xf32>
    %525 = arith.addf %523, %524 : vector<4x256xf32>
    %526 = arith.truncf %525 : vector<4x256xf32> to vector<4x256xbf16>
    %cst_330 = arith.constant dense<0.000000e+00> : vector<2x256xf32>
    %527 = tpu.matmul %503, %526, %cst_330 {dimension_numbers = #tpu.dot_dimension_numbers<[1], [0], [0], [1], [0, 0, 1, 1], [], []>} : vector<2x4xbf16>, vector<4x256xbf16>, vector<2x256xf32> -> vector<2x256xf32>
    %528 = arith.addf %502, %527 : vector<2x256xf32>
    %c0_331 = arith.constant 0 : index
    %c0_332 = arith.constant 0 : index
    %529 = vector.load %arg27[%c0_331, %c0_332] : memref<2x8xbf16, #tpu.memory_space<vmem>>, vector<2x8xbf16>
    %cst_333 = arith.constant dense<0.000000e+00> : vector<8xf32>
    %530 = vector.multi_reduction <add>, %475, %cst_333 [1] : vector<8x256xf32> to vector<8xf32>
    %531 = vector.shape_cast %530 : vector<8xf32> to vector<8x1xf32>
    %cst_334 = arith.constant 2.560000e+02 : f32
    %532 = vector.broadcast %cst_334 : f32 to vector<8x1xf32>
    %533 = arith.divf %531, %532 : vector<8x1xf32>
    %534 = vector.broadcast %533 : vector<8x1xf32> to vector<8x256xf32>
    %535 = arith.subf %475, %534 : vector<8x256xf32>
    %536 = arith.mulf %535, %535 : vector<8x256xf32>
    %cst_335 = arith.constant dense<0.000000e+00> : vector<8xf32>
    %537 = vector.multi_reduction <add>, %536, %cst_335 [1] : vector<8x256xf32> to vector<8xf32>
    %538 = vector.shape_cast %537 : vector<8xf32> to vector<8x1xf32>
    %cst_336 = arith.constant 2.560000e+02 : f32
    %539 = vector.broadcast %cst_336 : f32 to vector<8x1xf32>
    %540 = arith.divf %538, %539 : vector<8x1xf32>
    %541 = vector.broadcast %533 : vector<8x1xf32> to vector<8x256xf32>
    %542 = arith.subf %475, %541 : vector<8x256xf32>
    %cst_337 = arith.constant 9.99999974E-6 : f32
    %543 = vector.broadcast %cst_337 : f32 to vector<8x1xf32>
    %544 = arith.addf %540, %543 : vector<8x1xf32>
    %545 = math.rsqrt %544 : vector<8x1xf32>
    %546 = vector.broadcast %545 : vector<8x1xf32> to vector<8x256xf32>
    %547 = arith.mulf %542, %546 : vector<8x256xf32>
    %548 = vector.broadcast %476 : vector<1x256xf32> to vector<8x256xf32>
    %549 = arith.mulf %547, %548 : vector<8x256xf32>
    %550 = vector.broadcast %477 : vector<1x256xf32> to vector<8x256xf32>
    %551 = arith.addf %549, %550 : vector<8x256xf32>
    %552 = arith.truncf %551 : vector<8x256xf32> to vector<8x256xbf16>
    %cst_338 = arith.constant dense<0.000000e+00> : vector<2x256xf32>
    %553 = tpu.matmul %529, %552, %cst_338 {dimension_numbers = #tpu.dot_dimension_numbers<[1], [0], [0], [1], [0, 0, 1, 1], [], []>} : vector<2x8xbf16>, vector<8x256xbf16>, vector<2x256xf32> -> vector<2x256xf32>
    %554 = arith.addf %528, %553 : vector<2x256xf32>
    %c0_339 = arith.constant 0 : index
    %c0_340 = arith.constant 0 : index
    %c0_341 = arith.constant 0 : index
    %555 = vector.load %arg28[%c0_339, %c0_340, %c0_341] : memref<1x2x256xf32, #tpu.memory_space<vmem>>, vector<1x2x256xf32>
    %556 = vector.shape_cast %555 : vector<1x2x256xf32> to vector<2x256xf32>
    %557 = vector.shape_cast %554 : vector<2x256xf32> to vector<1x2x256xf32>
    tpu.vector_store %arg28[%c0_339, %c0_340, %c0_341], %557 {strides = array<i32>} : memref<1x2x256xf32, #tpu.memory_space<vmem>>, vector<1x2x256xf32>,
    return
  }
  func.func @transform_0(%arg0: i32) -> (i32, i32, i32) {
    %c0_i32 = arith.constant 0 : i32
    %c0_i32_0 = arith.constant 0 : i32
    %c0_i32_1 = arith.constant 0 : i32
    return %arg0, %c0_i32, %c0_i32_0 : i32, i32, i32
  }
  func.func @transform_1(%arg0: i32) -> (i32, i32) {
    %c0_i32 = arith.constant 0 : i32
    %c0_i32_0 = arith.constant 0 : i32
    %c0_i32_1 = arith.constant 0 : i32
    return %c0_i32, %c0_i32_0 : i32, i32
  }
  func.func @transform_2(%arg0: i32) -> (i32, i32) {
    %c0_i32 = arith.constant 0 : i32
    %c0_i32_0 = arith.constant 0 : i32
    %c0_i32_1 = arith.constant 0 : i32
    return %c0_i32, %c0_i32_0 : i32, i32
  }
  func.func @transform_3(%arg0: i32) -> (i32, i32, i32) {
    %c0_i32 = arith.constant 0 : i32
    %c0_i32_0 = arith.constant 0 : i32
    %c0_i32_1 = arith.constant 0 : i32
    %c0_i32_2 = arith.constant 0 : i32
    return %c0_i32, %c0_i32_0, %c0_i32_1 : i32, i32, i32
  }
  func.func @transform_4(%arg0: i32) -> (i32, i32, i32) {
    %c0_i32 = arith.constant 0 : i32
    %c0_i32_0 = arith.constant 0 : i32
    %c0_i32_1 = arith.constant 0 : i32
    %c0_i32_2 = arith.constant 0 : i32
    return %c0_i32, %c0_i32_0, %c0_i32_1 : i32, i32, i32
  }
  func.func @transform_5(%arg0: i32) -> (i32, i32, i32) {
    %c0_i32 = arith.constant 0 : i32
    %c0_i32_0 = arith.constant 0 : i32
    %c0_i32_1 = arith.constant 0 : i32
    %c0_i32_2 = arith.constant 0 : i32
    return %c0_i32, %c0_i32_0, %c0_i32_1 : i32, i32, i32
  }
  func.func @transform_6(%arg0: i32) -> (i32, i32, i32) {
    %c0_i32 = arith.constant 0 : i32
    %c0_i32_0 = arith.constant 0 : i32
    %c0_i32_1 = arith.constant 0 : i32
    %c0_i32_2 = arith.constant 0 : i32
    return %c0_i32, %c0_i32_0, %c0_i32_1 : i32, i32, i32
  }
  func.func @transform_7(%arg0: i32) -> (i32, i32, i32) {
    %c0_i32 = arith.constant 0 : i32
    %c0_i32_0 = arith.constant 0 : i32
    %c0_i32_1 = arith.constant 0 : i32
    %c0_i32_2 = arith.constant 0 : i32
    return %c0_i32, %c0_i32_0, %c0_i32_1 : i32, i32, i32
  }
  func.func @transform_8(%arg0: i32) -> (i32, i32, i32) {
    %c0_i32 = arith.constant 0 : i32
    %c0_i32_0 = arith.constant 0 : i32
    %c0_i32_1 = arith.constant 0 : i32
    %c0_i32_2 = arith.constant 0 : i32
    return %c0_i32, %c0_i32_0, %c0_i32_1 : i32, i32, i32
  }
  func.func @transform_9(%arg0: i32) -> (i32, i32, i32) {
    %c0_i32 = arith.constant 0 : i32
    %c0_i32_0 = arith.constant 0 : i32
    %c0_i32_1 = arith.constant 0 : i32
    %c0_i32_2 = arith.constant 0 : i32
    return %c0_i32, %c0_i32_0, %c0_i32_1 : i32, i32, i32
  }
  func.func @transform_10(%arg0: i32) -> (i32, i32, i32) {
    %c0_i32 = arith.constant 0 : i32
    %c0_i32_0 = arith.constant 0 : i32
    %c0_i32_1 = arith.constant 0 : i32
    %c0_i32_2 = arith.constant 0 : i32
    return %c0_i32, %c0_i32_0, %c0_i32_1 : i32, i32, i32
  }
  func.func @transform_11(%arg0: i32) -> (i32, i32, i32) {
    %c0_i32 = arith.constant 0 : i32
    %c0_i32_0 = arith.constant 0 : i32
    %c0_i32_1 = arith.constant 0 : i32
    %c0_i32_2 = arith.constant 0 : i32
    return %c0_i32, %c0_i32_0, %c0_i32_1 : i32, i32, i32
  }
  func.func @transform_12(%arg0: i32) -> (i32, i32, i32) {
    %c0_i32 = arith.constant 0 : i32
    %c0_i32_0 = arith.constant 0 : i32
    %c0_i32_1 = arith.constant 0 : i32
    %c0_i32_2 = arith.constant 0 : i32
    return %c0_i32, %c0_i32_0, %c0_i32_1 : i32, i32, i32
  }
  func.func @transform_13(%arg0: i32) -> (i32, i32, i32) {
    %c0_i32 = arith.constant 0 : i32
    %c0_i32_0 = arith.constant 0 : i32
    %c0_i32_1 = arith.constant 0 : i32
    %c0_i32_2 = arith.constant 0 : i32
    return %c0_i32, %c0_i32_0, %c0_i32_1 : i32, i32, i32
  }
  func.func @transform_14(%arg0: i32) -> (i32, i32, i32) {
    %c0_i32 = arith.constant 0 : i32
    %c0_i32_0 = arith.constant 0 : i32
    %c0_i32_1 = arith.constant 0 : i32
    %c0_i32_2 = arith.constant 0 : i32
    return %c0_i32, %c0_i32_0, %c0_i32_1 : i32, i32, i32
  }
  func.func @transform_15(%arg0: i32) -> (i32, i32) {
    %c0_i32 = arith.constant 0 : i32
    %c0_i32_0 = arith.constant 0 : i32
    %c0_i32_1 = arith.constant 0 : i32
    return %c0_i32, %c0_i32_0 : i32, i32
  }
  func.func @transform_16(%arg0: i32) -> (i32, i32, i32) {
    %c0_i32 = arith.constant 0 : i32
    %c0_i32_0 = arith.constant 0 : i32
    %c0_i32_1 = arith.constant 0 : i32
    %c0_i32_2 = arith.constant 0 : i32
    return %c0_i32, %c0_i32_0, %c0_i32_1 : i32, i32, i32
  }
  func.func @transform_17(%arg0: i32) -> (i32, i32, i32) {
    %c0_i32 = arith.constant 0 : i32
    %c0_i32_0 = arith.constant 0 : i32
    %c0_i32_1 = arith.constant 0 : i32
    %c0_i32_2 = arith.constant 0 : i32
    return %c0_i32, %c0_i32_0, %c0_i32_1 : i32, i32, i32
  }
  func.func @transform_18(%arg0: i32) -> (i32, i32) {
    %c0_i32 = arith.constant 0 : i32
    %c0_i32_0 = arith.constant 0 : i32
    %c0_i32_1 = arith.constant 0 : i32
    return %c0_i32, %c0_i32_0 : i32, i32
  }
  func.func @transform_19(%arg0: i32) -> (i32, i32, i32) {
    %c0_i32 = arith.constant 0 : i32
    %c0_i32_0 = arith.constant 0 : i32
    %c0_i32_1 = arith.constant 0 : i32
    %c0_i32_2 = arith.constant 0 : i32
    return %c0_i32, %c0_i32_0, %c0_i32_1 : i32, i32, i32
  }
  func.func @transform_20(%arg0: i32) -> (i32, i32, i32) {
    %c0_i32 = arith.constant 0 : i32
    %c0_i32_0 = arith.constant 0 : i32
    %c0_i32_1 = arith.constant 0 : i32
    %c0_i32_2 = arith.constant 0 : i32
    return %c0_i32, %c0_i32_0, %c0_i32_1 : i32, i32, i32
  }
  func.func @transform_21(%arg0: i32) -> (i32, i32) {
    %c0_i32 = arith.constant 0 : i32
    %c0_i32_0 = arith.constant 0 : i32
    %c0_i32_1 = arith.constant 0 : i32
    return %c0_i32, %c0_i32_0 : i32, i32
  }
  func.func @transform_22(%arg0: i32) -> (i32, i32) {
    %c0_i32 = arith.constant 0 : i32
    %c0_i32_0 = arith.constant 0 : i32
    %c0_i32_1 = arith.constant 0 : i32
    return %c0_i32, %c0_i32_0 : i32, i32
  }
  func.func @transform_23(%arg0: i32) -> (i32, i32) {
    %c0_i32 = arith.constant 0 : i32
    %c0_i32_0 = arith.constant 0 : i32
    %c0_i32_1 = arith.constant 0 : i32
    return %c0_i32, %c0_i32_0 : i32, i32
  }
  func.func @transform_24(%arg0: i32) -> (i32, i32) {
    %c0_i32 = arith.constant 0 : i32
    %c0_i32_0 = arith.constant 0 : i32
    %c0_i32_1 = arith.constant 0 : i32
    return %c0_i32, %c0_i32_0 : i32, i32
  }
  func.func @transform_25(%arg0: i32) -> (i32, i32) {
    %c0_i32 = arith.constant 0 : i32
    %c0_i32_0 = arith.constant 0 : i32
    %c0_i32_1 = arith.constant 0 : i32
    return %c0_i32, %c0_i32_0 : i32, i32
  }
  func.func @transform_26(%arg0: i32) -> (i32, i32) {
    %c0_i32 = arith.constant 0 : i32
    %c0_i32_0 = arith.constant 0 : i32
    %c0_i32_1 = arith.constant 0 : i32
    return %c0_i32, %c0_i32_0 : i32, i32
  }
  func.func @transform_27(%arg0: i32) -> (i32, i32, i32) {
    %c0_i32 = arith.constant 0 : i32
    %c0_i32_0 = arith.constant 0 : i32
    %c0_i32_1 = arith.constant 0 : i32
    return %arg0, %c0_i32, %c0_i32_0 : i32, i32, i32
  }
}

</mosaic_0001>

<llo_original>
// kernel: _lambda_.1
$region0: #{_lambda_.1}
  #allocation0 [shape = 'u32[]', space=smem, size = 0x4, offset = 0x4, fixed_abs, tag = 'smem constant byte address 0x4 - core index']
  #allocation1 [shape = 'u32[144,128]{1,0:T(1,128)}', space=vmem, size = 0x12000, scoped, tag = 'internal scratch']
  %s0 = inlined_call_operand.vmem [shape: f32[2,48,16], index: 0, kind: input, shape index: {}]
  %s1 = inlined_call_operand.vmem [shape: bf16[16,16], index: 1, kind: input, shape index: {}]
  %s2 = inlined_call_operand.vmem [shape: f32[1,16], index: 2, kind: input, shape index: {}]
  %s3 = inlined_call_operand.vmem [shape: f32[2,1,16], index: 3, kind: input, shape index: {}]
  %s4 = inlined_call_operand.vmem [shape: f32[2,1,16], index: 4, kind: input, shape index: {}]
  %s5 = inlined_call_operand.vmem [shape: bf16[2,144,48], index: 5, kind: input, shape index: {}]
  %s6 = inlined_call_operand.vmem [shape: f32[2,144,1], index: 6, kind: input, shape index: {}]
  %s7 = inlined_call_operand.vmem [shape: bf16[2,48,144], index: 7, kind: input, shape index: {}]
  %s8 = inlined_call_operand.vmem [shape: f32[2,48,1], index: 8, kind: input, shape index: {}]
  %s9 = inlined_call_operand.vmem [shape: f32[2,1,16], index: 9, kind: input, shape index: {}]
  %s10 = inlined_call_operand.vmem [shape: f32[2,1,16], index: 10, kind: input, shape index: {}]
  %s11 = inlined_call_operand.vmem [shape: bf16[2,16,48], index: 11, kind: input, shape index: {}]
  %s12 = inlined_call_operand.vmem [shape: f32[2,1,48], index: 12, kind: input, shape index: {}]
  %s13 = inlined_call_operand.vmem [shape: bf16[2,48,16], index: 13, kind: input, shape index: {}]
  %s14 = inlined_call_operand.vmem [shape: f32[2,1,16], index: 14, kind: input, shape index: {}]
  %s15 = inlined_call_operand.vmem [shape: bf16[16,256], index: 15, kind: input, shape index: {}]
  %s16 = inlined_call_operand.vmem [shape: bf16[9,256,256], index: 16, kind: input, shape index: {}]
  %s17 = inlined_call_operand.vmem [shape: bf16[9,4,48], index: 17, kind: input, shape index: {}]
  %s18 = inlined_call_operand.vmem [shape: f32[4,1], index: 18, kind: input, shape index: {}]
  %s19 = inlined_call_operand.vmem [shape: bf16[9,8,48], index: 19, kind: input, shape index: {}]
  %s20 = inlined_call_operand.vmem [shape: bf16[9,8,4], index: 20, kind: input, shape index: {}]
  %s21 = inlined_call_operand.vmem [shape: f32[8,1], index: 21, kind: input, shape index: {}]
  %s22 = inlined_call_operand.vmem [shape: f32[1,256], index: 22, kind: input, shape index: {}]
  %s23 = inlined_call_operand.vmem [shape: f32[1,256], index: 23, kind: input, shape index: {}]
  %s24 = inlined_call_operand.vmem [shape: bf16[2,48], index: 24, kind: input, shape index: {}]
  %s25 = inlined_call_operand.vmem [shape: bf16[2,4], index: 25, kind: input, shape index: {}]
  %s26 = inlined_call_operand.vmem [shape: bf16[2,8], index: 26, kind: input, shape index: {}]
  %s27 = inlined_call_operand.vmem [shape: f32[2,2,256], index: 27, kind: output, shape index: {}]
  %s28 = sld [smem:[#allocation0]]
  $region141: #{_lambda_.1} parent=0
    _
  %s30 = ssub.s32 1, %s28
  %s31 = scalar_select 0, %s30, %s28
  loop: start=0, step=1, limit=4
  $region2: #{_lambda_.1} parent=0 // loop_pre_header
    _
  $region3: #{_lambda_.1} parent=0 // loop_header
    %s33 = sphi 0, %s37
    %p34 = scmp.ge.s32.totalorder %s33, 4
    %s43 = sphi 0, %s45
    %s46 = sphi 0, %s43
    %s47 = sphi 0, %s46
    %s63 = sphi 0, %s47
    %s67 = sphi 0, %s67
    %s69 = sphi 0, %s67
    %s70 = sphi 0, %s69
    %s84 = sphi 0, %s70
    %s88 = sphi 0, %s88
    %s90 = sphi 0, %s88
    %s91 = sphi 0, %s90
    %s105 = sphi 0, %s91
    %s109 = sphi 0, %s109
    %s111 = sphi 0, %s109
    %s112 = sphi 0, %s111
    %s126 = sphi 0, %s112
    %s130 = sphi 0, %s130
    %s132 = sphi 0, %s130
    %s133 = sphi 0, %s132
    %s147 = sphi 0, %s133
    %s151 = sphi 0, %s151
    %s153 = sphi 0, %s151
    %s154 = sphi 0, %s153
    %s168 = sphi 0, %s154
    %s172 = sphi 0, %s172
    %s174 = sphi 0, %s172
    %s175 = sphi 0, %s174
    %s189 = sphi 0, %s175
    %s193 = sphi 0, %s193
    %s195 = sphi 0, %s193
    %s196 = sphi 0, %s195
    %s210 = sphi 0, %s196
    %s214 = sphi 0, %s214
    %s216 = sphi 0, %s214
    %s217 = sphi 0, %s216
    %s231 = sphi 0, %s217
    %s235 = sphi 0, %s235
    %s237 = sphi 0, %s235
    %s238 = sphi 0, %s237
    %s252 = sphi 0, %s238
    %s256 = sphi 0, %s256
    %s258 = sphi 0, %s256
    %s259 = sphi 0, %s258
    %s273 = sphi 0, %s259
    %s277 = sphi 0, %s277
    %s279 = sphi 0, %s277
    %s280 = sphi 0, %s279
    %s294 = sphi 0, %s280
    %s298 = sphi 0, %s298
    %s300 = sphi 0, %s298
    %s301 = sphi 0, %s300
    %s315 = sphi 0, %s301
    %s319 = sphi 0, %s319
    %s321 = sphi 0, %s319
    %s322 = sphi 0, %s321
    %s336 = sphi 0, %s322
    %s340 = sphi 0, %s340
    %s342 = sphi 0, %s340
    %s343 = sphi 0, %s342
    %s357 = sphi 0, %s343
    %s361 = sphi 0, %s361
    %s363 = sphi 0, %s361
    %s364 = sphi 0, %s363
    %s378 = sphi 0, %s364
    %s382 = sphi 0, %s382
    %s384 = sphi 0, %s382
    %s385 = sphi 0, %s384
    %s399 = sphi 0, %s385
    %s403 = sphi 0, %s403
    %s405 = sphi 0, %s403
    %s406 = sphi 0, %s405
    %s420 = sphi 0, %s406
    %s424 = sphi 0, %s424
    %s426 = sphi 0, %s424
    %s427 = sphi 0, %s426
    %s441 = sphi 0, %s427
    %s445 = sphi 0, %s445
    %s447 = sphi 0, %s445
    %s448 = sphi 0, %s447
    %s462 = sphi 0, %s448
    %s466 = sphi 0, %s466
    %s468 = sphi 0, %s466
    %s469 = sphi 0, %s468
    %s483 = sphi 0, %s469
    %s487 = sphi 0, %s487
    %s489 = sphi 0, %s487
    %s490 = sphi 0, %s489
    %s504 = sphi 0, %s490
    %s508 = sphi 0, %s508
    %s510 = sphi 0, %s508
    %s511 = sphi 0, %s510
    %s525 = sphi 0, %s511
    %s529 = sphi 0, %s529
    %s531 = sphi 0, %s529
    %s532 = sphi 0, %s531
    %s546 = sphi 0, %s532
    %s550 = sphi 0, %s550
    %s552 = sphi 0, %s550
    %s553 = sphi 0, %s552
    %s567 = sphi 0, %s553
    %s571 = sphi 0, %s571
    %s573 = sphi 0, %s571
    %s574 = sphi 0, %s573
    %s588 = sphi 0, %s574
    %s592 = sphi 0, %s592
    %s594 = sphi 0, %s592
    %s595 = sphi 0, %s594
    %s609 = sphi 0, %s595
    %s615 = sphi 0, %s617
    %s618 = sphi 0, %s615
    %s619 = sphi 0, %s618
    %s635 = sphi 0, %s619
  $region4: #{_lambda_.1} parent=0 // loop_header_branch
    %36 = sbr.rel (%p34) target = $region8
  $region5: #{_lambda_.1} parent=0 // loop_body
    %s38 = ssub.s32 %s33, 1
    %s39 = ssub.s32 %s33, 2
    %s40 = sadd.s32 %s33, 1
    %s41 = ssub.s32 %s33, %s40
    %p42 = scmp.eq.s32.totalorder %s41, 0
    %s44 = sadd.s32 %s43, 1
    %s45 = scalar_select %p42, %s43, %s44
    %p48 = pneg %p42
    %p49 = scmp.eq.s32.totalorder %s33, 1
    %p50 = por %p48, %p49
    %p51 = scmp.ne.s32.totalorder %s43, %s46
    %p52 = scmp.eq.s32.totalorder %s33, 0
    %p53 = por %p51, %p52
    %p54 = scmp.ne.s32.totalorder %s43, %s46
    %p55 = scmp.eq.s32.totalorder %s38, 1
    %p56 = por %p54, %p55
    %p57 = scmp.ne.s32.totalorder %s46, %s47
    %p58 = scmp.eq.s32.totalorder %s38, 0
    %p59 = por %p57, %p58
    %p60 = scmp.ne.s32.totalorder %s46, %s47
    %p61 = scmp.eq.s32.totalorder %s39, 1
    %p62 = por %p60, %p61
    %p64 = scmp.ne.s32.totalorder %s47, %s63
    %p65 = scmp.eq.s32.totalorder %s39, 0
    %p66 = por %p64, %p65
    %s68 = sadd.s32 %s67, 1
    %p71 = scmp.eq.s32.totalorder %s33, 1
    %p72 = scmp.ne.s32.totalorder %s67, %s69
    %p73 = scmp.eq.s32.totalorder %s33, 0
    %p74 = por %p72, %p73
    %p75 = scmp.ne.s32.totalorder %s67, %s69
    %p76 = scmp.eq.s32.totalorder %s38, 1
    %p77 = por %p75, %p76
    %p78 = scmp.ne.s32.totalorder %s69, %s70
    %p79 = scmp.eq.s32.totalorder %s38, 0
    %p80 = por %p78, %p79
    %p81 = scmp.ne.s32.totalorder %s69, %s70
    %p82 = scmp.eq.s32.totalorder %s39, 1
    %p83 = por %p81, %p82
    %p85 = scmp.ne.s32.totalorder %s70, %s84
    %p86 = scmp.eq.s32.totalorder %s39, 0
    %p87 = por %p85, %p86
    %s89 = sadd.s32 %s88, 1
    %p92 = scmp.eq.s32.totalorder %s33, 1
    %p93 = scmp.ne.s32.totalorder %s88, %s90
    %p94 = scmp.eq.s32.totalorder %s33, 0
    %p95 = por %p93, %p94
    %p96 = scmp.ne.s32.totalorder %s88, %s90
    %p97 = scmp.eq.s32.totalorder %s38, 1
    %p98 = por %p96, %p97
    %p99 = scmp.ne.s32.totalorder %s90, %s91
    %p100 = scmp.eq.s32.totalorder %s38, 0
    %p101 = por %p99, %p100
    %p102 = scmp.ne.s32.totalorder %s90, %s91
    %p103 = scmp.eq.s32.totalorder %s39, 1
    %p104 = por %p102, %p103
    %p106 = scmp.ne.s32.totalorder %s91, %s105
    %p107 = scmp.eq.s32.totalorder %s39, 0
    %p108 = por %p106, %p107
    %s110 = sadd.s32 %s109, 1
    %p113 = scmp.eq.s32.totalorder %s33, 1
    %p114 = scmp.ne.s32.totalorder %s109, %s111
    %p115 = scmp.eq.s32.totalorder %s33, 0
    %p116 = por %p114, %p115
    %p117 = scmp.ne.s32.totalorder %s109, %s111
    %p118 = scmp.eq.s32.totalorder %s38, 1
    %p119 = por %p117, %p118
    %p120 = scmp.ne.s32.totalorder %s111, %s112
    %p121 = scmp.eq.s32.totalorder %s38, 0
    %p122 = por %p120, %p121
    %p123 = scmp.ne.s32.totalorder %s111, %s112
    %p124 = scmp.eq.s32.totalorder %s39, 1
    %p125 = por %p123, %p124
    %p127 = scmp.ne.s32.totalorder %s112, %s126
    %p128 = scmp.eq.s32.totalorder %s39, 0
    %p129 = por %p127, %p128
    %s131 = sadd.s32 %s130, 1
    %p134 = scmp.eq.s32.totalorder %s33, 1
    %p135 = scmp.ne.s32.totalorder %s130, %s132
    %p136 = scmp.eq.s32.totalorder %s33, 0
    %p137 = por %p135, %p136
    %p138 = scmp.ne.s32.totalorder %s130, %s132
    %p139 = scmp.eq.s32.totalorder %s38, 1
    %p140 = por %p138, %p139
    %p141 = scmp.ne.s32.totalorder %s132, %s133
    %p142 = scmp.eq.s32.totalorder %s38, 0
    %p143 = por %p141, %p142
    %p144 = scmp.ne.s32.totalorder %s132, %s133
    %p145 = scmp.eq.s32.totalorder %s39, 1
    %p146 = por %p144, %p145
    %p148 = scmp.ne.s32.totalorder %s133, %s147
    %p149 = scmp.eq.s32.totalorder %s39, 0
    %p150 = por %p148, %p149
    %s152 = sadd.s32 %s151, 1
    %p155 = scmp.eq.s32.totalorder %s33, 1
    %p156 = scmp.ne.s32.totalorder %s151, %s153
    %p157 = scmp.eq.s32.totalorder %s33, 0
    %p158 = por %p156, %p157
    %p159 = scmp.ne.s32.totalorder %s151, %s153
    %p160 = scmp.eq.s32.totalorder %s38, 1
    %p161 = por %p159, %p160
    %p162 = scmp.ne.s32.totalorder %s153, %s154
    %p163 = scmp.eq.s32.totalorder %s38, 0
    %p164 = por %p162, %p163
    %p165 = scmp.ne.s32.totalorder %s153, %s154
    %p166 = scmp.eq.s32.totalorder %s39, 1
    %p167 = por %p165, %p166
    %p169 = scmp.ne.s32.totalorder %s154, %s168
    %p170 = scmp.eq.s32.totalorder %s39, 0
    %p171 = por %p169, %p170
    %s173 = sadd.s32 %s172, 1
    %p176 = scmp.eq.s32.totalorder %s33, 1
    %p177 = scmp.ne.s32.totalorder %s172, %s174
    %p178 = scmp.eq.s32.totalorder %s33, 0
    %p179 = por %p177, %p178
    %p180 = scmp.ne.s32.totalorder %s172, %s174
    %p181 = scmp.eq.s32.totalorder %s38, 1
    %p182 = por %p180, %p181
    %p183 = scmp.ne.s32.totalorder %s174, %s175
    %p184 = scmp.eq.s32.totalorder %s38, 0
    %p185 = por %p183, %p184
    %p186 = scmp.ne.s32.totalorder %s174, %s175
    %p187 = scmp.eq.s32.totalorder %s39, 1
    %p188 = por %p186, %p187
    %p190 = scmp.ne.s32.totalorder %s175, %s189
    %p191 = scmp.eq.s32.totalorder %s39, 0
    %p192 = por %p190, %p191
    %s194 = sadd.s32 %s193, 1
    %p197 = scmp.eq.s32.totalorder %s33, 1
    %p198 = scmp.ne.s32.totalorder %s193, %s195
    %p199 = scmp.eq.s32.totalorder %s33, 0
    %p200 = por %p198, %p199
    %p201 = scmp.ne.s32.totalorder %s193, %s195
    %p202 = scmp.eq.s32.totalorder %s38, 1
    %p203 = por %p201, %p202
    %p204 = scmp.ne.s32.totalorder %s195, %s196
    %p205 = scmp.eq.s32.totalorder %s38, 0
    %p206 = por %p204, %p205
    %p207 = scmp.ne.s32.totalorder %s195, %s196
    %p208 = scmp.eq.s32.totalorder %s39, 1
    %p209 = por %p207, %p208
    %p211 = scmp.ne.s32.totalorder %s196, %s210
    %p212 = scmp.eq.s32.totalorder %s39, 0
    %p213 = por %p211, %p212
    %s215 = sadd.s32 %s214, 1
    %p218 = scmp.eq.s32.totalorder %s33, 1
    %p219 = scmp.ne.s32.totalorder %s214, %s216
    %p220 = scmp.eq.s32.totalorder %s33, 0
    %p221 = por %p219, %p220
    %p222 = scmp.ne.s32.totalorder %s214, %s216
    %p223 = scmp.eq.s32.totalorder %s38, 1
    %p224 = por %p222, %p223
    %p225 = scmp.ne.s32.totalorder %s216, %s217
    %p226 = scmp.eq.s32.totalorder %s38, 0
    %p227 = por %p225, %p226
    %p228 = scmp.ne.s32.totalorder %s216, %s217
    %p229 = scmp.eq.s32.totalorder %s39, 1
    %p230 = por %p228, %p229
    %p232 = scmp.ne.s32.totalorder %s217, %s231
    %p233 = scmp.eq.s32.totalorder %s39, 0
    %p234 = por %p232, %p233
    %s236 = sadd.s32 %s235, 1
    %p239 = scmp.eq.s32.totalorder %s33, 1
    %p240 = scmp.ne.s32.totalorder %s235, %s237
    %p241 = scmp.eq.s32.totalorder %s33, 0
    %p242 = por %p240, %p241
    %p243 = scmp.ne.s32.totalorder %s235, %s237
    %p244 = scmp.eq.s32.totalorder %s38, 1
    %p245 = por %p243, %p244
    %p246 = scmp.ne.s32.totalorder %s237, %s238
    %p247 = scmp.eq.s32.totalorder %s38, 0
    %p248 = por %p246, %p247
    %p249 = scmp.ne.s32.totalorder %s237, %s238
    %p250 = scmp.eq.s32.totalorder %s39, 1
    %p251 = por %p249, %p250
    %p253 = scmp.ne.s32.totalorder %s238, %s252
    %p254 = scmp.eq.s32.totalorder %s39, 0
    %p255 = por %p253, %p254
    %s257 = sadd.s32 %s256, 1
    %p260 = scmp.eq.s32.totalorder %s33, 1
    %p261 = scmp.ne.s32.totalorder %s256, %s258
    %p262 = scmp.eq.s32.totalorder %s33, 0
    %p263 = por %p261, %p262
    %p264 = scmp.ne.s32.totalorder %s256, %s258
    %p265 = scmp.eq.s32.totalorder %s38, 1
    %p266 = por %p264, %p265
    %p267 = scmp.ne.s32.totalorder %s258, %s259
    %p268 = scmp.eq.s32.totalorder %s38, 0
    %p269 = por %p267, %p268
    %p270 = scmp.ne.s32.totalorder %s258, %s259
    %p271 = scmp.eq.s32.totalorder %s39, 1
    %p272 = por %p270, %p271
    %p274 = scmp.ne.s32.totalorder %s259, %s273
    %p275 = scmp.eq.s32.totalorder %s39, 0
    %p276 = por %p274, %p275
    %s278 = sadd.s32 %s277, 1
    %p281 = scmp.eq.s32.totalorder %s33, 1
    %p282 = scmp.ne.s32.totalorder %s277, %s279
    %p283 = scmp.eq.s32.totalorder %s33, 0
    %p284 = por %p282, %p283
    %p285 = scmp.ne.s32.totalorder %s277, %s279
    %p286 = scmp.eq.s32.totalorder %s38, 1
    %p287 = por %p285, %p286
    %p288 = scmp.ne.s32.totalorder %s279, %s280
    %p289 = scmp.eq.s32.totalorder %s38, 0
    %p290 = por %p288, %p289
    %p291 = scmp.ne.s32.totalorder %s279, %s280
    %p292 = scmp.eq.s32.totalorder %s39, 1
    %p293 = por %p291, %p292
    %p295 = scmp.ne.s32.totalorder %s280, %s294
    %p296 = scmp.eq.s32.totalorder %s39, 0
    %p297 = por %p295, %p296
    %s299 = sadd.s32 %s298, 1
    %p302 = scmp.eq.s32.totalorder %s33, 1
    %p303 = scmp.ne.s32.totalorder %s298, %s300
    %p304 = scmp.eq.s32.totalorder %s33, 0
    %p305 = por %p303, %p304
    %p306 = scmp.ne.s32.totalorder %s298, %s300
    %p307 = scmp.eq.s32.totalorder %s38, 1
    %p308 = por %p306, %p307
    %p309 = scmp.ne.s32.totalorder %s300, %s301
    %p310 = scmp.eq.s32.totalorder %s38, 0
    %p311 = por %p309, %p310
    %p312 = scmp.ne.s32.totalorder %s300, %s301
    %p313 = scmp.eq.s32.totalorder %s39, 1
    %p314 = por %p312, %p313
    %p316 = scmp.ne.s32.totalorder %s301, %s315
    %p317 = scmp.eq.s32.totalorder %s39, 0
    %p318 = por %p316, %p317
    %s320 = sadd.s32 %s319, 1
    %p323 = scmp.eq.s32.totalorder %s33, 1
    %p324 = scmp.ne.s32.totalorder %s319, %s321
    %p325 = scmp.eq.s32.totalorder %s33, 0
    %p326 = por %p324, %p325
    %p327 = scmp.ne.s32.totalorder %s319, %s321
    %p328 = scmp.eq.s32.totalorder %s38, 1
    %p329 = por %p327, %p328
    %p330 = scmp.ne.s32.totalorder %s321, %s322
    %p331 = scmp.eq.s32.totalorder %s38, 0
    %p332 = por %p330, %p331
    %p333 = scmp.ne.s32.totalorder %s321, %s322
    %p334 = scmp.eq.s32.totalorder %s39, 1
    %p335 = por %p333, %p334
    %p337 = scmp.ne.s32.totalorder %s322, %s336
    %p338 = scmp.eq.s32.totalorder %s39, 0
    %p339 = por %p337, %p338
    %s341 = sadd.s32 %s340, 1
    %p344 = scmp.eq.s32.totalorder %s33, 1
    %p345 = scmp.ne.s32.totalorder %s340, %s342
    %p346 = scmp.eq.s32.totalorder %s33, 0
    %p347 = por %p345, %p346
    %p348 = scmp.ne.s32.totalorder %s340, %s342
    %p349 = scmp.eq.s32.totalorder %s38, 1
    %p350 = por %p348, %p349
    %p351 = scmp.ne.s32.totalorder %s342, %s343
    %p352 = scmp.eq.s32.totalorder %s38, 0
    %p353 = por %p351, %p352
    %p354 = scmp.ne.s32.totalorder %s342, %s343
    %p355 = scmp.eq.s32.totalorder %s39, 1
    %p356 = por %p354, %p355
    %p358 = scmp.ne.s32.totalorder %s343, %s357
    %p359 = scmp.eq.s32.totalorder %s39, 0
    %p360 = por %p358, %p359
    %s362 = sadd.s32 %s361, 1
    %p365 = scmp.eq.s32.totalorder %s33, 1
    %p366 = scmp.ne.s32.totalorder %s361, %s363
    %p367 = scmp.eq.s32.totalorder %s33, 0
    %p368 = por %p366, %p367
    %p369 = scmp.ne.s32.totalorder %s361, %s363
    %p370 = scmp.eq.s32.totalorder %s38, 1
    %p371 = por %p369, %p370
    %p372 = scmp.ne.s32.totalorder %s363, %s364
    %p373 = scmp.eq.s32.totalorder %s38, 0
    %p374 = por %p372, %p373
    %p375 = scmp.ne.s32.totalorder %s363, %s364
    %p376 = scmp.eq.s32.totalorder %s39, 1
    %p377 = por %p375, %p376
    %p379 = scmp.ne.s32.totalorder %s364, %s378
    %p380 = scmp.eq.s32.totalorder %s39, 0
    %p381 = por %p379, %p380
    %s383 = sadd.s32 %s382, 1
    %p386 = scmp.eq.s32.totalorder %s33, 1
    %p387 = scmp.ne.s32.totalorder %s382, %s384
    %p388 = scmp.eq.s32.totalorder %s33, 0
    %p389 = por %p387, %p388
    %p390 = scmp.ne.s32.totalorder %s382, %s384
    %p391 = scmp.eq.s32.totalorder %s38, 1
    %p392 = por %p390, %p391
    %p393 = scmp.ne.s32.totalorder %s384, %s385
    %p394 = scmp.eq.s32.totalorder %s38, 0
    %p395 = por %p393, %p394
    %p396 = scmp.ne.s32.totalorder %s384, %s385
    %p397 = scmp.eq.s32.totalorder %s39, 1
    %p398 = por %p396, %p397
    %p400 = scmp.ne.s32.totalorder %s385, %s399
    %p401 = scmp.eq.s32.totalorder %s39, 0
    %p402 = por %p400, %p401
    %s404 = sadd.s32 %s403, 1
    %p407 = scmp.eq.s32.totalorder %s33, 1
    %p408 = scmp.ne.s32.totalorder %s403, %s405
    %p409 = scmp.eq.s32.totalorder %s33, 0
    %p410 = por %p408, %p409
    %p411 = scmp.ne.s32.totalorder %s403, %s405
    %p412 = scmp.eq.s32.totalorder %s38, 1
    %p413 = por %p411, %p412
    %p414 = scmp.ne.s32.totalorder %s405, %s406
    %p415 = scmp.eq.s32.totalorder %s38, 0
    %p416 = por %p414, %p415
    %p417 = scmp.ne.s32.totalorder %s405, %s406
    %p418 = scmp.eq.s32.totalorder %s39, 1
    %p419 = por %p417, %p418
    %p421 = scmp.ne.s32.totalorder %s406, %s420
    %p422 = scmp.eq.s32.totalorder %s39, 0
    %p423 = por %p421, %p422
    %s425 = sadd.s32 %s424, 1
    %p428 = scmp.eq.s32.totalorder %s33, 1
    %p429 = scmp.ne.s32.totalorder %s424, %s426
    %p430 = scmp.eq.s32.totalorder %s33, 0
    %p431 = por %p429, %p430
    %p432 = scmp.ne.s32.totalorder %s424, %s426
    %p433 = scmp.eq.s32.totalorder %s38, 1
    %p434 = por %p432, %p433
    %p435 = scmp.ne.s32.totalorder %s426, %s427
    %p436 = scmp.eq.s32.totalorder %s38, 0
    %p437 = por %p435, %p436
    %p438 = scmp.ne.s32.totalorder %s426, %s427
    %p439 = scmp.eq.s32.totalorder %s39, 1
    %p440 = por %p438, %p439
    %p442 = scmp.ne.s32.totalorder %s427, %s441
    %p443 = scmp.eq.s32.totalorder %s39, 0
    %p444 = por %p442, %p443
    %s446 = sadd.s32 %s445, 1
    %p449 = scmp.eq.s32.totalorder %s33, 1
    %p450 = scmp.ne.s32.totalorder %s445, %s447
    %p451 = scmp.eq.s32.totalorder %s33, 0
    %p452 = por %p450, %p451
    %p453 = scmp.ne.s32.totalorder %s445, %s447
    %p454 = scmp.eq.s32.totalorder %s38, 1
    %p455 = por %p453, %p454
    %p456 = scmp.ne.s32.totalorder %s447, %s448
    %p457 = scmp.eq.s32.totalorder %s38, 0
    %p458 = por %p456, %p457
    %p459 = scmp.ne.s32.totalorder %s447, %s448
    %p460 = scmp.eq.s32.totalorder %s39, 1
    %p461 = por %p459, %p460
    %p463 = scmp.ne.s32.totalorder %s448, %s462
    %p464 = scmp.eq.s32.totalorder %s39, 0
    %p465 = por %p463, %p464
    %s467 = sadd.s32 %s466, 1
    %p470 = scmp.eq.s32.totalorder %s33, 1
    %p471 = scmp.ne.s32.totalorder %s466, %s468
    %p472 = scmp.eq.s32.totalorder %s33, 0
    %p473 = por %p471, %p472
    %p474 = scmp.ne.s32.totalorder %s466, %s468
    %p475 = scmp.eq.s32.totalorder %s38, 1
    %p476 = por %p474, %p475
    %p477 = scmp.ne.s32.totalorder %s468, %s469
    %p478 = scmp.eq.s32.totalorder %s38, 0
    %p479 = por %p477, %p478
    %p480 = scmp.ne.s32.totalorder %s468, %s469
    %p481 = scmp.eq.s32.totalorder %s39, 1
    %p482 = por %p480, %p481
    %p484 = scmp.ne.s32.totalorder %s469, %s483
    %p485 = scmp.eq.s32.totalorder %s39, 0
    %p486 = por %p484, %p485
    %s488 = sadd.s32 %s487, 1
    %p491 = scmp.eq.s32.totalorder %s33, 1
    %p492 = scmp.ne.s32.totalorder %s487, %s489
    %p493 = scmp.eq.s32.totalorder %s33, 0
    %p494 = por %p492, %p493
    %p495 = scmp.ne.s32.totalorder %s487, %s489
    %p496 = scmp.eq.s32.totalorder %s38, 1
    %p497 = por %p495, %p496
    %p498 = scmp.ne.s32.totalorder %s489, %s490
    %p499 = scmp.eq.s32.totalorder %s38, 0
    %p500 = por %p498, %p499
    %p501 = scmp.ne.s32.totalorder %s489, %s490
    %p502 = scmp.eq.s32.totalorder %s39, 1
    %p503 = por %p501, %p502
    %p505 = scmp.ne.s32.totalorder %s490, %s504
    %p506 = scmp.eq.s32.totalorder %s39, 0
    %p507 = por %p505, %p506
    %s509 = sadd.s32 %s508, 1
    %p512 = scmp.eq.s32.totalorder %s33, 1
    %p513 = scmp.ne.s32.totalorder %s508, %s510
    %p514 = scmp.eq.s32.totalorder %s33, 0
    %p515 = por %p513, %p514
    %p516 = scmp.ne.s32.totalorder %s508, %s510
    %p517 = scmp.eq.s32.totalorder %s38, 1
    %p518 = por %p516, %p517
    %p519 = scmp.ne.s32.totalorder %s510, %s511
    %p520 = scmp.eq.s32.totalorder %s38, 0
    %p521 = por %p519, %p520
    %p522 = scmp.ne.s32.totalorder %s510, %s511
    %p523 = scmp.eq.s32.totalorder %s39, 1
    %p524 = por %p522, %p523
    %p526 = scmp.ne.s32.totalorder %s511, %s525
    %p527 = scmp.eq.s32.totalorder %s39, 0
    %p528 = por %p526, %p527
    %s530 = sadd.s32 %s529, 1
    %p533 = scmp.eq.s32.totalorder %s33, 1
    %p534 = scmp.ne.s32.totalorder %s529, %s531
    %p535 = scmp.eq.s32.totalorder %s33, 0
    %p536 = por %p534, %p535
    %p537 = scmp.ne.s32.totalorder %s529, %s531
    %p538 = scmp.eq.s32.totalorder %s38, 1
    %p539 = por %p537, %p538
    %p540 = scmp.ne.s32.totalorder %s531, %s532
    %p541 = scmp.eq.s32.totalorder %s38, 0
    %p542 = por %p540, %p541
    %p543 = scmp.ne.s32.totalorder %s531, %s532
    %p544 = scmp.eq.s32.totalorder %s39, 1
    %p545 = por %p543, %p544
    %p547 = scmp.ne.s32.totalorder %s532, %s546
    %p548 = scmp.eq.s32.totalorder %s39, 0
    %p549 = por %p547, %p548
    %s551 = sadd.s32 %s550, 1
    %p554 = scmp.eq.s32.totalorder %s33, 1
    %p555 = scmp.ne.s32.totalorder %s550, %s552
    %p556 = scmp.eq.s32.totalorder %s33, 0
    %p557 = por %p555, %p556
    %p558 = scmp.ne.s32.totalorder %s550, %s552
    %p559 = scmp.eq.s32.totalorder %s38, 1
    %p560 = por %p558, %p559
    %p561 = scmp.ne.s32.totalorder %s552, %s553
    %p562 = scmp.eq.s32.totalorder %s38, 0
    %p563 = por %p561, %p562
    %p564 = scmp.ne.s32.totalorder %s552, %s553
    %p565 = scmp.eq.s32.totalorder %s39, 1
    %p566 = por %p564, %p565
    %p568 = scmp.ne.s32.totalorder %s553, %s567
    %p569 = scmp.eq.s32.totalorder %s39, 0
    %p570 = por %p568, %p569
    %s572 = sadd.s32 %s571, 1
    %p575 = scmp.eq.s32.totalorder %s33, 1
    %p576 = scmp.ne.s32.totalorder %s571, %s573
    %p577 = scmp.eq.s32.totalorder %s33, 0
    %p578 = por %p576, %p577
    %p579 = scmp.ne.s32.totalorder %s571, %s573
    %p580 = scmp.eq.s32.totalorder %s38, 1
    %p581 = por %p579, %p580
    %p582 = scmp.ne.s32.totalorder %s573, %s574
    %p583 = scmp.eq.s32.totalorder %s38, 0
    %p584 = por %p582, %p583
    %p585 = scmp.ne.s32.totalorder %s573, %s574
    %p586 = scmp.eq.s32.totalorder %s39, 1
    %p587 = por %p585, %p586
    %p589 = scmp.ne.s32.totalorder %s574, %s588
    %p590 = scmp.eq.s32.totalorder %s39, 0
    %p591 = por %p589, %p590
    %s593 = sadd.s32 %s592, 1
    %p596 = scmp.eq.s32.totalorder %s33, 1
    %p597 = scmp.ne.s32.totalorder %s592, %s594
    %p598 = scmp.eq.s32.totalorder %s33, 0
    %p599 = por %p597, %p598
    %p600 = scmp.ne.s32.totalorder %s592, %s594
    %p601 = scmp.eq.s32.totalorder %s38, 1
    %p602 = por %p600, %p601
    %p603 = scmp.ne.s32.totalorder %s594, %s595
    %p604 = scmp.eq.s32.totalorder %s38, 0
    %p605 = por %p603, %p604
    %p606 = scmp.ne.s32.totalorder %s594, %s595
    %p607 = scmp.eq.s32.totalorder %s39, 1
    %p608 = por %p606, %p607
    %p610 = scmp.ne.s32.totalorder %s595, %s609
    %p611 = scmp.eq.s32.totalorder %s39, 0
    %p612 = por %p610, %p611
    %s613 = ssub.s32 %s33, %s40
    %p614 = scmp.eq.s32.totalorder %s613, 0
    %s616 = sadd.s32 %s615, 1
    %s617 = scalar_select %p614, %s615, %s616
    %p620 = pneg %p614
    %p621 = scmp.eq.s32.totalorder %s33, 1
    %p622 = por %p620, %p621
    %p623 = scmp.ne.s32.totalorder %s615, %s618
    %p624 = scmp.eq.s32.totalorder %s33, 0
    %p625 = por %p623, %p624
    %p626 = scmp.ne.s32.totalorder %s615, %s618
    %p627 = scmp.eq.s32.totalorder %s38, 1
    %p628 = por %p626, %p627
    %p629 = scmp.ne.s32.totalorder %s618, %s619
    %p630 = scmp.eq.s32.totalorder %s38, 0
    %p631 = por %p629, %p630
    %p632 = scmp.ne.s32.totalorder %s618, %s619
    %p633 = scmp.eq.s32.totalorder %s39, 1
    %p634 = por %p632, %p633
    %p636 = scmp.ne.s32.totalorder %s619, %s635
    %p637 = scmp.eq.s32.totalorder %s39, 0
    %p638 = por %p636, %p637
    %p639 = scmp.le.s32.totalorder 1, %s33
    %p640 = scmp.lt.s32.totalorder %s33, 3
    %p641 = pnand %p639, %p640
    %p642 = pneg %p641
    // Predicated region
    $region9: #{_lambda_.1} parent=5 // pred_check
      _
    $region10: #{_lambda_.1} parent=5 // pred_check_branch
      %644 = sbr.rel (%p641) target = $region12
    $region11: #{_lambda_.1} parent=5 // pred_region
      %s645 = ssub.s32 %s33, 1
      // Predicated region
      $region13: #{_lambda_.1} parent=11 // pred_check
        %p646 = pneg %p80
      $region14: #{_lambda_.1} parent=11 // pred_check_branch
        %648 = sbr.rel (%p646) target = $region16
      $region15: #{_lambda_.1} parent=11 // pred_region
        _
      $region16: #{_lambda_.1} parent=11 // pred_fallthru
        _
      // Predicated region
      $region17: #{_lambda_.1} parent=11 // pred_check
        %p649 = pneg %p101
      $region18: #{_lambda_.1} parent=11 // pred_check_branch
        %651 = sbr.rel (%p649) target = $region20
      $region19: #{_lambda_.1} parent=11 // pred_region
        _
      $region20: #{_lambda_.1} parent=11 // pred_fallthru
        _
      // Predicated region
      $region21: #{_lambda_.1} parent=11 // pred_check
        %p652 = pneg %p122
      $region22: #{_lambda_.1} parent=11 // pred_check_branch
        %654 = sbr.rel (%p652) target = $region24
      $region23: #{_lambda_.1} parent=11 // pred_region
        _
      $region24: #{_lambda_.1} parent=11 // pred_fallthru
        _
      // Predicated region
      $region25: #{_lambda_.1} parent=11 // pred_check
        %p655 = pneg %p143
      $region26: #{_lambda_.1} parent=11 // pred_check_branch
        %657 = sbr.rel (%p655) target = $region28
      $region27: #{_lambda_.1} parent=11 // pred_region
        _
      $region28: #{_lambda_.1} parent=11 // pred_fallthru
        _
      // Predicated region
      $region29: #{_lambda_.1} parent=11 // pred_check
        %p658 = pneg %p164
      $region30: #{_lambda_.1} parent=11 // pred_check_branch
        %660 = sbr.rel (%p658) target = $region32
      $region31: #{_lambda_.1} parent=11 // pred_region
        _
      $region32: #{_lambda_.1} parent=11 // pred_fallthru
        _
      // Predicated region
      $region33: #{_lambda_.1} parent=11 // pred_check
        %p661 = pneg %p185
      $region34: #{_lambda_.1} parent=11 // pred_check_branch
        %663 = sbr.rel (%p661) target = $region36
      $region35: #{_lambda_.1} parent=11 // pred_region
        _
      $region36: #{_lambda_.1} parent=11 // pred_fallthru
        _
      // Predicated region
      $region37: #{_lambda_.1} parent=11 // pred_check
        %p664 = pneg %p206
      $region38: #{_lambda_.1} parent=11 // pred_check_branch
        %666 = sbr.rel (%p664) target = $region40
      $region39: #{_lambda_.1} parent=11 // pred_region
        _
      $region40: #{_lambda_.1} parent=11 // pred_fallthru
        _
      // Predicated region
      $region41: #{_lambda_.1} parent=11 // pred_check
        %p667 = pneg %p227
      $region42: #{_lambda_.1} parent=11 // pred_check_branch
        %669 = sbr.rel (%p667) target = $region44
      $region43: #{_lambda_.1} parent=11 // pred_region
        _
      $region44: #{_lambda_.1} parent=11 // pred_fallthru
        _
      // Predicated region
      $region45: #{_lambda_.1} parent=11 // pred_check
        %p670 = pneg %p248
      $region46: #{_lambda_.1} parent=11 // pred_check_branch
        %672 = sbr.rel (%p670) target = $region48
      $region47: #{_lambda_.1} parent=11 // pred_region
        _
      $region48: #{_lambda_.1} parent=11 // pred_fallthru
        _
      // Predicated region
      $region49: #{_lambda_.1} parent=11 // pred_check
        %p673 = pneg %p269
      $region50: #{_lambda_.1} parent=11 // pred_check_branch
        %675 = sbr.rel (%p673) target = $region52
      $region51: #{_lambda_.1} parent=11 // pred_region
        _
      $region52: #{_lambda_.1} parent=11 // pred_fallthru
        _
      // Predicated region
      $region53: #{_lambda_.1} parent=11 // pred_check
        %p676 = pneg %p290
      $region54: #{_lambda_.1} parent=11 // pred_check_branch
        %678 = sbr.rel (%p676) target = $region56
      $region55: #{_lambda_.1} parent=11 // pred_region
        _
      $region56: #{_lambda_.1} parent=11 // pred_fallthru
        _
      // Predicated region
      $region57: #{_lambda_.1} parent=11 // pred_check
        %p679 = pneg %p311
      $region58: #{_lambda_.1} parent=11 // pred_check_branch
        %681 = sbr.rel (%p679) target = $region60
      $region59: #{_lambda_.1} parent=11 // pred_region
        _
      $region60: #{_lambda_.1} parent=11 // pred_fallthru
        _
      // Predicated region
      $region61: #{_lambda_.1} parent=11 // pred_check
        %p682 = pneg %p332
      $region62: #{_lambda_.1} parent=11 // pred_check_branch
        %684 = sbr.rel (%p682) target = $region64
      $region63: #{_lambda_.1} parent=11 // pred_region
        _
      $region64: #{_lambda_.1} parent=11 // pred_fallthru
        _
      // Predicated region
      $region65: #{_lambda_.1} parent=11 // pred_check
        %p685 = pneg %p353
      $region66: #{_lambda_.1} parent=11 // pred_check_branch
        %687 = sbr.rel (%p685) target = $region68
      $region67: #{_lambda_.1} parent=11 // pred_region
        _
      $region68: #{_lambda_.1} parent=11 // pred_fallthru
        _
      // Predicated region
      $region69: #{_lambda_.1} parent=11 // pred_check
        %p688 = pneg %p374
      $region70: #{_lambda_.1} parent=11 // pred_check_branch
        %690 = sbr.rel (%p688) target = $region72
      $region71: #{_lambda_.1} parent=11 // pred_region
        _
      $region72: #{_lambda_.1} parent=11 // pred_fallthru
        _
      // Predicated region
      $region73: #{_lambda_.1} parent=11 // pred_check
        %p691 = pneg %p395
      $region74: #{_lambda_.1} parent=11 // pred_check_branch
        %693 = sbr.rel (%p691) target = $region76
      $region75: #{_lambda_.1} parent=11 // pred_region
        _
      $region76: #{_lambda_.1} parent=11 // pred_fallthru
        _
      // Predicated region
      $region77: #{_lambda_.1} parent=11 // pred_check
        %p694 = pneg %p416
      $region78: #{_lambda_.1} parent=11 // pred_check_branch
        %696 = sbr.rel (%p694) target = $region80
      $region79: #{_lambda_.1} parent=11 // pred_region
        _
      $region80: #{_lambda_.1} parent=11 // pred_fallthru
        _
      // Predicated region
      $region81: #{_lambda_.1} parent=11 // pred_check
        %p697 = pneg %p437
      $region82: #{_lambda_.1} parent=11 // pred_check_branch
        %699 = sbr.rel (%p697) target = $region84
      $region83: #{_lambda_.1} parent=11 // pred_region
        _
      $region84: #{_lambda_.1} parent=11 // pred_fallthru
        _
      // Predicated region
      $region85: #{_lambda_.1} parent=11 // pred_check
        %p700 = pneg %p458
      $region86: #{_lambda_.1} parent=11 // pred_check_branch
        %702 = sbr.rel (%p700) target = $region88
      $region87: #{_lambda_.1} parent=11 // pred_region
        _
      $region88: #{_lambda_.1} parent=11 // pred_fallthru
        _
      // Predicated region
      $region89: #{_lambda_.1} parent=11 // pred_check
        %p703 = pneg %p479
      $region90: #{_lambda_.1} parent=11 // pred_check_branch
        %705 = sbr.rel (%p703) target = $region92
      $region91: #{_lambda_.1} parent=11 // pred_region
        _
      $region92: #{_lambda_.1} parent=11 // pred_fallthru
        _
      // Predicated region
      $region93: #{_lambda_.1} parent=11 // pred_check
        %p706 = pneg %p500
      $region94: #{_lambda_.1} parent=11 // pred_check_branch
        %708 = sbr.rel (%p706) target = $region96
      $region95: #{_lambda_.1} parent=11 // pred_region
        _
      $region96: #{_lambda_.1} parent=11 // pred_fallthru
        _
      // Predicated region
      $region97: #{_lambda_.1} parent=11 // pred_check
        %p709 = pneg %p521
      $region98: #{_lambda_.1} parent=11 // pred_check_branch
        %711 = sbr.rel (%p709) target = $region100
      $region99: #{_lambda_.1} parent=11 // pred_region
        _
      $region100: #{_lambda_.1} parent=11 // pred_fallthru
        _
      // Predicated region
      $region101: #{_lambda_.1} parent=11 // pred_check
        %p712 = pneg %p542
      $region102: #{_lambda_.1} parent=11 // pred_check_branch
        %714 = sbr.rel (%p712) target = $region104
      $region103: #{_lambda_.1} parent=11 // pred_region
        _
      $region104: #{_lambda_.1} parent=11 // pred_fallthru
        _
      // Predicated region
      $region105: #{_lambda_.1} parent=11 // pred_check
        %p715 = pneg %p563
      $region106: #{_lambda_.1} parent=11 // pred_check_branch
        %717 = sbr.rel (%p715) target = $region108
      $region107: #{_lambda_.1} parent=11 // pred_region
        _
      $region108: #{_lambda_.1} parent=11 // pred_fallthru
        _
      // Predicated region
      $region109: #{_lambda_.1} parent=11 // pred_check
        %p718 = pneg %p584
      $region110: #{_lambda_.1} parent=11 // pred_check_branch
        %720 = sbr.rel (%p718) target = $region112
      $region111: #{_lambda_.1} parent=11 // pred_region
        _
      $region112: #{_lambda_.1} parent=11 // pred_fallthru
        _
      // Predicated region
      $region113: #{_lambda_.1} parent=11 // pred_check
        %p721 = pneg %p605
      $region114: #{_lambda_.1} parent=11 // pred_check_branch
        %723 = sbr.rel (%p721) target = $region116
      $region115: #{_lambda_.1} parent=11 // pred_region
        _
      $region116: #{_lambda_.1} parent=11 // pred_fallthru
        _
    $region12: #{_lambda_.1} parent=5 // pred_fallthru
      _
    %p724 = scmp.lt.s32.totalorder %s33, 2
    // Predicated region
    $region117: #{_lambda_.1} parent=5 // pred_check
      %p725 = pneg %p724
    $region118: #{_lambda_.1} parent=5 // pred_check_branch
      %727 = sbr.rel (%p725) target = $region120
    $region119: #{_lambda_.1} parent=5 // pred_region
      // Predicated region
      $region121: #{_lambda_.1} parent=119 // pred_check
        %p728 = pneg %p53
      $region122: #{_lambda_.1} parent=119 // pred_check_branch
        %730 = sbr.rel (%p728) target = $region124
      $region123: #{_lambda_.1} parent=119 // pred_region
        %p731 = scmp.lt.s32.totalorder %s33, 1
        %s732 = scalar_select %p731, %s33, 1
        %s733 = smul.addr %s732, 6
        %s734 = smul.addr %s733, 8
        %s735 = scalar_lea.vmem %s0, %s734
      $region124: #{_lambda_.1} parent=119 // pred_fallthru
        _
    $region120: #{_lambda_.1} parent=5 // pred_fallthru
      _
    %p736 = scmp.le.s32.totalorder 1, %s33
    %p737 = scmp.lt.s32.totalorder %s33, 3
    %p738 = pnand %p736, %p737
    %p739 = pneg %p738
    // Predicated region
    $region125: #{_lambda_.1} parent=5 // pred_check
      _
    $region126: #{_lambda_.1} parent=5 // pred_check_branch
      %741 = sbr.rel (%p738) target = $region128
    $region127: #{_lambda_.1} parent=5 // pred_region
      %s742 = ssub.s32 %s33, 1
      %p743 = scmp.lt.s32.totalorder %s38, 1
      %s744 = scalar_select %p743, %s38, 1
      %s745 = smul.addr %s744, 6
      %s746 = smul.addr %s745, 8
      %s747 = scalar_lea.vmem %s0, %s746
      %p748 = pneg %p59
      %p749 = pneg %p56
      %p750 = pneg %p80
      %p751 = pneg %p77
      %p752 = pneg %p101
      %p753 = pneg %p98
      %p754 = pneg %p122
      %p755 = pneg %p119
      %p756 = pneg %p143
      %p757 = pneg %p140
      %p758 = pneg %p164
      %p759 = pneg %p161
      %p760 = pneg %p185
      %p761 = pneg %p182
      %p762 = pneg %p206
      %p763 = pneg %p203
      %p764 = pneg %p227
      %p765 = pneg %p224
      %p766 = pneg %p248
      %p767 = pneg %p245
      %p768 = pneg %p269
      %p769 = pneg %p266
      %p770 = pneg %p290
      %p771 = pneg %p287
      %p772 = pneg %p311
      %p773 = pneg %p308
      %p774 = pneg %p332
      %p775 = pneg %p329
      %p776 = pneg %p353
      %p777 = pneg %p350
      %p778 = pneg %p374
      %p779 = pneg %p371
      %p780 = pneg %p395
      %p781 = pneg %p392
      %p782 = pneg %p416
      %p783 = pneg %p413
      %p784 = pneg %p437
      %p785 = pneg %p434
      %p786 = pneg %p458
      %p787 = pneg %p455
      %p788 = pneg %p479
      %p789 = pneg %p476
      %p790 = pneg %p500
      %p791 = pneg %p497
      %p792 = pneg %p521
      %p793 = pneg %p518
      %p794 = pneg %p542
      %p795 = pneg %p539
      %p796 = pneg %p563
      %p797 = pneg %p560
      %p798 = pneg %p584
      %p799 = pneg %p581
      %p800 = pneg %p605
      %p801 = pneg %p602
      %p802 = pneg %p631
      %p803 = pneg %p628
      %p804 = scmp.lt.s32.totalorder %s38, 1
      %s805 = scalar_select %p804, %s38, 1
      %s806 = smul.addr %s805, 2
      %s807 = smul.addr %s806, 2
      %s808 = scalar_lea.vmem %s27, %s807
      %p809 = scmp.lt.s32.totalorder %s38, 1
      %s810 = scalar_select %p809, %s38, 1
      %s811 = smul.addr %s810, 6
      %s812 = smul.addr %s811, 8
      %s813 = scalar_lea.vmem %s0, %s812
      %p814 = scmp.lt.s32.totalorder %s38, 1
      %s815 = scalar_select %p814, %s38, 1
      %s816 = smul.addr %s815, 2
      %s817 = smul.addr %s816, 2
      %s818 = scalar_lea.vmem %s27, %s817
      %v820 = vld [vmem:[%s813] sm:$0xff]
      %v821 = vld [vmem:[%s813 + $0x8] sm:$0xff]
      %v822 = vld [vmem:[%s813 + $0x10] sm:$0xff]
      %v823 = vld [vmem:[%s813 + $0x18] sm:$0xff]
      %v824 = vld [vmem:[%s813 + $0x20] sm:$0xff]
      %v825 = vld [vmem:[%s813 + $0x28] sm:$0xff]
      %v826 = vld [vmem:[%s1] sm:$0xf]
      %v827 = vld [vmem:[%s1 + $0x4] sm:$0xf]
      %v828 = vpack.c.bf16 %v821, %v820
      %v829 = vpack.c.bf16 %v823, %v822
      %v830 = vpack.c.bf16 %v825, %v824
      %v831 = vld [vmem:[%s2] sm:$0x1]
      %v833 = vlaneseq
      %v834 = vshrl.u32 %v833, 7
      %v835 = vsub.s32 0, %v834
      %v836 = vrot.slane %v831, %v835
      %v840 = vunpack.c.l.b16 %v826
      %v841 = vunpack.c.l.b16 %v827
      %v842 = vpack.c.b16 %v841, %v840
      %vm844 = vcmask 130048
      %v846 = vsel %vm844, %v828, 0
      %v849 = vsel %vm844, %v829, 0
      %v852 = vsel %vm844, %v830, 0
      %854 = vmatprep.subr.bf16.mxu0 0
      %855 = vmatpush1.bf16.msra.mxu0 %v842
      %856 = vmatprep.subr.bf16.mxu0 0
      %857 = vmatpush1.bf16.msra.mxu0 0
      %858 = vmatprep.subr.bf16.mxu0 0
      %859 = vmatpush1.bf16.msra.mxu0 0
      %860 = vmatprep.subr.bf16.mxu0 0
      %861 = vmatpush1.bf16.msra.mxu0 0
      %862 = vmatprep.subr.bf16.mxu0 0
      %863 = vmatpush1.bf16.msra.mxu0 0
      %864 = vmatprep.subr.bf16.mxu0 0
      %865 = vmatpush1.bf16.msra.mxu0 0
      %866 = vmatprep.subr.bf16.mxu0 0
      %867 = vmatpush1.bf16.msra.mxu0 0
      %868 = vmatprep.subr.bf16.mxu0 0
      %869 = vmatpush1.bf16.msra.mxu0 0
      %870 = vmatprep.subr.bf16.mxu0 0
      %871 = vmatpush1.bf16.msra.mxu0 0
      %872 = vmatprep.subr.bf16.mxu0 0
      %873 = vmatpush1.bf16.msra.mxu0 0
      %874 = vmatprep.subr.bf16.mxu0 0
      %875 = vmatpush1.bf16.msra.mxu0 0
      %876 = vmatprep.subr.bf16.mxu0 0
      %877 = vmatpush1.bf16.msra.mxu0 0
      %878 = vmatprep.subr.bf16.mxu0 0
      %879 = vmatpush1.bf16.msra.mxu0 0
      %880 = vmatprep.subr.bf16.mxu0 0
      %881 = vmatpush1.bf16.msra.mxu0 0
      %882 = vmatprep.subr.bf16.mxu0 0
      %883 = vmatpush1.bf16.msra.mxu0 0
      %884 = vmatprep.subr.bf16.mxu0 0
      %885 = vmatpush1.bf16.msra.mxu0 0
      %886 = vmatprep.mubr.bf16.mxu0 0
      %887 = vmatmul.mubr.bf16.gmra.mrb[0].mxu0 %v846
      %v888 = vpop.f32.mrb[0].mxu0
      %v889 = vadd.f32 %v836, %v888
      %v890 = vpop.f32.mrb[0].mxu0
      %v891 = vpop.f32.mrb[0].mxu0
      %v892 = vadd.f32 %v836, %v891
      %v893 = vpop.f32.mrb[0].mxu0
      %894 = vmatprep.mubr.bf16.mxu0 0
      %895 = vmatmul.mubr.bf16.gmra.mrb[0].mxu0 %v849
      %v896 = vpop.f32.mrb[0].mxu0
      %v897 = vadd.f32 %v836, %v896
      %v898 = vpop.f32.mrb[0].mxu0
      %v899 = vpop.f32.mrb[0].mxu0
      %v900 = vadd.f32 %v836, %v899
      %v901 = vpop.f32.mrb[0].mxu0
      %902 = vmatprep.mubr.bf16.mxu0 0
      %903 = vmatmul.mubr.bf16.gmra.mrb[0].mxu0 %v852
      %v904 = vpop.f32.mrb[0].mxu0
      %v905 = vadd.f32 %v836, %v904
      %v906 = vpop.f32.mrb[0].mxu0
      %v907 = vpop.f32.mrb[0].mxu0
      %v908 = vadd.f32 %v836, %v907
      %v909 = vpop.f32.mrb[0].mxu0
      %910 = vdwg.mxu0
      %v911 = vsel %vm844, %v889, 0.0
      %912 = vadd.xlane.f32.xlu0 %v911
      %v913 = vpop.xlane.xlu0 %912
      %v914 = vsel %vm844, %v892, 0.0
      %915 = vadd.xlane.f32.xlu0 %v914
      %v916 = vpop.xlane.xlu0 %915
      %v917 = vsel %vm844, %v897, 0.0
      %918 = vadd.xlane.f32.xlu0 %v917
      %v919 = vpop.xlane.xlu0 %918
      %v920 = vsel %vm844, %v900, 0.0
      %921 = vadd.xlane.f32.xlu0 %v920
      %v922 = vpop.xlane.xlu0 %921
      %v923 = vsel %vm844, %v905, 0.0
      %924 = vadd.xlane.f32.xlu0 %v923
      %v925 = vpop.xlane.xlu0 %924
      %v926 = vsel %vm844, %v908, 0.0
      %927 = vadd.xlane.f32.xlu0 %v926
      %v928 = vpop.xlane.xlu0 %927
      %v929 = vrcp.pop 16.0
      %v930 = vmul.f32 %v913, %v929
      %v931 = vmul.f32 %v916, %v929
      %v932 = vmul.f32 %v919, %v929
      %v933 = vmul.f32 %v922, %v929
      %v934 = vmul.f32 %v925, %v929
      %v935 = vmul.f32 %v928, %v929
      %v936 = vsub.f32 %v889, %v930
      %v937 = vsub.f32 %v892, %v931
      %v938 = vsub.f32 %v897, %v932
      %v939 = vsub.f32 %v900, %v933
      %v940 = vsub.f32 %v905, %v934
      %v941 = vsub.f32 %v908, %v935
      %v942 = vmul.f32 %v936, %v936
      %v943 = vmul.f32 %v937, %v937
      %v944 = vmul.f32 %v938, %v938
      %v945 = vmul.f32 %v939, %v939
      %v946 = vmul.f32 %v940, %v940
      %v947 = vmul.f32 %v941, %v941
      %v948 = vsel %vm844, %v942, 0.0
      %949 = vadd.xlane.f32.xlu0 %v948
      %v950 = vpop.xlane.xlu0 %949
      %v951 = vsel %vm844, %v943, 0.0
      %952 = vadd.xlane.f32.xlu0 %v951
      %v953 = vpop.xlane.xlu0 %952
      %v954 = vsel %vm844, %v944, 0.0
      %955 = vadd.xlane.f32.xlu0 %v954
      %v956 = vpop.xlane.xlu0 %955
      %v957 = vsel %vm844, %v945, 0.0
      %958 = vadd.xlane.f32.xlu0 %v957
      %v959 = vpop.xlane.xlu0 %958
      %v960 = vsel %vm844, %v946, 0.0
      %961 = vadd.xlane.f32.xlu0 %v960
      %v962 = vpop.xlane.xlu0 %961
      %v963 = vsel %vm844, %v947, 0.0
      %964 = vadd.xlane.f32.xlu0 %v963
      %v965 = vpop.xlane.xlu0 %964
      %v966 = vmul.f32 %v950, %v929
      %v967 = vmul.f32 %v953, %v929
      %v968 = vmul.f32 %v956, %v929
      %v969 = vmul.f32 %v959, %v929
      %v970 = vmul.f32 %v962, %v929
      %v971 = vmul.f32 %v965, %v929
      %v972 = vadd.f32 %v966, 1e-05
      %v973 = vadd.f32 %v967, 1e-05
      %v974 = vadd.f32 %v968, 1e-05
      %v975 = vadd.f32 %v969, 1e-05
      %v976 = vadd.f32 %v970, 1e-05
      %v977 = vadd.f32 %v971, 1e-05
      %v978 = vrsqrt.pop %v972
      %v979 = vrsqrt.pop %v973
      %v980 = vrsqrt.pop %v974
      %v981 = vrsqrt.pop %v975
      %v982 = vrsqrt.pop %v976
      %v983 = vrsqrt.pop %v977
      %v984 = vmul.f32 %v936, %v978
      %v985 = vmul.f32 %v937, %v979
      %v986 = vmul.f32 %v938, %v980
      %v987 = vmul.f32 %v939, %v981
      %v988 = vmul.f32 %v940, %v982
      %v989 = vmul.f32 %v941, %v983
      %v990 = vld [vmem:[%s3] sm:$0x1]
      %v992 = vlaneseq
      %v993 = vshrl.u32 %v992, 7
      %v994 = vsub.s32 0, %v993
      %v995 = vrot.slane %v990, %v994
      %v997 = vmul.f32 %v984, %v995
      %v998 = vmul.f32 %v985, %v995
      %v999 = vmul.f32 %v986, %v995
      %v1000 = vmul.f32 %v987, %v995
      %v1001 = vmul.f32 %v988, %v995
      %v1002 = vmul.f32 %v989, %v995
      %v1003 = vld [vmem:[%s4] sm:$0x1]
      %v1005 = vlaneseq
      %v1006 = vshrl.u32 %v1005, 7
      %v1007 = vsub.s32 0, %v1006
      %v1008 = vrot.slane %v1003, %v1007
      %v1010 = vadd.f32 %v997, %v1008
      %v1011 = vadd.f32 %v998, %v1008
      %v1012 = vadd.f32 %v999, %v1008
      %v1013 = vadd.f32 %v1000, %v1008
      %v1014 = vadd.f32 %v1001, %v1008
      %v1015 = vadd.f32 %v1002, %v1008
      %v1016 = vld [vmem:[%s5] sm:$0xf]
      %v1017 = vld [vmem:[%s5 + $0x4] sm:$0xf]
      %v1018 = vld [vmem:[%s5 + $0x8] sm:$0xf]
      %v1019 = vld [vmem:[%s5 + $0xc] sm:$0xf]
      %v1020 = vld [vmem:[%s5 + $0x10] sm:$0xf]
      %v1021 = vld [vmem:[%s5 + $0x14] sm:$0xf]
      %v1022 = vld [vmem:[%s5 + $0x18] sm:$0xf]
      %v1023 = vld [vmem:[%s5 + $0x1c] sm:$0xf]
      %v1024 = vld [vmem:[%s5 + $0x20] sm:$0xf]
      %v1025 = vld [vmem:[%s5 + $0x24] sm:$0xf]
      %v1026 = vld [vmem:[%s5 + $0x28] sm:$0xf]
      %v1027 = vld [vmem:[%s5 + $0x2c] sm:$0xf]
      %v1028 = vld [vmem:[%s5 + $0x30] sm:$0xf]
      %v1029 = vld [vmem:[%s5 + $0x34] sm:$0xf]
      %v1030 = vld [vmem:[%s5 + $0x38] sm:$0xf]
      %v1031 = vld [vmem:[%s5 + $0x3c] sm:$0xf]
      %v1032 = vld [vmem:[%s5 + $0x40] sm:$0xf]
      %v1033 = vld [vmem:[%s5 + $0x44] sm:$0xf]
      %v1034 = vpack.c.bf16 %v1011, %v1010
      %v1035 = vpack.c.bf16 %v1013, %v1012
      %v1036 = vpack.c.bf16 %v1015, %v1014
      %v1037 = vld [vmem:[%s6] sm:$0xff]
      %v1038 = vld [vmem:[%s6 + $0x8] sm:$0xff]
      %v1039 = vld [vmem:[%s6 + $0x10] sm:$0xff]
      %v1040 = vld [vmem:[%s6 + $0x18] sm:$0xff]
      %v1041 = vld [vmem:[%s6 + $0x20] sm:$0xff]
      %v1042 = vld [vmem:[%s6 + $0x28] sm:$0xff]
      %v1043 = vld [vmem:[%s6 + $0x30] sm:$0xff]
      %v1044 = vld [vmem:[%s6 + $0x38] sm:$0xff]
      %v1045 = vld [vmem:[%s6 + $0x40] sm:$0xff]
      %v1046 = vld [vmem:[%s6 + $0x48] sm:$0xff]
      %v1047 = vld [vmem:[%s6 + $0x50] sm:$0xff]
      %v1048 = vld [vmem:[%s6 + $0x58] sm:$0xff]
      %v1049 = vld [vmem:[%s6 + $0x60] sm:$0xff]
      %v1050 = vld [vmem:[%s6 + $0x68] sm:$0xff]
      %v1051 = vld [vmem:[%s6 + $0x70] sm:$0xff]
      %v1052 = vld [vmem:[%s6 + $0x78] sm:$0xff]
      %v1053 = vld [vmem:[%s6 + $0x80] sm:$0xff]
      %v1054 = vld [vmem:[%s6 + $0x88] sm:$0xff]
      %1056 = vset.pattern.permute.xlu0 0
      %1057 = vperm.xlu0 %1056, %v1037
      %v1058 = vpop.permute.xlu0 %1057
      %1061 = vset.pattern.permute.xlu0 0
      %1062 = vperm.xlu0 %1061, %v1038
      %v1063 = vpop.permute.xlu0 %1062
      %1066 = vset.pattern.permute.xlu0 0
      %1067 = vperm.xlu0 %1066, %v1039
      %v1068 = vpop.permute.xlu0 %1067
      %1071 = vset.pattern.permute.xlu0 0
      %1072 = vperm.xlu0 %1071, %v1040
      %v1073 = vpop.permute.xlu0 %1072
      %1076 = vset.pattern.permute.xlu0 0
      %1077 = vperm.xlu0 %1076, %v1041
      %v1078 = vpop.permute.xlu0 %1077
      %1081 = vset.pattern.permute.xlu0 0
      %1082 = vperm.xlu0 %1081, %v1042
      %v1083 = vpop.permute.xlu0 %1082
      %1086 = vset.pattern.permute.xlu0 0
      %1087 = vperm.xlu0 %1086, %v1043
      %v1088 = vpop.permute.xlu0 %1087
      %1091 = vset.pattern.permute.xlu0 0
      %1092 = vperm.xlu0 %1091, %v1044
      %v1093 = vpop.permute.xlu0 %1092
      %1096 = vset.pattern.permute.xlu0 0
      %1097 = vperm.xlu0 %1096, %v1045
      %v1098 = vpop.permute.xlu0 %1097
      %1101 = vset.pattern.permute.xlu0 0
      %1102 = vperm.xlu0 %1101, %v1046
      %v1103 = vpop.permute.xlu0 %1102
      %1106 = vset.pattern.permute.xlu0 0
      %1107 = vperm.xlu0 %1106, %v1047
      %v1108 = vpop.permute.xlu0 %1107
      %1111 = vset.pattern.permute.xlu0 0
      %1112 = vperm.xlu0 %1111, %v1048
      %v1113 = vpop.permute.xlu0 %1112
      %1116 = vset.pattern.permute.xlu0 0
      %1117 = vperm.xlu0 %1116, %v1049
      %v1118 = vpop.permute.xlu0 %1117
      %1121 = vset.pattern.permute.xlu0 0
      %1122 = vperm.xlu0 %1121, %v1050
      %v1123 = vpop.permute.xlu0 %1122
      %1126 = vset.pattern.permute.xlu0 0
      %1127 = vperm.xlu0 %1126, %v1051
      %v1128 = vpop.permute.xlu0 %1127
      %1131 = vset.pattern.permute.xlu0 0
      %1132 = vperm.xlu0 %1131, %v1052
      %v1133 = vpop.permute.xlu0 %1132
      %1136 = vset.pattern.permute.xlu0 0
      %1137 = vperm.xlu0 %1136, %v1053
      %v1138 = vpop.permute.xlu0 %1137
      %1141 = vset.pattern.permute.xlu0 0
      %1142 = vperm.xlu0 %1141, %v1054
      %v1143 = vpop.permute.xlu0 %1142
      %v1163 = vunpack.c.l.b16 %v1016
      %v1164 = vunpack.c.l.b16 %v1017
      %v1165 = vunpack.c.l.b16 %v1018
      %v1166 = vunpack.c.l.b16 %v1019
      %v1167 = vunpack.c.l.b16 %v1020
      %v1168 = vunpack.c.l.b16 %v1021
      %v1169 = vunpack.c.l.b16 %v1022
      %v1170 = vunpack.c.l.b16 %v1023
      %v1171 = vunpack.c.l.b16 %v1024
      %v1172 = vunpack.c.l.b16 %v1025
      %v1173 = vunpack.c.l.b16 %v1026
      %v1174 = vunpack.c.l.b16 %v1027
      %v1175 = vunpack.c.l.b16 %v1028
      %v1176 = vunpack.c.l.b16 %v1029
      %v1177 = vunpack.c.l.b16 %v1030
      %v1178 = vunpack.c.l.b16 %v1031
      %v1179 = vunpack.c.l.b16 %v1032
      %v1180 = vunpack.c.l.b16 %v1033
      %v1181 = vpack.c.b16 %v1164, %v1163
      %v1182 = vpack.c.b16 %v1166, %v1165
      %v1183 = vpack.c.b16 %v1168, %v1167
      %v1184 = vpack.c.b16 %v1170, %v1169
      %v1185 = vpack.c.b16 %v1172, %v1171
      %v1186 = vpack.c.b16 %v1174, %v1173
      %v1187 = vpack.c.b16 %v1176, %v1175
      %v1188 = vpack.c.b16 %v1178, %v1177
      %v1189 = vpack.c.b16 %v1180, %v1179
      %vm1190 = vcmask 392192
      %v1192 = vsel %vm1190, %v1181, 0
      %v1195 = vsel %vm1190, %v1182, 0
      %v1198 = vsel %vm1190, %v1183, 0
      %v1201 = vsel %vm1190, %v1184, 0
      %v1204 = vsel %vm1190, %v1185, 0
      %v1207 = vsel %vm1190, %v1186, 0
      %v1210 = vsel %vm1190, %v1187, 0
      %v1213 = vsel %vm1190, %v1188, 0
      %v1216 = vsel %vm1190, %v1189, 0
      %1218 = vmatprep.subr.bf16.mxu0 0
      %1219 = vmatpush1.bf16.msra.mxu0 %v1034
      %1220 = vmatprep.subr.bf16.mxu0 0
      %1221 = vmatpush1.bf16.msra.mxu0 %v1035
      %1222 = vmatprep.subr.bf16.mxu0 0
      %1223 = vmatpush1.bf16.msra.mxu0 %v1036
      %1224 = vmatprep.subr.bf16.mxu0 0
      %1225 = vmatpush1.bf16.msra.mxu0 0
      %1226 = vmatprep.subr.bf16.mxu0 0
      %1227 = vmatpush1.bf16.msra.mxu0 0
      %1228 = vmatprep.subr.bf16.mxu0 0
      %1229 = vmatpush1.bf16.msra.mxu0 0
      %1230 = vmatprep.subr.bf16.mxu0 0
      %1231 = vmatpush1.bf16.msra.mxu0 0
      %1232 = vmatprep.subr.bf16.mxu0 0
      %1233 = vmatpush1.bf16.msra.mxu0 0
      %1234 = vmatprep.subr.bf16.mxu0 0
      %1235 = vmatpush1.bf16.msra.mxu0 0
      %1236 = vmatprep.subr.bf16.mxu0 0
      %1237 = vmatpush1.bf16.msra.mxu0 0
      %1238 = vmatprep.subr.bf16.mxu0 0
      %1239 = vmatpush1.bf16.msra.mxu0 0
      %1240 = vmatprep.subr.bf16.mxu0 0
      %1241 = vmatpush1.bf16.msra.mxu0 0
      %1242 = vmatprep.subr.bf16.mxu0 0
      %1243 = vmatpush1.bf16.msra.mxu0 0
      %1244 = vmatprep.subr.bf16.mxu0 0
      %1245 = vmatpush1.bf16.msra.mxu0 0
      %1246 = vmatprep.subr.bf16.mxu0 0
      %1247 = vmatpush1.bf16.msra.mxu0 0
      %1248 = vmatprep.subr.bf16.mxu0 0
      %1249 = vmatpush1.bf16.msra.mxu0 0
      %1250 = vmatprep.mubr.bf16.mxu0 0
      %1251 = vmatmul.mubr.bf16.gmra.mrb[0].mxu0 %v1192
      %v1252 = vpop.f32.mrb[0].mxu0
      %v1253 = vadd.f32 %v1058, %v1252
      %v1254 = vpop.f32.mrb[0].mxu0
      %v1255 = vpop.f32.mrb[0].mxu0
      %v1256 = vadd.f32 %v1063, %v1255
      %v1257 = vpop.f32.mrb[0].mxu0
      %1258 = vmatprep.mubr.bf16.mxu0 0
      %1259 = vmatmul.mubr.bf16.gmra.mrb[0].mxu0 %v1195
      %v1260 = vpop.f32.mrb[0].mxu0
      %v1261 = vadd.f32 %v1068, %v1260
      %v1262 = vpop.f32.mrb[0].mxu0
      %v1263 = vpop.f32.mrb[0].mxu0
      %v1264 = vadd.f32 %v1073, %v1263
      %v1265 = vpop.f32.mrb[0].mxu0
      %1266 = vmatprep.mubr.bf16.mxu0 0
      %1267 = vmatmul.mubr.bf16.gmra.mrb[0].mxu0 %v1198
      %v1268 = vpop.f32.mrb[0].mxu0
      %v1269 = vadd.f32 %v1078, %v1268
      %v1270 = vpop.f32.mrb[0].mxu0
      %v1271 = vpop.f32.mrb[0].mxu0
      %v1272 = vadd.f32 %v1083, %v1271
      %v1273 = vpop.f32.mrb[0].mxu0
      %1274 = vmatprep.mubr.bf16.mxu0 0
      %1275 = vmatmul.mubr.bf16.gmra.mrb[0].mxu0 %v1201
      %v1276 = vpop.f32.mrb[0].mxu0
      %v1277 = vadd.f32 %v1088, %v1276
      %v1278 = vpop.f32.mrb[0].mxu0
      %v1279 = vpop.f32.mrb[0].mxu0
      %v1280 = vadd.f32 %v1093, %v1279
      %v1281 = vpop.f32.mrb[0].mxu0
      %1282 = vmatprep.mubr.bf16.mxu0 0
      %1283 = vmatmul.mubr.bf16.gmra.mrb[0].mxu0 %v1204
      %v1284 = vpop.f32.mrb[0].mxu0
      %v1285 = vadd.f32 %v1098, %v1284
      %v1286 = vpop.f32.mrb[0].mxu0
      %v1287 = vpop.f32.mrb[0].mxu0
      %v1288 = vadd.f32 %v1103, %v1287
      %v1289 = vpop.f32.mrb[0].mxu0
      %1290 = vmatprep.mubr.bf16.mxu0 0
      %1291 = vmatmul.mubr.bf16.gmra.mrb[0].mxu0 %v1207
      %v1292 = vpop.f32.mrb[0].mxu0
      %v1293 = vadd.f32 %v1108, %v1292
      %v1294 = vpop.f32.mrb[0].mxu0
      %v1295 = vpop.f32.mrb[0].mxu0
      %v1296 = vadd.f32 %v1113, %v1295
      %v1297 = vpop.f32.mrb[0].mxu0
      %1298 = vmatprep.mubr.bf16.mxu0 0
      %1299 = vmatmul.mubr.bf16.gmra.mrb[0].mxu0 %v1210
      %v1300 = vpop.f32.mrb[0].mxu0
      %v1301 = vadd.f32 %v1118, %v1300
      %v1302 = vpop.f32.mrb[0].mxu0
      %v1303 = vpop.f32.mrb[0].mxu0
      %v1304 = vadd.f32 %v1123, %v1303
      %v1305 = vpop.f32.mrb[0].mxu0
      %1306 = vmatprep.mubr.bf16.mxu0 0
      %1307 = vmatmul.mubr.bf16.gmra.mrb[0].mxu0 %v1213
      %v1308 = vpop.f32.mrb[0].mxu0
      %v1309 = vadd.f32 %v1128, %v1308
      %v1310 = vpop.f32.mrb[0].mxu0
      %v1311 = vpop.f32.mrb[0].mxu0
      %v1312 = vadd.f32 %v1133, %v1311
      %v1313 = vpop.f32.mrb[0].mxu0
      %1314 = vmatprep.mubr.bf16.mxu0 0
      %1315 = vmatmul.mubr.bf16.gmra.mrb[0].mxu0 %v1216
      %v1316 = vpop.f32.mrb[0].mxu0
      %v1317 = vadd.f32 %v1138, %v1316
      %v1318 = vpop.f32.mrb[0].mxu0
      %v1319 = vpop.f32.mrb[0].mxu0
      %v1320 = vadd.f32 %v1143, %v1319
      %v1321 = vpop.f32.mrb[0].mxu0
      %1322 = vdwg.mxu0
      %v1323 = vmul.f32 %v1253, 0.5
      %v1324 = vmul.f32 %v1256, 0.5
      %v1325 = vmul.f32 %v1261, 0.5
      %v1326 = vmul.f32 %v1264, 0.5
      %v1327 = vmul.f32 %v1269, 0.5
      %v1328 = vmul.f32 %v1272, 0.5
      %v1329 = vmul.f32 %v1277, 0.5
      %v1330 = vmul.f32 %v1280, 0.5
      %v1331 = vmul.f32 %v1285, 0.5
      %v1332 = vmul.f32 %v1288, 0.5
      %v1333 = vmul.f32 %v1293, 0.5
      %v1334 = vmul.f32 %v1296, 0.5
      %v1335 = vmul.f32 %v1301, 0.5
      %v1336 = vmul.f32 %v1304, 0.5
      %v1337 = vmul.f32 %v1309, 0.5
      %v1338 = vmul.f32 %v1312, 0.5
      %v1339 = vmul.f32 %v1317, 0.5
      %v1340 = vmul.f32 %v1320, 0.5
      %v1341 = vmul.f32 %v1253, 0.044715
      %v1342 = vmul.f32 %v1256, 0.044715
      %v1343 = vmul.f32 %v1261, 0.044715
      %v1344 = vmul.f32 %v1264, 0.044715
      %v1345 = vmul.f32 %v1269, 0.044715
      %v1346 = vmul.f32 %v1272, 0.044715
      %v1347 = vmul.f32 %v1277, 0.044715
      %v1348 = vmul.f32 %v1280, 0.044715
      %v1349 = vmul.f32 %v1285, 0.044715
      %v1350 = vmul.f32 %v1288, 0.044715
      %v1351 = vmul.f32 %v1293, 0.044715
      %v1352 = vmul.f32 %v1296, 0.044715
      %v1353 = vmul.f32 %v1301, 0.044715
      %v1354 = vmul.f32 %v1304, 0.044715
      %v1355 = vmul.f32 %v1309, 0.044715
      %v1356 = vmul.f32 %v1312, 0.044715
      %v1357 = vmul.f32 %v1317, 0.044715
      %v1358 = vmul.f32 %v1320, 0.044715
      %v1359 = vmul.f32 %v1341, %v1253
      %v1360 = vmul.f32 %v1342, %v1256
      %v1361 = vmul.f32 %v1343, %v1261
      %v1362 = vmul.f32 %v1344, %v1264
      %v1363 = vmul.f32 %v1345, %v1269
      %v1364 = vmul.f32 %v1346, %v1272
      %v1365 = vmul.f32 %v1347, %v1277
      %v1366 = vmul.f32 %v1348, %v1280
      %v1367 = vmul.f32 %v1349, %v1285
      %v1368 = vmul.f32 %v1350, %v1288
      %v1369 = vmul.f32 %v1351, %v1293
      %v1370 = vmul.f32 %v1352, %v1296
      %v1371 = vmul.f32 %v1353, %v1301
      %v1372 = vmul.f32 %v1354, %v1304
      %v1373 = vmul.f32 %v1355, %v1309
      %v1374 = vmul.f32 %v1356, %v1312
      %v1375 = vmul.f32 %v1357, %v1317
      %v1376 = vmul.f32 %v1358, %v1320
      %v1377 = vmul.f32 %v1359, %v1253
      %v1378 = vmul.f32 %v1360, %v1256
      %v1379 = vmul.f32 %v1361, %v1261
      %v1380 = vmul.f32 %v1362, %v1264
      %v1381 = vmul.f32 %v1363, %v1269
      %v1382 = vmul.f32 %v1364, %v1272
      %v1383 = vmul.f32 %v1365, %v1277
      %v1384 = vmul.f32 %v1366, %v1280
      %v1385 = vmul.f32 %v1367, %v1285
      %v1386 = vmul.f32 %v1368, %v1288
      %v1387 = vmul.f32 %v1369, %v1293
      %v1388 = vmul.f32 %v1370, %v1296
      %v1389 = vmul.f32 %v1371, %v1301
      %v1390 = vmul.f32 %v1372, %v1304
      %v1391 = vmul.f32 %v1373, %v1309
      %v1392 = vmul.f32 %v1374, %v1312
      %v1393 = vmul.f32 %v1375, %v1317
      %v1394 = vmul.f32 %v1376, %v1320
      %v1395 = vadd.f32 %v1253, %v1377
      %v1396 = vadd.f32 %v1256, %v1378
      %v1397 = vadd.f32 %v1261, %v1379
      %v1398 = vadd.f32 %v1264, %v1380
      %v1399 = vadd.f32 %v1269, %v1381
      %v1400 = vadd.f32 %v1272, %v1382
      %v1401 = vadd.f32 %v1277, %v1383
      %v1402 = vadd.f32 %v1280, %v1384
      %v1403 = vadd.f32 %v1285, %v1385
      %v1404 = vadd.f32 %v1288, %v1386
      %v1405 = vadd.f32 %v1293, %v1387
      %v1406 = vadd.f32 %v1296, %v1388
      %v1407 = vadd.f32 %v1301, %v1389
      %v1408 = vadd.f32 %v1304, %v1390
      %v1409 = vadd.f32 %v1309, %v1391
      %v1410 = vadd.f32 %v1312, %v1392
      %v1411 = vadd.f32 %v1317, %v1393
      %v1412 = vadd.f32 %v1320, %v1394
      %v1413 = vmul.f32 %v1395, 0.7978846
      %v1414 = vmul.f32 %v1396, 0.7978846
      %v1415 = vmul.f32 %v1397, 0.7978846
      %v1416 = vmul.f32 %v1398, 0.7978846
      %v1417 = vmul.f32 %v1399, 0.7978846
      %v1418 = vmul.f32 %v1400, 0.7978846
      %v1419 = vmul.f32 %v1401, 0.7978846
      %v1420 = vmul.f32 %v1402, 0.7978846
      %v1421 = vmul.f32 %v1403, 0.7978846
      %v1422 = vmul.f32 %v1404, 0.7978846
      %v1423 = vmul.f32 %v1405, 0.7978846
      %v1424 = vmul.f32 %v1406, 0.7978846
      %v1425 = vmul.f32 %v1407, 0.7978846
      %v1426 = vmul.f32 %v1408, 0.7978846
      %v1427 = vmul.f32 %v1409, 0.7978846
      %v1428 = vmul.f32 %v1410, 0.7978846
      %v1429 = vmul.f32 %v1411, 0.7978846
      %v1430 = vmul.f32 %v1412, 0.7978846
      %v1431 = vtanh.pop %v1413
      %v1432 = vtanh.pop %v1414
      %v1433 = vtanh.pop %v1415
      %v1434 = vtanh.pop %v1416
      %v1435 = vtanh.pop %v1417
      %v1436 = vtanh.pop %v1418
      %v1437 = vtanh.pop %v1419
      %v1438 = vtanh.pop %v1420
      %v1439 = vtanh.pop %v1421
      %v1440 = vtanh.pop %v1422
      %v1441 = vtanh.pop %v1423
      %v1442 = vtanh.pop %v1424
      %v1443 = vtanh.pop %v1425
      %v1444 = vtanh.pop %v1426
      %v1445 = vtanh.pop %v1427
      %v1446 = vtanh.pop %v1428
      %v1447 = vtanh.pop %v1429
      %v1448 = vtanh.pop %v1430
      %v1449 = vadd.f32 %v1431, 1.0
      %v1450 = vadd.f32 %v1432, 1.0
      %v1451 = vadd.f32 %v1433, 1.0
      %v1452 = vadd.f32 %v1434, 1.0
      %v1453 = vadd.f32 %v1435, 1.0
      %v1454 = vadd.f32 %v1436, 1.0
      %v1455 = vadd.f32 %v1437, 1.0
      %v1456 = vadd.f32 %v1438, 1.0
      %v1457 = vadd.f32 %v1439, 1.0
      %v1458 = vadd.f32 %v1440, 1.0
      %v1459 = vadd.f32 %v1441, 1.0
      %v1460 = vadd.f32 %v1442, 1.0
      %v1461 = vadd.f32 %v1443, 1.0
      %v1462 = vadd.f32 %v1444, 1.0
      %v1463 = vadd.f32 %v1445, 1.0
      %v1464 = vadd.f32 %v1446, 1.0
      %v1465 = vadd.f32 %v1447, 1.0
      %v1466 = vadd.f32 %v1448, 1.0
      %v1467 = vmul.f32 %v1323, %v1449
      %v1468 = vmul.f32 %v1324, %v1450
      %v1469 = vmul.f32 %v1325, %v1451
      %v1470 = vmul.f32 %v1326, %v1452
      %v1471 = vmul.f32 %v1327, %v1453
      %v1472 = vmul.f32 %v1328, %v1454
      %v1473 = vmul.f32 %v1329, %v1455
      %v1474 = vmul.f32 %v1330, %v1456
      %v1475 = vmul.f32 %v1331, %v1457
      %v1476 = vmul.f32 %v1332, %v1458
      %v1477 = vmul.f32 %v1333, %v1459
      %v1478 = vmul.f32 %v1334, %v1460
      %v1479 = vmul.f32 %v1335, %v1461
      %v1480 = vmul.f32 %v1336, %v1462
      %v1481 = vmul.f32 %v1337, %v1463
      %v1482 = vmul.f32 %v1338, %v1464
      %v1483 = vmul.f32 %v1339, %v1465
      %v1484 = vmul.f32 %v1340, %v1466
      %v1485 = vld [vmem:[%s7] sm:$0xff]
      %v1486 = vld [vmem:[%s7 + $0x8] sm:$0xff]
      %v1487 = vld [vmem:[%s7 + $0x10] sm:$0xff]
      %v1488 = vld [vmem:[%s7 + $0x18] sm:$0xff]
      %v1489 = vld [vmem:[%s7 + $0x20] sm:$0xff]
      %v1490 = vld [vmem:[%s7 + $0x28] sm:$0xff]
      %v1491 = vpack.c.bf16 %v1468, %v1467
      %v1492 = vpack.c.bf16 %v1470, %v1469
      %v1493 = vpack.c.bf16 %v1472, %v1471
      %v1494 = vpack.c.bf16 %v1474, %v1473
      %v1495 = vpack.c.bf16 %v1476, %v1475
      %v1496 = vpack.c.bf16 %v1478, %v1477
      %v1497 = vpack.c.bf16 %v1480, %v1479
      %v1498 = vpack.c.bf16 %v1482, %v1481
      %v1499 = vpack.c.bf16 %v1484, %v1483
      %v1500 = vld [vmem:[%s8] sm:$0xff]
      %v1501 = vld [vmem:[%s8 + $0x8] sm:$0xff]
      %v1502 = vld [vmem:[%s8 + $0x10] sm:$0xff]
      %v1503 = vld [vmem:[%s8 + $0x18] sm:$0xff]
      %v1504 = vld [vmem:[%s8 + $0x20] sm:$0xff]
      %v1505 = vld [vmem:[%s8 + $0x28] sm:$0xff]
      %1507 = vset.pattern.permute.xlu0 0
      %1508 = vperm.xlu0 %1507, %v1500
      %v1509 = vpop.permute.xlu0 %1508
      %1512 = vset.pattern.permute.xlu0 0
      %1513 = vperm.xlu0 %1512, %v1501
      %v1514 = vpop.permute.xlu0 %1513
      %1517 = vset.pattern.permute.xlu0 0
      %1518 = vperm.xlu0 %1517, %v1502
      %v1519 = vpop.permute.xlu0 %1518
      %1522 = vset.pattern.permute.xlu0 0
      %1523 = vperm.xlu0 %1522, %v1503
      %v1524 = vpop.permute.xlu0 %1523
      %1527 = vset.pattern.permute.xlu0 0
      %1528 = vperm.xlu0 %1527, %v1504
      %v1529 = vpop.permute.xlu0 %1528
      %1532 = vset.pattern.permute.xlu0 0
      %1533 = vperm.xlu0 %1532, %v1505
      %v1534 = vpop.permute.xlu0 %1533
      %v1542 = vunpack.c.l.b16 %v1485
      %v1543 = vunpack.c.h.b16 %v1485
      %v1544 = vunpack.c.l.b16 %v1486
      %v1545 = vunpack.c.h.b16 %v1486
      %v1546 = vunpack.c.l.b16 %v1487
      %v1547 = vunpack.c.h.b16 %v1487
      %v1548 = vunpack.c.l.b16 %v1488
      %v1549 = vunpack.c.h.b16 %v1488
      %v1550 = vunpack.c.l.b16 %v1489
      %v1551 = vunpack.c.h.b16 %v1489
      %v1552 = vunpack.c.l.b16 %v1490
      %v1553 = vunpack.c.h.b16 %v1490
      %v1554 = vpack.c.b16 %v1544, %v1542
      %v1555 = vpack.c.b16 %v1545, %v1543
      %v1556 = vpack.c.b16 %v1548, %v1546
      %v1557 = vpack.c.b16 %v1549, %v1547
      %v1558 = vpack.c.b16 %v1552, %v1550
      %v1559 = vpack.c.b16 %v1553, %v1551
      %v1564 = vsel %vm844, %v1555, 0
      %v1567 = vsel %vm844, %v1557, 0
      %v1570 = vsel %vm844, %v1559, 0
      %1572 = vmatprep.subr.bf16.mxu0 0
      %1573 = vmatpush1.bf16.msra.mxu0 %v1491
      %1574 = vmatprep.subr.bf16.mxu0 0
      %1575 = vmatpush1.bf16.msra.mxu0 %v1492
      %1576 = vmatprep.subr.bf16.mxu0 0
      %1577 = vmatpush1.bf16.msra.mxu0 %v1493
      %1578 = vmatprep.subr.bf16.mxu0 0
      %1579 = vmatpush1.bf16.msra.mxu0 %v1494
      %1580 = vmatprep.subr.bf16.mxu0 0
      %1581 = vmatpush1.bf16.msra.mxu0 %v1495
      %1582 = vmatprep.subr.bf16.mxu0 0
      %1583 = vmatpush1.bf16.msra.mxu0 %v1496
      %1584 = vmatprep.subr.bf16.mxu0 0
      %1585 = vmatpush1.bf16.msra.mxu0 %v1497
      %1586 = vmatprep.subr.bf16.mxu0 0
      %1587 = vmatpush1.bf16.msra.mxu0 %v1498
      %1588 = vmatprep.subr.bf16.mxu0 0
      %1589 = vmatpush1.bf16.msra.mxu0 %v1499
      %1590 = vmatprep.subr.bf16.mxu0 0
      %1591 = vmatpush1.bf16.msra.mxu0 0
      %1592 = vmatprep.subr.bf16.mxu0 0
      %1593 = vmatpush1.bf16.msra.mxu0 0
      %1594 = vmatprep.subr.bf16.mxu0 0
      %1595 = vmatpush1.bf16.msra.mxu0 0
      %1596 = vmatprep.subr.bf16.mxu0 0
      %1597 = vmatpush1.bf16.msra.mxu0 0
      %1598 = vmatprep.subr.bf16.mxu0 0
      %1599 = vmatpush1.bf16.msra.mxu0 0
      %1600 = vmatprep.subr.bf16.mxu0 0
      %1601 = vmatpush1.bf16.msra.mxu0 0
      %1602 = vmatprep.subr.bf16.mxu0 0
      %1603 = vmatpush1.bf16.msra.mxu0 0
      %1604 = vmatprep.mubr.bf16.mxu0 %v1564
      %1605 = vmatmul.mubr.bf16.gmra.mrb[0].mxu0 %v1554
      %v1606 = vpop.f32.mrb[0].mxu0
      %v1607 = vadd.f32 %v1509, %v1606
      %v1608 = vpop.f32.mrb[0].mxu0
      %v1609 = vpop.f32.mrb[0].mxu0
      %v1610 = vadd.f32 %v1514, %v1609
      %v1611 = vpop.f32.mrb[0].mxu0
      %1612 = vmatprep.mubr.bf16.mxu0 %v1567
      %1613 = vmatmul.mubr.bf16.gmra.mrb[0].mxu0 %v1556
      %v1614 = vpop.f32.mrb[0].mxu0
      %v1615 = vadd.f32 %v1519, %v1614
      %v1616 = vpop.f32.mrb[0].mxu0
      %v1617 = vpop.f32.mrb[0].mxu0
      %v1618 = vadd.f32 %v1524, %v1617
      %v1619 = vpop.f32.mrb[0].mxu0
      %1620 = vmatprep.mubr.bf16.mxu0 %v1570
      %1621 = vmatmul.mubr.bf16.gmra.mrb[0].mxu0 %v1558
      %v1622 = vpop.f32.mrb[0].mxu0
      %v1623 = vadd.f32 %v1529, %v1622
      %v1624 = vpop.f32.mrb[0].mxu0
      %v1625 = vpop.f32.mrb[0].mxu0
      %v1626 = vadd.f32 %v1534, %v1625
      %v1627 = vpop.f32.mrb[0].mxu0
      %1628 = vdwg.mxu0
      %v1629 = vadd.f32 %v1607, %v889
      %v1630 = vadd.f32 %v1610, %v892
      %v1631 = vadd.f32 %v1615, %v897
      %v1632 = vadd.f32 %v1618, %v900
      %v1633 = vadd.f32 %v1623, %v905
      %v1634 = vadd.f32 %v1626, %v908
      %v1635 = vsel %vm844, %v1629, 0.0
      %1636 = vadd.xlane.f32.xlu0 %v1635
      %v1637 = vpop.xlane.xlu0 %1636
      %v1638 = vsel %vm844, %v1630, 0.0
      %1639 = vadd.xlane.f32.xlu0 %v1638
      %v1640 = vpop.xlane.xlu0 %1639
      %v1641 = vsel %vm844, %v1631, 0.0
      %1642 = vadd.xlane.f32.xlu0 %v1641
      %v1643 = vpop.xlane.xlu0 %1642
      %v1644 = vsel %vm844, %v1632, 0.0
      %1645 = vadd.xlane.f32.xlu0 %v1644
      %v1646 = vpop.xlane.xlu0 %1645
      %v1647 = vsel %vm844, %v1633, 0.0
      %1648 = vadd.xlane.f32.xlu0 %v1647
      %v1649 = vpop.xlane.xlu0 %1648
      %v1650 = vsel %vm844, %v1634, 0.0
      %1651 = vadd.xlane.f32.xlu0 %v1650
      %v1652 = vpop.xlane.xlu0 %1651
      %v1653 = vmul.f32 %v1637, %v929
      %v1654 = vmul.f32 %v1640, %v929
      %v1655 = vmul.f32 %v1643, %v929
      %v1656 = vmul.f32 %v1646, %v929
      %v1657 = vmul.f32 %v1649, %v929
      %v1658 = vmul.f32 %v1652, %v929
      %v1659 = vsub.f32 %v1629, %v1653
      %v1660 = vsub.f32 %v1630, %v1654
      %v1661 = vsub.f32 %v1631, %v1655
      %v1662 = vsub.f32 %v1632, %v1656
      %v1663 = vsub.f32 %v1633, %v1657
      %v1664 = vsub.f32 %v1634, %v1658
      %v1665 = vmul.f32 %v1659, %v1659
      %v1666 = vmul.f32 %v1660, %v1660
      %v1667 = vmul.f32 %v1661, %v1661
      %v1668 = vmul.f32 %v1662, %v1662
      %v1669 = vmul.f32 %v1663, %v1663
      %v1670 = vmul.f32 %v1664, %v1664
      %v1671 = vsel %vm844, %v1665, 0.0
      %1672 = vadd.xlane.f32.xlu0 %v1671
      %v1673 = vpop.xlane.xlu0 %1672
      %v1674 = vsel %vm844, %v1666, 0.0
      %1675 = vadd.xlane.f32.xlu0 %v1674
      %v1676 = vpop.xlane.xlu0 %1675
      %v1677 = vsel %vm844, %v1667, 0.0
      %1678 = vadd.xlane.f32.xlu0 %v1677
      %v1679 = vpop.xlane.xlu0 %1678
      %v1680 = vsel %vm844, %v1668, 0.0
      %1681 = vadd.xlane.f32.xlu0 %v1680
      %v1682 = vpop.xlane.xlu0 %1681
      %v1683 = vsel %vm844, %v1669, 0.0
      %1684 = vadd.xlane.f32.xlu0 %v1683
      %v1685 = vpop.xlane.xlu0 %1684
      %v1686 = vsel %vm844, %v1670, 0.0
      %1687 = vadd.xlane.f32.xlu0 %v1686
      %v1688 = vpop.xlane.xlu0 %1687
      %v1689 = vmul.f32 %v1673, %v929
      %v1690 = vmul.f32 %v1676, %v929
      %v1691 = vmul.f32 %v1679, %v929
      %v1692 = vmul.f32 %v1682, %v929
      %v1693 = vmul.f32 %v1685, %v929
      %v1694 = vmul.f32 %v1688, %v929
      %v1695 = vadd.f32 %v1689, 1e-05
      %v1696 = vadd.f32 %v1690, 1e-05
      %v1697 = vadd.f32 %v1691, 1e-05
      %v1698 = vadd.f32 %v1692, 1e-05
      %v1699 = vadd.f32 %v1693, 1e-05
      %v1700 = vadd.f32 %v1694, 1e-05
      %v1701 = vrsqrt.pop %v1695
      %v1702 = vrsqrt.pop %v1696
      %v1703 = vrsqrt.pop %v1697
      %v1704 = vrsqrt.pop %v1698
      %v1705 = vrsqrt.pop %v1699
      %v1706 = vrsqrt.pop %v1700
      %v1707 = vmul.f32 %v1659, %v1701
      %v1708 = vmul.f32 %v1660, %v1702
      %v1709 = vmul.f32 %v1661, %v1703
      %v1710 = vmul.f32 %v1662, %v1704
      %v1711 = vmul.f32 %v1663, %v1705
      %v1712 = vmul.f32 %v1664, %v1706
      %v1713 = vld [vmem:[%s9] sm:$0x1]
      %v1715 = vlaneseq
      %v1716 = vshrl.u32 %v1715, 7
      %v1717 = vsub.s32 0, %v1716
      %v1718 = vrot.slane %v1713, %v1717
      %v1720 = vmul.f32 %v1707, %v1718
      %v1721 = vmul.f32 %v1708, %v1718
      %v1722 = vmul.f32 %v1709, %v1718
      %v1723 = vmul.f32 %v1710, %v1718
      %v1724 = vmul.f32 %v1711, %v1718
      %v1725 = vmul.f32 %v1712, %v1718
      %v1726 = vld [vmem:[%s10] sm:$0x1]
      %v1728 = vlaneseq
      %v1729 = vshrl.u32 %v1728, 7
      %v1730 = vsub.s32 0, %v1729
      %v1731 = vrot.slane %v1726, %v1730
      %v1733 = vadd.f32 %v1720, %v1731
      %v1734 = vadd.f32 %v1721, %v1731
      %v1735 = vadd.f32 %v1722, %v1731
      %v1736 = vadd.f32 %v1723, %v1731
      %v1737 = vadd.f32 %v1724, %v1731
      %v1738 = vadd.f32 %v1725, %v1731
      %v1739 = vld [vmem:[%s11] sm:$0xf]
      %v1740 = vld [vmem:[%s11 + $0x4] sm:$0xf]
      %v1741 = vpack.c.bf16 %v1734, %v1733
      %v1742 = vpack.c.bf16 %v1736, %v1735
      %v1743 = vpack.c.bf16 %v1738, %v1737
      %v1744 = vld [vmem:[%s12] sm:$0x1]
      %v1746 = vlaneseq
      %v1747 = vshrl.u32 %v1746, 7
      %v1748 = vsub.s32 0, %v1747
      %v1749 = vrot.slane %v1744, %v1748
      %v1753 = vunpack.c.l.b16 %v1739
      %v1754 = vunpack.c.l.b16 %v1740
      %v1755 = vpack.c.b16 %v1754, %v1753
      %v1758 = vsel %vm844, %v1741, 0
      %v1761 = vsel %vm844, %v1742, 0
      %v1764 = vsel %vm844, %v1743, 0
      %1766 = vmatprep.subr.bf16.mxu0 0
      %1767 = vmatpush1.bf16.msra.mxu0 %v1755
      %1768 = vmatprep.subr.bf16.mxu0 0
      %1769 = vmatpush1.bf16.msra.mxu0 0
      %1770 = vmatprep.subr.bf16.mxu0 0
      %1771 = vmatpush1.bf16.msra.mxu0 0
      %1772 = vmatprep.subr.bf16.mxu0 0
      %1773 = vmatpush1.bf16.msra.mxu0 0
      %1774 = vmatprep.subr.bf16.mxu0 0
      %1775 = vmatpush1.bf16.msra.mxu0 0
      %1776 = vmatprep.subr.bf16.mxu0 0
      %1777 = vmatpush1.bf16.msra.mxu0 0
      %1778 = vmatprep.subr.bf16.mxu0 0
      %1779 = vmatpush1.bf16.msra.mxu0 0
      %1780 = vmatprep.subr.bf16.mxu0 0
      %1781 = vmatpush1.bf16.msra.mxu0 0
      %1782 = vmatprep.subr.bf16.mxu0 0
      %1783 = vmatpush1.bf16.msra.mxu0 0
      %1784 = vmatprep.subr.bf16.mxu0 0
      %1785 = vmatpush1.bf16.msra.mxu0 0
      %1786 = vmatprep.subr.bf16.mxu0 0
      %1787 = vmatpush1.bf16.msra.mxu0 0
      %1788 = vmatprep.subr.bf16.mxu0 0
      %1789 = vmatpush1.bf16.msra.mxu0 0
      %1790 = vmatprep.subr.bf16.mxu0 0
      %1791 = vmatpush1.bf16.msra.mxu0 0
      %1792 = vmatprep.subr.bf16.mxu0 0
      %1793 = vmatpush1.bf16.msra.mxu0 0
      %1794 = vmatprep.subr.bf16.mxu0 0
      %1795 = vmatpush1.bf16.msra.mxu0 0
      %1796 = vmatprep.subr.bf16.mxu0 0
      %1797 = vmatpush1.bf16.msra.mxu0 0
      %1798 = vmatprep.mubr.bf16.mxu0 0
      %1799 = vmatmul.mubr.bf16.gmra.mrb[0].mxu0 %v1758
      %v1800 = vpop.f32.mrb[0].mxu0
      %v1801 = vadd.f32 %v1749, %v1800
      %v1802 = vpop.f32.mrb[0].mxu0
      %v1803 = vpop.f32.mrb[0].mxu0
      %v1804 = vadd.f32 %v1749, %v1803
      %v1805 = vpop.f32.mrb[0].mxu0
      %1806 = vmatprep.mubr.bf16.mxu0 0
      %1807 = vmatmul.mubr.bf16.gmra.mrb[0].mxu0 %v1761
      %v1808 = vpop.f32.mrb[0].mxu0
      %v1809 = vadd.f32 %v1749, %v1808
      %v1810 = vpop.f32.mrb[0].mxu0
      %v1811 = vpop.f32.mrb[0].mxu0
      %v1812 = vadd.f32 %v1749, %v1811
      %v1813 = vpop.f32.mrb[0].mxu0
      %1814 = vmatprep.mubr.bf16.mxu0 0
      %1815 = vmatmul.mubr.bf16.gmra.mrb[0].mxu0 %v1764
      %v1816 = vpop.f32.mrb[0].mxu0
      %v1817 = vadd.f32 %v1749, %v1816
      %v1818 = vpop.f32.mrb[0].mxu0
      %v1819 = vpop.f32.mrb[0].mxu0
      %v1820 = vadd.f32 %v1749, %v1819
      %v1821 = vpop.f32.mrb[0].mxu0
      %1822 = vdwg.mxu0
      %v1823 = vmul.f32 %v1801, 0.5
      %v1824 = vmul.f32 %v1804, 0.5
      %v1825 = vmul.f32 %v1809, 0.5
      %v1826 = vmul.f32 %v1812, 0.5
      %v1827 = vmul.f32 %v1817, 0.5
      %v1828 = vmul.f32 %v1820, 0.5
      %v1829 = vmul.f32 %v1801, 0.044715
      %v1830 = vmul.f32 %v1804, 0.044715
      %v1831 = vmul.f32 %v1809, 0.044715
      %v1832 = vmul.f32 %v1812, 0.044715
      %v1833 = vmul.f32 %v1817, 0.044715
      %v1834 = vmul.f32 %v1820, 0.044715
      %v1835 = vmul.f32 %v1829, %v1801
      %v1836 = vmul.f32 %v1830, %v1804
      %v1837 = vmul.f32 %v1831, %v1809
      %v1838 = vmul.f32 %v1832, %v1812
      %v1839 = vmul.f32 %v1833, %v1817
      %v1840 = vmul.f32 %v1834, %v1820
      %v1841 = vmul.f32 %v1835, %v1801
      %v1842 = vmul.f32 %v1836, %v1804
      %v1843 = vmul.f32 %v1837, %v1809
      %v1844 = vmul.f32 %v1838, %v1812
      %v1845 = vmul.f32 %v1839, %v1817
      %v1846 = vmul.f32 %v1840, %v1820
      %v1847 = vadd.f32 %v1801, %v1841
      %v1848 = vadd.f32 %v1804, %v1842
      %v1849 = vadd.f32 %v1809, %v1843
      %v1850 = vadd.f32 %v1812, %v1844
      %v1851 = vadd.f32 %v1817, %v1845
      %v1852 = vadd.f32 %v1820, %v1846
      %v1853 = vmul.f32 %v1847, 0.7978846
      %v1854 = vmul.f32 %v1848, 0.7978846
      %v1855 = vmul.f32 %v1849, 0.7978846
      %v1856 = vmul.f32 %v1850, 0.7978846
      %v1857 = vmul.f32 %v1851, 0.7978846
      %v1858 = vmul.f32 %v1852, 0.7978846
      %v1859 = vtanh.pop %v1853
      %v1860 = vtanh.pop %v1854
      %v1861 = vtanh.pop %v1855
      %v1862 = vtanh.pop %v1856
      %v1863 = vtanh.pop %v1857
      %v1864 = vtanh.pop %v1858
      %v1865 = vadd.f32 %v1859, 1.0
      %v1866 = vadd.f32 %v1860, 1.0
      %v1867 = vadd.f32 %v1861, 1.0
      %v1868 = vadd.f32 %v1862, 1.0
      %v1869 = vadd.f32 %v1863, 1.0
      %v1870 = vadd.f32 %v1864, 1.0
      %v1871 = vmul.f32 %v1823, %v1865
      %v1872 = vmul.f32 %v1824, %v1866
      %v1873 = vmul.f32 %v1825, %v1867
      %v1874 = vmul.f32 %v1826, %v1868
      %v1875 = vmul.f32 %v1827, %v1869
      %v1876 = vmul.f32 %v1828, %v1870
      %v1877 = vld [vmem:[%s13] sm:$0xf]
      %v1878 = vld [vmem:[%s13 + $0x4] sm:$0xf]
      %v1879 = vld [vmem:[%s13 + $0x8] sm:$0xf]
      %v1880 = vld [vmem:[%s13 + $0xc] sm:$0xf]
      %v1881 = vld [vmem:[%s13 + $0x10] sm:$0xf]
      %v1882 = vld [vmem:[%s13 + $0x14] sm:$0xf]
      %v1883 = vpack.c.bf16 %v1872, %v1871
      %v1884 = vpack.c.bf16 %v1874, %v1873
      %v1885 = vpack.c.bf16 %v1876, %v1875
      %v1886 = vld [vmem:[%s14] sm:$0x1]
      %v1888 = vlaneseq
      %v1889 = vshrl.u32 %v1888, 7
      %v1890 = vsub.s32 0, %v1889
      %v1891 = vrot.slane %v1886, %v1890
      %v1899 = vunpack.c.l.b16 %v1877
      %v1900 = vunpack.c.l.b16 %v1878
      %v1901 = vunpack.c.l.b16 %v1879
      %v1902 = vunpack.c.l.b16 %v1880
      %v1903 = vunpack.c.l.b16 %v1881
      %v1904 = vunpack.c.l.b16 %v1882
      %v1905 = vpack.c.b16 %v1900, %v1899
      %v1906 = vpack.c.b16 %v1902, %v1901
      %v1907 = vpack.c.b16 %v1904, %v1903
      %v1912 = vsel %vm1190, %v1883, 0
      %v1915 = vsel %vm1190, %v1884, 0
      %v1918 = vsel %vm1190, %v1885, 0
      %1920 = vmatprep.subr.bf16.mxu0 0
      %1921 = vmatpush1.bf16.msra.mxu0 %v1905
      %1922 = vmatprep.subr.bf16.mxu0 0
      %1923 = vmatpush1.bf16.msra.mxu0 %v1906
      %1924 = vmatprep.subr.bf16.mxu0 0
      %1925 = vmatpush1.bf16.msra.mxu0 %v1907
      %1926 = vmatprep.subr.bf16.mxu0 0
      %1927 = vmatpush1.bf16.msra.mxu0 0
      %1928 = vmatprep.subr.bf16.mxu0 0
      %1929 = vmatpush1.bf16.msra.mxu0 0
      %1930 = vmatprep.subr.bf16.mxu0 0
      %1931 = vmatpush1.bf16.msra.mxu0 0
      %1932 = vmatprep.subr.bf16.mxu0 0
      %1933 = vmatpush1.bf16.msra.mxu0 0
      %1934 = vmatprep.subr.bf16.mxu0 0
      %1935 = vmatpush1.bf16.msra.mxu0 0
      %1936 = vmatprep.subr.bf16.mxu0 0
      %1937 = vmatpush1.bf16.msra.mxu0 0
      %1938 = vmatprep.subr.bf16.mxu0 0
      %1939 = vmatpush1.bf16.msra.mxu0 0
      %1940 = vmatprep.subr.bf16.mxu0 0
      %1941 = vmatpush1.bf16.msra.mxu0 0
      %1942 = vmatprep.subr.bf16.mxu0 0
      %1943 = vmatpush1.bf16.msra.mxu0 0
      %1944 = vmatprep.subr.bf16.mxu0 0
      %1945 = vmatpush1.bf16.msra.mxu0 0
      %1946 = vmatprep.subr.bf16.mxu0 0
      %1947 = vmatpush1.bf16.msra.mxu0 0
      %1948 = vmatprep.subr.bf16.mxu0 0
      %1949 = vmatpush1.bf16.msra.mxu0 0
      %1950 = vmatprep.subr.bf16.mxu0 0
      %1951 = vmatpush1.bf16.msra.mxu0 0
      %1952 = vmatprep.mubr.bf16.mxu0 0
      %1953 = vmatmul.mubr.bf16.gmra.mrb[0].mxu0 %v1912
      %v1954 = vpop.f32.mrb[0].mxu0
      %v1955 = vadd.f32 %v1891, %v1954
      %v1956 = vpop.f32.mrb[0].mxu0
      %v1957 = vpop.f32.mrb[0].mxu0
      %v1958 = vadd.f32 %v1891, %v1957
      %v1959 = vpop.f32.mrb[0].mxu0
      %1960 = vmatprep.mubr.bf16.mxu0 0
      %1961 = vmatmul.mubr.bf16.gmra.mrb[0].mxu0 %v1915
      %v1962 = vpop.f32.mrb[0].mxu0
      %v1963 = vadd.f32 %v1891, %v1962
      %v1964 = vpop.f32.mrb[0].mxu0
      %v1965 = vpop.f32.mrb[0].mxu0
      %v1966 = vadd.f32 %v1891, %v1965
      %v1967 = vpop.f32.mrb[0].mxu0
      %1968 = vmatprep.mubr.bf16.mxu0 0
      %1969 = vmatmul.mubr.bf16.gmra.mrb[0].mxu0 %v1918
      %v1970 = vpop.f32.mrb[0].mxu0
      %v1971 = vadd.f32 %v1891, %v1970
      %v1972 = vpop.f32.mrb[0].mxu0
      %v1973 = vpop.f32.mrb[0].mxu0
      %v1974 = vadd.f32 %v1891, %v1973
      %v1975 = vpop.f32.mrb[0].mxu0
      %1976 = vdwg.mxu0
      %v1977 = vadd.f32 %v1955, %v1629
      %v1978 = vadd.f32 %v1958, %v1630
      %v1979 = vadd.f32 %v1963, %v1631
      %v1980 = vadd.f32 %v1966, %v1632
      %v1981 = vadd.f32 %v1971, %v1633
      %v1982 = vadd.f32 %v1974, %v1634
      %v1983 = vsel %vm844, %v1977, 0.0
      %1984 = vadd.xlane.f32.xlu0 %v1983
      %v1985 = vpop.xlane.xlu0 %1984
      %v1986 = vsel %vm844, %v1978, 0.0
      %1987 = vadd.xlane.f32.xlu0 %v1986
      %v1988 = vpop.xlane.xlu0 %1987
      %v1989 = vsel %vm844, %v1979, 0.0
      %1990 = vadd.xlane.f32.xlu0 %v1989
      %v1991 = vpop.xlane.xlu0 %1990
      %v1992 = vsel %vm844, %v1980, 0.0
      %1993 = vadd.xlane.f32.xlu0 %v1992
      %v1994 = vpop.xlane.xlu0 %1993
      %v1995 = vsel %vm844, %v1981, 0.0
      %1996 = vadd.xlane.f32.xlu0 %v1995
      %v1997 = vpop.xlane.xlu0 %1996
      %v1998 = vsel %vm844, %v1982, 0.0
      %1999 = vadd.xlane.f32.xlu0 %v1998
      %v2000 = vpop.xlane.xlu0 %1999
      %v2001 = vmul.f32 %v1985, %v929
      %v2002 = vmul.f32 %v1988, %v929
      %v2003 = vmul.f32 %v1991, %v929
      %v2004 = vmul.f32 %v1994, %v929
      %v2005 = vmul.f32 %v1997, %v929
      %v2006 = vmul.f32 %v2000, %v929
      %v2007 = vsub.f32 %v1977, %v2001
      %v2008 = vsub.f32 %v1978, %v2002
      %v2009 = vsub.f32 %v1979, %v2003
      %v2010 = vsub.f32 %v1980, %v2004
      %v2011 = vsub.f32 %v1981, %v2005
      %v2012 = vsub.f32 %v1982, %v2006
      %v2013 = vmul.f32 %v2007, %v2007
      %v2014 = vmul.f32 %v2008, %v2008
      %v2015 = vmul.f32 %v2009, %v2009
      %v2016 = vmul.f32 %v2010, %v2010
      %v2017 = vmul.f32 %v2011, %v2011
      %v2018 = vmul.f32 %v2012, %v2012
      %v2019 = vsel %vm844, %v2013, 0.0
      %2020 = vadd.xlane.f32.xlu0 %v2019
      %v2021 = vpop.xlane.xlu0 %2020
      %v2022 = vsel %vm844, %v2014, 0.0
      %2023 = vadd.xlane.f32.xlu0 %v2022
      %v2024 = vpop.xlane.xlu0 %2023
      %v2025 = vsel %vm844, %v2015, 0.0
      %2026 = vadd.xlane.f32.xlu0 %v2025
      %v2027 = vpop.xlane.xlu0 %2026
      %v2028 = vsel %vm844, %v2016, 0.0
      %2029 = vadd.xlane.f32.xlu0 %v2028
      %v2030 = vpop.xlane.xlu0 %2029
      %v2031 = vsel %vm844, %v2017, 0.0
      %2032 = vadd.xlane.f32.xlu0 %v2031
      %v2033 = vpop.xlane.xlu0 %2032
      %v2034 = vsel %vm844, %v2018, 0.0
      %2035 = vadd.xlane.f32.xlu0 %v2034
      %v2036 = vpop.xlane.xlu0 %2035
      %v2037 = vmul.f32 %v2021, %v929
      %v2038 = vmul.f32 %v2024, %v929
      %v2039 = vmul.f32 %v2027, %v929
      %v2040 = vmul.f32 %v2030, %v929
      %v2041 = vmul.f32 %v2033, %v929
      %v2042 = vmul.f32 %v2036, %v929
      %v2043 = vadd.f32 %v2037, 1e-05
      %v2044 = vadd.f32 %v2038, 1e-05
      %v2045 = vadd.f32 %v2039, 1e-05
      %v2046 = vadd.f32 %v2040, 1e-05
      %v2047 = vadd.f32 %v2041, 1e-05
      %v2048 = vadd.f32 %v2042, 1e-05
      %v2049 = vrsqrt.pop %v2043
      %v2050 = vrsqrt.pop %v2044
      %v2051 = vrsqrt.pop %v2045
      %v2052 = vrsqrt.pop %v2046
      %v2053 = vrsqrt.pop %v2047
      %v2054 = vrsqrt.pop %v2048
      %v2055 = vmul.f32 %v2007, %v2049
      %v2056 = vmul.f32 %v2008, %v2050
      %v2057 = vmul.f32 %v2009, %v2051
      %v2058 = vmul.f32 %v2010, %v2052
      %v2059 = vmul.f32 %v2011, %v2053
      %v2060 = vmul.f32 %v2012, %v2054
      %s2061 = scalar_lea.vmem %s3, 1
      %v2062 = vld [vmem:[%s2061] sm:$0x1]
      %v2064 = vlaneseq
      %v2065 = vshrl.u32 %v2064, 7
      %v2066 = vsub.s32 0, %v2065
      %v2067 = vrot.slane %v2062, %v2066
      %v2069 = vmul.f32 %v2055, %v2067
      %v2070 = vmul.f32 %v2056, %v2067
      %v2071 = vmul.f32 %v2057, %v2067
      %v2072 = vmul.f32 %v2058, %v2067
      %v2073 = vmul.f32 %v2059, %v2067
      %v2074 = vmul.f32 %v2060, %v2067
      %s2075 = scalar_lea.vmem %s4, 1
      %v2076 = vld [vmem:[%s2075] sm:$0x1]
      %v2078 = vlaneseq
      %v2079 = vshrl.u32 %v2078, 7
      %v2080 = vsub.s32 0, %v2079
      %v2081 = vrot.slane %v2076, %v2080
      %v2083 = vadd.f32 %v2069, %v2081
      %v2084 = vadd.f32 %v2070, %v2081
      %v2085 = vadd.f32 %v2071, %v2081
      %v2086 = vadd.f32 %v2072, %v2081
      %v2087 = vadd.f32 %v2073, %v2081
      %v2088 = vadd.f32 %v2074, %v2081
      %s2089 = scalar_lea.vmem %s5, 72
      %v2090 = vld [vmem:[%s2089] sm:$0xf]
      %v2091 = vld [vmem:[%s2089 + $0x4] sm:$0xf]
      %v2092 = vld [vmem:[%s2089 + $0x8] sm:$0xf]
      %v2093 = vld [vmem:[%s2089 + $0xc] sm:$0xf]
      %v2094 = vld [vmem:[%s2089 + $0x10] sm:$0xf]
      %v2095 = vld [vmem:[%s2089 + $0x14] sm:$0xf]
      %v2096 = vld [vmem:[%s2089 + $0x18] sm:$0xf]
      %v2097 = vld [vmem:[%s2089 + $0x1c] sm:$0xf]
      %v2098 = vld [vmem:[%s2089 + $0x20] sm:$0xf]
      %v2099 = vld [vmem:[%s2089 + $0x24] sm:$0xf]
      %v2100 = vld [vmem:[%s2089 + $0x28] sm:$0xf]
      %v2101 = vld [vmem:[%s2089 + $0x2c] sm:$0xf]
      %v2102 = vld [vmem:[%s2089 + $0x30] sm:$0xf]
      %v2103 = vld [vmem:[%s2089 + $0x34] sm:$0xf]
      %v2104 = vld [vmem:[%s2089 + $0x38] sm:$0xf]
      %v2105 = vld [vmem:[%s2089 + $0x3c] sm:$0xf]
      %v2106 = vld [vmem:[%s2089 + $0x40] sm:$0xf]
      %v2107 = vld [vmem:[%s2089 + $0x44] sm:$0xf]
      %v2108 = vpack.c.bf16 %v2084, %v2083
      %v2109 = vpack.c.bf16 %v2086, %v2085
      %v2110 = vpack.c.bf16 %v2088, %v2087
      %s2111 = scalar_lea.vmem %s6, 144
      %v2112 = vld [vmem:[%s2111] sm:$0xff]
      %v2113 = vld [vmem:[%s2111 + $0x8] sm:$0xff]
      %v2114 = vld [vmem:[%s2111 + $0x10] sm:$0xff]
      %v2115 = vld [vmem:[%s2111 + $0x18] sm:$0xff]
      %v2116 = vld [vmem:[%s2111 + $0x20] sm:$0xff]
      %v2117 = vld [vmem:[%s2111 + $0x28] sm:$0xff]
      %v2118 = vld [vmem:[%s2111 + $0x30] sm:$0xff]
      %v2119 = vld [vmem:[%s2111 + $0x38] sm:$0xff]
      %v2120 = vld [vmem:[%s2111 + $0x40] sm:$0xff]
      %v2121 = vld [vmem:[%s2111 + $0x48] sm:$0xff]
      %v2122 = vld [vmem:[%s2111 + $0x50] sm:$0xff]
      %v2123 = vld [vmem:[%s2111 + $0x58] sm:$0xff]
      %v2124 = vld [vmem:[%s2111 + $0x60] sm:$0xff]
      %v2125 = vld [vmem:[%s2111 + $0x68] sm:$0xff]
      %v2126 = vld [vmem:[%s2111 + $0x70] sm:$0xff]
      %v2127 = vld [vmem:[%s2111 + $0x78] sm:$0xff]
      %v2128 = vld [vmem:[%s2111 + $0x80] sm:$0xff]
      %v2129 = vld [vmem:[%s2111 + $0x88] sm:$0xff]
      %2131 = vset.pattern.permute.xlu0 0
      %2132 = vperm.xlu0 %2131, %v2112
      %v2133 = vpop.permute.xlu0 %2132
      %2136 = vset.pattern.permute.xlu0 0
      %2137 = vperm.xlu0 %2136, %v2113
      %v2138 = vpop.permute.xlu0 %2137
      %2141 = vset.pattern.permute.xlu0 0
      %2142 = vperm.xlu0 %2141, %v2114
      %v2143 = vpop.permute.xlu0 %2142
      %2146 = vset.pattern.permute.xlu0 0
      %2147 = vperm.xlu0 %2146, %v2115
      %v2148 = vpop.permute.xlu0 %2147
      %2151 = vset.pattern.permute.xlu0 0
      %2152 = vperm.xlu0 %2151, %v2116
      %v2153 = vpop.permute.xlu0 %2152
      %2156 = vset.pattern.permute.xlu0 0
      %2157 = vperm.xlu0 %2156, %v2117
      %v2158 = vpop.permute.xlu0 %2157
      %2161 = vset.pattern.permute.xlu0 0
      %2162 = vperm.xlu0 %2161, %v2118
      %v2163 = vpop.permute.xlu0 %2162
      %2166 = vset.pattern.permute.xlu0 0
      %2167 = vperm.xlu0 %2166, %v2119
      %v2168 = vpop.permute.xlu0 %2167
      %2171 = vset.pattern.permute.xlu0 0
      %2172 = vperm.xlu0 %2171, %v2120
      %v2173 = vpop.permute.xlu0 %2172
      %2176 = vset.pattern.permute.xlu0 0
      %2177 = vperm.xlu0 %2176, %v2121
      %v2178 = vpop.permute.xlu0 %2177
      %2181 = vset.pattern.permute.xlu0 0
      %2182 = vperm.xlu0 %2181, %v2122
      %v2183 = vpop.permute.xlu0 %2182
      %2186 = vset.pattern.permute.xlu0 0
      %2187 = vperm.xlu0 %2186, %v2123
      %v2188 = vpop.permute.xlu0 %2187
      %2191 = vset.pattern.permute.xlu0 0
      %2192 = vperm.xlu0 %2191, %v2124
      %v2193 = vpop.permute.xlu0 %2192
      %2196 = vset.pattern.permute.xlu0 0
      %2197 = vperm.xlu0 %2196, %v2125
      %v2198 = vpop.permute.xlu0 %2197
      %2201 = vset.pattern.permute.xlu0 0
      %2202 = vperm.xlu0 %2201, %v2126
      %v2203 = vpop.permute.xlu0 %2202
      %2206 = vset.pattern.permute.xlu0 0
      %2207 = vperm.xlu0 %2206, %v2127
      %v2208 = vpop.permute.xlu0 %2207
      %2211 = vset.pattern.permute.xlu0 0
      %2212 = vperm.xlu0 %2211, %v2128
      %v2213 = vpop.permute.xlu0 %2212
      %2216 = vset.pattern.permute.xlu0 0
      %2217 = vperm.xlu0 %2216, %v2129
      %v2218 = vpop.permute.xlu0 %2217
      %v2238 = vunpack.c.l.b16 %v2090
      %v2239 = vunpack.c.l.b16 %v2091
      %v2240 = vunpack.c.l.b16 %v2092
      %v2241 = vunpack.c.l.b16 %v2093
      %v2242 = vunpack.c.l.b16 %v2094
      %v2243 = vunpack.c.l.b16 %v2095
      %v2244 = vunpack.c.l.b16 %v2096
      %v2245 = vunpack.c.l.b16 %v2097
      %v2246 = vunpack.c.l.b16 %v2098
      %v2247 = vunpack.c.l.b16 %v2099
      %v2248 = vunpack.c.l.b16 %v2100
      %v2249 = vunpack.c.l.b16 %v2101
      %v2250 = vunpack.c.l.b16 %v2102
      %v2251 = vunpack.c.l.b16 %v2103
      %v2252 = vunpack.c.l.b16 %v2104
      %v2253 = vunpack.c.l.b16 %v2105
      %v2254 = vunpack.c.l.b16 %v2106
      %v2255 = vunpack.c.l.b16 %v2107
      %v2256 = vpack.c.b16 %v2239, %v2238
      %v2257 = vpack.c.b16 %v2241, %v2240
      %v2258 = vpack.c.b16 %v2243, %v2242
      %v2259 = vpack.c.b16 %v2245, %v2244
      %v2260 = vpack.c.b16 %v2247, %v2246
      %v2261 = vpack.c.b16 %v2249, %v2248
      %v2262 = vpack.c.b16 %v2251, %v2250
      %v2263 = vpack.c.b16 %v2253, %v2252
      %v2264 = vpack.c.b16 %v2255, %v2254
      %v2266 = vsel %vm1190, %v2256, 0
      %v2269 = vsel %vm1190, %v2257, 0
      %v2272 = vsel %vm1190, %v2258, 0
      %v2275 = vsel %vm1190, %v2259, 0
      %v2278 = vsel %vm1190, %v2260, 0
      %v2281 = vsel %vm1190, %v2261, 0
      %v2284 = vsel %vm1190, %v2262, 0
      %v2287 = vsel %vm1190, %v2263, 0
      %v2290 = vsel %vm1190, %v2264, 0
      %2292 = vmatprep.subr.bf16.mxu0 0
      %2293 = vmatpush1.bf16.msra.mxu0 %v2108
      %2294 = vmatprep.subr.bf16.mxu0 0
      %2295 = vmatpush1.bf16.msra.mxu0 %v2109
      %2296 = vmatprep.subr.bf16.mxu0 0
      %2297 = vmatpush1.bf16.msra.mxu0 %v2110
      %2298 = vmatprep.subr.bf16.mxu0 0
      %2299 = vmatpush1.bf16.msra.mxu0 0
      %2300 = vmatprep.subr.bf16.mxu0 0
      %2301 = vmatpush1.bf16.msra.mxu0 0
      %2302 = vmatprep.subr.bf16.mxu0 0
      %2303 = vmatpush1.bf16.msra.mxu0 0
      %2304 = vmatprep.subr.bf16.mxu0 0
      %2305 = vmatpush1.bf16.msra.mxu0 0
      %2306 = vmatprep.subr.bf16.mxu0 0
      %2307 = vmatpush1.bf16.msra.mxu0 0
      %2308 = vmatprep.subr.bf16.mxu0 0
      %2309 = vmatpush1.bf16.msra.mxu0 0
      %2310 = vmatprep.subr.bf16.mxu0 0
      %2311 = vmatpush1.bf16.msra.mxu0 0
      %2312 = vmatprep.subr.bf16.mxu0 0
      %2313 = vmatpush1.bf16.msra.mxu0 0
      %2314 = vmatprep.subr.bf16.mxu0 0
      %2315 = vmatpush1.bf16.msra.mxu0 0
      %2316 = vmatprep.subr.bf16.mxu0 0
      %2317 = vmatpush1.bf16.msra.mxu0 0
      %2318 = vmatprep.subr.bf16.mxu0 0
      %2319 = vmatpush1.bf16.msra.mxu0 0
      %2320 = vmatprep.subr.bf16.mxu0 0
      %2321 = vmatpush1.bf16.msra.mxu0 0
      %2322 = vmatprep.subr.bf16.mxu0 0
      %2323 = vmatpush1.bf16.msra.mxu0 0
      %2324 = vmatprep.mubr.bf16.mxu0 0
      %2325 = vmatmul.mubr.bf16.gmra.mrb[0].mxu0 %v2266
      %v2326 = vpop.f32.mrb[0].mxu0
      %v2327 = vadd.f32 %v2133, %v2326
      %v2328 = vpop.f32.mrb[0].mxu0
      %v2329 = vpop.f32.mrb[0].mxu0
      %v2330 = vadd.f32 %v2138, %v2329
      %v2331 = vpop.f32.mrb[0].mxu0
      %2332 = vmatprep.mubr.bf16.mxu0 0
      %2333 = vmatmul.mubr.bf16.gmra.mrb[0].mxu0 %v2269
      %v2334 = vpop.f32.mrb[0].mxu0
      %v2335 = vadd.f32 %v2143, %v2334
      %v2336 = vpop.f32.mrb[0].mxu0
      %v2337 = vpop.f32.mrb[0].mxu0
      %v2338 = vadd.f32 %v2148, %v2337
      %v2339 = vpop.f32.mrb[0].mxu0
      %2340 = vmatprep.mubr.bf16.mxu0 0
      %2341 = vmatmul.mubr.bf16.gmra.mrb[0].mxu0 %v2272
      %v2342 = vpop.f32.mrb[0].mxu0
      %v2343 = vadd.f32 %v2153, %v2342
      %v2344 = vpop.f32.mrb[0].mxu0
      %v2345 = vpop.f32.mrb[0].mxu0
      %v2346 = vadd.f32 %v2158, %v2345
      %v2347 = vpop.f32.mrb[0].mxu0
      %2348 = vmatprep.mubr.bf16.mxu0 0
      %2349 = vmatmul.mubr.bf16.gmra.mrb[0].mxu0 %v2275
      %v2350 = vpop.f32.mrb[0].mxu0
      %v2351 = vadd.f32 %v2163, %v2350
      %v2352 = vpop.f32.mrb[0].mxu0
      %v2353 = vpop.f32.mrb[0].mxu0
      %v2354 = vadd.f32 %v2168, %v2353
      %v2355 = vpop.f32.mrb[0].mxu0
      %2356 = vmatprep.mubr.bf16.mxu0 0
      %2357 = vmatmul.mubr.bf16.gmra.mrb[0].mxu0 %v2278
      %v2358 = vpop.f32.mrb[0].mxu0
      %v2359 = vadd.f32 %v2173, %v2358
      %v2360 = vpop.f32.mrb[0].mxu0
      %v2361 = vpop.f32.mrb[0].mxu0
      %v2362 = vadd.f32 %v2178, %v2361
      %v2363 = vpop.f32.mrb[0].mxu0
      %2364 = vmatprep.mubr.bf16.mxu0 0
      %2365 = vmatmul.mubr.bf16.gmra.mrb[0].mxu0 %v2281
      %v2366 = vpop.f32.mrb[0].mxu0
      %v2367 = vadd.f32 %v2183, %v2366
      %v2368 = vpop.f32.mrb[0].mxu0
      %v2369 = vpop.f32.mrb[0].mxu0
      %v2370 = vadd.f32 %v2188, %v2369
      %v2371 = vpop.f32.mrb[0].mxu0
      %2372 = vmatprep.mubr.bf16.mxu0 0
      %2373 = vmatmul.mubr.bf16.gmra.mrb[0].mxu0 %v2284
      %v2374 = vpop.f32.mrb[0].mxu0
      %v2375 = vadd.f32 %v2193, %v2374
      %v2376 = vpop.f32.mrb[0].mxu0
      %v2377 = vpop.f32.mrb[0].mxu0
      %v2378 = vadd.f32 %v2198, %v2377
      %v2379 = vpop.f32.mrb[0].mxu0
      %2380 = vmatprep.mubr.bf16.mxu0 0
      %2381 = vmatmul.mubr.bf16.gmra.mrb[0].mxu0 %v2287
      %v2382 = vpop.f32.mrb[0].mxu0
      %v2383 = vadd.f32 %v2203, %v2382
      %v2384 = vpop.f32.mrb[0].mxu0
      %v2385 = vpop.f32.mrb[0].mxu0
      %v2386 = vadd.f32 %v2208, %v2385
      %v2387 = vpop.f32.mrb[0].mxu0
      %2388 = vmatprep.mubr.bf16.mxu0 0
      %2389 = vmatmul.mubr.bf16.gmra.mrb[0].mxu0 %v2290
      %v2390 = vpop.f32.mrb[0].mxu0
      %v2391 = vadd.f32 %v2213, %v2390
      %v2392 = vpop.f32.mrb[0].mxu0
      %v2393 = vpop.f32.mrb[0].mxu0
      %v2394 = vadd.f32 %v2218, %v2393
      %v2395 = vpop.f32.mrb[0].mxu0
      %2396 = vdwg.mxu0
      %v2397 = vmul.f32 %v2327, 0.5
      %v2398 = vmul.f32 %v2330, 0.5
      %v2399 = vmul.f32 %v2335, 0.5
      %v2400 = vmul.f32 %v2338, 0.5
      %v2401 = vmul.f32 %v2343, 0.5
      %v2402 = vmul.f32 %v2346, 0.5
      %v2403 = vmul.f32 %v2351, 0.5
      %v2404 = vmul.f32 %v2354, 0.5
      %v2405 = vmul.f32 %v2359, 0.5
      %v2406 = vmul.f32 %v2362, 0.5
      %v2407 = vmul.f32 %v2367, 0.5
      %v2408 = vmul.f32 %v2370, 0.5
      %v2409 = vmul.f32 %v2375, 0.5
      %v2410 = vmul.f32 %v2378, 0.5
      %v2411 = vmul.f32 %v2383, 0.5
      %v2412 = vmul.f32 %v2386, 0.5
      %v2413 = vmul.f32 %v2391, 0.5
      %v2414 = vmul.f32 %v2394, 0.5
      %v2415 = vmul.f32 %v2327, 0.044715
      %v2416 = vmul.f32 %v2330, 0.044715
      %v2417 = vmul.f32 %v2335, 0.044715
      %v2418 = vmul.f32 %v2338, 0.044715
      %v2419 = vmul.f32 %v2343, 0.044715
      %v2420 = vmul.f32 %v2346, 0.044715
      %v2421 = vmul.f32 %v2351, 0.044715
      %v2422 = vmul.f32 %v2354, 0.044715
      %v2423 = vmul.f32 %v2359, 0.044715
      %v2424 = vmul.f32 %v2362, 0.044715
      %v2425 = vmul.f32 %v2367, 0.044715
      %v2426 = vmul.f32 %v2370, 0.044715
      %v2427 = vmul.f32 %v2375, 0.044715
      %v2428 = vmul.f32 %v2378, 0.044715
      %v2429 = vmul.f32 %v2383, 0.044715
      %v2430 = vmul.f32 %v2386, 0.044715
      %v2431 = vmul.f32 %v2391, 0.044715
      %v2432 = vmul.f32 %v2394, 0.044715
      %v2433 = vmul.f32 %v2415, %v2327
      %v2434 = vmul.f32 %v2416, %v2330
      %v2435 = vmul.f32 %v2417, %v2335
      %v2436 = vmul.f32 %v2418, %v2338
      %v2437 = vmul.f32 %v2419, %v2343
      %v2438 = vmul.f32 %v2420, %v2346
      %v2439 = vmul.f32 %v2421, %v2351
      %v2440 = vmul.f32 %v2422, %v2354
      %v2441 = vmul.f32 %v2423, %v2359
      %v2442 = vmul.f32 %v2424, %v2362
      %v2443 = vmul.f32 %v2425, %v2367
      %v2444 = vmul.f32 %v2426, %v2370
      %v2445 = vmul.f32 %v2427, %v2375
      %v2446 = vmul.f32 %v2428, %v2378
      %v2447 = vmul.f32 %v2429, %v2383
      %v2448 = vmul.f32 %v2430, %v2386
      %v2449 = vmul.f32 %v2431, %v2391
      %v2450 = vmul.f32 %v2432, %v2394
      %v2451 = vmul.f32 %v2433, %v2327
      %v2452 = vmul.f32 %v2434, %v2330
      %v2453 = vmul.f32 %v2435, %v2335
      %v2454 = vmul.f32 %v2436, %v2338
      %v2455 = vmul.f32 %v2437, %v2343
      %v2456 = vmul.f32 %v2438, %v2346
      %v2457 = vmul.f32 %v2439, %v2351
      %v2458 = vmul.f32 %v2440, %v2354
      %v2459 = vmul.f32 %v2441, %v2359
      %v2460 = vmul.f32 %v2442, %v2362
      %v2461 = vmul.f32 %v2443, %v2367
      %v2462 = vmul.f32 %v2444, %v2370
      %v2463 = vmul.f32 %v2445, %v2375
      %v2464 = vmul.f32 %v2446, %v2378
      %v2465 = vmul.f32 %v2447, %v2383
      %v2466 = vmul.f32 %v2448, %v2386
      %v2467 = vmul.f32 %v2449, %v2391
      %v2468 = vmul.f32 %v2450, %v2394
      %v2469 = vadd.f32 %v2327, %v2451
      %v2470 = vadd.f32 %v2330, %v2452
      %v2471 = vadd.f32 %v2335, %v2453
      %v2472 = vadd.f32 %v2338, %v2454
      %v2473 = vadd.f32 %v2343, %v2455
      %v2474 = vadd.f32 %v2346, %v2456
      %v2475 = vadd.f32 %v2351, %v2457
      %v2476 = vadd.f32 %v2354, %v2458
      %v2477 = vadd.f32 %v2359, %v2459
      %v2478 = vadd.f32 %v2362, %v2460
      %v2479 = vadd.f32 %v2367, %v2461
      %v2480 = vadd.f32 %v2370, %v2462
      %v2481 = vadd.f32 %v2375, %v2463
      %v2482 = vadd.f32 %v2378, %v2464
      %v2483 = vadd.f32 %v2383, %v2465
      %v2484 = vadd.f32 %v2386, %v2466
      %v2485 = vadd.f32 %v2391, %v2467
      %v2486 = vadd.f32 %v2394, %v2468
      %v2487 = vmul.f32 %v2469, 0.7978846
      %v2488 = vmul.f32 %v2470, 0.7978846
      %v2489 = vmul.f32 %v2471, 0.7978846
      %v2490 = vmul.f32 %v2472, 0.7978846
      %v2491 = vmul.f32 %v2473, 0.7978846
      %v2492 = vmul.f32 %v2474, 0.7978846
      %v2493 = vmul.f32 %v2475, 0.7978846
      %v2494 = vmul.f32 %v2476, 0.7978846
      %v2495 = vmul.f32 %v2477, 0.7978846
      %v2496 = vmul.f32 %v2478, 0.7978846
      %v2497 = vmul.f32 %v2479, 0.7978846
      %v2498 = vmul.f32 %v2480, 0.7978846
      %v2499 = vmul.f32 %v2481, 0.7978846
      %v2500 = vmul.f32 %v2482, 0.7978846
      %v2501 = vmul.f32 %v2483, 0.7978846
      %v2502 = vmul.f32 %v2484, 0.7978846
      %v2503 = vmul.f32 %v2485, 0.7978846
      %v2504 = vmul.f32 %v2486, 0.7978846
      %v2505 = vtanh.pop %v2487
      %v2506 = vtanh.pop %v2488
      %v2507 = vtanh.pop %v2489
      %v2508 = vtanh.pop %v2490
      %v2509 = vtanh.pop %v2491
      %v2510 = vtanh.pop %v2492
      %v2511 = vtanh.pop %v2493
      %v2512 = vtanh.pop %v2494
      %v2513 = vtanh.pop %v2495
      %v2514 = vtanh.pop %v2496
      %v2515 = vtanh.pop %v2497
      %v2516 = vtanh.pop %v2498
      %v2517 = vtanh.pop %v2499
      %v2518 = vtanh.pop %v2500
      %v2519 = vtanh.pop %v2501
      %v2520 = vtanh.pop %v2502
      %v2521 = vtanh.pop %v2503
      %v2522 = vtanh.pop %v2504
      %v2523 = vadd.f32 %v2505, 1.0
      %v2524 = vadd.f32 %v2506, 1.0
      %v2525 = vadd.f32 %v2507, 1.0
      %v2526 = vadd.f32 %v2508, 1.0
      %v2527 = vadd.f32 %v2509, 1.0
      %v2528 = vadd.f32 %v2510, 1.0
      %v2529 = vadd.f32 %v2511, 1.0
      %v2530 = vadd.f32 %v2512, 1.0
      %v2531 = vadd.f32 %v2513, 1.0
      %v2532 = vadd.f32 %v2514, 1.0
      %v2533 = vadd.f32 %v2515, 1.0
      %v2534 = vadd.f32 %v2516, 1.0
      %v2535 = vadd.f32 %v2517, 1.0
      %v2536 = vadd.f32 %v2518, 1.0
      %v2537 = vadd.f32 %v2519, 1.0
      %v2538 = vadd.f32 %v2520, 1.0
      %v2539 = vadd.f32 %v2521, 1.0
      %v2540 = vadd.f32 %v2522, 1.0
      %v2541 = vmul.f32 %v2397, %v2523
      %v2542 = vmul.f32 %v2398, %v2524
      %v2543 = vmul.f32 %v2399, %v2525
      %v2544 = vmul.f32 %v2400, %v2526
      %v2545 = vmul.f32 %v2401, %v2527
      %v2546 = vmul.f32 %v2402, %v2528
      %v2547 = vmul.f32 %v2403, %v2529
      %v2548 = vmul.f32 %v2404, %v2530
      %v2549 = vmul.f32 %v2405, %v2531
      %v2550 = vmul.f32 %v2406, %v2532
      %v2551 = vmul.f32 %v2407, %v2533
      %v2552 = vmul.f32 %v2408, %v2534
      %v2553 = vmul.f32 %v2409, %v2535
      %v2554 = vmul.f32 %v2410, %v2536
      %v2555 = vmul.f32 %v2411, %v2537
      %v2556 = vmul.f32 %v2412, %v2538
      %v2557 = vmul.f32 %v2413, %v2539
      %v2558 = vmul.f32 %v2414, %v2540
      %s2559 = scalar_lea.vmem %s7, 48
      %v2560 = vld [vmem:[%s2559] sm:$0xff]
      %v2561 = vld [vmem:[%s2559 + $0x8] sm:$0xff]
      %v2562 = vld [vmem:[%s2559 + $0x10] sm:$0xff]
      %v2563 = vld [vmem:[%s2559 + $0x18] sm:$0xff]
      %v2564 = vld [vmem:[%s2559 + $0x20] sm:$0xff]
      %v2565 = vld [vmem:[%s2559 + $0x28] sm:$0xff]
      %v2566 = vpack.c.bf16 %v2542, %v2541
      %v2567 = vpack.c.bf16 %v2544, %v2543
      %v2568 = vpack.c.bf16 %v2546, %v2545
      %v2569 = vpack.c.bf16 %v2548, %v2547
      %v2570 = vpack.c.bf16 %v2550, %v2549
      %v2571 = vpack.c.bf16 %v2552, %v2551
      %v2572 = vpack.c.bf16 %v2554, %v2553
      %v2573 = vpack.c.bf16 %v2556, %v2555
      %v2574 = vpack.c.bf16 %v2558, %v2557
      %s2575 = scalar_lea.vmem %s8, 48
      %v2576 = vld [vmem:[%s2575] sm:$0xff]
      %v2577 = vld [vmem:[%s2575 + $0x8] sm:$0xff]
      %v2578 = vld [vmem:[%s2575 + $0x10] sm:$0xff]
      %v2579 = vld [vmem:[%s2575 + $0x18] sm:$0xff]
      %v2580 = vld [vmem:[%s2575 + $0x20] sm:$0xff]
      %v2581 = vld [vmem:[%s2575 + $0x28] sm:$0xff]
      %2583 = vset.pattern.permute.xlu0 0
      %2584 = vperm.xlu0 %2583, %v2576
      %v2585 = vpop.permute.xlu0 %2584
      %2588 = vset.pattern.permute.xlu0 0
      %2589 = vperm.xlu0 %2588, %v2577
      %v2590 = vpop.permute.xlu0 %2589
      %2593 = vset.pattern.permute.xlu0 0
      %2594 = vperm.xlu0 %2593, %v2578
      %v2595 = vpop.permute.xlu0 %2594
      %2598 = vset.pattern.permute.xlu0 0
      %2599 = vperm.xlu0 %2598, %v2579
      %v2600 = vpop.permute.xlu0 %2599
      %2603 = vset.pattern.permute.xlu0 0
      %2604 = vperm.xlu0 %2603, %v2580
      %v2605 = vpop.permute.xlu0 %2604
      %2608 = vset.pattern.permute.xlu0 0
      %2609 = vperm.xlu0 %2608, %v2581
      %v2610 = vpop.permute.xlu0 %2609
      %v2618 = vunpack.c.l.b16 %v2560
      %v2619 = vunpack.c.h.b16 %v2560
      %v2620 = vunpack.c.l.b16 %v2561
      %v2621 = vunpack.c.h.b16 %v2561
      %v2622 = vunpack.c.l.b16 %v2562
      %v2623 = vunpack.c.h.b16 %v2562
      %v2624 = vunpack.c.l.b16 %v2563
      %v2625 = vunpack.c.h.b16 %v2563
      %v2626 = vunpack.c.l.b16 %v2564
      %v2627 = vunpack.c.h.b16 %v2564
      %v2628 = vunpack.c.l.b16 %v2565
      %v2629 = vunpack.c.h.b16 %v2565
      %v2630 = vpack.c.b16 %v2620, %v2618
      %v2631 = vpack.c.b16 %v2621, %v2619
      %v2632 = vpack.c.b16 %v2624, %v2622
      %v2633 = vpack.c.b16 %v2625, %v2623
      %v2634 = vpack.c.b16 %v2628, %v2626
      %v2635 = vpack.c.b16 %v2629, %v2627
      %v2640 = vsel %vm844, %v2631, 0
      %v2643 = vsel %vm844, %v2633, 0
      %v2646 = vsel %vm844, %v2635, 0
      %2648 = vmatprep.subr.bf16.mxu0 0
      %2649 = vmatpush1.bf16.msra.mxu0 %v2566
      %2650 = vmatprep.subr.bf16.mxu0 0
      %2651 = vmatpush1.bf16.msra.mxu0 %v2567
      %2652 = vmatprep.subr.bf16.mxu0 0
      %2653 = vmatpush1.bf16.msra.mxu0 %v2568
      %2654 = vmatprep.subr.bf16.mxu0 0
      %2655 = vmatpush1.bf16.msra.mxu0 %v2569
      %2656 = vmatprep.subr.bf16.mxu0 0
      %2657 = vmatpush1.bf16.msra.mxu0 %v2570
      %2658 = vmatprep.subr.bf16.mxu0 0
      %2659 = vmatpush1.bf16.msra.mxu0 %v2571
      %2660 = vmatprep.subr.bf16.mxu0 0
      %2661 = vmatpush1.bf16.msra.mxu0 %v2572
      %2662 = vmatprep.subr.bf16.mxu0 0
      %2663 = vmatpush1.bf16.msra.mxu0 %v2573
      %2664 = vmatprep.subr.bf16.mxu0 0
      %2665 = vmatpush1.bf16.msra.mxu0 %v2574
      %2666 = vmatprep.subr.bf16.mxu0 0
      %2667 = vmatpush1.bf16.msra.mxu0 0
      %2668 = vmatprep.subr.bf16.mxu0 0
      %2669 = vmatpush1.bf16.msra.mxu0 0
      %2670 = vmatprep.subr.bf16.mxu0 0
      %2671 = vmatpush1.bf16.msra.mxu0 0
      %2672 = vmatprep.subr.bf16.mxu0 0
      %2673 = vmatpush1.bf16.msra.mxu0 0
      %2674 = vmatprep.subr.bf16.mxu0 0
      %2675 = vmatpush1.bf16.msra.mxu0 0
      %2676 = vmatprep.subr.bf16.mxu0 0
      %2677 = vmatpush1.bf16.msra.mxu0 0
      %2678 = vmatprep.subr.bf16.mxu0 0
      %2679 = vmatpush1.bf16.msra.mxu0 0
      %2680 = vmatprep.mubr.bf16.mxu0 %v2640
      %2681 = vmatmul.mubr.bf16.gmra.mrb[0].mxu0 %v2630
      %v2682 = vpop.f32.mrb[0].mxu0
      %v2683 = vadd.f32 %v2585, %v2682
      %v2684 = vpop.f32.mrb[0].mxu0
      %v2685 = vpop.f32.mrb[0].mxu0
      %v2686 = vadd.f32 %v2590, %v2685
      %v2687 = vpop.f32.mrb[0].mxu0
      %2688 = vmatprep.mubr.bf16.mxu0 %v2643
      %2689 = vmatmul.mubr.bf16.gmra.mrb[0].mxu0 %v2632
      %v2690 = vpop.f32.mrb[0].mxu0
      %v2691 = vadd.f32 %v2595, %v2690
      %v2692 = vpop.f32.mrb[0].mxu0
      %v2693 = vpop.f32.mrb[0].mxu0
      %v2694 = vadd.f32 %v2600, %v2693
      %v2695 = vpop.f32.mrb[0].mxu0
      %2696 = vmatprep.mubr.bf16.mxu0 %v2646
      %2697 = vmatmul.mubr.bf16.gmra.mrb[0].mxu0 %v2634
      %v2698 = vpop.f32.mrb[0].mxu0
      %v2699 = vadd.f32 %v2605, %v2698
      %v2700 = vpop.f32.mrb[0].mxu0
      %v2701 = vpop.f32.mrb[0].mxu0
      %v2702 = vadd.f32 %v2610, %v2701
      %v2703 = vpop.f32.mrb[0].mxu0
      %2704 = vdwg.mxu0
      %v2705 = vadd.f32 %v2683, %v1977
      %v2706 = vadd.f32 %v2686, %v1978
      %v2707 = vadd.f32 %v2691, %v1979
      %v2708 = vadd.f32 %v2694, %v1980
      %v2709 = vadd.f32 %v2699, %v1981
      %v2710 = vadd.f32 %v2702, %v1982
      %v2711 = vsel %vm844, %v2705, 0.0
      %2712 = vadd.xlane.f32.xlu0 %v2711
      %v2713 = vpop.xlane.xlu0 %2712
      %v2714 = vsel %vm844, %v2706, 0.0
      %2715 = vadd.xlane.f32.xlu0 %v2714
      %v2716 = vpop.xlane.xlu0 %2715
      %v2717 = vsel %vm844, %v2707, 0.0
      %2718 = vadd.xlane.f32.xlu0 %v2717
      %v2719 = vpop.xlane.xlu0 %2718
      %v2720 = vsel %vm844, %v2708, 0.0
      %2721 = vadd.xlane.f32.xlu0 %v2720
      %v2722 = vpop.xlane.xlu0 %2721
      %v2723 = vsel %vm844, %v2709, 0.0
      %2724 = vadd.xlane.f32.xlu0 %v2723
      %v2725 = vpop.xlane.xlu0 %2724
      %v2726 = vsel %vm844, %v2710, 0.0
      %2727 = vadd.xlane.f32.xlu0 %v2726
      %v2728 = vpop.xlane.xlu0 %2727
      %v2729 = vmul.f32 %v2713, %v929
      %v2730 = vmul.f32 %v2716, %v929
      %v2731 = vmul.f32 %v2719, %v929
      %v2732 = vmul.f32 %v2722, %v929
      %v2733 = vmul.f32 %v2725, %v929
      %v2734 = vmul.f32 %v2728, %v929
      %v2735 = vsub.f32 %v2705, %v2729
      %v2736 = vsub.f32 %v2706, %v2730
      %v2737 = vsub.f32 %v2707, %v2731
      %v2738 = vsub.f32 %v2708, %v2732
      %v2739 = vsub.f32 %v2709, %v2733
      %v2740 = vsub.f32 %v2710, %v2734
      %v2741 = vmul.f32 %v2735, %v2735
      %v2742 = vmul.f32 %v2736, %v2736
      %v2743 = vmul.f32 %v2737, %v2737
      %v2744 = vmul.f32 %v2738, %v2738
      %v2745 = vmul.f32 %v2739, %v2739
      %v2746 = vmul.f32 %v2740, %v2740
      %v2747 = vsel %vm844, %v2741, 0.0
      %2748 = vadd.xlane.f32.xlu0 %v2747
      %v2749 = vpop.xlane.xlu0 %2748
      %v2750 = vsel %vm844, %v2742, 0.0
      %2751 = vadd.xlane.f32.xlu0 %v2750
      %v2752 = vpop.xlane.xlu0 %2751
      %v2753 = vsel %vm844, %v2743, 0.0
      %2754 = vadd.xlane.f32.xlu0 %v2753
      %v2755 = vpop.xlane.xlu0 %2754
      %v2756 = vsel %vm844, %v2744, 0.0
      %2757 = vadd.xlane.f32.xlu0 %v2756
      %v2758 = vpop.xlane.xlu0 %2757
      %v2759 = vsel %vm844, %v2745, 0.0
      %2760 = vadd.xlane.f32.xlu0 %v2759
      %v2761 = vpop.xlane.xlu0 %2760
      %v2762 = vsel %vm844, %v2746, 0.0
      %2763 = vadd.xlane.f32.xlu0 %v2762
      %v2764 = vpop.xlane.xlu0 %2763
      %v2765 = vmul.f32 %v2749, %v929
      %v2766 = vmul.f32 %v2752, %v929
      %v2767 = vmul.f32 %v2755, %v929
      %v2768 = vmul.f32 %v2758, %v929
      %v2769 = vmul.f32 %v2761, %v929
      %v2770 = vmul.f32 %v2764, %v929
      %v2771 = vadd.f32 %v2765, 1e-05
      %v2772 = vadd.f32 %v2766, 1e-05
      %v2773 = vadd.f32 %v2767, 1e-05
      %v2774 = vadd.f32 %v2768, 1e-05
      %v2775 = vadd.f32 %v2769, 1e-05
      %v2776 = vadd.f32 %v2770, 1e-05
      %v2777 = vrsqrt.pop %v2771
      %v2778 = vrsqrt.pop %v2772
      %v2779 = vrsqrt.pop %v2773
      %v2780 = vrsqrt.pop %v2774
      %v2781 = vrsqrt.pop %v2775
      %v2782 = vrsqrt.pop %v2776
      %v2783 = vmul.f32 %v2735, %v2777
      %v2784 = vmul.f32 %v2736, %v2778
      %v2785 = vmul.f32 %v2737, %v2779
      %v2786 = vmul.f32 %v2738, %v2780
      %v2787 = vmul.f32 %v2739, %v2781
      %v2788 = vmul.f32 %v2740, %v2782
      %s2789 = scalar_lea.vmem %s9, 1
      %v2790 = vld [vmem:[%s2789] sm:$0x1]
      %v2792 = vlaneseq
      %v2793 = vshrl.u32 %v2792, 7
      %v2794 = vsub.s32 0, %v2793
      %v2795 = vrot.slane %v2790, %v2794
      %v2797 = vmul.f32 %v2783, %v2795
      %v2798 = vmul.f32 %v2784, %v2795
      %v2799 = vmul.f32 %v2785, %v2795
      %v2800 = vmul.f32 %v2786, %v2795
      %v2801 = vmul.f32 %v2787, %v2795
      %v2802 = vmul.f32 %v2788, %v2795
      %s2803 = scalar_lea.vmem %s10, 1
      %v2804 = vld [vmem:[%s2803] sm:$0x1]
      %v2806 = vlaneseq
      %v2807 = vshrl.u32 %v2806, 7
      %v2808 = vsub.s32 0, %v2807
      %v2809 = vrot.slane %v2804, %v2808
      %v2811 = vadd.f32 %v2797, %v2809
      %v2812 = vadd.f32 %v2798, %v2809
      %v2813 = vadd.f32 %v2799, %v2809
      %v2814 = vadd.f32 %v2800, %v2809
      %v2815 = vadd.f32 %v2801, %v2809
      %v2816 = vadd.f32 %v2802, %v2809
      %s2817 = scalar_lea.vmem %s11, 8
      %v2818 = vld [vmem:[%s2817] sm:$0xf]
      %v2819 = vld [vmem:[%s2817 + $0x4] sm:$0xf]
      %v2820 = vpack.c.bf16 %v2812, %v2811
      %v2821 = vpack.c.bf16 %v2814, %v2813
      %v2822 = vpack.c.bf16 %v2816, %v2815
      %s2823 = scalar_lea.vmem %s12, 1
      %v2824 = vld [vmem:[%s2823] sm:$0x1]
      %v2826 = vlaneseq
      %v2827 = vshrl.u32 %v2826, 7
      %v2828 = vsub.s32 0, %v2827
      %v2829 = vrot.slane %v2824, %v2828
      %v2833 = vunpack.c.l.b16 %v2818
      %v2834 = vunpack.c.l.b16 %v2819
      %v2835 = vpack.c.b16 %v2834, %v2833
      %v2838 = vsel %vm844, %v2820, 0
      %v2841 = vsel %vm844, %v2821, 0
      %v2844 = vsel %vm844, %v2822, 0
      %2846 = vmatprep.subr.bf16.mxu0 0
      %2847 = vmatpush1.bf16.msra.mxu0 %v2835
      %2848 = vmatprep.subr.bf16.mxu0 0
      %2849 = vmatpush1.bf16.msra.mxu0 0
      %2850 = vmatprep.subr.bf16.mxu0 0
      %2851 = vmatpush1.bf16.msra.mxu0 0
      %2852 = vmatprep.subr.bf16.mxu0 0
      %2853 = vmatpush1.bf16.msra.mxu0 0
      %2854 = vmatprep.subr.bf16.mxu0 0
      %2855 = vmatpush1.bf16.msra.mxu0 0
      %2856 = vmatprep.subr.bf16.mxu0 0
      %2857 = vmatpush1.bf16.msra.mxu0 0
      %2858 = vmatprep.subr.bf16.mxu0 0
      %2859 = vmatpush1.bf16.msra.mxu0 0
      %2860 = vmatprep.subr.bf16.mxu0 0
      %2861 = vmatpush1.bf16.msra.mxu0 0
      %2862 = vmatprep.subr.bf16.mxu0 0
      %2863 = vmatpush1.bf16.msra.mxu0 0
      %2864 = vmatprep.subr.bf16.mxu0 0
      %2865 = vmatpush1.bf16.msra.mxu0 0
      %2866 = vmatprep.subr.bf16.mxu0 0
      %2867 = vmatpush1.bf16.msra.mxu0 0
      %2868 = vmatprep.subr.bf16.mxu0 0
      %2869 = vmatpush1.bf16.msra.mxu0 0
      %2870 = vmatprep.subr.bf16.mxu0 0
      %2871 = vmatpush1.bf16.msra.mxu0 0
      %2872 = vmatprep.subr.bf16.mxu0 0
      %2873 = vmatpush1.bf16.msra.mxu0 0
      %2874 = vmatprep.subr.bf16.mxu0 0
      %2875 = vmatpush1.bf16.msra.mxu0 0
      %2876 = vmatprep.subr.bf16.mxu0 0
      %2877 = vmatpush1.bf16.msra.mxu0 0
      %2878 = vmatprep.mubr.bf16.mxu0 0
      %2879 = vmatmul.mubr.bf16.gmra.mrb[0].mxu0 %v2838
      %v2880 = vpop.f32.mrb[0].mxu0
      %v2881 = vadd.f32 %v2829, %v2880
      %v2882 = vpop.f32.mrb[0].mxu0
      %v2883 = vpop.f32.mrb[0].mxu0
      %v2884 = vadd.f32 %v2829, %v2883
      %v2885 = vpop.f32.mrb[0].mxu0
      %2886 = vmatprep.mubr.bf16.mxu0 0
      %2887 = vmatmul.mubr.bf16.gmra.mrb[0].mxu0 %v2841
      %v2888 = vpop.f32.mrb[0].mxu0
      %v2889 = vadd.f32 %v2829, %v2888
      %v2890 = vpop.f32.mrb[0].mxu0
      %v2891 = vpop.f32.mrb[0].mxu0
      %v2892 = vadd.f32 %v2829, %v2891
      %v2893 = vpop.f32.mrb[0].mxu0
      %2894 = vmatprep.mubr.bf16.mxu0 0
      %2895 = vmatmul.mubr.bf16.gmra.mrb[0].mxu0 %v2844
      %v2896 = vpop.f32.mrb[0].mxu0
      %v2897 = vadd.f32 %v2829, %v2896
      %v2898 = vpop.f32.mrb[0].mxu0
      %v2899 = vpop.f32.mrb[0].mxu0
      %v2900 = vadd.f32 %v2829, %v2899
      %v2901 = vpop.f32.mrb[0].mxu0
      %2902 = vdwg.mxu0
      %v2903 = vmul.f32 %v2881, 0.5
      %v2904 = vmul.f32 %v2884, 0.5
      %v2905 = vmul.f32 %v2889, 0.5
      %v2906 = vmul.f32 %v2892, 0.5
      %v2907 = vmul.f32 %v2897, 0.5
      %v2908 = vmul.f32 %v2900, 0.5
      %v2909 = vmul.f32 %v2881, 0.044715
      %v2910 = vmul.f32 %v2884, 0.044715
      %v2911 = vmul.f32 %v2889, 0.044715
      %v2912 = vmul.f32 %v2892, 0.044715
      %v2913 = vmul.f32 %v2897, 0.044715
      %v2914 = vmul.f32 %v2900, 0.044715
      %v2915 = vmul.f32 %v2909, %v2881
      %v2916 = vmul.f32 %v2910, %v2884
      %v2917 = vmul.f32 %v2911, %v2889
      %v2918 = vmul.f32 %v2912, %v2892
      %v2919 = vmul.f32 %v2913, %v2897
      %v2920 = vmul.f32 %v2914, %v2900
      %v2921 = vmul.f32 %v2915, %v2881
      %v2922 = vmul.f32 %v2916, %v2884
      %v2923 = vmul.f32 %v2917, %v2889
      %v2924 = vmul.f32 %v2918, %v2892
      %v2925 = vmul.f32 %v2919, %v2897
      %v2926 = vmul.f32 %v2920, %v2900
      %v2927 = vadd.f32 %v2881, %v2921
      %v2928 = vadd.f32 %v2884, %v2922
      %v2929 = vadd.f32 %v2889, %v2923
      %v2930 = vadd.f32 %v2892, %v2924
      %v2931 = vadd.f32 %v2897, %v2925
      %v2932 = vadd.f32 %v2900, %v2926
      %v2933 = vmul.f32 %v2927, 0.7978846
      %v2934 = vmul.f32 %v2928, 0.7978846
      %v2935 = vmul.f32 %v2929, 0.7978846
      %v2936 = vmul.f32 %v2930, 0.7978846
      %v2937 = vmul.f32 %v2931, 0.7978846
      %v2938 = vmul.f32 %v2932, 0.7978846
      %v2939 = vtanh.pop %v2933
      %v2940 = vtanh.pop %v2934
      %v2941 = vtanh.pop %v2935
      %v2942 = vtanh.pop %v2936
      %v2943 = vtanh.pop %v2937
      %v2944 = vtanh.pop %v2938
      %v2945 = vadd.f32 %v2939, 1.0
      %v2946 = vadd.f32 %v2940, 1.0
      %v2947 = vadd.f32 %v2941, 1.0
      %v2948 = vadd.f32 %v2942, 1.0
      %v2949 = vadd.f32 %v2943, 1.0
      %v2950 = vadd.f32 %v2944, 1.0
      %v2951 = vmul.f32 %v2903, %v2945
      %v2952 = vmul.f32 %v2904, %v2946
      %v2953 = vmul.f32 %v2905, %v2947
      %v2954 = vmul.f32 %v2906, %v2948
      %v2955 = vmul.f32 %v2907, %v2949
      %v2956 = vmul.f32 %v2908, %v2950
      %s2957 = scalar_lea.vmem %s13, 24
      %v2958 = vld [vmem:[%s2957] sm:$0xf]
      %v2959 = vld [vmem:[%s2957 + $0x4] sm:$0xf]
      %v2960 = vld [vmem:[%s2957 + $0x8] sm:$0xf]
      %v2961 = vld [vmem:[%s2957 + $0xc] sm:$0xf]
      %v2962 = vld [vmem:[%s2957 + $0x10] sm:$0xf]
      %v2963 = vld [vmem:[%s2957 + $0x14] sm:$0xf]
      %v2964 = vpack.c.bf16 %v2952, %v2951
      %v2965 = vpack.c.bf16 %v2954, %v2953
      %v2966 = vpack.c.bf16 %v2956, %v2955
      %s2967 = scalar_lea.vmem %s14, 1
      %v2968 = vld [vmem:[%s2967] sm:$0x1]
      %v2970 = vlaneseq
      %v2971 = vshrl.u32 %v2970, 7
      %v2972 = vsub.s32 0, %v2971
      %v2973 = vrot.slane %v2968, %v2972
      %v2981 = vunpack.c.l.b16 %v2958
      %v2982 = vunpack.c.l.b16 %v2959
      %v2983 = vunpack.c.l.b16 %v2960
      %v2984 = vunpack.c.l.b16 %v2961
      %v2985 = vunpack.c.l.b16 %v2962
      %v2986 = vunpack.c.l.b16 %v2963
      %v2987 = vpack.c.b16 %v2982, %v2981
      %v2988 = vpack.c.b16 %v2984, %v2983
      %v2989 = vpack.c.b16 %v2986, %v2985
      %v2994 = vsel %vm1190, %v2964, 0
      %v2997 = vsel %vm1190, %v2965, 0
      %v3000 = vsel %vm1190, %v2966, 0
      %3002 = vmatprep.subr.bf16.mxu0 0
      %3003 = vmatpush1.bf16.msra.mxu0 %v2987
      %3004 = vmatprep.subr.bf16.mxu0 0
      %3005 = vmatpush1.bf16.msra.mxu0 %v2988
      %3006 = vmatprep.subr.bf16.mxu0 0
      %3007 = vmatpush1.bf16.msra.mxu0 %v2989
      %3008 = vmatprep.subr.bf16.mxu0 0
      %3009 = vmatpush1.bf16.msra.mxu0 0
      %3010 = vmatprep.subr.bf16.mxu0 0
      %3011 = vmatpush1.bf16.msra.mxu0 0
      %3012 = vmatprep.subr.bf16.mxu0 0
      %3013 = vmatpush1.bf16.msra.mxu0 0
      %3014 = vmatprep.subr.bf16.mxu0 0
      %3015 = vmatpush1.bf16.msra.mxu0 0
      %3016 = vmatprep.subr.bf16.mxu0 0
      %3017 = vmatpush1.bf16.msra.mxu0 0
      %3018 = vmatprep.subr.bf16.mxu0 0
      %3019 = vmatpush1.bf16.msra.mxu0 0
      %3020 = vmatprep.subr.bf16.mxu0 0
      %3021 = vmatpush1.bf16.msra.mxu0 0
      %3022 = vmatprep.subr.bf16.mxu0 0
      %3023 = vmatpush1.bf16.msra.mxu0 0
      %3024 = vmatprep.subr.bf16.mxu0 0
      %3025 = vmatpush1.bf16.msra.mxu0 0
      %3026 = vmatprep.subr.bf16.mxu0 0
      %3027 = vmatpush1.bf16.msra.mxu0 0
      %3028 = vmatprep.subr.bf16.mxu0 0
      %3029 = vmatpush1.bf16.msra.mxu0 0
      %3030 = vmatprep.subr.bf16.mxu0 0
      %3031 = vmatpush1.bf16.msra.mxu0 0
      %3032 = vmatprep.subr.bf16.mxu0 0
      %3033 = vmatpush1.bf16.msra.mxu0 0
      %3034 = vmatprep.mubr.bf16.mxu0 0
      %3035 = vmatmul.mubr.bf16.gmra.mrb[0].mxu0 %v2994
      %v3036 = vpop.f32.mrb[0].mxu0
      %v3037 = vadd.f32 %v2973, %v3036
      %v3038 = vpop.f32.mrb[0].mxu0
      %v3039 = vpop.f32.mrb[0].mxu0
      %v3040 = vadd.f32 %v2973, %v3039
      %v3041 = vpop.f32.mrb[0].mxu0
      %3042 = vmatprep.mubr.bf16.mxu0 0
      %3043 = vmatmul.mubr.bf16.gmra.mrb[0].mxu0 %v2997
      %v3044 = vpop.f32.mrb[0].mxu0
      %v3045 = vadd.f32 %v2973, %v3044
      %v3046 = vpop.f32.mrb[0].mxu0
      %v3047 = vpop.f32.mrb[0].mxu0
      %v3048 = vadd.f32 %v2973, %v3047
      %v3049 = vpop.f32.mrb[0].mxu0
      %3050 = vmatprep.mubr.bf16.mxu0 0
      %3051 = vmatmul.mubr.bf16.gmra.mrb[0].mxu0 %v3000
      %v3052 = vpop.f32.mrb[0].mxu0
      %v3053 = vadd.f32 %v2973, %v3052
      %v3054 = vpop.f32.mrb[0].mxu0
      %v3055 = vpop.f32.mrb[0].mxu0
      %v3056 = vadd.f32 %v2973, %v3055
      %v3057 = vpop.f32.mrb[0].mxu0
      %3058 = vdwg.mxu0
      %v3059 = vadd.f32 %v3037, %v2705
      %v3060 = vadd.f32 %v3040, %v2706
      %v3061 = vadd.f32 %v3045, %v2707
      %v3062 = vadd.f32 %v3048, %v2708
      %v3063 = vadd.f32 %v3053, %v2709
      %v3064 = vadd.f32 %v3056, %v2710
      %v3065 = vld [vmem:[%s15] sm:$0xff]
      %v3066 = vld [vmem:[%s15 + $0x8] sm:$0xff]
      %v3067 = vpack.c.bf16 %v3060, %v3059
      %v3068 = vpack.c.bf16 %v3062, %v3061
      %v3069 = vpack.c.bf16 %v3064, %v3063
      %v3072 = vunpack.c.l.b16 %v3065
      %v3073 = vunpack.c.h.b16 %v3065
      %v3074 = vunpack.c.l.b16 %v3066
      %v3075 = vunpack.c.h.b16 %v3066
      %v3076 = vpack.c.b16 %v3074, %v3072
      %v3077 = vpack.c.b16 %v3075, %v3073
      %v3081 = vsel %vm844, %v3067, 0
      %v3084 = vsel %vm844, %v3068, 0
      %v3087 = vsel %vm844, %v3069, 0
      %3089 = vmatprep.subr.bf16.mxu0 %v3077
      %3090 = vmatpush1.bf16.msra.mxu0 %v3076
      %3091 = vmatprep.subr.bf16.mxu0 0
      %3092 = vmatpush1.bf16.msra.mxu0 0
      %3093 = vmatprep.subr.bf16.mxu0 0
      %3094 = vmatpush1.bf16.msra.mxu0 0
      %3095 = vmatprep.subr.bf16.mxu0 0
      %3096 = vmatpush1.bf16.msra.mxu0 0
      %3097 = vmatprep.subr.bf16.mxu0 0
      %3098 = vmatpush1.bf16.msra.mxu0 0
      %3099 = vmatprep.subr.bf16.mxu0 0
      %3100 = vmatpush1.bf16.msra.mxu0 0
      %3101 = vmatprep.subr.bf16.mxu0 0
      %3102 = vmatpush1.bf16.msra.mxu0 0
      %3103 = vmatprep.subr.bf16.mxu0 0
      %3104 = vmatpush1.bf16.msra.mxu0 0
      %3105 = vmatprep.subr.bf16.mxu0 0
      %3106 = vmatpush1.bf16.msra.mxu0 0
      %3107 = vmatprep.subr.bf16.mxu0 0
      %3108 = vmatpush1.bf16.msra.mxu0 0
      %3109 = vmatprep.subr.bf16.mxu0 0
      %3110 = vmatpush1.bf16.msra.mxu0 0
      %3111 = vmatprep.subr.bf16.mxu0 0
      %3112 = vmatpush1.bf16.msra.mxu0 0
      %3113 = vmatprep.subr.bf16.mxu0 0
      %3114 = vmatpush1.bf16.msra.mxu0 0
      %3115 = vmatprep.subr.bf16.mxu0 0
      %3116 = vmatpush1.bf16.msra.mxu0 0
      %3117 = vmatprep.subr.bf16.mxu0 0
      %3118 = vmatpush1.bf16.msra.mxu0 0
      %3119 = vmatprep.subr.bf16.mxu0 0
      %3120 = vmatpush1.bf16.msra.mxu0 0
      %3121 = vmatprep.mubr.bf16.mxu0 0
      %3122 = vmatmul.mubr.bf16.gmra.mrb[0].mxu0 %v3081
      %v3123 = vpop.f32.mrb[0].mxu0
      %v3124 = vadd.f32 0.0, %v3123
      %v3125 = vpop.f32.mrb[0].mxu0
      %v3126 = vadd.f32 0.0, %v3125
      %v3127 = vpop.f32.mrb[0].mxu0
      %v3128 = vadd.f32 0.0, %v3127
      %v3129 = vpop.f32.mrb[0].mxu0
      %v3130 = vadd.f32 0.0, %v3129
      %3131 = vmatprep.mubr.bf16.mxu0 0
      %3132 = vmatmul.mubr.bf16.gmra.mrb[0].mxu0 %v3084
      %v3133 = vpop.f32.mrb[0].mxu0
      %v3134 = vadd.f32 0.0, %v3133
      %v3135 = vpop.f32.mrb[0].mxu0
      %v3136 = vadd.f32 0.0, %v3135
      %v3137 = vpop.f32.mrb[0].mxu0
      %v3138 = vadd.f32 0.0, %v3137
      %v3139 = vpop.f32.mrb[0].mxu0
      %v3140 = vadd.f32 0.0, %v3139
      %3141 = vmatprep.mubr.bf16.mxu0 0
      %3142 = vmatmul.mubr.bf16.gmra.mrb[0].mxu0 %v3087
      %v3143 = vpop.f32.mrb[0].mxu0
      %v3144 = vadd.f32 0.0, %v3143
      %v3145 = vpop.f32.mrb[0].mxu0
      %v3146 = vadd.f32 0.0, %v3145
      %v3147 = vpop.f32.mrb[0].mxu0
      %v3148 = vadd.f32 0.0, %v3147
      %v3149 = vpop.f32.mrb[0].mxu0
      %v3150 = vadd.f32 0.0, %v3149
      %3151 = vdwg.mxu0
      %v3152 = vld [vmem:[%s16] sm:$0xff]
      %v3153 = vld [vmem:[%s16 + $0x8] sm:$0xff]
      %v3154 = vld [vmem:[%s16 + $0x10] sm:$0xff]
      %v3155 = vld [vmem:[%s16 + $0x18] sm:$0xff]
      %v3156 = vld [vmem:[%s16 + $0x20] sm:$0xff]
      %v3157 = vld [vmem:[%s16 + $0x28] sm:$0xff]
      %v3158 = vld [vmem:[%s16 + $0x30] sm:$0xff]
      %v3159 = vld [vmem:[%s16 + $0x38] sm:$0xff]
      %v3160 = vld [vmem:[%s16 + $0x40] sm:$0xff]
      %v3161 = vld [vmem:[%s16 + $0x48] sm:$0xff]
      %v3162 = vld [vmem:[%s16 + $0x50] sm:$0xff]
      %v3163 = vld [vmem:[%s16 + $0x58] sm:$0xff]
      %v3164 = vld [vmem:[%s16 + $0x60] sm:$0xff]
      %v3165 = vld [vmem:[%s16 + $0x68] sm:$0xff]
      %v3166 = vld [vmem:[%s16 + $0x70] sm:$0xff]
      %v3167 = vld [vmem:[%s16 + $0x78] sm:$0xff]
      %v3168 = vld [vmem:[%s16 + $0x80] sm:$0xff]
      %v3169 = vld [vmem:[%s16 + $0x88] sm:$0xff]
      %v3170 = vld [vmem:[%s16 + $0x90] sm:$0xff]
      %v3171 = vld [vmem:[%s16 + $0x98] sm:$0xff]
      %v3172 = vld [vmem:[%s16 + $0xa0] sm:$0xff]
      %v3173 = vld [vmem:[%s16 + $0xa8] sm:$0xff]
      %v3174 = vld [vmem:[%s16 + $0xb0] sm:$0xff]
      %v3175 = vld [vmem:[%s16 + $0xb8] sm:$0xff]
      %v3176 = vld [vmem:[%s16 + $0xc0] sm:$0xff]
      %v3177 = vld [vmem:[%s16 + $0xc8] sm:$0xff]
      %v3178 = vld [vmem:[%s16 + $0xd0] sm:$0xff]
      %v3179 = vld [vmem:[%s16 + $0xd8] sm:$0xff]
      %v3180 = vld [vmem:[%s16 + $0xe0] sm:$0xff]
      %v3181 = vld [vmem:[%s16 + $0xe8] sm:$0xff]
      %v3182 = vld [vmem:[%s16 + $0xf0] sm:$0xff]
      %v3183 = vld [vmem:[%s16 + $0xf8] sm:$0xff]
      %v3184 = vpack.c.bf16 %v3128, %v3124
      %v3185 = vpack.c.bf16 %v3130, %v3126
      %v3186 = vpack.c.bf16 %v3138, %v3134
      %v3187 = vpack.c.bf16 %v3140, %v3136
      %v3188 = vpack.c.bf16 %v3148, %v3144
      %v3189 = vpack.c.bf16 %v3150, %v3146
      %v3222 = vunpack.c.l.b16 %v3152
      %v3223 = vunpack.c.h.b16 %v3152
      %v3224 = vunpack.c.l.b16 %v3153
      %v3225 = vunpack.c.h.b16 %v3153
      %v3226 = vunpack.c.l.b16 %v3154
      %v3227 = vunpack.c.h.b16 %v3154
      %v3228 = vunpack.c.l.b16 %v3155
      %v3229 = vunpack.c.h.b16 %v3155
      %v3230 = vunpack.c.l.b16 %v3156
      %v3231 = vunpack.c.h.b16 %v3156
      %v3232 = vunpack.c.l.b16 %v3157
      %v3233 = vunpack.c.h.b16 %v3157
      %v3234 = vunpack.c.l.b16 %v3158
      %v3235 = vunpack.c.h.b16 %v3158
      %v3236 = vunpack.c.l.b16 %v3159
      %v3237 = vunpack.c.h.b16 %v3159
      %v3238 = vunpack.c.l.b16 %v3160
      %v3239 = vunpack.c.h.b16 %v3160
      %v3240 = vunpack.c.l.b16 %v3161
      %v3241 = vunpack.c.h.b16 %v3161
      %v3242 = vunpack.c.l.b16 %v3162
      %v3243 = vunpack.c.h.b16 %v3162
      %v3244 = vunpack.c.l.b16 %v3163
      %v3245 = vunpack.c.h.b16 %v3163
      %v3246 = vunpack.c.l.b16 %v3164
      %v3247 = vunpack.c.h.b16 %v3164
      %v3248 = vunpack.c.l.b16 %v3165
      %v3249 = vunpack.c.h.b16 %v3165
      %v3250 = vunpack.c.l.b16 %v3166
      %v3251 = vunpack.c.h.b16 %v3166
      %v3252 = vunpack.c.l.b16 %v3167
      %v3253 = vunpack.c.h.b16 %v3167
      %v3254 = vunpack.c.l.b16 %v3168
      %v3255 = vunpack.c.h.b16 %v3168
      %v3256 = vunpack.c.l.b16 %v3169
      %v3257 = vunpack.c.h.b16 %v3169
      %v3258 = vunpack.c.l.b16 %v3170
      %v3259 = vunpack.c.h.b16 %v3170
      %v3260 = vunpack.c.l.b16 %v3171
      %v3261 = vunpack.c.h.b16 %v3171
      %v3262 = vunpack.c.l.b16 %v3172
      %v3263 = vunpack.c.h.b16 %v3172
      %v3264 = vunpack.c.l.b16 %v3173
      %v3265 = vunpack.c.h.b16 %v3173
      %v3266 = vunpack.c.l.b16 %v3174
      %v3267 = vunpack.c.h.b16 %v3174
      %v3268 = vunpack.c.l.b16 %v3175
      %v3269 = vunpack.c.h.b16 %v3175
      %v3270 = vunpack.c.l.b16 %v3176
      %v3271 = vunpack.c.h.b16 %v3176
      %v3272 = vunpack.c.l.b16 %v3177
      %v3273 = vunpack.c.h.b16 %v3177
      %v3274 = vunpack.c.l.b16 %v3178
      %v3275 = vunpack.c.h.b16 %v3178
      %v3276 = vunpack.c.l.b16 %v3179
      %v3277 = vunpack.c.h.b16 %v3179
      %v3278 = vunpack.c.l.b16 %v3180
      %v3279 = vunpack.c.h.b16 %v3180
      %v3280 = vunpack.c.l.b16 %v3181
      %v3281 = vunpack.c.h.b16 %v3181
      %v3282 = vunpack.c.l.b16 %v3182
      %v3283 = vunpack.c.h.b16 %v3182
      %v3284 = vunpack.c.l.b16 %v3183
      %v3285 = vunpack.c.h.b16 %v3183
      %v3286 = vpack.c.b16 %v3224, %v3222
      %v3287 = vpack.c.b16 %v3225, %v3223
      %v3288 = vpack.c.b16 %v3228, %v3226
      %v3289 = vpack.c.b16 %v3229, %v3227
      %v3290 = vpack.c.b16 %v3232, %v3230
      %v3291 = vpack.c.b16 %v3233, %v3231
      %v3292 = vpack.c.b16 %v3236, %v3234
      %v3293 = vpack.c.b16 %v3237, %v3235
      %v3294 = vpack.c.b16 %v3240, %v3238
      %v3295 = vpack.c.b16 %v3241, %v3239
      %v3296 = vpack.c.b16 %v3244, %v3242
      %v3297 = vpack.c.b16 %v3245, %v3243
      %v3298 = vpack.c.b16 %v3248, %v3246
      %v3299 = vpack.c.b16 %v3249, %v3247
      %v3300 = vpack.c.b16 %v3252, %v3250
      %v3301 = vpack.c.b16 %v3253, %v3251
      %v3302 = vpack.c.b16 %v3256, %v3254
      %v3303 = vpack.c.b16 %v3257, %v3255
      %v3304 = vpack.c.b16 %v3260, %v3258
      %v3305 = vpack.c.b16 %v3261, %v3259
      %v3306 = vpack.c.b16 %v3264, %v3262
      %v3307 = vpack.c.b16 %v3265, %v3263
      %v3308 = vpack.c.b16 %v3268, %v3266
      %v3309 = vpack.c.b16 %v3269, %v3267
      %v3310 = vpack.c.b16 %v3272, %v3270
      %v3311 = vpack.c.b16 %v3273, %v3271
      %v3312 = vpack.c.b16 %v3276, %v3274
      %v3313 = vpack.c.b16 %v3277, %v3275
      %v3314 = vpack.c.b16 %v3280, %v3278
      %v3315 = vpack.c.b16 %v3281, %v3279
      %v3316 = vpack.c.b16 %v3284, %v3282
      %v3317 = vpack.c.b16 %v3285, %v3283
      %3350 = vmatprep.subr.bf16.mxu0 %v3287
      %3351 = vmatpush1.bf16.msra.mxu0 %v3286
      %3352 = vmatprep.subr.bf16.mxu0 %v3289
      %3353 = vmatpush1.bf16.msra.mxu0 %v3288
      %3354 = vmatprep.subr.bf16.mxu0 %v3291
      %3355 = vmatpush1.bf16.msra.mxu0 %v3290
      %3356 = vmatprep.subr.bf16.mxu0 %v3293
      %3357 = vmatpush1.bf16.msra.mxu0 %v3292
      %3358 = vmatprep.subr.bf16.mxu0 %v3295
      %3359 = vmatpush1.bf16.msra.mxu0 %v3294
      %3360 = vmatprep.subr.bf16.mxu0 %v3297
      %3361 = vmatpush1.bf16.msra.mxu0 %v3296
      %3362 = vmatprep.subr.bf16.mxu0 %v3299
      %3363 = vmatpush1.bf16.msra.mxu0 %v3298
      %3364 = vmatprep.subr.bf16.mxu0 %v3301
      %3365 = vmatpush1.bf16.msra.mxu0 %v3300
      %3366 = vmatprep.subr.bf16.mxu0 %v3303
      %3367 = vmatpush1.bf16.msra.mxu0 %v3302
      %3368 = vmatprep.subr.bf16.mxu0 %v3305
      %3369 = vmatpush1.bf16.msra.mxu0 %v3304
      %3370 = vmatprep.subr.bf16.mxu0 %v3307
      %3371 = vmatpush1.bf16.msra.mxu0 %v3306
      %3372 = vmatprep.subr.bf16.mxu0 %v3309
      %3373 = vmatpush1.bf16.msra.mxu0 %v3308
      %3374 = vmatprep.subr.bf16.mxu0 %v3311
      %3375 = vmatpush1.bf16.msra.mxu0 %v3310
      %3376 = vmatprep.subr.bf16.mxu0 %v3313
      %3377 = vmatpush1.bf16.msra.mxu0 %v3312
      %3378 = vmatprep.subr.bf16.mxu0 %v3315
      %3379 = vmatpush1.bf16.msra.mxu0 %v3314
      %3380 = vmatprep.subr.bf16.mxu0 %v3317
      %3381 = vmatpush1.bf16.msra.mxu0 %v3316
      %3382 = vmatprep.mubr.bf16.mxu0 %v3185
      %3383 = vmatmul.mubr.bf16.gmra.mrb[0].mxu0 %v3184
      %v3384 = vpop.f32.mrb[0].mxu0
      %v3385 = vadd.f32 0.0, %v3384
      %v3386 = vpop.f32.mrb[0].mxu0
      %v3387 = vadd.f32 0.0, %v3386
      %v3388 = vpop.f32.mrb[0].mxu0
      %v3389 = vadd.f32 0.0, %v3388
      %v3390 = vpop.f32.mrb[0].mxu0
      %v3391 = vadd.f32 0.0, %v3390
      %3392 = vmatprep.mubr.bf16.mxu0 %v3187
      %3393 = vmatmul.mubr.bf16.gmra.mrb[0].mxu0 %v3186
      %v3394 = vpop.f32.mrb[0].mxu0
      %v3395 = vadd.f32 0.0, %v3394
      %v3396 = vpop.f32.mrb[0].mxu0
      %v3397 = vadd.f32 0.0, %v3396
      %v3398 = vpop.f32.mrb[0].mxu0
      %v3399 = vadd.f32 0.0, %v3398
      %v3400 = vpop.f32.mrb[0].mxu0
      %v3401 = vadd.f32 0.0, %v3400
      %3402 = vmatprep.mubr.bf16.mxu0 %v3189
      %3403 = vmatmul.mubr.bf16.gmra.mrb[0].mxu0 %v3188
      %v3404 = vpop.f32.mrb[0].mxu0
      %v3405 = vadd.f32 0.0, %v3404
      %v3406 = vpop.f32.mrb[0].mxu0
      %v3407 = vadd.f32 0.0, %v3406
      %v3408 = vpop.f32.mrb[0].mxu0
      %v3409 = vadd.f32 0.0, %v3408
      %v3410 = vpop.f32.mrb[0].mxu0
      %v3411 = vadd.f32 0.0, %v3410
      %3412 = vdwg.mxu0
      %v3413 = vld [vmem:[%s17] sm:$0x3]
      %v3414 = vpack.c.bf16 %v3389, %v3385
      %v3415 = vpack.c.bf16 %v3391, %v3387
      %v3416 = vpack.c.bf16 %v3399, %v3395
      %v3417 = vpack.c.bf16 %v3401, %v3397
      %v3418 = vpack.c.bf16 %v3409, %v3405
      %v3419 = vpack.c.bf16 %v3411, %v3407
      %v3420 = vld [vmem:[%s19] sm:$0xf]
      %s3421 = scalar_lea.vmem %s16, 256
      %v3422 = vld [vmem:[%s3421] sm:$0xff]
      %v3423 = vld [vmem:[%s3421 + $0x8] sm:$0xff]
      %v3424 = vld [vmem:[%s3421 + $0x10] sm:$0xff]
      %v3425 = vld [vmem:[%s3421 + $0x18] sm:$0xff]
      %v3426 = vld [vmem:[%s3421 + $0x20] sm:$0xff]
      %v3427 = vld [vmem:[%s3421 + $0x28] sm:$0xff]
      %v3428 = vld [vmem:[%s3421 + $0x30] sm:$0xff]
      %v3429 = vld [vmem:[%s3421 + $0x38] sm:$0xff]
      %v3430 = vld [vmem:[%s3421 + $0x40] sm:$0xff]
      %v3431 = vld [vmem:[%s3421 + $0x48] sm:$0xff]
      %v3432 = vld [vmem:[%s3421 + $0x50] sm:$0xff]
      %v3433 = vld [vmem:[%s3421 + $0x58] sm:$0xff]
      %v3434 = vld [vmem:[%s3421 + $0x60] sm:$0xff]
      %v3435 = vld [vmem:[%s3421 + $0x68] sm:$0xff]
      %v3436 = vld [vmem:[%s3421 + $0x70] sm:$0xff]
      %v3437 = vld [vmem:[%s3421 + $0x78] sm:$0xff]
      %v3438 = vld [vmem:[%s3421 + $0x80] sm:$0xff]
      %v3439 = vld [vmem:[%s3421 + $0x88] sm:$0xff]
      %v3440 = vld [vmem:[%s3421 + $0x90] sm:$0xff]
      %v3441 = vld [vmem:[%s3421 + $0x98] sm:$0xff]
      %v3442 = vld [vmem:[%s3421 + $0xa0] sm:$0xff]
      %v3443 = vld [vmem:[%s3421 + $0xa8] sm:$0xff]
      %v3444 = vld [vmem:[%s3421 + $0xb0] sm:$0xff]
      %v3445 = vld [vmem:[%s3421 + $0xb8] sm:$0xff]
      %v3446 = vld [vmem:[%s3421 + $0xc0] sm:$0xff]
      %v3447 = vld [vmem:[%s3421 + $0xc8] sm:$0xff]
      %v3448 = vld [vmem:[%s3421 + $0xd0] sm:$0xff]
      %v3449 = vld [vmem:[%s3421 + $0xd8] sm:$0xff]
      %v3450 = vld [vmem:[%s3421 + $0xe0] sm:$0xff]
      %v3451 = vld [vmem:[%s3421 + $0xe8] sm:$0xff]
      %v3452 = vld [vmem:[%s3421 + $0xf0] sm:$0xff]
      %v3453 = vld [vmem:[%s3421 + $0xf8] sm:$0xff]
      %v3486 = vunpack.c.l.b16 %v3422
      %v3487 = vunpack.c.h.b16 %v3422
      %v3488 = vunpack.c.l.b16 %v3423
      %v3489 = vunpack.c.h.b16 %v3423
      %v3490 = vunpack.c.l.b16 %v3424
      %v3491 = vunpack.c.h.b16 %v3424
      %v3492 = vunpack.c.l.b16 %v3425
      %v3493 = vunpack.c.h.b16 %v3425
      %v3494 = vunpack.c.l.b16 %v3426
      %v3495 = vunpack.c.h.b16 %v3426
      %v3496 = vunpack.c.l.b16 %v3427
      %v3497 = vunpack.c.h.b16 %v3427
      %v3498 = vunpack.c.l.b16 %v3428
      %v3499 = vunpack.c.h.b16 %v3428
      %v3500 = vunpack.c.l.b16 %v3429
      %v3501 = vunpack.c.h.b16 %v3429
      %v3502 = vunpack.c.l.b16 %v3430
      %v3503 = vunpack.c.h.b16 %v3430
      %v3504 = vunpack.c.l.b16 %v3431
      %v3505 = vunpack.c.h.b16 %v3431
      %v3506 = vunpack.c.l.b16 %v3432
      %v3507 = vunpack.c.h.b16 %v3432
      %v3508 = vunpack.c.l.b16 %v3433
      %v3509 = vunpack.c.h.b16 %v3433
      %v3510 = vunpack.c.l.b16 %v3434
      %v3511 = vunpack.c.h.b16 %v3434
      %v3512 = vunpack.c.l.b16 %v3435
      %v3513 = vunpack.c.h.b16 %v3435
      %v3514 = vunpack.c.l.b16 %v3436
      %v3515 = vunpack.c.h.b16 %v3436
      %v3516 = vunpack.c.l.b16 %v3437
      %v3517 = vunpack.c.h.b16 %v3437
      %v3518 = vunpack.c.l.b16 %v3438
      %v3519 = vunpack.c.h.b16 %v3438
      %v3520 = vunpack.c.l.b16 %v3439
      %v3521 = vunpack.c.h.b16 %v3439
      %v3522 = vunpack.c.l.b16 %v3440
      %v3523 = vunpack.c.h.b16 %v3440
      %v3524 = vunpack.c.l.b16 %v3441
      %v3525 = vunpack.c.h.b16 %v3441
      %v3526 = vunpack.c.l.b16 %v3442
      %v3527 = vunpack.c.h.b16 %v3442
      %v3528 = vunpack.c.l.b16 %v3443
      %v3529 = vunpack.c.h.b16 %v3443
      %v3530 = vunpack.c.l.b16 %v3444
      %v3531 = vunpack.c.h.b16 %v3444
      %v3532 = vunpack.c.l.b16 %v3445
      %v3533 = vunpack.c.h.b16 %v3445
      %v3534 = vunpack.c.l.b16 %v3446
      %v3535 = vunpack.c.h.b16 %v3446
      %v3536 = vunpack.c.l.b16 %v3447
      %v3537 = vunpack.c.h.b16 %v3447
      %v3538 = vunpack.c.l.b16 %v3448
      %v3539 = vunpack.c.h.b16 %v3448
      %v3540 = vunpack.c.l.b16 %v3449
      %v3541 = vunpack.c.h.b16 %v3449
      %v3542 = vunpack.c.l.b16 %v3450
      %v3543 = vunpack.c.h.b16 %v3450
      %v3544 = vunpack.c.l.b16 %v3451
      %v3545 = vunpack.c.h.b16 %v3451
      %v3546 = vunpack.c.l.b16 %v3452
      %v3547 = vunpack.c.h.b16 %v3452
      %v3548 = vunpack.c.l.b16 %v3453
      %v3549 = vunpack.c.h.b16 %v3453
      %v3550 = vpack.c.b16 %v3488, %v3486
      %v3551 = vpack.c.b16 %v3489, %v3487
      %v3552 = vpack.c.b16 %v3492, %v3490
      %v3553 = vpack.c.b16 %v3493, %v3491
      %v3554 = vpack.c.b16 %v3496, %v3494
      %v3555 = vpack.c.b16 %v3497, %v3495
      %v3556 = vpack.c.b16 %v3500, %v3498
      %v3557 = vpack.c.b16 %v3501, %v3499
      %v3558 = vpack.c.b16 %v3504, %v3502
      %v3559 = vpack.c.b16 %v3505, %v3503
      %v3560 = vpack.c.b16 %v3508, %v3506
      %v3561 = vpack.c.b16 %v3509, %v3507
      %v3562 = vpack.c.b16 %v3512, %v3510
      %v3563 = vpack.c.b16 %v3513, %v3511
      %v3564 = vpack.c.b16 %v3516, %v3514
      %v3565 = vpack.c.b16 %v3517, %v3515
      %v3566 = vpack.c.b16 %v3520, %v3518
      %v3567 = vpack.c.b16 %v3521, %v3519
      %v3568 = vpack.c.b16 %v3524, %v3522
      %v3569 = vpack.c.b16 %v3525, %v3523
      %v3570 = vpack.c.b16 %v3528, %v3526
      %v3571 = vpack.c.b16 %v3529, %v3527
      %v3572 = vpack.c.b16 %v3532, %v3530
      %v3573 = vpack.c.b16 %v3533, %v3531
      %v3574 = vpack.c.b16 %v3536, %v3534
      %v3575 = vpack.c.b16 %v3537, %v3535
      %v3576 = vpack.c.b16 %v3540, %v3538
      %v3577 = vpack.c.b16 %v3541, %v3539
      %v3578 = vpack.c.b16 %v3544, %v3542
      %v3579 = vpack.c.b16 %v3545, %v3543
      %v3580 = vpack.c.b16 %v3548, %v3546
      %v3581 = vpack.c.b16 %v3549, %v3547
      %3614 = vmatprep.subr.bf16.mxu0 %v3551
      %3615 = vmatpush1.bf16.msra.mxu0 %v3550
      %3616 = vmatprep.subr.bf16.mxu0 %v3553
      %3617 = vmatpush1.bf16.msra.mxu0 %v3552
      %3618 = vmatprep.subr.bf16.mxu0 %v3555
      %3619 = vmatpush1.bf16.msra.mxu0 %v3554
      %3620 = vmatprep.subr.bf16.mxu0 %v3557
      %3621 = vmatpush1.bf16.msra.mxu0 %v3556
      %3622 = vmatprep.subr.bf16.mxu0 %v3559
      %3623 = vmatpush1.bf16.msra.mxu0 %v3558
      %3624 = vmatprep.subr.bf16.mxu0 %v3561
      %3625 = vmatpush1.bf16.msra.mxu0 %v3560
      %3626 = vmatprep.subr.bf16.mxu0 %v3563
      %3627 = vmatpush1.bf16.msra.mxu0 %v3562
      %3628 = vmatprep.subr.bf16.mxu0 %v3565
      %3629 = vmatpush1.bf16.msra.mxu0 %v3564
      %3630 = vmatprep.subr.bf16.mxu0 %v3567
      %3631 = vmatpush1.bf16.msra.mxu0 %v3566
      %3632 = vmatprep.subr.bf16.mxu0 %v3569
      %3633 = vmatpush1.bf16.msra.mxu0 %v3568
      %3634 = vmatprep.subr.bf16.mxu0 %v3571
      %3635 = vmatpush1.bf16.msra.mxu0 %v3570
      %3636 = vmatprep.subr.bf16.mxu0 %v3573
      %3637 = vmatpush1.bf16.msra.mxu0 %v3572
      %3638 = vmatprep.subr.bf16.mxu0 %v3575
      %3639 = vmatpush1.bf16.msra.mxu0 %v3574
      %3640 = vmatprep.subr.bf16.mxu0 %v3577
      %3641 = vmatpush1.bf16.msra.mxu0 %v3576
      %3642 = vmatprep.subr.bf16.mxu0 %v3579
      %3643 = vmatpush1.bf16.msra.mxu0 %v3578
      %3644 = vmatprep.subr.bf16.mxu0 %v3581
      %3645 = vmatpush1.bf16.msra.mxu0 %v3580
      %3646 = vmatprep.mubr.bf16.mxu0 %v3185
      %3647 = vmatmul.mubr.bf16.gmra.mrb[0].mxu0 %v3184
      %v3648 = vpop.f32.mrb[0].mxu0
      %v3649 = vadd.f32 0.0, %v3648
      %v3650 = vpop.f32.mrb[0].mxu0
      %v3651 = vadd.f32 0.0, %v3650
      %v3652 = vpop.f32.mrb[0].mxu0
      %v3653 = vadd.f32 0.0, %v3652
      %v3654 = vpop.f32.mrb[0].mxu0
      %v3655 = vadd.f32 0.0, %v3654
      %3656 = vmatprep.mubr.bf16.mxu0 %v3187
      %3657 = vmatmul.mubr.bf16.gmra.mrb[0].mxu0 %v3186
      %v3658 = vpop.f32.mrb[0].mxu0
      %v3659 = vadd.f32 0.0, %v3658
      %v3660 = vpop.f32.mrb[0].mxu0
      %v3661 = vadd.f32 0.0, %v3660
      %v3662 = vpop.f32.mrb[0].mxu0
      %v3663 = vadd.f32 0.0, %v3662
      %v3664 = vpop.f32.mrb[0].mxu0
      %v3665 = vadd.f32 0.0, %v3664
      %3666 = vmatprep.mubr.bf16.mxu0 %v3189
      %3667 = vmatmul.mubr.bf16.gmra.mrb[0].mxu0 %v3188
      %v3668 = vpop.f32.mrb[0].mxu0
      %v3669 = vadd.f32 0.0, %v3668
      %v3670 = vpop.f32.mrb[0].mxu0
      %v3671 = vadd.f32 0.0, %v3670
      %v3672 = vpop.f32.mrb[0].mxu0
      %v3673 = vadd.f32 0.0, %v3672
      %v3674 = vpop.f32.mrb[0].mxu0
      %v3675 = vadd.f32 0.0, %v3674
      %3676 = vdwg.mxu0
      %s3677 = scalar_lea.vmem %s17, 2
      %v3678 = vld [vmem:[%s3677] sm:$0x3]
      %v3679 = vpack.c.bf16 %v3653, %v3649
      %v3680 = vpack.c.bf16 %v3655, %v3651
      %v3681 = vpack.c.bf16 %v3663, %v3659
      %v3682 = vpack.c.bf16 %v3665, %v3661
      %v3683 = vpack.c.bf16 %v3673, %v3669
      %v3684 = vpack.c.bf16 %v3675, %v3671
      %v3686 = vsel %vm1190, %v3678, 0
      %3688 = vmatprep.subr.bf16.mxu0 %v3680
      %3689 = vmatpush1.bf16.msra.mxu0 %v3679
      %3690 = vmatprep.subr.bf16.mxu0 %v3682
      %3691 = vmatpush1.bf16.msra.mxu0 %v3681
      %3692 = vmatprep.subr.bf16.mxu0 %v3684
      %3693 = vmatpush1.bf16.msra.mxu0 %v3683
      %3694 = vmatprep.subr.bf16.mxu0 0
      %3695 = vmatpush1.bf16.msra.mxu0 0
      %3696 = vmatprep.subr.bf16.mxu0 0
      %3697 = vmatpush1.bf16.msra.mxu0 0
      %3698 = vmatprep.subr.bf16.mxu0 0
      %3699 = vmatpush1.bf16.msra.mxu0 0
      %3700 = vmatprep.subr.bf16.mxu0 0
      %3701 = vmatpush1.bf16.msra.mxu0 0
      %3702 = vmatprep.subr.bf16.mxu0 0
      %3703 = vmatpush1.bf16.msra.mxu0 0
      %3704 = vmatprep.subr.bf16.mxu0 0
      %3705 = vmatpush1.bf16.msra.mxu0 0
      %3706 = vmatprep.subr.bf16.mxu0 0
      %3707 = vmatpush1.bf16.msra.mxu0 0
      %3708 = vmatprep.subr.bf16.mxu0 0
      %3709 = vmatpush1.bf16.msra.mxu0 0
      %3710 = vmatprep.subr.bf16.mxu0 0
      %3711 = vmatpush1.bf16.msra.mxu0 0
      %3712 = vmatprep.subr.bf16.mxu0 0
      %3713 = vmatpush1.bf16.msra.mxu0 0
      %3714 = vmatprep.subr.bf16.mxu0 0
      %3715 = vmatpush1.bf16.msra.mxu0 0
      %3716 = vmatprep.subr.bf16.mxu0 0
      %3717 = vmatpush1.bf16.msra.mxu0 0
      %3718 = vmatprep.subr.bf16.mxu0 0
      %3719 = vmatpush1.bf16.msra.mxu0 0
      %3720 = vmatprep.mubr.bf16.mxu0 0
      %3721 = vmatmul.mubr.bf16.gmra.mrb[0].mxu0 %v3686
      %v3722 = vpop.f32.mrb[0].mxu0
      %v3723 = vadd.f32 0.0, %v3722
      %v3724 = vpop.f32.mrb[0].mxu0
      %v3725 = vadd.f32 0.0, %v3724
      %v3726 = vpop.f32.mrb[0].mxu0
      %v3727 = vpop.f32.mrb[0].mxu0
      %3728 = vdwg.mxu0
      %v3730 = vsel %vm1190, %v3413, 0
      %3732 = vmatprep.subr.bf16.mxu0 %v3415
      %3733 = vmatpush1.bf16.msra.mxu0 %v3414
      %3734 = vmatprep.subr.bf16.mxu0 %v3417
      %3735 = vmatpush1.bf16.msra.mxu0 %v3416
      %3736 = vmatprep.subr.bf16.mxu0 %v3419
      %3737 = vmatpush1.bf16.msra.mxu0 %v3418
      %3738 = vmatprep.subr.bf16.mxu0 0
      %3739 = vmatpush1.bf16.msra.mxu0 0
      %3740 = vmatprep.subr.bf16.mxu0 0
      %3741 = vmatpush1.bf16.msra.mxu0 0
      %3742 = vmatprep.subr.bf16.mxu0 0
      %3743 = vmatpush1.bf16.msra.mxu0 0
      %3744 = vmatprep.subr.bf16.mxu0 0
      %3745 = vmatpush1.bf16.msra.mxu0 0
      %3746 = vmatprep.subr.bf16.mxu0 0
      %3747 = vmatpush1.bf16.msra.mxu0 0
      %3748 = vmatprep.subr.bf16.mxu0 0
      %3749 = vmatpush1.bf16.msra.mxu0 0
      %3750 = vmatprep.subr.bf16.mxu0 0
      %3751 = vmatpush1.bf16.msra.mxu0 0
      %3752 = vmatprep.subr.bf16.mxu0 0
      %3753 = vmatpush1.bf16.msra.mxu0 0
      %3754 = vmatprep.subr.bf16.mxu0 0
      %3755 = vmatpush1.bf16.msra.mxu0 0
      %3756 = vmatprep.subr.bf16.mxu0 0
      %3757 = vmatpush1.bf16.msra.mxu0 0
      %3758 = vmatprep.subr.bf16.mxu0 0
      %3759 = vmatpush1.bf16.msra.mxu0 0
      %3760 = vmatprep.subr.bf16.mxu0 0
      %3761 = vmatpush1.bf16.msra.mxu0 0
      %3762 = vmatprep.subr.bf16.mxu0 0
      %3763 = vmatpush1.bf16.msra.mxu0 0
      %3764 = vmatprep.mubr.bf16.mxu0 0
      %3765 = vmatmul.mubr.bf16.gmra.mrb[0].mxu0 %v3730
      %v3766 = vpop.f32.mrb[0].mxu0
      %v3767 = vadd.f32 %v3723, %v3766
      %v3768 = vpop.f32.mrb[0].mxu0
      %v3769 = vadd.f32 %v3725, %v3768
      %v3770 = vpop.f32.mrb[0].mxu0
      %v3771 = vpop.f32.mrb[0].mxu0
      %3772 = vdwg.mxu0
      %s3773 = scalar_lea.vmem %s19, 4
      %v3774 = vld [vmem:[%s3773] sm:$0xf]
      %v3776 = vsel %vm1190, %v3774, 0
      %3778 = vmatprep.subr.bf16.mxu0 %v3680
      %3779 = vmatpush1.bf16.msra.mxu0 %v3679
      %3780 = vmatprep.subr.bf16.mxu0 %v3682
      %3781 = vmatpush1.bf16.msra.mxu0 %v3681
      %3782 = vmatprep.subr.bf16.mxu0 %v3684
      %3783 = vmatpush1.bf16.msra.mxu0 %v3683
      %3784 = vmatprep.subr.bf16.mxu0 0
      %3785 = vmatpush1.bf16.msra.mxu0 0
      %3786 = vmatprep.subr.bf16.mxu0 0
      %3787 = vmatpush1.bf16.msra.mxu0 0
      %3788 = vmatprep.subr.bf16.mxu0 0
      %3789 = vmatpush1.bf16.msra.mxu0 0
      %3790 = vmatprep.subr.bf16.mxu0 0
      %3791 = vmatpush1.bf16.msra.mxu0 0
      %3792 = vmatprep.subr.bf16.mxu0 0
      %3793 = vmatpush1.bf16.msra.mxu0 0
      %3794 = vmatprep.subr.bf16.mxu0 0
      %3795 = vmatpush1.bf16.msra.mxu0 0
      %3796 = vmatprep.subr.bf16.mxu0 0
      %3797 = vmatpush1.bf16.msra.mxu0 0
      %3798 = vmatprep.subr.bf16.mxu0 0
      %3799 = vmatpush1.bf16.msra.mxu0 0
      %3800 = vmatprep.subr.bf16.mxu0 0
      %3801 = vmatpush1.bf16.msra.mxu0 0
      %3802 = vmatprep.subr.bf16.mxu0 0
      %3803 = vmatpush1.bf16.msra.mxu0 0
      %3804 = vmatprep.subr.bf16.mxu0 0
      %3805 = vmatpush1.bf16.msra.mxu0 0
      %3806 = vmatprep.subr.bf16.mxu0 0
      %3807 = vmatpush1.bf16.msra.mxu0 0
      %3808 = vmatprep.subr.bf16.mxu0 0
      %3809 = vmatpush1.bf16.msra.mxu0 0
      %3810 = vmatprep.mubr.bf16.mxu0 0
      %3811 = vmatmul.mubr.bf16.gmra.mrb[0].mxu0 %v3776
      %v3812 = vpop.f32.mrb[0].mxu0
      %v3813 = vadd.f32 0.0, %v3812
      %v3814 = vpop.f32.mrb[0].mxu0
      %v3815 = vadd.f32 0.0, %v3814
      %v3816 = vpop.f32.mrb[0].mxu0
      %v3817 = vpop.f32.mrb[0].mxu0
      %3818 = vdwg.mxu0
      %v3820 = vsel %vm1190, %v3420, 0
      %3822 = vmatprep.subr.bf16.mxu0 %v3415
      %3823 = vmatpush1.bf16.msra.mxu0 %v3414
      %3824 = vmatprep.subr.bf16.mxu0 %v3417
      %3825 = vmatpush1.bf16.msra.mxu0 %v3416
      %3826 = vmatprep.subr.bf16.mxu0 %v3419
      %3827 = vmatpush1.bf16.msra.mxu0 %v3418
      %3828 = vmatprep.subr.bf16.mxu0 0
      %3829 = vmatpush1.bf16.msra.mxu0 0
      %3830 = vmatprep.subr.bf16.mxu0 0
      %3831 = vmatpush1.bf16.msra.mxu0 0
      %3832 = vmatprep.subr.bf16.mxu0 0
      %3833 = vmatpush1.bf16.msra.mxu0 0
      %3834 = vmatprep.subr.bf16.mxu0 0
      %3835 = vmatpush1.bf16.msra.mxu0 0
      %3836 = vmatprep.subr.bf16.mxu0 0
      %3837 = vmatpush1.bf16.msra.mxu0 0
      %3838 = vmatprep.subr.bf16.mxu0 0
      %3839 = vmatpush1.bf16.msra.mxu0 0
      %3840 = vmatprep.subr.bf16.mxu0 0
      %3841 = vmatpush1.bf16.msra.mxu0 0
      %3842 = vmatprep.subr.bf16.mxu0 0
      %3843 = vmatpush1.bf16.msra.mxu0 0
      %3844 = vmatprep.subr.bf16.mxu0 0
      %3845 = vmatpush1.bf16.msra.mxu0 0
      %3846 = vmatprep.subr.bf16.mxu0 0
      %3847 = vmatpush1.bf16.msra.mxu0 0
      %3848 = vmatprep.subr.bf16.mxu0 0
      %3849 = vmatpush1.bf16.msra.mxu0 0
      %3850 = vmatprep.subr.bf16.mxu0 0
      %3851 = vmatpush1.bf16.msra.mxu0 0
      %3852 = vmatprep.subr.bf16.mxu0 0
      %3853 = vmatpush1.bf16.msra.mxu0 0
      %3854 = vmatprep.mubr.bf16.mxu0 0
      %3855 = vmatmul.mubr.bf16.gmra.mrb[0].mxu0 %v3820
      %v3856 = vpop.f32.mrb[0].mxu0
      %v3857 = vadd.f32 %v3813, %v3856
      %v3858 = vpop.f32.mrb[0].mxu0
      %v3859 = vadd.f32 %v3815, %v3858
      %v3860 = vpop.f32.mrb[0].mxu0
      %v3861 = vpop.f32.mrb[0].mxu0
      %3862 = vdwg.mxu0
      %s3863 = scalar_lea.vmem %s16, 512
      %v3864 = vld [vmem:[%s3863] sm:$0xff]
      %v3865 = vld [vmem:[%s3863 + $0x8] sm:$0xff]
      %v3866 = vld [vmem:[%s3863 + $0x10] sm:$0xff]
      %v3867 = vld [vmem:[%s3863 + $0x18] sm:$0xff]
      %v3868 = vld [vmem:[%s3863 + $0x20] sm:$0xff]
      %v3869 = vld [vmem:[%s3863 + $0x28] sm:$0xff]
      %v3870 = vld [vmem:[%s3863 + $0x30] sm:$0xff]
      %v3871 = vld [vmem:[%s3863 + $0x38] sm:$0xff]
      %v3872 = vld [vmem:[%s3863 + $0x40] sm:$0xff]
      %v3873 = vld [vmem:[%s3863 + $0x48] sm:$0xff]
      %v3874 = vld [vmem:[%s3863 + $0x50] sm:$0xff]
      %v3875 = vld [vmem:[%s3863 + $0x58] sm:$0xff]
      %v3876 = vld [vmem:[%s3863 + $0x60] sm:$0xff]
      %v3877 = vld [vmem:[%s3863 + $0x68] sm:$0xff]
      %v3878 = vld [vmem:[%s3863 + $0x70] sm:$0xff]
      %v3879 = vld [vmem:[%s3863 + $0x78] sm:$0xff]
      %v3880 = vld [vmem:[%s3863 + $0x80] sm:$0xff]
      %v3881 = vld [vmem:[%s3863 + $0x88] sm:$0xff]
      %v3882 = vld [vmem:[%s3863 + $0x90] sm:$0xff]
      %v3883 = vld [vmem:[%s3863 + $0x98] sm:$0xff]
      %v3884 = vld [vmem:[%s3863 + $0xa0] sm:$0xff]
      %v3885 = vld [vmem:[%s3863 + $0xa8] sm:$0xff]
      %v3886 = vld [vmem:[%s3863 + $0xb0] sm:$0xff]
      %v3887 = vld [vmem:[%s3863 + $0xb8] sm:$0xff]
      %v3888 = vld [vmem:[%s3863 + $0xc0] sm:$0xff]
      %v3889 = vld [vmem:[%s3863 + $0xc8] sm:$0xff]
      %v3890 = vld [vmem:[%s3863 + $0xd0] sm:$0xff]
      %v3891 = vld [vmem:[%s3863 + $0xd8] sm:$0xff]
      %v3892 = vld [vmem:[%s3863 + $0xe0] sm:$0xff]
      %v3893 = vld [vmem:[%s3863 + $0xe8] sm:$0xff]
      %v3894 = vld [vmem:[%s3863 + $0xf0] sm:$0xff]
      %v3895 = vld [vmem:[%s3863 + $0xf8] sm:$0xff]
      %v3928 = vunpack.c.l.b16 %v3864
      %v3929 = vunpack.c.h.b16 %v3864
      %v3930 = vunpack.c.l.b16 %v3865
      %v3931 = vunpack.c.h.b16 %v3865
      %v3932 = vunpack.c.l.b16 %v3866
      %v3933 = vunpack.c.h.b16 %v3866
      %v3934 = vunpack.c.l.b16 %v3867
      %v3935 = vunpack.c.h.b16 %v3867
      %v3936 = vunpack.c.l.b16 %v3868
      %v3937 = vunpack.c.h.b16 %v3868
      %v3938 = vunpack.c.l.b16 %v3869
      %v3939 = vunpack.c.h.b16 %v3869
      %v3940 = vunpack.c.l.b16 %v3870
      %v3941 = vunpack.c.h.b16 %v3870
      %v3942 = vunpack.c.l.b16 %v3871
      %v3943 = vunpack.c.h.b16 %v3871
      %v3944 = vunpack.c.l.b16 %v3872
      %v3945 = vunpack.c.h.b16 %v3872
      %v3946 = vunpack.c.l.b16 %v3873
      %v3947 = vunpack.c.h.b16 %v3873
      %v3948 = vunpack.c.l.b16 %v3874
      %v3949 = vunpack.c.h.b16 %v3874
      %v3950 = vunpack.c.l.b16 %v3875
      %v3951 = vunpack.c.h.b16 %v3875
      %v3952 = vunpack.c.l.b16 %v3876
      %v3953 = vunpack.c.h.b16 %v3876
      %v3954 = vunpack.c.l.b16 %v3877
      %v3955 = vunpack.c.h.b16 %v3877
      %v3956 = vunpack.c.l.b16 %v3878
      %v3957 = vunpack.c.h.b16 %v3878
      %v3958 = vunpack.c.l.b16 %v3879
      %v3959 = vunpack.c.h.b16 %v3879
      %v3960 = vunpack.c.l.b16 %v3880
      %v3961 = vunpack.c.h.b16 %v3880
      %v3962 = vunpack.c.l.b16 %v3881
      %v3963 = vunpack.c.h.b16 %v3881
      %v3964 = vunpack.c.l.b16 %v3882
      %v3965 = vunpack.c.h.b16 %v3882
      %v3966 = vunpack.c.l.b16 %v3883
      %v3967 = vunpack.c.h.b16 %v3883
      %v3968 = vunpack.c.l.b16 %v3884
      %v3969 = vunpack.c.h.b16 %v3884
      %v3970 = vunpack.c.l.b16 %v3885
      %v3971 = vunpack.c.h.b16 %v3885
      %v3972 = vunpack.c.l.b16 %v3886
      %v3973 = vunpack.c.h.b16 %v3886
      %v3974 = vunpack.c.l.b16 %v3887
      %v3975 = vunpack.c.h.b16 %v3887
      %v3976 = vunpack.c.l.b16 %v3888
      %v3977 = vunpack.c.h.b16 %v3888
      %v3978 = vunpack.c.l.b16 %v3889
      %v3979 = vunpack.c.h.b16 %v3889
      %v3980 = vunpack.c.l.b16 %v3890
      %v3981 = vunpack.c.h.b16 %v3890
      %v3982 = vunpack.c.l.b16 %v3891
      %v3983 = vunpack.c.h.b16 %v3891
      %v3984 = vunpack.c.l.b16 %v3892
      %v3985 = vunpack.c.h.b16 %v3892
      %v3986 = vunpack.c.l.b16 %v3893
      %v3987 = vunpack.c.h.b16 %v3893
      %v3988 = vunpack.c.l.b16 %v3894
      %v3989 = vunpack.c.h.b16 %v3894
      %v3990 = vunpack.c.l.b16 %v3895
      %v3991 = vunpack.c.h.b16 %v3895
      %v3992 = vpack.c.b16 %v3930, %v3928
      %v3993 = vpack.c.b16 %v3931, %v3929
      %v3994 = vpack.c.b16 %v3934, %v3932
      %v3995 = vpack.c.b16 %v3935, %v3933
      %v3996 = vpack.c.b16 %v3938, %v3936
      %v3997 = vpack.c.b16 %v3939, %v3937
      %v3998 = vpack.c.b16 %v3942, %v3940
      %v3999 = vpack.c.b16 %v3943, %v3941
      %v4000 = vpack.c.b16 %v3946, %v3944
      %v4001 = vpack.c.b16 %v3947, %v3945
      %v4002 = vpack.c.b16 %v3950, %v3948
      %v4003 = vpack.c.b16 %v3951, %v3949
      %v4004 = vpack.c.b16 %v3954, %v3952
      %v4005 = vpack.c.b16 %v3955, %v3953
      %v4006 = vpack.c.b16 %v3958, %v3956
      %v4007 = vpack.c.b16 %v3959, %v3957
      %v4008 = vpack.c.b16 %v3962, %v3960
      %v4009 = vpack.c.b16 %v3963, %v3961
      %v4010 = vpack.c.b16 %v3966, %v3964
      %v4011 = vpack.c.b16 %v3967, %v3965
      %v4012 = vpack.c.b16 %v3970, %v3968
      %v4013 = vpack.c.b16 %v3971, %v3969
      %v4014 = vpack.c.b16 %v3974, %v3972
      %v4015 = vpack.c.b16 %v3975, %v3973
      %v4016 = vpack.c.b16 %v3978, %v3976
      %v4017 = vpack.c.b16 %v3979, %v3977
      %v4018 = vpack.c.b16 %v3982, %v3980
      %v4019 = vpack.c.b16 %v3983, %v3981
      %v4020 = vpack.c.b16 %v3986, %v3984
      %v4021 = vpack.c.b16 %v3987, %v3985
      %v4022 = vpack.c.b16 %v3990, %v3988
      %v4023 = vpack.c.b16 %v3991, %v3989
      %4056 = vmatprep.subr.bf16.mxu0 %v3993
      %4057 = vmatpush1.bf16.msra.mxu0 %v3992
      %4058 = vmatprep.subr.bf16.mxu0 %v3995
      %4059 = vmatpush1.bf16.msra.mxu0 %v3994
      %4060 = vmatprep.subr.bf16.mxu0 %v3997
      %4061 = vmatpush1.bf16.msra.mxu0 %v3996
      %4062 = vmatprep.subr.bf16.mxu0 %v3999
      %4063 = vmatpush1.bf16.msra.mxu0 %v3998
      %4064 = vmatprep.subr.bf16.mxu0 %v4001
      %4065 = vmatpush1.bf16.msra.mxu0 %v4000
      %4066 = vmatprep.subr.bf16.mxu0 %v4003
      %4067 = vmatpush1.bf16.msra.mxu0 %v4002
      %4068 = vmatprep.subr.bf16.mxu0 %v4005
      %4069 = vmatpush1.bf16.msra.mxu0 %v4004
      %4070 = vmatprep.subr.bf16.mxu0 %v4007
      %4071 = vmatpush1.bf16.msra.mxu0 %v4006
      %4072 = vmatprep.subr.bf16.mxu0 %v4009
      %4073 = vmatpush1.bf16.msra.mxu0 %v4008
      %4074 = vmatprep.subr.bf16.mxu0 %v4011
      %4075 = vmatpush1.bf16.msra.mxu0 %v4010
      %4076 = vmatprep.subr.bf16.mxu0 %v4013
      %4077 = vmatpush1.bf16.msra.mxu0 %v4012
      %4078 = vmatprep.subr.bf16.mxu0 %v4015
      %4079 = vmatpush1.bf16.msra.mxu0 %v4014
      %4080 = vmatprep.subr.bf16.mxu0 %v4017
      %4081 = vmatpush1.bf16.msra.mxu0 %v4016
      %4082 = vmatprep.subr.bf16.mxu0 %v4019
      %4083 = vmatpush1.bf16.msra.mxu0 %v4018
      %4084 = vmatprep.subr.bf16.mxu0 %v4021
      %4085 = vmatpush1.bf16.msra.mxu0 %v4020
      %4086 = vmatprep.subr.bf16.mxu0 %v4023
      %4087 = vmatpush1.bf16.msra.mxu0 %v4022
      %4088 = vmatprep.mubr.bf16.mxu0 %v3185
      %4089 = vmatmul.mubr.bf16.gmra.mrb[0].mxu0 %v3184
      %v4090 = vpop.f32.mrb[0].mxu0
      %v4091 = vadd.f32 0.0, %v4090
      %v4092 = vpop.f32.mrb[0].mxu0
      %v4093 = vadd.f32 0.0, %v4092
      %v4094 = vpop.f32.mrb[0].mxu0
      %v4095 = vadd.f32 0.0, %v4094
      %v4096 = vpop.f32.mrb[0].mxu0
      %v4097 = vadd.f32 0.0, %v4096
      %4098 = vmatprep.mubr.bf16.mxu0 %v3187
      %4099 = vmatmul.mubr.bf16.gmra.mrb[0].mxu0 %v3186
      %v4100 = vpop.f32.mrb[0].mxu0
      %v4101 = vadd.f32 0.0, %v4100
      %v4102 = vpop.f32.mrb[0].mxu0
      %v4103 = vadd.f32 0.0, %v4102
      %v4104 = vpop.f32.mrb[0].mxu0
      %v4105 = vadd.f32 0.0, %v4104
      %v4106 = vpop.f32.mrb[0].mxu0
      %v4107 = vadd.f32 0.0, %v4106
      %4108 = vmatprep.mubr.bf16.mxu0 %v3189
      %4109 = vmatmul.mubr.bf16.gmra.mrb[0].mxu0 %v3188
      %v4110 = vpop.f32.mrb[0].mxu0
      %v4111 = vadd.f32 0.0, %v4110
      %v4112 = vpop.f32.mrb[0].mxu0
      %v4113 = vadd.f32 0.0, %v4112
      %v4114 = vpop.f32.mrb[0].mxu0
      %v4115 = vadd.f32 0.0, %v4114
      %v4116 = vpop.f32.mrb[0].mxu0
      %v4117 = vadd.f32 0.0, %v4116
      %4118 = vdwg.mxu0
      %s4119 = scalar_lea.vmem %s17, 4
      %v4120 = vld [vmem:[%s4119] sm:$0x3]
      %v4121 = vpack.c.bf16 %v4095, %v4091
      %v4122 = vpack.c.bf16 %v4097, %v4093
      %v4123 = vpack.c.bf16 %v4105, %v4101
      %v4124 = vpack.c.bf16 %v4107, %v4103
      %v4125 = vpack.c.bf16 %v4115, %v4111
      %v4126 = vpack.c.bf16 %v4117, %v4113
      %v4128 = vsel %vm1190, %v4120, 0
      %4130 = vmatprep.subr.bf16.mxu0 %v4122
      %4131 = vmatpush1.bf16.msra.mxu0 %v4121
      %4132 = vmatprep.subr.bf16.mxu0 %v4124
      %4133 = vmatpush1.bf16.msra.mxu0 %v4123
      %4134 = vmatprep.subr.bf16.mxu0 %v4126
      %4135 = vmatpush1.bf16.msra.mxu0 %v4125
      %4136 = vmatprep.subr.bf16.mxu0 0
      %4137 = vmatpush1.bf16.msra.mxu0 0
      %4138 = vmatprep.subr.bf16.mxu0 0
      %4139 = vmatpush1.bf16.msra.mxu0 0
      %4140 = vmatprep.subr.bf16.mxu0 0
      %4141 = vmatpush1.bf16.msra.mxu0 0
      %4142 = vmatprep.subr.bf16.mxu0 0
      %4143 = vmatpush1.bf16.msra.mxu0 0
      %4144 = vmatprep.subr.bf16.mxu0 0
      %4145 = vmatpush1.bf16.msra.mxu0 0
      %4146 = vmatprep.subr.bf16.mxu0 0
      %4147 = vmatpush1.bf16.msra.mxu0 0
      %4148 = vmatprep.subr.bf16.mxu0 0
      %4149 = vmatpush1.bf16.msra.mxu0 0
      %4150 = vmatprep.subr.bf16.mxu0 0
      %4151 = vmatpush1.bf16.msra.mxu0 0
      %4152 = vmatprep.subr.bf16.mxu0 0
      %4153 = vmatpush1.bf16.msra.mxu0 0
      %4154 = vmatprep.subr.bf16.mxu0 0
      %4155 = vmatpush1.bf16.msra.mxu0 0
      %4156 = vmatprep.subr.bf16.mxu0 0
      %4157 = vmatpush1.bf16.msra.mxu0 0
      %4158 = vmatprep.subr.bf16.mxu0 0
      %4159 = vmatpush1.bf16.msra.mxu0 0
      %4160 = vmatprep.subr.bf16.mxu0 0
      %4161 = vmatpush1.bf16.msra.mxu0 0
      %4162 = vmatprep.mubr.bf16.mxu0 0
      %4163 = vmatmul.mubr.bf16.gmra.mrb[0].mxu0 %v4128
      %v4164 = vpop.f32.mrb[0].mxu0
      %v4165 = vadd.f32 0.0, %v4164
      %v4166 = vpop.f32.mrb[0].mxu0
      %v4167 = vadd.f32 0.0, %v4166
      %v4168 = vpop.f32.mrb[0].mxu0
      %v4169 = vpop.f32.mrb[0].mxu0
      %4170 = vdwg.mxu0
      %v4171 = vadd.f32 %v3767, %v4165
      %v4172 = vadd.f32 %v3769, %v4167
      %s4173 = scalar_lea.vmem %s19, 8
      %v4174 = vld [vmem:[%s4173] sm:$0xf]
      %v4176 = vsel %vm1190, %v4174, 0
      %4178 = vmatprep.subr.bf16.mxu0 %v4122
      %4179 = vmatpush1.bf16.msra.mxu0 %v4121
      %4180 = vmatprep.subr.bf16.mxu0 %v4124
      %4181 = vmatpush1.bf16.msra.mxu0 %v4123
      %4182 = vmatprep.subr.bf16.mxu0 %v4126
      %4183 = vmatpush1.bf16.msra.mxu0 %v4125
      %4184 = vmatprep.subr.bf16.mxu0 0
      %4185 = vmatpush1.bf16.msra.mxu0 0
      %4186 = vmatprep.subr.bf16.mxu0 0
      %4187 = vmatpush1.bf16.msra.mxu0 0
      %4188 = vmatprep.subr.bf16.mxu0 0
      %4189 = vmatpush1.bf16.msra.mxu0 0
      %4190 = vmatprep.subr.bf16.mxu0 0
      %4191 = vmatpush1.bf16.msra.mxu0 0
      %4192 = vmatprep.subr.bf16.mxu0 0
      %4193 = vmatpush1.bf16.msra.mxu0 0
      %4194 = vmatprep.subr.bf16.mxu0 0
      %4195 = vmatpush1.bf16.msra.mxu0 0
      %4196 = vmatprep.subr.bf16.mxu0 0
      %4197 = vmatpush1.bf16.msra.mxu0 0
      %4198 = vmatprep.subr.bf16.mxu0 0
      %4199 = vmatpush1.bf16.msra.mxu0 0
      %4200 = vmatprep.subr.bf16.mxu0 0
      %4201 = vmatpush1.bf16.msra.mxu0 0
      %4202 = vmatprep.subr.bf16.mxu0 0
      %4203 = vmatpush1.bf16.msra.mxu0 0
      %4204 = vmatprep.subr.bf16.mxu0 0
      %4205 = vmatpush1.bf16.msra.mxu0 0
      %4206 = vmatprep.subr.bf16.mxu0 0
      %4207 = vmatpush1.bf16.msra.mxu0 0
      %4208 = vmatprep.subr.bf16.mxu0 0
      %4209 = vmatpush1.bf16.msra.mxu0 0
      %4210 = vmatprep.mubr.bf16.mxu0 0
      %4211 = vmatmul.mubr.bf16.gmra.mrb[0].mxu0 %v4176
      %v4212 = vpop.f32.mrb[0].mxu0
      %v4213 = vadd.f32 0.0, %v4212
      %v4214 = vpop.f32.mrb[0].mxu0
      %v4215 = vadd.f32 0.0, %v4214
      %v4216 = vpop.f32.mrb[0].mxu0
      %v4217 = vpop.f32.mrb[0].mxu0
      %4218 = vdwg.mxu0
      %v4219 = vadd.f32 %v3857, %v4213
      %v4220 = vadd.f32 %v3859, %v4215
      %s4221 = scalar_lea.vmem %s16, 768
      %v4222 = vld [vmem:[%s4221] sm:$0xff]
      %v4223 = vld [vmem:[%s4221 + $0x8] sm:$0xff]
      %v4224 = vld [vmem:[%s4221 + $0x10] sm:$0xff]
      %v4225 = vld [vmem:[%s4221 + $0x18] sm:$0xff]
      %v4226 = vld [vmem:[%s4221 + $0x20] sm:$0xff]
      %v4227 = vld [vmem:[%s4221 + $0x28] sm:$0xff]
      %v4228 = vld [vmem:[%s4221 + $0x30] sm:$0xff]
      %v4229 = vld [vmem:[%s4221 + $0x38] sm:$0xff]
      %v4230 = vld [vmem:[%s4221 + $0x40] sm:$0xff]
      %v4231 = vld [vmem:[%s4221 + $0x48] sm:$0xff]
      %v4232 = vld [vmem:[%s4221 + $0x50] sm:$0xff]
      %v4233 = vld [vmem:[%s4221 + $0x58] sm:$0xff]
      %v4234 = vld [vmem:[%s4221 + $0x60] sm:$0xff]
      %v4235 = vld [vmem:[%s4221 + $0x68] sm:$0xff]
      %v4236 = vld [vmem:[%s4221 + $0x70] sm:$0xff]
      %v4237 = vld [vmem:[%s4221 + $0x78] sm:$0xff]
      %v4238 = vld [vmem:[%s4221 + $0x80] sm:$0xff]
      %v4239 = vld [vmem:[%s4221 + $0x88] sm:$0xff]
      %v4240 = vld [vmem:[%s4221 + $0x90] sm:$0xff]
      %v4241 = vld [vmem:[%s4221 + $0x98] sm:$0xff]
      %v4242 = vld [vmem:[%s4221 + $0xa0] sm:$0xff]
      %v4243 = vld [vmem:[%s4221 + $0xa8] sm:$0xff]
      %v4244 = vld [vmem:[%s4221 + $0xb0] sm:$0xff]
      %v4245 = vld [vmem:[%s4221 + $0xb8] sm:$0xff]
      %v4246 = vld [vmem:[%s4221 + $0xc0] sm:$0xff]
      %v4247 = vld [vmem:[%s4221 + $0xc8] sm:$0xff]
      %v4248 = vld [vmem:[%s4221 + $0xd0] sm:$0xff]
      %v4249 = vld [vmem:[%s4221 + $0xd8] sm:$0xff]
      %v4250 = vld [vmem:[%s4221 + $0xe0] sm:$0xff]
      %v4251 = vld [vmem:[%s4221 + $0xe8] sm:$0xff]
      %v4252 = vld [vmem:[%s4221 + $0xf0] sm:$0xff]
      %v4253 = vld [vmem:[%s4221 + $0xf8] sm:$0xff]
      %v4286 = vunpack.c.l.b16 %v4222
      %v4287 = vunpack.c.h.b16 %v4222
      %v4288 = vunpack.c.l.b16 %v4223
      %v4289 = vunpack.c.h.b16 %v4223
      %v4290 = vunpack.c.l.b16 %v4224
      %v4291 = vunpack.c.h.b16 %v4224
      %v4292 = vunpack.c.l.b16 %v4225
      %v4293 = vunpack.c.h.b16 %v4225
      %v4294 = vunpack.c.l.b16 %v4226
      %v4295 = vunpack.c.h.b16 %v4226
      %v4296 = vunpack.c.l.b16 %v4227
      %v4297 = vunpack.c.h.b16 %v4227
      %v4298 = vunpack.c.l.b16 %v4228
      %v4299 = vunpack.c.h.b16 %v4228
      %v4300 = vunpack.c.l.b16 %v4229
      %v4301 = vunpack.c.h.b16 %v4229
      %v4302 = vunpack.c.l.b16 %v4230
      %v4303 = vunpack.c.h.b16 %v4230
      %v4304 = vunpack.c.l.b16 %v4231
      %v4305 = vunpack.c.h.b16 %v4231
      %v4306 = vunpack.c.l.b16 %v4232
      %v4307 = vunpack.c.h.b16 %v4232
      %v4308 = vunpack.c.l.b16 %v4233
      %v4309 = vunpack.c.h.b16 %v4233
      %v4310 = vunpack.c.l.b16 %v4234
      %v4311 = vunpack.c.h.b16 %v4234
      %v4312 = vunpack.c.l.b16 %v4235
      %v4313 = vunpack.c.h.b16 %v4235
      %v4314 = vunpack.c.l.b16 %v4236
      %v4315 = vunpack.c.h.b16 %v4236
      %v4316 = vunpack.c.l.b16 %v4237
      %v4317 = vunpack.c.h.b16 %v4237
      %v4318 = vunpack.c.l.b16 %v4238
      %v4319 = vunpack.c.h.b16 %v4238
      %v4320 = vunpack.c.l.b16 %v4239
      %v4321 = vunpack.c.h.b16 %v4239
      %v4322 = vunpack.c.l.b16 %v4240
      %v4323 = vunpack.c.h.b16 %v4240
      %v4324 = vunpack.c.l.b16 %v4241
      %v4325 = vunpack.c.h.b16 %v4241
      %v4326 = vunpack.c.l.b16 %v4242
      %v4327 = vunpack.c.h.b16 %v4242
      %v4328 = vunpack.c.l.b16 %v4243
      %v4329 = vunpack.c.h.b16 %v4243
      %v4330 = vunpack.c.l.b16 %v4244
      %v4331 = vunpack.c.h.b16 %v4244
      %v4332 = vunpack.c.l.b16 %v4245
      %v4333 = vunpack.c.h.b16 %v4245
      %v4334 = vunpack.c.l.b16 %v4246
      %v4335 = vunpack.c.h.b16 %v4246
      %v4336 = vunpack.c.l.b16 %v4247
      %v4337 = vunpack.c.h.b16 %v4247
      %v4338 = vunpack.c.l.b16 %v4248
      %v4339 = vunpack.c.h.b16 %v4248
      %v4340 = vunpack.c.l.b16 %v4249
      %v4341 = vunpack.c.h.b16 %v4249
      %v4342 = vunpack.c.l.b16 %v4250
      %v4343 = vunpack.c.h.b16 %v4250
      %v4344 = vunpack.c.l.b16 %v4251
      %v4345 = vunpack.c.h.b16 %v4251
      %v4346 = vunpack.c.l.b16 %v4252
      %v4347 = vunpack.c.h.b16 %v4252
      %v4348 = vunpack.c.l.b16 %v4253
      %v4349 = vunpack.c.h.b16 %v4253
      %v4350 = vpack.c.b16 %v4288, %v4286
      %v4351 = vpack.c.b16 %v4289, %v4287
      %v4352 = vpack.c.b16 %v4292, %v4290
      %v4353 = vpack.c.b16 %v4293, %v4291
      %v4354 = vpack.c.b16 %v4296, %v4294
      %v4355 = vpack.c.b16 %v4297, %v4295
      %v4356 = vpack.c.b16 %v4300, %v4298
      %v4357 = vpack.c.b16 %v4301, %v4299
      %v4358 = vpack.c.b16 %v4304, %v4302
      %v4359 = vpack.c.b16 %v4305, %v4303
      %v4360 = vpack.c.b16 %v4308, %v4306
      %v4361 = vpack.c.b16 %v4309, %v4307
      %v4362 = vpack.c.b16 %v4312, %v4310
      %v4363 = vpack.c.b16 %v4313, %v4311
      %v4364 = vpack.c.b16 %v4316, %v4314
      %v4365 = vpack.c.b16 %v4317, %v4315
      %v4366 = vpack.c.b16 %v4320, %v4318
      %v4367 = vpack.c.b16 %v4321, %v4319
      %v4368 = vpack.c.b16 %v4324, %v4322
      %v4369 = vpack.c.b16 %v4325, %v4323
      %v4370 = vpack.c.b16 %v4328, %v4326
      %v4371 = vpack.c.b16 %v4329, %v4327
      %v4372 = vpack.c.b16 %v4332, %v4330
      %v4373 = vpack.c.b16 %v4333, %v4331
      %v4374 = vpack.c.b16 %v4336, %v4334
      %v4375 = vpack.c.b16 %v4337, %v4335
      %v4376 = vpack.c.b16 %v4340, %v4338
      %v4377 = vpack.c.b16 %v4341, %v4339
      %v4378 = vpack.c.b16 %v4344, %v4342
      %v4379 = vpack.c.b16 %v4345, %v4343
      %v4380 = vpack.c.b16 %v4348, %v4346
      %v4381 = vpack.c.b16 %v4349, %v4347
      %4414 = vmatprep.subr.bf16.mxu0 %v4351
      %4415 = vmatpush1.bf16.msra.mxu0 %v4350
      %4416 = vmatprep.subr.bf16.mxu0 %v4353
      %4417 = vmatpush1.bf16.msra.mxu0 %v4352
      %4418 = vmatprep.subr.bf16.mxu0 %v4355
      %4419 = vmatpush1.bf16.msra.mxu0 %v4354
      %4420 = vmatprep.subr.bf16.mxu0 %v4357
      %4421 = vmatpush1.bf16.msra.mxu0 %v4356
      %4422 = vmatprep.subr.bf16.mxu0 %v4359
      %4423 = vmatpush1.bf16.msra.mxu0 %v4358
      %4424 = vmatprep.subr.bf16.mxu0 %v4361
      %4425 = vmatpush1.bf16.msra.mxu0 %v4360
      %4426 = vmatprep.subr.bf16.mxu0 %v4363
      %4427 = vmatpush1.bf16.msra.mxu0 %v4362
      %4428 = vmatprep.subr.bf16.mxu0 %v4365
      %4429 = vmatpush1.bf16.msra.mxu0 %v4364
      %4430 = vmatprep.subr.bf16.mxu0 %v4367
      %4431 = vmatpush1.bf16.msra.mxu0 %v4366
      %4432 = vmatprep.subr.bf16.mxu0 %v4369
      %4433 = vmatpush1.bf16.msra.mxu0 %v4368
      %4434 = vmatprep.subr.bf16.mxu0 %v4371
      %4435 = vmatpush1.bf16.msra.mxu0 %v4370
      %4436 = vmatprep.subr.bf16.mxu0 %v4373
      %4437 = vmatpush1.bf16.msra.mxu0 %v4372
      %4438 = vmatprep.subr.bf16.mxu0 %v4375
      %4439 = vmatpush1.bf16.msra.mxu0 %v4374
      %4440 = vmatprep.subr.bf16.mxu0 %v4377
      %4441 = vmatpush1.bf16.msra.mxu0 %v4376
      %4442 = vmatprep.subr.bf16.mxu0 %v4379
      %4443 = vmatpush1.bf16.msra.mxu0 %v4378
      %4444 = vmatprep.subr.bf16.mxu0 %v4381
      %4445 = vmatpush1.bf16.msra.mxu0 %v4380
      %4446 = vmatprep.mubr.bf16.mxu0 %v3185
      %4447 = vmatmul.mubr.bf16.gmra.mrb[0].mxu0 %v3184
      %v4448 = vpop.f32.mrb[0].mxu0
      %v4449 = vadd.f32 0.0, %v4448
      %v4450 = vpop.f32.mrb[0].mxu0
      %v4451 = vadd.f32 0.0, %v4450
      %v4452 = vpop.f32.mrb[0].mxu0
      %v4453 = vadd.f32 0.0, %v4452
      %v4454 = vpop.f32.mrb[0].mxu0
      %v4455 = vadd.f32 0.0, %v4454
      %4456 = vmatprep.mubr.bf16.mxu0 %v3187
      %4457 = vmatmul.mubr.bf16.gmra.mrb[0].mxu0 %v3186
      %v4458 = vpop.f32.mrb[0].mxu0
      %v4459 = vadd.f32 0.0, %v4458
      %v4460 = vpop.f32.mrb[0].mxu0
      %v4461 = vadd.f32 0.0, %v4460
      %v4462 = vpop.f32.mrb[0].mxu0
      %v4463 = vadd.f32 0.0, %v4462
      %v4464 = vpop.f32.mrb[0].mxu0
      %v4465 = vadd.f32 0.0, %v4464
      %4466 = vmatprep.mubr.bf16.mxu0 %v3189
      %4467 = vmatmul.mubr.bf16.gmra.mrb[0].mxu0 %v3188
      %v4468 = vpop.f32.mrb[0].mxu0
      %v4469 = vadd.f32 0.0, %v4468
      %v4470 = vpop.f32.mrb[0].mxu0
      %v4471 = vadd.f32 0.0, %v4470
      %v4472 = vpop.f32.mrb[0].mxu0
      %v4473 = vadd.f32 0.0, %v4472
      %v4474 = vpop.f32.mrb[0].mxu0
      %v4475 = vadd.f32 0.0, %v4474
      %4476 = vdwg.mxu0
      %s4477 = scalar_lea.vmem %s17, 6
      %v4478 = vld [vmem:[%s4477] sm:$0x3]
      %v4479 = vpack.c.bf16 %v4453, %v4449
      %v4480 = vpack.c.bf16 %v4455, %v4451
      %v4481 = vpack.c.bf16 %v4463, %v4459
      %v4482 = vpack.c.bf16 %v4465, %v4461
      %v4483 = vpack.c.bf16 %v4473, %v4469
      %v4484 = vpack.c.bf16 %v4475, %v4471
      %v4486 = vsel %vm1190, %v4478, 0
      %4488 = vmatprep.subr.bf16.mxu0 %v4480
      %4489 = vmatpush1.bf16.msra.mxu0 %v4479
      %4490 = vmatprep.subr.bf16.mxu0 %v4482
      %4491 = vmatpush1.bf16.msra.mxu0 %v4481
      %4492 = vmatprep.subr.bf16.mxu0 %v4484
      %4493 = vmatpush1.bf16.msra.mxu0 %v4483
      %4494 = vmatprep.subr.bf16.mxu0 0
      %4495 = vmatpush1.bf16.msra.mxu0 0
      %4496 = vmatprep.subr.bf16.mxu0 0
      %4497 = vmatpush1.bf16.msra.mxu0 0
      %4498 = vmatprep.subr.bf16.mxu0 0
      %4499 = vmatpush1.bf16.msra.mxu0 0
      %4500 = vmatprep.subr.bf16.mxu0 0
      %4501 = vmatpush1.bf16.msra.mxu0 0
      %4502 = vmatprep.subr.bf16.mxu0 0
      %4503 = vmatpush1.bf16.msra.mxu0 0
      %4504 = vmatprep.subr.bf16.mxu0 0
      %4505 = vmatpush1.bf16.msra.mxu0 0
      %4506 = vmatprep.subr.bf16.mxu0 0
      %4507 = vmatpush1.bf16.msra.mxu0 0
      %4508 = vmatprep.subr.bf16.mxu0 0
      %4509 = vmatpush1.bf16.msra.mxu0 0
      %4510 = vmatprep.subr.bf16.mxu0 0
      %4511 = vmatpush1.bf16.msra.mxu0 0
      %4512 = vmatprep.subr.bf16.mxu0 0
      %4513 = vmatpush1.bf16.msra.mxu0 0
      %4514 = vmatprep.subr.bf16.mxu0 0
      %4515 = vmatpush1.bf16.msra.mxu0 0
      %4516 = vmatprep.subr.bf16.mxu0 0
      %4517 = vmatpush1.bf16.msra.mxu0 0
      %4518 = vmatprep.subr.bf16.mxu0 0
      %4519 = vmatpush1.bf16.msra.mxu0 0
      %4520 = vmatprep.mubr.bf16.mxu0 0
      %4521 = vmatmul.mubr.bf16.gmra.mrb[0].mxu0 %v4486
      %v4522 = vpop.f32.mrb[0].mxu0
      %v4523 = vadd.f32 0.0, %v4522
      %v4524 = vpop.f32.mrb[0].mxu0
      %v4525 = vadd.f32 0.0, %v4524
      %v4526 = vpop.f32.mrb[0].mxu0
      %v4527 = vpop.f32.mrb[0].mxu0
      %4528 = vdwg.mxu0
      %v4529 = vadd.f32 %v4171, %v4523
      %v4530 = vadd.f32 %v4172, %v4525
      %s4531 = scalar_lea.vmem %s19, 12
      %v4532 = vld [vmem:[%s4531] sm:$0xf]
      %v4534 = vsel %vm1190, %v4532, 0
      %4536 = vmatprep.subr.bf16.mxu0 %v4480
      %4537 = vmatpush1.bf16.msra.mxu0 %v4479
      %4538 = vmatprep.subr.bf16.mxu0 %v4482
      %4539 = vmatpush1.bf16.msra.mxu0 %v4481
      %4540 = vmatprep.subr.bf16.mxu0 %v4484
      %4541 = vmatpush1.bf16.msra.mxu0 %v4483
      %4542 = vmatprep.subr.bf16.mxu0 0
      %4543 = vmatpush1.bf16.msra.mxu0 0
      %4544 = vmatprep.subr.bf16.mxu0 0
      %4545 = vmatpush1.bf16.msra.mxu0 0
      %4546 = vmatprep.subr.bf16.mxu0 0
      %4547 = vmatpush1.bf16.msra.mxu0 0
      %4548 = vmatprep.subr.bf16.mxu0 0
      %4549 = vmatpush1.bf16.msra.mxu0 0
      %4550 = vmatprep.subr.bf16.mxu0 0
      %4551 = vmatpush1.bf16.msra.mxu0 0
      %4552 = vmatprep.subr.bf16.mxu0 0
      %4553 = vmatpush1.bf16.msra.mxu0 0
      %4554 = vmatprep.subr.bf16.mxu0 0
      %4555 = vmatpush1.bf16.msra.mxu0 0
      %4556 = vmatprep.subr.bf16.mxu0 0
      %4557 = vmatpush1.bf16.msra.mxu0 0
      %4558 = vmatprep.subr.bf16.mxu0 0
      %4559 = vmatpush1.bf16.msra.mxu0 0
      %4560 = vmatprep.subr.bf16.mxu0 0
      %4561 = vmatpush1.bf16.msra.mxu0 0
      %4562 = vmatprep.subr.bf16.mxu0 0
      %4563 = vmatpush1.bf16.msra.mxu0 0
      %4564 = vmatprep.subr.bf16.mxu0 0
      %4565 = vmatpush1.bf16.msra.mxu0 0
      %4566 = vmatprep.subr.bf16.mxu0 0
      %4567 = vmatpush1.bf16.msra.mxu0 0
      %4568 = vmatprep.mubr.bf16.mxu0 0
      %4569 = vmatmul.mubr.bf16.gmra.mrb[0].mxu0 %v4534
      %v4570 = vpop.f32.mrb[0].mxu0
      %v4571 = vadd.f32 0.0, %v4570
      %v4572 = vpop.f32.mrb[0].mxu0
      %v4573 = vadd.f32 0.0, %v4572
      %v4574 = vpop.f32.mrb[0].mxu0
      %v4575 = vpop.f32.mrb[0].mxu0
      %4576 = vdwg.mxu0
      %v4577 = vadd.f32 %v4219, %v4571
      %v4578 = vadd.f32 %v4220, %v4573
      %s4579 = scalar_lea.vmem %s16, 1024
      %v4580 = vld [vmem:[%s4579] sm:$0xff]
      %v4581 = vld [vmem:[%s4579 + $0x8] sm:$0xff]
      %v4582 = vld [vmem:[%s4579 + $0x10] sm:$0xff]
      %v4583 = vld [vmem:[%s4579 + $0x18] sm:$0xff]
      %v4584 = vld [vmem:[%s4579 + $0x20] sm:$0xff]
      %v4585 = vld [vmem:[%s4579 + $0x28] sm:$0xff]
      %v4586 = vld [vmem:[%s4579 + $0x30] sm:$0xff]
      %v4587 = vld [vmem:[%s4579 + $0x38] sm:$0xff]
      %v4588 = vld [vmem:[%s4579 + $0x40] sm:$0xff]
      %v4589 = vld [vmem:[%s4579 + $0x48] sm:$0xff]
      %v4590 = vld [vmem:[%s4579 + $0x50] sm:$0xff]
      %v4591 = vld [vmem:[%s4579 + $0x58] sm:$0xff]
      %v4592 = vld [vmem:[%s4579 + $0x60] sm:$0xff]
      %v4593 = vld [vmem:[%s4579 + $0x68] sm:$0xff]
      %v4594 = vld [vmem:[%s4579 + $0x70] sm:$0xff]
      %v4595 = vld [vmem:[%s4579 + $0x78] sm:$0xff]
      %v4596 = vld [vmem:[%s4579 + $0x80] sm:$0xff]
      %v4597 = vld [vmem:[%s4579 + $0x88] sm:$0xff]
      %v4598 = vld [vmem:[%s4579 + $0x90] sm:$0xff]
      %v4599 = vld [vmem:[%s4579 + $0x98] sm:$0xff]
      %v4600 = vld [vmem:[%s4579 + $0xa0] sm:$0xff]
      %v4601 = vld [vmem:[%s4579 + $0xa8] sm:$0xff]
      %v4602 = vld [vmem:[%s4579 + $0xb0] sm:$0xff]
      %v4603 = vld [vmem:[%s4579 + $0xb8] sm:$0xff]
      %v4604 = vld [vmem:[%s4579 + $0xc0] sm:$0xff]
      %v4605 = vld [vmem:[%s4579 + $0xc8] sm:$0xff]
      %v4606 = vld [vmem:[%s4579 + $0xd0] sm:$0xff]
      %v4607 = vld [vmem:[%s4579 + $0xd8] sm:$0xff]
      %v4608 = vld [vmem:[%s4579 + $0xe0] sm:$0xff]
      %v4609 = vld [vmem:[%s4579 + $0xe8] sm:$0xff]
      %v4610 = vld [vmem:[%s4579 + $0xf0] sm:$0xff]
      %v4611 = vld [vmem:[%s4579 + $0xf8] sm:$0xff]
      %v4644 = vunpack.c.l.b16 %v4580
      %v4645 = vunpack.c.h.b16 %v4580
      %v4646 = vunpack.c.l.b16 %v4581
      %v4647 = vunpack.c.h.b16 %v4581
      %v4648 = vunpack.c.l.b16 %v4582
      %v4649 = vunpack.c.h.b16 %v4582
      %v4650 = vunpack.c.l.b16 %v4583
      %v4651 = vunpack.c.h.b16 %v4583
      %v4652 = vunpack.c.l.b16 %v4584
      %v4653 = vunpack.c.h.b16 %v4584
      %v4654 = vunpack.c.l.b16 %v4585
      %v4655 = vunpack.c.h.b16 %v4585
      %v4656 = vunpack.c.l.b16 %v4586
      %v4657 = vunpack.c.h.b16 %v4586
      %v4658 = vunpack.c.l.b16 %v4587
      %v4659 = vunpack.c.h.b16 %v4587
      %v4660 = vunpack.c.l.b16 %v4588
      %v4661 = vunpack.c.h.b16 %v4588
      %v4662 = vunpack.c.l.b16 %v4589
      %v4663 = vunpack.c.h.b16 %v4589
      %v4664 = vunpack.c.l.b16 %v4590
      %v4665 = vunpack.c.h.b16 %v4590
      %v4666 = vunpack.c.l.b16 %v4591
      %v4667 = vunpack.c.h.b16 %v4591
      %v4668 = vunpack.c.l.b16 %v4592
      %v4669 = vunpack.c.h.b16 %v4592
      %v4670 = vunpack.c.l.b16 %v4593
      %v4671 = vunpack.c.h.b16 %v4593
      %v4672 = vunpack.c.l.b16 %v4594
      %v4673 = vunpack.c.h.b16 %v4594
      %v4674 = vunpack.c.l.b16 %v4595
      %v4675 = vunpack.c.h.b16 %v4595
      %v4676 = vunpack.c.l.b16 %v4596
      %v4677 = vunpack.c.h.b16 %v4596
      %v4678 = vunpack.c.l.b16 %v4597
      %v4679 = vunpack.c.h.b16 %v4597
      %v4680 = vunpack.c.l.b16 %v4598
      %v4681 = vunpack.c.h.b16 %v4598
      %v4682 = vunpack.c.l.b16 %v4599
      %v4683 = vunpack.c.h.b16 %v4599
      %v4684 = vunpack.c.l.b16 %v4600
      %v4685 = vunpack.c.h.b16 %v4600
      %v4686 = vunpack.c.l.b16 %v4601
      %v4687 = vunpack.c.h.b16 %v4601
      %v4688 = vunpack.c.l.b16 %v4602
      %v4689 = vunpack.c.h.b16 %v4602
      %v4690 = vunpack.c.l.b16 %v4603
      %v4691 = vunpack.c.h.b16 %v4603
      %v4692 = vunpack.c.l.b16 %v4604
      %v4693 = vunpack.c.h.b16 %v4604
      %v4694 = vunpack.c.l.b16 %v4605
      %v4695 = vunpack.c.h.b16 %v4605
      %v4696 = vunpack.c.l.b16 %v4606
      %v4697 = vunpack.c.h.b16 %v4606
      %v4698 = vunpack.c.l.b16 %v4607
      %v4699 = vunpack.c.h.b16 %v4607
      %v4700 = vunpack.c.l.b16 %v4608
      %v4701 = vunpack.c.h.b16 %v4608
      %v4702 = vunpack.c.l.b16 %v4609
      %v4703 = vunpack.c.h.b16 %v4609
      %v4704 = vunpack.c.l.b16 %v4610
      %v4705 = vunpack.c.h.b16 %v4610
      %v4706 = vunpack.c.l.b16 %v4611
      %v4707 = vunpack.c.h.b16 %v4611
      %v4708 = vpack.c.b16 %v4646, %v4644
      %v4709 = vpack.c.b16 %v4647, %v4645
      %v4710 = vpack.c.b16 %v4650, %v4648
      %v4711 = vpack.c.b16 %v4651, %v4649
      %v4712 = vpack.c.b16 %v4654, %v4652
      %v4713 = vpack.c.b16 %v4655, %v4653
      %v4714 = vpack.c.b16 %v4658, %v4656
      %v4715 = vpack.c.b16 %v4659, %v4657
      %v4716 = vpack.c.b16 %v4662, %v4660
      %v4717 = vpack.c.b16 %v4663, %v4661
      %v4718 = vpack.c.b16 %v4666, %v4664
      %v4719 = vpack.c.b16 %v4667, %v4665
      %v4720 = vpack.c.b16 %v4670, %v4668
      %v4721 = vpack.c.b16 %v4671, %v4669
      %v4722 = vpack.c.b16 %v4674, %v4672
      %v4723 = vpack.c.b16 %v4675, %v4673
      %v4724 = vpack.c.b16 %v4678, %v4676
      %v4725 = vpack.c.b16 %v4679, %v4677
      %v4726 = vpack.c.b16 %v4682, %v4680
      %v4727 = vpack.c.b16 %v4683, %v4681
      %v4728 = vpack.c.b16 %v4686, %v4684
      %v4729 = vpack.c.b16 %v4687, %v4685
      %v4730 = vpack.c.b16 %v4690, %v4688
      %v4731 = vpack.c.b16 %v4691, %v4689
      %v4732 = vpack.c.b16 %v4694, %v4692
      %v4733 = vpack.c.b16 %v4695, %v4693
      %v4734 = vpack.c.b16 %v4698, %v4696
      %v4735 = vpack.c.b16 %v4699, %v4697
      %v4736 = vpack.c.b16 %v4702, %v4700
      %v4737 = vpack.c.b16 %v4703, %v4701
      %v4738 = vpack.c.b16 %v4706, %v4704
      %v4739 = vpack.c.b16 %v4707, %v4705
      %4772 = vmatprep.subr.bf16.mxu0 %v4709
      %4773 = vmatpush1.bf16.msra.mxu0 %v4708
      %4774 = vmatprep.subr.bf16.mxu0 %v4711
      %4775 = vmatpush1.bf16.msra.mxu0 %v4710
      %4776 = vmatprep.subr.bf16.mxu0 %v4713
      %4777 = vmatpush1.bf16.msra.mxu0 %v4712
      %4778 = vmatprep.subr.bf16.mxu0 %v4715
      %4779 = vmatpush1.bf16.msra.mxu0 %v4714
      %4780 = vmatprep.subr.bf16.mxu0 %v4717
      %4781 = vmatpush1.bf16.msra.mxu0 %v4716
      %4782 = vmatprep.subr.bf16.mxu0 %v4719
      %4783 = vmatpush1.bf16.msra.mxu0 %v4718
      %4784 = vmatprep.subr.bf16.mxu0 %v4721
      %4785 = vmatpush1.bf16.msra.mxu0 %v4720
      %4786 = vmatprep.subr.bf16.mxu0 %v4723
      %4787 = vmatpush1.bf16.msra.mxu0 %v4722
      %4788 = vmatprep.subr.bf16.mxu0 %v4725
      %4789 = vmatpush1.bf16.msra.mxu0 %v4724
      %4790 = vmatprep.subr.bf16.mxu0 %v4727
      %4791 = vmatpush1.bf16.msra.mxu0 %v4726
      %4792 = vmatprep.subr.bf16.mxu0 %v4729
      %4793 = vmatpush1.bf16.msra.mxu0 %v4728
      %4794 = vmatprep.subr.bf16.mxu0 %v4731
      %4795 = vmatpush1.bf16.msra.mxu0 %v4730
      %4796 = vmatprep.subr.bf16.mxu0 %v4733
      %4797 = vmatpush1.bf16.msra.mxu0 %v4732
      %4798 = vmatprep.subr.bf16.mxu0 %v4735
      %4799 = vmatpush1.bf16.msra.mxu0 %v4734
      %4800 = vmatprep.subr.bf16.mxu0 %v4737
      %4801 = vmatpush1.bf16.msra.mxu0 %v4736
      %4802 = vmatprep.subr.bf16.mxu0 %v4739
      %4803 = vmatpush1.bf16.msra.mxu0 %v4738
      %4804 = vmatprep.mubr.bf16.mxu0 %v3185
      %4805 = vmatmul.mubr.bf16.gmra.mrb[0].mxu0 %v3184
      %v4806 = vpop.f32.mrb[0].mxu0
      %v4807 = vadd.f32 0.0, %v4806
      %v4808 = vpop.f32.mrb[0].mxu0
      %v4809 = vadd.f32 0.0, %v4808
      %v4810 = vpop.f32.mrb[0].mxu0
      %v4811 = vadd.f32 0.0, %v4810
      %v4812 = vpop.f32.mrb[0].mxu0
      %v4813 = vadd.f32 0.0, %v4812
      %4814 = vmatprep.mubr.bf16.mxu0 %v3187
      %4815 = vmatmul.mubr.bf16.gmra.mrb[0].mxu0 %v3186
      %v4816 = vpop.f32.mrb[0].mxu0
      %v4817 = vadd.f32 0.0, %v4816
      %v4818 = vpop.f32.mrb[0].mxu0
      %v4819 = vadd.f32 0.0, %v4818
      %v4820 = vpop.f32.mrb[0].mxu0
      %v4821 = vadd.f32 0.0, %v4820
      %v4822 = vpop.f32.mrb[0].mxu0
      %v4823 = vadd.f32 0.0, %v4822
      %4824 = vmatprep.mubr.bf16.mxu0 %v3189
      %4825 = vmatmul.mubr.bf16.gmra.mrb[0].mxu0 %v3188
      %v4826 = vpop.f32.mrb[0].mxu0
      %v4827 = vadd.f32 0.0, %v4826
      %v4828 = vpop.f32.mrb[0].mxu0
      %v4829 = vadd.f32 0.0, %v4828
      %v4830 = vpop.f32.mrb[0].mxu0
      %v4831 = vadd.f32 0.0, %v4830
      %v4832 = vpop.f32.mrb[0].mxu0
      %v4833 = vadd.f32 0.0, %v4832
      %4834 = vdwg.mxu0
      %s4835 = scalar_lea.vmem %s17, 8
      %v4836 = vld [vmem:[%s4835] sm:$0x3]
      %v4837 = vpack.c.bf16 %v4811, %v4807
      %v4838 = vpack.c.bf16 %v4813, %v4809
      %v4839 = vpack.c.bf16 %v4821, %v4817
      %v4840 = vpack.c.bf16 %v4823, %v4819
      %v4841 = vpack.c.bf16 %v4831, %v4827
      %v4842 = vpack.c.bf16 %v4833, %v4829
      %v4844 = vsel %vm1190, %v4836, 0
      %4846 = vmatprep.subr.bf16.mxu0 %v4838
      %4847 = vmatpush1.bf16.msra.mxu0 %v4837
      %4848 = vmatprep.subr.bf16.mxu0 %v4840
      %4849 = vmatpush1.bf16.msra.mxu0 %v4839
      %4850 = vmatprep.subr.bf16.mxu0 %v4842
      %4851 = vmatpush1.bf16.msra.mxu0 %v4841
      %4852 = vmatprep.subr.bf16.mxu0 0
      %4853 = vmatpush1.bf16.msra.mxu0 0
      %4854 = vmatprep.subr.bf16.mxu0 0
      %4855 = vmatpush1.bf16.msra.mxu0 0
      %4856 = vmatprep.subr.bf16.mxu0 0
      %4857 = vmatpush1.bf16.msra.mxu0 0
      %4858 = vmatprep.subr.bf16.mxu0 0
      %4859 = vmatpush1.bf16.msra.mxu0 0
      %4860 = vmatprep.subr.bf16.mxu0 0
      %4861 = vmatpush1.bf16.msra.mxu0 0
      %4862 = vmatprep.subr.bf16.mxu0 0
      %4863 = vmatpush1.bf16.msra.mxu0 0
      %4864 = vmatprep.subr.bf16.mxu0 0
      %4865 = vmatpush1.bf16.msra.mxu0 0
      %4866 = vmatprep.subr.bf16.mxu0 0
      %4867 = vmatpush1.bf16.msra.mxu0 0
      %4868 = vmatprep.subr.bf16.mxu0 0
      %4869 = vmatpush1.bf16.msra.mxu0 0
      %4870 = vmatprep.subr.bf16.mxu0 0
      %4871 = vmatpush1.bf16.msra.mxu0 0
      %4872 = vmatprep.subr.bf16.mxu0 0
      %4873 = vmatpush1.bf16.msra.mxu0 0
      %4874 = vmatprep.subr.bf16.mxu0 0
      %4875 = vmatpush1.bf16.msra.mxu0 0
      %4876 = vmatprep.subr.bf16.mxu0 0
      %4877 = vmatpush1.bf16.msra.mxu0 0
      %4878 = vmatprep.mubr.bf16.mxu0 0
      %4879 = vmatmul.mubr.bf16.gmra.mrb[0].mxu0 %v4844
      %v4880 = vpop.f32.mrb[0].mxu0
      %v4881 = vadd.f32 0.0, %v4880
      %v4882 = vpop.f32.mrb[0].mxu0
      %v4883 = vadd.f32 0.0, %v4882
      %v4884 = vpop.f32.mrb[0].mxu0
      %v4885 = vpop.f32.mrb[0].mxu0
      %4886 = vdwg.mxu0
      %v4887 = vadd.f32 %v4529, %v4881
      %v4888 = vadd.f32 %v4530, %v4883
      %s4889 = scalar_lea.vmem %s19, 16
      %v4890 = vld [vmem:[%s4889] sm:$0xf]
      %v4892 = vsel %vm1190, %v4890, 0
      %4894 = vmatprep.subr.bf16.mxu0 %v4838
      %4895 = vmatpush1.bf16.msra.mxu0 %v4837
      %4896 = vmatprep.subr.bf16.mxu0 %v4840
      %4897 = vmatpush1.bf16.msra.mxu0 %v4839
      %4898 = vmatprep.subr.bf16.mxu0 %v4842
      %4899 = vmatpush1.bf16.msra.mxu0 %v4841
      %4900 = vmatprep.subr.bf16.mxu0 0
      %4901 = vmatpush1.bf16.msra.mxu0 0
      %4902 = vmatprep.subr.bf16.mxu0 0
      %4903 = vmatpush1.bf16.msra.mxu0 0
      %4904 = vmatprep.subr.bf16.mxu0 0
      %4905 = vmatpush1.bf16.msra.mxu0 0
      %4906 = vmatprep.subr.bf16.mxu0 0
      %4907 = vmatpush1.bf16.msra.mxu0 0
      %4908 = vmatprep.subr.bf16.mxu0 0
      %4909 = vmatpush1.bf16.msra.mxu0 0
      %4910 = vmatprep.subr.bf16.mxu0 0
      %4911 = vmatpush1.bf16.msra.mxu0 0
      %4912 = vmatprep.subr.bf16.mxu0 0
      %4913 = vmatpush1.bf16.msra.mxu0 0
      %4914 = vmatprep.subr.bf16.mxu0 0
      %4915 = vmatpush1.bf16.msra.mxu0 0
      %4916 = vmatprep.subr.bf16.mxu0 0
      %4917 = vmatpush1.bf16.msra.mxu0 0
      %4918 = vmatprep.subr.bf16.mxu0 0
      %4919 = vmatpush1.bf16.msra.mxu0 0
      %4920 = vmatprep.subr.bf16.mxu0 0
      %4921 = vmatpush1.bf16.msra.mxu0 0
      %4922 = vmatprep.subr.bf16.mxu0 0
      %4923 = vmatpush1.bf16.msra.mxu0 0
      %4924 = vmatprep.subr.bf16.mxu0 0
      %4925 = vmatpush1.bf16.msra.mxu0 0
      %4926 = vmatprep.mubr.bf16.mxu0 0
      %4927 = vmatmul.mubr.bf16.gmra.mrb[0].mxu0 %v4892
      %v4928 = vpop.f32.mrb[0].mxu0
      %v4929 = vadd.f32 0.0, %v4928
      %v4930 = vpop.f32.mrb[0].mxu0
      %v4931 = vadd.f32 0.0, %v4930
      %v4932 = vpop.f32.mrb[0].mxu0
      %v4933 = vpop.f32.mrb[0].mxu0
      %4934 = vdwg.mxu0
      %v4935 = vadd.f32 %v4577, %v4929
      %v4936 = vadd.f32 %v4578, %v4931
      %s4937 = scalar_lea.vmem %s16, 1280
      %v4938 = vld [vmem:[%s4937] sm:$0xff]
      %v4939 = vld [vmem:[%s4937 + $0x8] sm:$0xff]
      %v4940 = vld [vmem:[%s4937 + $0x10] sm:$0xff]
      %v4941 = vld [vmem:[%s4937 + $0x18] sm:$0xff]
      %v4942 = vld [vmem:[%s4937 + $0x20] sm:$0xff]
      %v4943 = vld [vmem:[%s4937 + $0x28] sm:$0xff]
      %v4944 = vld [vmem:[%s4937 + $0x30] sm:$0xff]
      %v4945 = vld [vmem:[%s4937 + $0x38] sm:$0xff]
      %v4946 = vld [vmem:[%s4937 + $0x40] sm:$0xff]
      %v4947 = vld [vmem:[%s4937 + $0x48] sm:$0xff]
      %v4948 = vld [vmem:[%s4937 + $0x50] sm:$0xff]
      %v4949 = vld [vmem:[%s4937 + $0x58] sm:$0xff]
      %v4950 = vld [vmem:[%s4937 + $0x60] sm:$0xff]
      %v4951 = vld [vmem:[%s4937 + $0x68] sm:$0xff]
      %v4952 = vld [vmem:[%s4937 + $0x70] sm:$0xff]
      %v4953 = vld [vmem:[%s4937 + $0x78] sm:$0xff]
      %v4954 = vld [vmem:[%s4937 + $0x80] sm:$0xff]
      %v4955 = vld [vmem:[%s4937 + $0x88] sm:$0xff]
      %v4956 = vld [vmem:[%s4937 + $0x90] sm:$0xff]
      %v4957 = vld [vmem:[%s4937 + $0x98] sm:$0xff]
      %v4958 = vld [vmem:[%s4937 + $0xa0] sm:$0xff]
      %v4959 = vld [vmem:[%s4937 + $0xa8] sm:$0xff]
      %v4960 = vld [vmem:[%s4937 + $0xb0] sm:$0xff]
      %v4961 = vld [vmem:[%s4937 + $0xb8] sm:$0xff]
      %v4962 = vld [vmem:[%s4937 + $0xc0] sm:$0xff]
      %v4963 = vld [vmem:[%s4937 + $0xc8] sm:$0xff]
      %v4964 = vld [vmem:[%s4937 + $0xd0] sm:$0xff]
      %v4965 = vld [vmem:[%s4937 + $0xd8] sm:$0xff]
      %v4966 = vld [vmem:[%s4937 + $0xe0] sm:$0xff]
      %v4967 = vld [vmem:[%s4937 + $0xe8] sm:$0xff]
      %v4968 = vld [vmem:[%s4937 + $0xf0] sm:$0xff]
      %v4969 = vld [vmem:[%s4937 + $0xf8] sm:$0xff]
      %v5002 = vunpack.c.l.b16 %v4938
      %v5003 = vunpack.c.h.b16 %v4938
      %v5004 = vunpack.c.l.b16 %v4939
      %v5005 = vunpack.c.h.b16 %v4939
      %v5006 = vunpack.c.l.b16 %v4940
      %v5007 = vunpack.c.h.b16 %v4940
      %v5008 = vunpack.c.l.b16 %v4941
      %v5009 = vunpack.c.h.b16 %v4941
      %v5010 = vunpack.c.l.b16 %v4942
      %v5011 = vunpack.c.h.b16 %v4942
      %v5012 = vunpack.c.l.b16 %v4943
      %v5013 = vunpack.c.h.b16 %v4943
      %v5014 = vunpack.c.l.b16 %v4944
      %v5015 = vunpack.c.h.b16 %v4944
      %v5016 = vunpack.c.l.b16 %v4945
      %v5017 = vunpack.c.h.b16 %v4945
      %v5018 = vunpack.c.l.b16 %v4946
      %v5019 = vunpack.c.h.b16 %v4946
      %v5020 = vunpack.c.l.b16 %v4947
      %v5021 = vunpack.c.h.b16 %v4947
      %v5022 = vunpack.c.l.b16 %v4948
      %v5023 = vunpack.c.h.b16 %v4948
      %v5024 = vunpack.c.l.b16 %v4949
      %v5025 = vunpack.c.h.b16 %v4949
      %v5026 = vunpack.c.l.b16 %v4950
      %v5027 = vunpack.c.h.b16 %v4950
      %v5028 = vunpack.c.l.b16 %v4951
      %v5029 = vunpack.c.h.b16 %v4951
      %v5030 = vunpack.c.l.b16 %v4952
      %v5031 = vunpack.c.h.b16 %v4952
      %v5032 = vunpack.c.l.b16 %v4953
      %v5033 = vunpack.c.h.b16 %v4953
      %v5034 = vunpack.c.l.b16 %v4954
      %v5035 = vunpack.c.h.b16 %v4954
      %v5036 = vunpack.c.l.b16 %v4955
      %v5037 = vunpack.c.h.b16 %v4955
      %v5038 = vunpack.c.l.b16 %v4956
      %v5039 = vunpack.c.h.b16 %v4956
      %v5040 = vunpack.c.l.b16 %v4957
      %v5041 = vunpack.c.h.b16 %v4957
      %v5042 = vunpack.c.l.b16 %v4958
      %v5043 = vunpack.c.h.b16 %v4958
      %v5044 = vunpack.c.l.b16 %v4959
      %v5045 = vunpack.c.h.b16 %v4959
      %v5046 = vunpack.c.l.b16 %v4960
      %v5047 = vunpack.c.h.b16 %v4960
      %v5048 = vunpack.c.l.b16 %v4961
      %v5049 = vunpack.c.h.b16 %v4961
      %v5050 = vunpack.c.l.b16 %v4962
      %v5051 = vunpack.c.h.b16 %v4962
      %v5052 = vunpack.c.l.b16 %v4963
      %v5053 = vunpack.c.h.b16 %v4963
      %v5054 = vunpack.c.l.b16 %v4964
      %v5055 = vunpack.c.h.b16 %v4964
      %v5056 = vunpack.c.l.b16 %v4965
      %v5057 = vunpack.c.h.b16 %v4965
      %v5058 = vunpack.c.l.b16 %v4966
      %v5059 = vunpack.c.h.b16 %v4966
      %v5060 = vunpack.c.l.b16 %v4967
      %v5061 = vunpack.c.h.b16 %v4967
      %v5062 = vunpack.c.l.b16 %v4968
      %v5063 = vunpack.c.h.b16 %v4968
      %v5064 = vunpack.c.l.b16 %v4969
      %v5065 = vunpack.c.h.b16 %v4969
      %v5066 = vpack.c.b16 %v5004, %v5002
      %v5067 = vpack.c.b16 %v5005, %v5003
      %v5068 = vpack.c.b16 %v5008, %v5006
      %v5069 = vpack.c.b16 %v5009, %v5007
      %v5070 = vpack.c.b16 %v5012, %v5010
      %v5071 = vpack.c.b16 %v5013, %v5011
      %v5072 = vpack.c.b16 %v5016, %v5014
      %v5073 = vpack.c.b16 %v5017, %v5015
      %v5074 = vpack.c.b16 %v5020, %v5018
      %v5075 = vpack.c.b16 %v5021, %v5019
      %v5076 = vpack.c.b16 %v5024, %v5022
      %v5077 = vpack.c.b16 %v5025, %v5023
      %v5078 = vpack.c.b16 %v5028, %v5026
      %v5079 = vpack.c.b16 %v5029, %v5027
      %v5080 = vpack.c.b16 %v5032, %v5030
      %v5081 = vpack.c.b16 %v5033, %v5031
      %v5082 = vpack.c.b16 %v5036, %v5034
      %v5083 = vpack.c.b16 %v5037, %v5035
      %v5084 = vpack.c.b16 %v5040, %v5038
      %v5085 = vpack.c.b16 %v5041, %v5039
      %v5086 = vpack.c.b16 %v5044, %v5042
      %v5087 = vpack.c.b16 %v5045, %v5043
      %v5088 = vpack.c.b16 %v5048, %v5046
      %v5089 = vpack.c.b16 %v5049, %v5047
      %v5090 = vpack.c.b16 %v5052, %v5050
      %v5091 = vpack.c.b16 %v5053, %v5051
      %v5092 = vpack.c.b16 %v5056, %v5054
      %v5093 = vpack.c.b16 %v5057, %v5055
      %v5094 = vpack.c.b16 %v5060, %v5058
      %v5095 = vpack.c.b16 %v5061, %v5059
      %v5096 = vpack.c.b16 %v5064, %v5062
      %v5097 = vpack.c.b16 %v5065, %v5063
      %5130 = vmatprep.subr.bf16.mxu0 %v5067
      %5131 = vmatpush1.bf16.msra.mxu0 %v5066
      %5132 = vmatprep.subr.bf16.mxu0 %v5069
      %5133 = vmatpush1.bf16.msra.mxu0 %v5068
      %5134 = vmatprep.subr.bf16.mxu0 %v5071
      %5135 = vmatpush1.bf16.msra.mxu0 %v5070
      %5136 = vmatprep.subr.bf16.mxu0 %v5073
      %5137 = vmatpush1.bf16.msra.mxu0 %v5072
      %5138 = vmatprep.subr.bf16.mxu0 %v5075
      %5139 = vmatpush1.bf16.msra.mxu0 %v5074
      %5140 = vmatprep.subr.bf16.mxu0 %v5077
      %5141 = vmatpush1.bf16.msra.mxu0 %v5076
      %5142 = vmatprep.subr.bf16.mxu0 %v5079
      %5143 = vmatpush1.bf16.msra.mxu0 %v5078
      %5144 = vmatprep.subr.bf16.mxu0 %v5081
      %5145 = vmatpush1.bf16.msra.mxu0 %v5080
      %5146 = vmatprep.subr.bf16.mxu0 %v5083
      %5147 = vmatpush1.bf16.msra.mxu0 %v5082
      %5148 = vmatprep.subr.bf16.mxu0 %v5085
      %5149 = vmatpush1.bf16.msra.mxu0 %v5084
      %5150 = vmatprep.subr.bf16.mxu0 %v5087
      %5151 = vmatpush1.bf16.msra.mxu0 %v5086
      %5152 = vmatprep.subr.bf16.mxu0 %v5089
      %5153 = vmatpush1.bf16.msra.mxu0 %v5088
      %5154 = vmatprep.subr.bf16.mxu0 %v5091
      %5155 = vmatpush1.bf16.msra.mxu0 %v5090
      %5156 = vmatprep.subr.bf16.mxu0 %v5093
      %5157 = vmatpush1.bf16.msra.mxu0 %v5092
      %5158 = vmatprep.subr.bf16.mxu0 %v5095
      %5159 = vmatpush1.bf16.msra.mxu0 %v5094
      %5160 = vmatprep.subr.bf16.mxu0 %v5097
      %5161 = vmatpush1.bf16.msra.mxu0 %v5096
      %5162 = vmatprep.mubr.bf16.mxu0 %v3185
      %5163 = vmatmul.mubr.bf16.gmra.mrb[0].mxu0 %v3184
      %v5164 = vpop.f32.mrb[0].mxu0
      %v5165 = vadd.f32 0.0, %v5164
      %v5166 = vpop.f32.mrb[0].mxu0
      %v5167 = vadd.f32 0.0, %v5166
      %v5168 = vpop.f32.mrb[0].mxu0
      %v5169 = vadd.f32 0.0, %v5168
      %v5170 = vpop.f32.mrb[0].mxu0
      %v5171 = vadd.f32 0.0, %v5170
      %5172 = vmatprep.mubr.bf16.mxu0 %v3187
      %5173 = vmatmul.mubr.bf16.gmra.mrb[0].mxu0 %v3186
      %v5174 = vpop.f32.mrb[0].mxu0
      %v5175 = vadd.f32 0.0, %v5174
      %v5176 = vpop.f32.mrb[0].mxu0
      %v5177 = vadd.f32 0.0, %v5176
      %v5178 = vpop.f32.mrb[0].mxu0
      %v5179 = vadd.f32 0.0, %v5178
      %v5180 = vpop.f32.mrb[0].mxu0
      %v5181 = vadd.f32 0.0, %v5180
      %5182 = vmatprep.mubr.bf16.mxu0 %v3189
      %5183 = vmatmul.mubr.bf16.gmra.mrb[0].mxu0 %v3188
      %v5184 = vpop.f32.mrb[0].mxu0
      %v5185 = vadd.f32 0.0, %v5184
      %v5186 = vpop.f32.mrb[0].mxu0
      %v5187 = vadd.f32 0.0, %v5186
      %v5188 = vpop.f32.mrb[0].mxu0
      %v5189 = vadd.f32 0.0, %v5188
      %v5190 = vpop.f32.mrb[0].mxu0
      %v5191 = vadd.f32 0.0, %v5190
      %5192 = vdwg.mxu0
      %s5193 = scalar_lea.vmem %s17, 10
      %v5194 = vld [vmem:[%s5193] sm:$0x3]
      %v5195 = vpack.c.bf16 %v5169, %v5165
      %v5196 = vpack.c.bf16 %v5171, %v5167
      %v5197 = vpack.c.bf16 %v5179, %v5175
      %v5198 = vpack.c.bf16 %v5181, %v5177
      %v5199 = vpack.c.bf16 %v5189, %v5185
      %v5200 = vpack.c.bf16 %v5191, %v5187
      %v5202 = vsel %vm1190, %v5194, 0
      %5204 = vmatprep.subr.bf16.mxu0 %v5196
      %5205 = vmatpush1.bf16.msra.mxu0 %v5195
      %5206 = vmatprep.subr.bf16.mxu0 %v5198
      %5207 = vmatpush1.bf16.msra.mxu0 %v5197
      %5208 = vmatprep.subr.bf16.mxu0 %v5200
      %5209 = vmatpush1.bf16.msra.mxu0 %v5199
      %5210 = vmatprep.subr.bf16.mxu0 0
      %5211 = vmatpush1.bf16.msra.mxu0 0
      %5212 = vmatprep.subr.bf16.mxu0 0
      %5213 = vmatpush1.bf16.msra.mxu0 0
      %5214 = vmatprep.subr.bf16.mxu0 0
      %5215 = vmatpush1.bf16.msra.mxu0 0
      %5216 = vmatprep.subr.bf16.mxu0 0
      %5217 = vmatpush1.bf16.msra.mxu0 0
      %5218 = vmatprep.subr.bf16.mxu0 0
      %5219 = vmatpush1.bf16.msra.mxu0 0
      %5220 = vmatprep.subr.bf16.mxu0 0
      %5221 = vmatpush1.bf16.msra.mxu0 0
      %5222 = vmatprep.subr.bf16.mxu0 0
      %5223 = vmatpush1.bf16.msra.mxu0 0
      %5224 = vmatprep.subr.bf16.mxu0 0
      %5225 = vmatpush1.bf16.msra.mxu0 0
      %5226 = vmatprep.subr.bf16.mxu0 0
      %5227 = vmatpush1.bf16.msra.mxu0 0
      %5228 = vmatprep.subr.bf16.mxu0 0
      %5229 = vmatpush1.bf16.msra.mxu0 0
      %5230 = vmatprep.subr.bf16.mxu0 0
      %5231 = vmatpush1.bf16.msra.mxu0 0
      %5232 = vmatprep.subr.bf16.mxu0 0
      %5233 = vmatpush1.bf16.msra.mxu0 0
      %5234 = vmatprep.subr.bf16.mxu0 0
      %5235 = vmatpush1.bf16.msra.mxu0 0
      %5236 = vmatprep.mubr.bf16.mxu0 0
      %5237 = vmatmul.mubr.bf16.gmra.mrb[0].mxu0 %v5202
      %v5238 = vpop.f32.mrb[0].mxu0
      %v5239 = vadd.f32 0.0, %v5238
      %v5240 = vpop.f32.mrb[0].mxu0
      %v5241 = vadd.f32 0.0, %v5240
      %v5242 = vpop.f32.mrb[0].mxu0
      %v5243 = vpop.f32.mrb[0].mxu0
      %5244 = vdwg.mxu0
      %v5245 = vadd.f32 %v4887, %v5239
      %v5246 = vadd.f32 %v4888, %v5241
      %s5247 = scalar_lea.vmem %s19, 20
      %v5248 = vld [vmem:[%s5247] sm:$0xf]
      %v5250 = vsel %vm1190, %v5248, 0
      %5252 = vmatprep.subr.bf16.mxu0 %v5196
      %5253 = vmatpush1.bf16.msra.mxu0 %v5195
      %5254 = vmatprep.subr.bf16.mxu0 %v5198
      %5255 = vmatpush1.bf16.msra.mxu0 %v5197
      %5256 = vmatprep.subr.bf16.mxu0 %v5200
      %5257 = vmatpush1.bf16.msra.mxu0 %v5199
      %5258 = vmatprep.subr.bf16.mxu0 0
      %5259 = vmatpush1.bf16.msra.mxu0 0
      %5260 = vmatprep.subr.bf16.mxu0 0
      %5261 = vmatpush1.bf16.msra.mxu0 0
      %5262 = vmatprep.subr.bf16.mxu0 0
      %5263 = vmatpush1.bf16.msra.mxu0 0
      %5264 = vmatprep.subr.bf16.mxu0 0
      %5265 = vmatpush1.bf16.msra.mxu0 0
      %5266 = vmatprep.subr.bf16.mxu0 0
      %5267 = vmatpush1.bf16.msra.mxu0 0
      %5268 = vmatprep.subr.bf16.mxu0 0
      %5269 = vmatpush1.bf16.msra.mxu0 0
      %5270 = vmatprep.subr.bf16.mxu0 0
      %5271 = vmatpush1.bf16.msra.mxu0 0
      %5272 = vmatprep.subr.bf16.mxu0 0
      %5273 = vmatpush1.bf16.msra.mxu0 0
      %5274 = vmatprep.subr.bf16.mxu0 0
      %5275 = vmatpush1.bf16.msra.mxu0 0
      %5276 = vmatprep.subr.bf16.mxu0 0
      %5277 = vmatpush1.bf16.msra.mxu0 0
      %5278 = vmatprep.subr.bf16.mxu0 0
      %5279 = vmatpush1.bf16.msra.mxu0 0
      %5280 = vmatprep.subr.bf16.mxu0 0
      %5281 = vmatpush1.bf16.msra.mxu0 0
      %5282 = vmatprep.subr.bf16.mxu0 0
      %5283 = vmatpush1.bf16.msra.mxu0 0
      %5284 = vmatprep.mubr.bf16.mxu0 0
      %5285 = vmatmul.mubr.bf16.gmra.mrb[0].mxu0 %v5250
      %v5286 = vpop.f32.mrb[0].mxu0
      %v5287 = vadd.f32 0.0, %v5286
      %v5288 = vpop.f32.mrb[0].mxu0
      %v5289 = vadd.f32 0.0, %v5288
      %v5290 = vpop.f32.mrb[0].mxu0
      %v5291 = vpop.f32.mrb[0].mxu0
      %5292 = vdwg.mxu0
      %v5293 = vadd.f32 %v4935, %v5287
      %v5294 = vadd.f32 %v4936, %v5289
      %s5295 = scalar_lea.vmem %s16, 1536
      %v5296 = vld [vmem:[%s5295] sm:$0xff]
      %v5297 = vld [vmem:[%s5295 + $0x8] sm:$0xff]
      %v5298 = vld [vmem:[%s5295 + $0x10] sm:$0xff]
      %v5299 = vld [vmem:[%s5295 + $0x18] sm:$0xff]
      %v5300 = vld [vmem:[%s5295 + $0x20] sm:$0xff]
      %v5301 = vld [vmem:[%s5295 + $0x28] sm:$0xff]
      %v5302 = vld [vmem:[%s5295 + $0x30] sm:$0xff]
      %v5303 = vld [vmem:[%s5295 + $0x38] sm:$0xff]
      %v5304 = vld [vmem:[%s5295 + $0x40] sm:$0xff]
      %v5305 = vld [vmem:[%s5295 + $0x48] sm:$0xff]
      %v5306 = vld [vmem:[%s5295 + $0x50] sm:$0xff]
      %v5307 = vld [vmem:[%s5295 + $0x58] sm:$0xff]
      %v5308 = vld [vmem:[%s5295 + $0x60] sm:$0xff]
      %v5309 = vld [vmem:[%s5295 + $0x68] sm:$0xff]
      %v5310 = vld [vmem:[%s5295 + $0x70] sm:$0xff]
      %v5311 = vld [vmem:[%s5295 + $0x78] sm:$0xff]
      %v5312 = vld [vmem:[%s5295 + $0x80] sm:$0xff]
      %v5313 = vld [vmem:[%s5295 + $0x88] sm:$0xff]
      %v5314 = vld [vmem:[%s5295 + $0x90] sm:$0xff]
      %v5315 = vld [vmem:[%s5295 + $0x98] sm:$0xff]
      %v5316 = vld [vmem:[%s5295 + $0xa0] sm:$0xff]
      %v5317 = vld [vmem:[%s5295 + $0xa8] sm:$0xff]
      %v5318 = vld [vmem:[%s5295 + $0xb0] sm:$0xff]
      %v5319 = vld [vmem:[%s5295 + $0xb8] sm:$0xff]
      %v5320 = vld [vmem:[%s5295 + $0xc0] sm:$0xff]
      %v5321 = vld [vmem:[%s5295 + $0xc8] sm:$0xff]
      %v5322 = vld [vmem:[%s5295 + $0xd0] sm:$0xff]
      %v5323 = vld [vmem:[%s5295 + $0xd8] sm:$0xff]
      %v5324 = vld [vmem:[%s5295 + $0xe0] sm:$0xff]
      %v5325 = vld [vmem:[%s5295 + $0xe8] sm:$0xff]
      %v5326 = vld [vmem:[%s5295 + $0xf0] sm:$0xff]
      %v5327 = vld [vmem:[%s5295 + $0xf8] sm:$0xff]
      %v5360 = vunpack.c.l.b16 %v5296
      %v5361 = vunpack.c.h.b16 %v5296
      %v5362 = vunpack.c.l.b16 %v5297
      %v5363 = vunpack.c.h.b16 %v5297
      %v5364 = vunpack.c.l.b16 %v5298
      %v5365 = vunpack.c.h.b16 %v5298
      %v5366 = vunpack.c.l.b16 %v5299
      %v5367 = vunpack.c.h.b16 %v5299
      %v5368 = vunpack.c.l.b16 %v5300
      %v5369 = vunpack.c.h.b16 %v5300
      %v5370 = vunpack.c.l.b16 %v5301
      %v5371 = vunpack.c.h.b16 %v5301
      %v5372 = vunpack.c.l.b16 %v5302
      %v5373 = vunpack.c.h.b16 %v5302
      %v5374 = vunpack.c.l.b16 %v5303
      %v5375 = vunpack.c.h.b16 %v5303
      %v5376 = vunpack.c.l.b16 %v5304
      %v5377 = vunpack.c.h.b16 %v5304
      %v5378 = vunpack.c.l.b16 %v5305
      %v5379 = vunpack.c.h.b16 %v5305
      %v5380 = vunpack.c.l.b16 %v5306
      %v5381 = vunpack.c.h.b16 %v5306
      %v5382 = vunpack.c.l.b16 %v5307
      %v5383 = vunpack.c.h.b16 %v5307
      %v5384 = vunpack.c.l.b16 %v5308
      %v5385 = vunpack.c.h.b16 %v5308
      %v5386 = vunpack.c.l.b16 %v5309
      %v5387 = vunpack.c.h.b16 %v5309
      %v5388 = vunpack.c.l.b16 %v5310
      %v5389 = vunpack.c.h.b16 %v5310
      %v5390 = vunpack.c.l.b16 %v5311
      %v5391 = vunpack.c.h.b16 %v5311
      %v5392 = vunpack.c.l.b16 %v5312
      %v5393 = vunpack.c.h.b16 %v5312
      %v5394 = vunpack.c.l.b16 %v5313
      %v5395 = vunpack.c.h.b16 %v5313
      %v5396 = vunpack.c.l.b16 %v5314
      %v5397 = vunpack.c.h.b16 %v5314
      %v5398 = vunpack.c.l.b16 %v5315
      %v5399 = vunpack.c.h.b16 %v5315
      %v5400 = vunpack.c.l.b16 %v5316
      %v5401 = vunpack.c.h.b16 %v5316
      %v5402 = vunpack.c.l.b16 %v5317
      %v5403 = vunpack.c.h.b16 %v5317
      %v5404 = vunpack.c.l.b16 %v5318
      %v5405 = vunpack.c.h.b16 %v5318
      %v5406 = vunpack.c.l.b16 %v5319
      %v5407 = vunpack.c.h.b16 %v5319
      %v5408 = vunpack.c.l.b16 %v5320
      %v5409 = vunpack.c.h.b16 %v5320
      %v5410 = vunpack.c.l.b16 %v5321
      %v5411 = vunpack.c.h.b16 %v5321
      %v5412 = vunpack.c.l.b16 %v5322
      %v5413 = vunpack.c.h.b16 %v5322
      %v5414 = vunpack.c.l.b16 %v5323
      %v5415 = vunpack.c.h.b16 %v5323
      %v5416 = vunpack.c.l.b16 %v5324
      %v5417 = vunpack.c.h.b16 %v5324
      %v5418 = vunpack.c.l.b16 %v5325
      %v5419 = vunpack.c.h.b16 %v5325
      %v5420 = vunpack.c.l.b16 %v5326
      %v5421 = vunpack.c.h.b16 %v5326
      %v5422 = vunpack.c.l.b16 %v5327
      %v5423 = vunpack.c.h.b16 %v5327
      %v5424 = vpack.c.b16 %v5362, %v5360
      %v5425 = vpack.c.b16 %v5363, %v5361
      %v5426 = vpack.c.b16 %v5366, %v5364
      %v5427 = vpack.c.b16 %v5367, %v5365
      %v5428 = vpack.c.b16 %v5370, %v5368
      %v5429 = vpack.c.b16 %v5371, %v5369
      %v5430 = vpack.c.b16 %v5374, %v5372
      %v5431 = vpack.c.b16 %v5375, %v5373
      %v5432 = vpack.c.b16 %v5378, %v5376
      %v5433 = vpack.c.b16 %v5379, %v5377
      %v5434 = vpack.c.b16 %v5382, %v5380
      %v5435 = vpack.c.b16 %v5383, %v5381
      %v5436 = vpack.c.b16 %v5386, %v5384
      %v5437 = vpack.c.b16 %v5387, %v5385
      %v5438 = vpack.c.b16 %v5390, %v5388
      %v5439 = vpack.c.b16 %v5391, %v5389
      %v5440 = vpack.c.b16 %v5394, %v5392
      %v5441 = vpack.c.b16 %v5395, %v5393
      %v5442 = vpack.c.b16 %v5398, %v5396
      %v5443 = vpack.c.b16 %v5399, %v5397
      %v5444 = vpack.c.b16 %v5402, %v5400
      %v5445 = vpack.c.b16 %v5403, %v5401
      %v5446 = vpack.c.b16 %v5406, %v5404
      %v5447 = vpack.c.b16 %v5407, %v5405
      %v5448 = vpack.c.b16 %v5410, %v5408
      %v5449 = vpack.c.b16 %v5411, %v5409
      %v5450 = vpack.c.b16 %v5414, %v5412
      %v5451 = vpack.c.b16 %v5415, %v5413
      %v5452 = vpack.c.b16 %v5418, %v5416
      %v5453 = vpack.c.b16 %v5419, %v5417
      %v5454 = vpack.c.b16 %v5422, %v5420
      %v5455 = vpack.c.b16 %v5423, %v5421
      %5488 = vmatprep.subr.bf16.mxu0 %v5425
      %5489 = vmatpush1.bf16.msra.mxu0 %v5424
      %5490 = vmatprep.subr.bf16.mxu0 %v5427
      %5491 = vmatpush1.bf16.msra.mxu0 %v5426
      %5492 = vmatprep.subr.bf16.mxu0 %v5429
      %5493 = vmatpush1.bf16.msra.mxu0 %v5428
      %5494 = vmatprep.subr.bf16.mxu0 %v5431
      %5495 = vmatpush1.bf16.msra.mxu0 %v5430
      %5496 = vmatprep.subr.bf16.mxu0 %v5433
      %5497 = vmatpush1.bf16.msra.mxu0 %v5432
      %5498 = vmatprep.subr.bf16.mxu0 %v5435
      %5499 = vmatpush1.bf16.msra.mxu0 %v5434
      %5500 = vmatprep.subr.bf16.mxu0 %v5437
      %5501 = vmatpush1.bf16.msra.mxu0 %v5436
      %5502 = vmatprep.subr.bf16.mxu0 %v5439
      %5503 = vmatpush1.bf16.msra.mxu0 %v5438
      %5504 = vmatprep.subr.bf16.mxu0 %v5441
      %5505 = vmatpush1.bf16.msra.mxu0 %v5440
      %5506 = vmatprep.subr.bf16.mxu0 %v5443
      %5507 = vmatpush1.bf16.msra.mxu0 %v5442
      %5508 = vmatprep.subr.bf16.mxu0 %v5445
      %5509 = vmatpush1.bf16.msra.mxu0 %v5444
      %5510 = vmatprep.subr.bf16.mxu0 %v5447
      %5511 = vmatpush1.bf16.msra.mxu0 %v5446
      %5512 = vmatprep.subr.bf16.mxu0 %v5449
      %5513 = vmatpush1.bf16.msra.mxu0 %v5448
      %5514 = vmatprep.subr.bf16.mxu0 %v5451
      %5515 = vmatpush1.bf16.msra.mxu0 %v5450
      %5516 = vmatprep.subr.bf16.mxu0 %v5453
      %5517 = vmatpush1.bf16.msra.mxu0 %v5452
      %5518 = vmatprep.subr.bf16.mxu0 %v5455
      %5519 = vmatpush1.bf16.msra.mxu0 %v5454
      %5520 = vmatprep.mubr.bf16.mxu0 %v3185
      %5521 = vmatmul.mubr.bf16.gmra.mrb[0].mxu0 %v3184
      %v5522 = vpop.f32.mrb[0].mxu0
      %v5523 = vadd.f32 0.0, %v5522
      %v5524 = vpop.f32.mrb[0].mxu0
      %v5525 = vadd.f32 0.0, %v5524
      %v5526 = vpop.f32.mrb[0].mxu0
      %v5527 = vadd.f32 0.0, %v5526
      %v5528 = vpop.f32.mrb[0].mxu0
      %v5529 = vadd.f32 0.0, %v5528
      %5530 = vmatprep.mubr.bf16.mxu0 %v3187
      %5531 = vmatmul.mubr.bf16.gmra.mrb[0].mxu0 %v3186
      %v5532 = vpop.f32.mrb[0].mxu0
      %v5533 = vadd.f32 0.0, %v5532
      %v5534 = vpop.f32.mrb[0].mxu0
      %v5535 = vadd.f32 0.0, %v5534
      %v5536 = vpop.f32.mrb[0].mxu0
      %v5537 = vadd.f32 0.0, %v5536
      %v5538 = vpop.f32.mrb[0].mxu0
      %v5539 = vadd.f32 0.0, %v5538
      %5540 = vmatprep.mubr.bf16.mxu0 %v3189
      %5541 = vmatmul.mubr.bf16.gmra.mrb[0].mxu0 %v3188
      %v5542 = vpop.f32.mrb[0].mxu0
      %v5543 = vadd.f32 0.0, %v5542
      %v5544 = vpop.f32.mrb[0].mxu0
      %v5545 = vadd.f32 0.0, %v5544
      %v5546 = vpop.f32.mrb[0].mxu0
      %v5547 = vadd.f32 0.0, %v5546
      %v5548 = vpop.f32.mrb[0].mxu0
      %v5549 = vadd.f32 0.0, %v5548
      %5550 = vdwg.mxu0
      %s5551 = scalar_lea.vmem %s17, 12
      %v5552 = vld [vmem:[%s5551] sm:$0x3]
      %v5553 = vpack.c.bf16 %v5527, %v5523
      %v5554 = vpack.c.bf16 %v5529, %v5525
      %v5555 = vpack.c.bf16 %v5537, %v5533
      %v5556 = vpack.c.bf16 %v5539, %v5535
      %v5557 = vpack.c.bf16 %v5547, %v5543
      %v5558 = vpack.c.bf16 %v5549, %v5545
      %v5560 = vsel %vm1190, %v5552, 0
      %5562 = vmatprep.subr.bf16.mxu0 %v5554
      %5563 = vmatpush1.bf16.msra.mxu0 %v5553
      %5564 = vmatprep.subr.bf16.mxu0 %v5556
      %5565 = vmatpush1.bf16.msra.mxu0 %v5555
      %5566 = vmatprep.subr.bf16.mxu0 %v5558
      %5567 = vmatpush1.bf16.msra.mxu0 %v5557
      %5568 = vmatprep.subr.bf16.mxu0 0
      %5569 = vmatpush1.bf16.msra.mxu0 0
      %5570 = vmatprep.subr.bf16.mxu0 0
      %5571 = vmatpush1.bf16.msra.mxu0 0
      %5572 = vmatprep.subr.bf16.mxu0 0
      %5573 = vmatpush1.bf16.msra.mxu0 0
      %5574 = vmatprep.subr.bf16.mxu0 0
      %5575 = vmatpush1.bf16.msra.mxu0 0
      %5576 = vmatprep.subr.bf16.mxu0 0
      %5577 = vmatpush1.bf16.msra.mxu0 0
      %5578 = vmatprep.subr.bf16.mxu0 0
      %5579 = vmatpush1.bf16.msra.mxu0 0
      %5580 = vmatprep.subr.bf16.mxu0 0
      %5581 = vmatpush1.bf16.msra.mxu0 0
      %5582 = vmatprep.subr.bf16.mxu0 0
      %5583 = vmatpush1.bf16.msra.mxu0 0
      %5584 = vmatprep.subr.bf16.mxu0 0
      %5585 = vmatpush1.bf16.msra.mxu0 0
      %5586 = vmatprep.subr.bf16.mxu0 0
      %5587 = vmatpush1.bf16.msra.mxu0 0
      %5588 = vmatprep.subr.bf16.mxu0 0
      %5589 = vmatpush1.bf16.msra.mxu0 0
      %5590 = vmatprep.subr.bf16.mxu0 0
      %5591 = vmatpush1.bf16.msra.mxu0 0
      %5592 = vmatprep.subr.bf16.mxu0 0
      %5593 = vmatpush1.bf16.msra.mxu0 0
      %5594 = vmatprep.mubr.bf16.mxu0 0
      %5595 = vmatmul.mubr.bf16.gmra.mrb[0].mxu0 %v5560
      %v5596 = vpop.f32.mrb[0].mxu0
      %v5597 = vadd.f32 0.0, %v5596
      %v5598 = vpop.f32.mrb[0].mxu0
      %v5599 = vadd.f32 0.0, %v5598
      %v5600 = vpop.f32.mrb[0].mxu0
      %v5601 = vpop.f32.mrb[0].mxu0
      %5602 = vdwg.mxu0
      %v5603 = vadd.f32 %v5245, %v5597
      %v5604 = vadd.f32 %v5246, %v5599
      %s5605 = scalar_lea.vmem %s19, 24
      %v5606 = vld [vmem:[%s5605] sm:$0xf]
      %v5608 = vsel %vm1190, %v5606, 0
      %5610 = vmatprep.subr.bf16.mxu0 %v5554
      %5611 = vmatpush1.bf16.msra.mxu0 %v5553
      %5612 = vmatprep.subr.bf16.mxu0 %v5556
      %5613 = vmatpush1.bf16.msra.mxu0 %v5555
      %5614 = vmatprep.subr.bf16.mxu0 %v5558
      %5615 = vmatpush1.bf16.msra.mxu0 %v5557
      %5616 = vmatprep.subr.bf16.mxu0 0
      %5617 = vmatpush1.bf16.msra.mxu0 0
      %5618 = vmatprep.subr.bf16.mxu0 0
      %5619 = vmatpush1.bf16.msra.mxu0 0
      %5620 = vmatprep.subr.bf16.mxu0 0
      %5621 = vmatpush1.bf16.msra.mxu0 0
      %5622 = vmatprep.subr.bf16.mxu0 0
      %5623 = vmatpush1.bf16.msra.mxu0 0
      %5624 = vmatprep.subr.bf16.mxu0 0
      %5625 = vmatpush1.bf16.msra.mxu0 0
      %5626 = vmatprep.subr.bf16.mxu0 0
      %5627 = vmatpush1.bf16.msra.mxu0 0
      %5628 = vmatprep.subr.bf16.mxu0 0
      %5629 = vmatpush1.bf16.msra.mxu0 0
      %5630 = vmatprep.subr.bf16.mxu0 0
      %5631 = vmatpush1.bf16.msra.mxu0 0
      %5632 = vmatprep.subr.bf16.mxu0 0
      %5633 = vmatpush1.bf16.msra.mxu0 0
      %5634 = vmatprep.subr.bf16.mxu0 0
      %5635 = vmatpush1.bf16.msra.mxu0 0
      %5636 = vmatprep.subr.bf16.mxu0 0
      %5637 = vmatpush1.bf16.msra.mxu0 0
      %5638 = vmatprep.subr.bf16.mxu0 0
      %5639 = vmatpush1.bf16.msra.mxu0 0
      %5640 = vmatprep.subr.bf16.mxu0 0
      %5641 = vmatpush1.bf16.msra.mxu0 0
      %5642 = vmatprep.mubr.bf16.mxu0 0
      %5643 = vmatmul.mubr.bf16.gmra.mrb[0].mxu0 %v5608
      %v5644 = vpop.f32.mrb[0].mxu0
      %v5645 = vadd.f32 0.0, %v5644
      %v5646 = vpop.f32.mrb[0].mxu0
      %v5647 = vadd.f32 0.0, %v5646
      %v5648 = vpop.f32.mrb[0].mxu0
      %v5649 = vpop.f32.mrb[0].mxu0
      %5650 = vdwg.mxu0
      %v5651 = vadd.f32 %v5293, %v5645
      %v5652 = vadd.f32 %v5294, %v5647
      %s5653 = scalar_lea.vmem %s16, 1792
      %v5654 = vld [vmem:[%s5653] sm:$0xff]
      %v5655 = vld [vmem:[%s5653 + $0x8] sm:$0xff]
      %v5656 = vld [vmem:[%s5653 + $0x10] sm:$0xff]
      %v5657 = vld [vmem:[%s5653 + $0x18] sm:$0xff]
      %v5658 = vld [vmem:[%s5653 + $0x20] sm:$0xff]
      %v5659 = vld [vmem:[%s5653 + $0x28] sm:$0xff]
      %v5660 = vld [vmem:[%s5653 + $0x30] sm:$0xff]
      %v5661 = vld [vmem:[%s5653 + $0x38] sm:$0xff]
      %v5662 = vld [vmem:[%s5653 + $0x40] sm:$0xff]
      %v5663 = vld [vmem:[%s5653 + $0x48] sm:$0xff]
      %v5664 = vld [vmem:[%s5653 + $0x50] sm:$0xff]
      %v5665 = vld [vmem:[%s5653 + $0x58] sm:$0xff]
      %v5666 = vld [vmem:[%s5653 + $0x60] sm:$0xff]
      %v5667 = vld [vmem:[%s5653 + $0x68] sm:$0xff]
      %v5668 = vld [vmem:[%s5653 + $0x70] sm:$0xff]
      %v5669 = vld [vmem:[%s5653 + $0x78] sm:$0xff]
      %v5670 = vld [vmem:[%s5653 + $0x80] sm:$0xff]
      %v5671 = vld [vmem:[%s5653 + $0x88] sm:$0xff]
      %v5672 = vld [vmem:[%s5653 + $0x90] sm:$0xff]
      %v5673 = vld [vmem:[%s5653 + $0x98] sm:$0xff]
      %v5674 = vld [vmem:[%s5653 + $0xa0] sm:$0xff]
      %v5675 = vld [vmem:[%s5653 + $0xa8] sm:$0xff]
      %v5676 = vld [vmem:[%s5653 + $0xb0] sm:$0xff]
      %v5677 = vld [vmem:[%s5653 + $0xb8] sm:$0xff]
      %v5678 = vld [vmem:[%s5653 + $0xc0] sm:$0xff]
      %v5679 = vld [vmem:[%s5653 + $0xc8] sm:$0xff]
      %v5680 = vld [vmem:[%s5653 + $0xd0] sm:$0xff]
      %v5681 = vld [vmem:[%s5653 + $0xd8] sm:$0xff]
      %v5682 = vld [vmem:[%s5653 + $0xe0] sm:$0xff]
      %v5683 = vld [vmem:[%s5653 + $0xe8] sm:$0xff]
      %v5684 = vld [vmem:[%s5653 + $0xf0] sm:$0xff]
      %v5685 = vld [vmem:[%s5653 + $0xf8] sm:$0xff]
      %v5718 = vunpack.c.l.b16 %v5654
      %v5719 = vunpack.c.h.b16 %v5654
      %v5720 = vunpack.c.l.b16 %v5655
      %v5721 = vunpack.c.h.b16 %v5655
      %v5722 = vunpack.c.l.b16 %v5656
      %v5723 = vunpack.c.h.b16 %v5656
      %v5724 = vunpack.c.l.b16 %v5657
      %v5725 = vunpack.c.h.b16 %v5657
      %v5726 = vunpack.c.l.b16 %v5658
      %v5727 = vunpack.c.h.b16 %v5658
      %v5728 = vunpack.c.l.b16 %v5659
      %v5729 = vunpack.c.h.b16 %v5659
      %v5730 = vunpack.c.l.b16 %v5660
      %v5731 = vunpack.c.h.b16 %v5660
      %v5732 = vunpack.c.l.b16 %v5661
      %v5733 = vunpack.c.h.b16 %v5661
      %v5734 = vunpack.c.l.b16 %v5662
      %v5735 = vunpack.c.h.b16 %v5662
      %v5736 = vunpack.c.l.b16 %v5663
      %v5737 = vunpack.c.h.b16 %v5663
      %v5738 = vunpack.c.l.b16 %v5664
      %v5739 = vunpack.c.h.b16 %v5664
      %v5740 = vunpack.c.l.b16 %v5665
      %v5741 = vunpack.c.h.b16 %v5665
      %v5742 = vunpack.c.l.b16 %v5666
      %v5743 = vunpack.c.h.b16 %v5666
      %v5744 = vunpack.c.l.b16 %v5667
      %v5745 = vunpack.c.h.b16 %v5667
      %v5746 = vunpack.c.l.b16 %v5668
      %v5747 = vunpack.c.h.b16 %v5668
      %v5748 = vunpack.c.l.b16 %v5669
      %v5749 = vunpack.c.h.b16 %v5669
      %v5750 = vunpack.c.l.b16 %v5670
      %v5751 = vunpack.c.h.b16 %v5670
      %v5752 = vunpack.c.l.b16 %v5671
      %v5753 = vunpack.c.h.b16 %v5671
      %v5754 = vunpack.c.l.b16 %v5672
      %v5755 = vunpack.c.h.b16 %v5672
      %v5756 = vunpack.c.l.b16 %v5673
      %v5757 = vunpack.c.h.b16 %v5673
      %v5758 = vunpack.c.l.b16 %v5674
      %v5759 = vunpack.c.h.b16 %v5674
      %v5760 = vunpack.c.l.b16 %v5675
      %v5761 = vunpack.c.h.b16 %v5675
      %v5762 = vunpack.c.l.b16 %v5676
      %v5763 = vunpack.c.h.b16 %v5676
      %v5764 = vunpack.c.l.b16 %v5677
      %v5765 = vunpack.c.h.b16 %v5677
      %v5766 = vunpack.c.l.b16 %v5678
      %v5767 = vunpack.c.h.b16 %v5678
      %v5768 = vunpack.c.l.b16 %v5679
      %v5769 = vunpack.c.h.b16 %v5679
      %v5770 = vunpack.c.l.b16 %v5680
      %v5771 = vunpack.c.h.b16 %v5680
      %v5772 = vunpack.c.l.b16 %v5681
      %v5773 = vunpack.c.h.b16 %v5681
      %v5774 = vunpack.c.l.b16 %v5682
      %v5775 = vunpack.c.h.b16 %v5682
      %v5776 = vunpack.c.l.b16 %v5683
      %v5777 = vunpack.c.h.b16 %v5683
      %v5778 = vunpack.c.l.b16 %v5684
      %v5779 = vunpack.c.h.b16 %v5684
      %v5780 = vunpack.c.l.b16 %v5685
      %v5781 = vunpack.c.h.b16 %v5685
      %v5782 = vpack.c.b16 %v5720, %v5718
      %v5783 = vpack.c.b16 %v5721, %v5719
      %v5784 = vpack.c.b16 %v5724, %v5722
      %v5785 = vpack.c.b16 %v5725, %v5723
      %v5786 = vpack.c.b16 %v5728, %v5726
      %v5787 = vpack.c.b16 %v5729, %v5727
      %v5788 = vpack.c.b16 %v5732, %v5730
      %v5789 = vpack.c.b16 %v5733, %v5731
      %v5790 = vpack.c.b16 %v5736, %v5734
      %v5791 = vpack.c.b16 %v5737, %v5735
      %v5792 = vpack.c.b16 %v5740, %v5738
      %v5793 = vpack.c.b16 %v5741, %v5739
      %v5794 = vpack.c.b16 %v5744, %v5742
      %v5795 = vpack.c.b16 %v5745, %v5743
      %v5796 = vpack.c.b16 %v5748, %v5746
      %v5797 = vpack.c.b16 %v5749, %v5747
      %v5798 = vpack.c.b16 %v5752, %v5750
      %v5799 = vpack.c.b16 %v5753, %v5751
      %v5800 = vpack.c.b16 %v5756, %v5754
      %v5801 = vpack.c.b16 %v5757, %v5755
      %v5802 = vpack.c.b16 %v5760, %v5758
      %v5803 = vpack.c.b16 %v5761, %v5759
      %v5804 = vpack.c.b16 %v5764, %v5762
      %v5805 = vpack.c.b16 %v5765, %v5763
      %v5806 = vpack.c.b16 %v5768, %v5766
      %v5807 = vpack.c.b16 %v5769, %v5767
      %v5808 = vpack.c.b16 %v5772, %v5770
      %v5809 = vpack.c.b16 %v5773, %v5771
      %v5810 = vpack.c.b16 %v5776, %v5774
      %v5811 = vpack.c.b16 %v5777, %v5775
      %v5812 = vpack.c.b16 %v5780, %v5778
      %v5813 = vpack.c.b16 %v5781, %v5779
      %5846 = vmatprep.subr.bf16.mxu0 %v5783
      %5847 = vmatpush1.bf16.msra.mxu0 %v5782
      %5848 = vmatprep.subr.bf16.mxu0 %v5785
      %5849 = vmatpush1.bf16.msra.mxu0 %v5784
      %5850 = vmatprep.subr.bf16.mxu0 %v5787
      %5851 = vmatpush1.bf16.msra.mxu0 %v5786
      %5852 = vmatprep.subr.bf16.mxu0 %v5789
      %5853 = vmatpush1.bf16.msra.mxu0 %v5788
      %5854 = vmatprep.subr.bf16.mxu0 %v5791
      %5855 = vmatpush1.bf16.msra.mxu0 %v5790
      %5856 = vmatprep.subr.bf16.mxu0 %v5793
      %5857 = vmatpush1.bf16.msra.mxu0 %v5792
      %5858 = vmatprep.subr.bf16.mxu0 %v5795
      %5859 = vmatpush1.bf16.msra.mxu0 %v5794
      %5860 = vmatprep.subr.bf16.mxu0 %v5797
      %5861 = vmatpush1.bf16.msra.mxu0 %v5796
      %5862 = vmatprep.subr.bf16.mxu0 %v5799
      %5863 = vmatpush1.bf16.msra.mxu0 %v5798
      %5864 = vmatprep.subr.bf16.mxu0 %v5801
      %5865 = vmatpush1.bf16.msra.mxu0 %v5800
      %5866 = vmatprep.subr.bf16.mxu0 %v5803
      %5867 = vmatpush1.bf16.msra.mxu0 %v5802
      %5868 = vmatprep.subr.bf16.mxu0 %v5805
      %5869 = vmatpush1.bf16.msra.mxu0 %v5804
      %5870 = vmatprep.subr.bf16.mxu0 %v5807
      %5871 = vmatpush1.bf16.msra.mxu0 %v5806
      %5872 = vmatprep.subr.bf16.mxu0 %v5809
      %5873 = vmatpush1.bf16.msra.mxu0 %v5808
      %5874 = vmatprep.subr.bf16.mxu0 %v5811
      %5875 = vmatpush1.bf16.msra.mxu0 %v5810
      %5876 = vmatprep.subr.bf16.mxu0 %v5813
      %5877 = vmatpush1.bf16.msra.mxu0 %v5812
      %5878 = vmatprep.mubr.bf16.mxu0 %v3185
      %5879 = vmatmul.mubr.bf16.gmra.mrb[0].mxu0 %v3184
      %v5880 = vpop.f32.mrb[0].mxu0
      %v5881 = vadd.f32 0.0, %v5880
      %v5882 = vpop.f32.mrb[0].mxu0
      %v5883 = vadd.f32 0.0, %v5882
      %v5884 = vpop.f32.mrb[0].mxu0
      %v5885 = vadd.f32 0.0, %v5884
      %v5886 = vpop.f32.mrb[0].mxu0
      %v5887 = vadd.f32 0.0, %v5886
      %5888 = vmatprep.mubr.bf16.mxu0 %v3187
      %5889 = vmatmul.mubr.bf16.gmra.mrb[0].mxu0 %v3186
      %v5890 = vpop.f32.mrb[0].mxu0
      %v5891 = vadd.f32 0.0, %v5890
      %v5892 = vpop.f32.mrb[0].mxu0
      %v5893 = vadd.f32 0.0, %v5892
      %v5894 = vpop.f32.mrb[0].mxu0
      %v5895 = vadd.f32 0.0, %v5894
      %v5896 = vpop.f32.mrb[0].mxu0
      %v5897 = vadd.f32 0.0, %v5896
      %5898 = vmatprep.mubr.bf16.mxu0 %v3189
      %5899 = vmatmul.mubr.bf16.gmra.mrb[0].mxu0 %v3188
      %v5900 = vpop.f32.mrb[0].mxu0
      %v5901 = vadd.f32 0.0, %v5900
      %v5902 = vpop.f32.mrb[0].mxu0
      %v5903 = vadd.f32 0.0, %v5902
      %v5904 = vpop.f32.mrb[0].mxu0
      %v5905 = vadd.f32 0.0, %v5904
      %v5906 = vpop.f32.mrb[0].mxu0
      %v5907 = vadd.f32 0.0, %v5906
      %5908 = vdwg.mxu0
      %s5909 = scalar_lea.vmem %s17, 14
      %v5910 = vld [vmem:[%s5909] sm:$0x3]
      %v5911 = vpack.c.bf16 %v5885, %v5881
      %v5912 = vpack.c.bf16 %v5887, %v5883
      %v5913 = vpack.c.bf16 %v5895, %v5891
      %v5914 = vpack.c.bf16 %v5897, %v5893
      %v5915 = vpack.c.bf16 %v5905, %v5901
      %v5916 = vpack.c.bf16 %v5907, %v5903
      %v5918 = vsel %vm1190, %v5910, 0
      %5920 = vmatprep.subr.bf16.mxu0 %v5912
      %5921 = vmatpush1.bf16.msra.mxu0 %v5911
      %5922 = vmatprep.subr.bf16.mxu0 %v5914
      %5923 = vmatpush1.bf16.msra.mxu0 %v5913
      %5924 = vmatprep.subr.bf16.mxu0 %v5916
      %5925 = vmatpush1.bf16.msra.mxu0 %v5915
      %5926 = vmatprep.subr.bf16.mxu0 0
      %5927 = vmatpush1.bf16.msra.mxu0 0
      %5928 = vmatprep.subr.bf16.mxu0 0
      %5929 = vmatpush1.bf16.msra.mxu0 0
      %5930 = vmatprep.subr.bf16.mxu0 0
      %5931 = vmatpush1.bf16.msra.mxu0 0
      %5932 = vmatprep.subr.bf16.mxu0 0
      %5933 = vmatpush1.bf16.msra.mxu0 0
      %5934 = vmatprep.subr.bf16.mxu0 0
      %5935 = vmatpush1.bf16.msra.mxu0 0
      %5936 = vmatprep.subr.bf16.mxu0 0
      %5937 = vmatpush1.bf16.msra.mxu0 0
      %5938 = vmatprep.subr.bf16.mxu0 0
      %5939 = vmatpush1.bf16.msra.mxu0 0
      %5940 = vmatprep.subr.bf16.mxu0 0
      %5941 = vmatpush1.bf16.msra.mxu0 0
      %5942 = vmatprep.subr.bf16.mxu0 0
      %5943 = vmatpush1.bf16.msra.mxu0 0
      %5944 = vmatprep.subr.bf16.mxu0 0
      %5945 = vmatpush1.bf16.msra.mxu0 0
      %5946 = vmatprep.subr.bf16.mxu0 0
      %5947 = vmatpush1.bf16.msra.mxu0 0
      %5948 = vmatprep.subr.bf16.mxu0 0
      %5949 = vmatpush1.bf16.msra.mxu0 0
      %5950 = vmatprep.subr.bf16.mxu0 0
      %5951 = vmatpush1.bf16.msra.mxu0 0
      %5952 = vmatprep.mubr.bf16.mxu0 0
      %5953 = vmatmul.mubr.bf16.gmra.mrb[0].mxu0 %v5918
      %v5954 = vpop.f32.mrb[0].mxu0
      %v5955 = vadd.f32 0.0, %v5954
      %v5956 = vpop.f32.mrb[0].mxu0
      %v5957 = vadd.f32 0.0, %v5956
      %v5958 = vpop.f32.mrb[0].mxu0
      %v5959 = vpop.f32.mrb[0].mxu0
      %5960 = vdwg.mxu0
      %v5961 = vadd.f32 %v5603, %v5955
      %v5962 = vadd.f32 %v5604, %v5957
      %s5963 = scalar_lea.vmem %s19, 28
      %v5964 = vld [vmem:[%s5963] sm:$0xf]
      %v5966 = vsel %vm1190, %v5964, 0
      %5968 = vmatprep.subr.bf16.mxu0 %v5912
      %5969 = vmatpush1.bf16.msra.mxu0 %v5911
      %5970 = vmatprep.subr.bf16.mxu0 %v5914
      %5971 = vmatpush1.bf16.msra.mxu0 %v5913
      %5972 = vmatprep.subr.bf16.mxu0 %v5916
      %5973 = vmatpush1.bf16.msra.mxu0 %v5915
      %5974 = vmatprep.subr.bf16.mxu0 0
      %5975 = vmatpush1.bf16.msra.mxu0 0
      %5976 = vmatprep.subr.bf16.mxu0 0
      %5977 = vmatpush1.bf16.msra.mxu0 0
      %5978 = vmatprep.subr.bf16.mxu0 0
      %5979 = vmatpush1.bf16.msra.mxu0 0
      %5980 = vmatprep.subr.bf16.mxu0 0
      %5981 = vmatpush1.bf16.msra.mxu0 0
      %5982 = vmatprep.subr.bf16.mxu0 0
      %5983 = vmatpush1.bf16.msra.mxu0 0
      %5984 = vmatprep.subr.bf16.mxu0 0
      %5985 = vmatpush1.bf16.msra.mxu0 0
      %5986 = vmatprep.subr.bf16.mxu0 0
      %5987 = vmatpush1.bf16.msra.mxu0 0
      %5988 = vmatprep.subr.bf16.mxu0 0
      %5989 = vmatpush1.bf16.msra.mxu0 0
      %5990 = vmatprep.subr.bf16.mxu0 0
      %5991 = vmatpush1.bf16.msra.mxu0 0
      %5992 = vmatprep.subr.bf16.mxu0 0
      %5993 = vmatpush1.bf16.msra.mxu0 0
      %5994 = vmatprep.subr.bf16.mxu0 0
      %5995 = vmatpush1.bf16.msra.mxu0 0
      %5996 = vmatprep.subr.bf16.mxu0 0
      %5997 = vmatpush1.bf16.msra.mxu0 0
      %5998 = vmatprep.subr.bf16.mxu0 0
      %5999 = vmatpush1.bf16.msra.mxu0 0
      %6000 = vmatprep.mubr.bf16.mxu0 0
      %6001 = vmatmul.mubr.bf16.gmra.mrb[0].mxu0 %v5966
      %v6002 = vpop.f32.mrb[0].mxu0
      %v6003 = vadd.f32 0.0, %v6002
      %v6004 = vpop.f32.mrb[0].mxu0
      %v6005 = vadd.f32 0.0, %v6004
      %v6006 = vpop.f32.mrb[0].mxu0
      %v6007 = vpop.f32.mrb[0].mxu0
      %6008 = vdwg.mxu0
      %v6009 = vadd.f32 %v5651, %v6003
      %v6010 = vadd.f32 %v5652, %v6005
      %s6011 = scalar_lea.vmem %s16, 2048
      %v6012 = vld [vmem:[%s6011] sm:$0xff]
      %v6013 = vld [vmem:[%s6011 + $0x8] sm:$0xff]
      %v6014 = vld [vmem:[%s6011 + $0x10] sm:$0xff]
      %v6015 = vld [vmem:[%s6011 + $0x18] sm:$0xff]
      %v6016 = vld [vmem:[%s6011 + $0x20] sm:$0xff]
      %v6017 = vld [vmem:[%s6011 + $0x28] sm:$0xff]
      %v6018 = vld [vmem:[%s6011 + $0x30] sm:$0xff]
      %v6019 = vld [vmem:[%s6011 + $0x38] sm:$0xff]
      %v6020 = vld [vmem:[%s6011 + $0x40] sm:$0xff]
      %v6021 = vld [vmem:[%s6011 + $0x48] sm:$0xff]
      %v6022 = vld [vmem:[%s6011 + $0x50] sm:$0xff]
      %v6023 = vld [vmem:[%s6011 + $0x58] sm:$0xff]
      %v6024 = vld [vmem:[%s6011 + $0x60] sm:$0xff]
      %v6025 = vld [vmem:[%s6011 + $0x68] sm:$0xff]
      %v6026 = vld [vmem:[%s6011 + $0x70] sm:$0xff]
      %v6027 = vld [vmem:[%s6011 + $0x78] sm:$0xff]
      %v6028 = vld [vmem:[%s6011 + $0x80] sm:$0xff]
      %v6029 = vld [vmem:[%s6011 + $0x88] sm:$0xff]
      %v6030 = vld [vmem:[%s6011 + $0x90] sm:$0xff]
      %v6031 = vld [vmem:[%s6011 + $0x98] sm:$0xff]
      %v6032 = vld [vmem:[%s6011 + $0xa0] sm:$0xff]
      %v6033 = vld [vmem:[%s6011 + $0xa8] sm:$0xff]
      %v6034 = vld [vmem:[%s6011 + $0xb0] sm:$0xff]
      %v6035 = vld [vmem:[%s6011 + $0xb8] sm:$0xff]
      %v6036 = vld [vmem:[%s6011 + $0xc0] sm:$0xff]
      %v6037 = vld [vmem:[%s6011 + $0xc8] sm:$0xff]
      %v6038 = vld [vmem:[%s6011 + $0xd0] sm:$0xff]
      %v6039 = vld [vmem:[%s6011 + $0xd8] sm:$0xff]
      %v6040 = vld [vmem:[%s6011 + $0xe0] sm:$0xff]
      %v6041 = vld [vmem:[%s6011 + $0xe8] sm:$0xff]
      %v6042 = vld [vmem:[%s6011 + $0xf0] sm:$0xff]
      %v6043 = vld [vmem:[%s6011 + $0xf8] sm:$0xff]
      %v6076 = vunpack.c.l.b16 %v6012
      %v6077 = vunpack.c.h.b16 %v6012
      %v6078 = vunpack.c.l.b16 %v6013
      %v6079 = vunpack.c.h.b16 %v6013
      %v6080 = vunpack.c.l.b16 %v6014
      %v6081 = vunpack.c.h.b16 %v6014
      %v6082 = vunpack.c.l.b16 %v6015
      %v6083 = vunpack.c.h.b16 %v6015
      %v6084 = vunpack.c.l.b16 %v6016
      %v6085 = vunpack.c.h.b16 %v6016
      %v6086 = vunpack.c.l.b16 %v6017
      %v6087 = vunpack.c.h.b16 %v6017
      %v6088 = vunpack.c.l.b16 %v6018
      %v6089 = vunpack.c.h.b16 %v6018
      %v6090 = vunpack.c.l.b16 %v6019
      %v6091 = vunpack.c.h.b16 %v6019
      %v6092 = vunpack.c.l.b16 %v6020
      %v6093 = vunpack.c.h.b16 %v6020
      %v6094 = vunpack.c.l.b16 %v6021
      %v6095 = vunpack.c.h.b16 %v6021
      %v6096 = vunpack.c.l.b16 %v6022
      %v6097 = vunpack.c.h.b16 %v6022
      %v6098 = vunpack.c.l.b16 %v6023
      %v6099 = vunpack.c.h.b16 %v6023
      %v6100 = vunpack.c.l.b16 %v6024
      %v6101 = vunpack.c.h.b16 %v6024
      %v6102 = vunpack.c.l.b16 %v6025
      %v6103 = vunpack.c.h.b16 %v6025
      %v6104 = vunpack.c.l.b16 %v6026
      %v6105 = vunpack.c.h.b16 %v6026
      %v6106 = vunpack.c.l.b16 %v6027
      %v6107 = vunpack.c.h.b16 %v6027
      %v6108 = vunpack.c.l.b16 %v6028
      %v6109 = vunpack.c.h.b16 %v6028
      %v6110 = vunpack.c.l.b16 %v6029
      %v6111 = vunpack.c.h.b16 %v6029
      %v6112 = vunpack.c.l.b16 %v6030
      %v6113 = vunpack.c.h.b16 %v6030
      %v6114 = vunpack.c.l.b16 %v6031
      %v6115 = vunpack.c.h.b16 %v6031
      %v6116 = vunpack.c.l.b16 %v6032
      %v6117 = vunpack.c.h.b16 %v6032
      %v6118 = vunpack.c.l.b16 %v6033
      %v6119 = vunpack.c.h.b16 %v6033
      %v6120 = vunpack.c.l.b16 %v6034
      %v6121 = vunpack.c.h.b16 %v6034
      %v6122 = vunpack.c.l.b16 %v6035
      %v6123 = vunpack.c.h.b16 %v6035
      %v6124 = vunpack.c.l.b16 %v6036
      %v6125 = vunpack.c.h.b16 %v6036
      %v6126 = vunpack.c.l.b16 %v6037
      %v6127 = vunpack.c.h.b16 %v6037
      %v6128 = vunpack.c.l.b16 %v6038
      %v6129 = vunpack.c.h.b16 %v6038
      %v6130 = vunpack.c.l.b16 %v6039
      %v6131 = vunpack.c.h.b16 %v6039
      %v6132 = vunpack.c.l.b16 %v6040
      %v6133 = vunpack.c.h.b16 %v6040
      %v6134 = vunpack.c.l.b16 %v6041
      %v6135 = vunpack.c.h.b16 %v6041
      %v6136 = vunpack.c.l.b16 %v6042
      %v6137 = vunpack.c.h.b16 %v6042
      %v6138 = vunpack.c.l.b16 %v6043
      %v6139 = vunpack.c.h.b16 %v6043
      %v6140 = vpack.c.b16 %v6078, %v6076
      %v6141 = vpack.c.b16 %v6079, %v6077
      %v6142 = vpack.c.b16 %v6082, %v6080
      %v6143 = vpack.c.b16 %v6083, %v6081
      %v6144 = vpack.c.b16 %v6086, %v6084
      %v6145 = vpack.c.b16 %v6087, %v6085
      %v6146 = vpack.c.b16 %v6090, %v6088
      %v6147 = vpack.c.b16 %v6091, %v6089
      %v6148 = vpack.c.b16 %v6094, %v6092
      %v6149 = vpack.c.b16 %v6095, %v6093
      %v6150 = vpack.c.b16 %v6098, %v6096
      %v6151 = vpack.c.b16 %v6099, %v6097
      %v6152 = vpack.c.b16 %v6102, %v6100
      %v6153 = vpack.c.b16 %v6103, %v6101
      %v6154 = vpack.c.b16 %v6106, %v6104
      %v6155 = vpack.c.b16 %v6107, %v6105
      %v6156 = vpack.c.b16 %v6110, %v6108
      %v6157 = vpack.c.b16 %v6111, %v6109
      %v6158 = vpack.c.b16 %v6114, %v6112
      %v6159 = vpack.c.b16 %v6115, %v6113
      %v6160 = vpack.c.b16 %v6118, %v6116
      %v6161 = vpack.c.b16 %v6119, %v6117
      %v6162 = vpack.c.b16 %v6122, %v6120
      %v6163 = vpack.c.b16 %v6123, %v6121
      %v6164 = vpack.c.b16 %v6126, %v6124
      %v6165 = vpack.c.b16 %v6127, %v6125
      %v6166 = vpack.c.b16 %v6130, %v6128
      %v6167 = vpack.c.b16 %v6131, %v6129
      %v6168 = vpack.c.b16 %v6134, %v6132
      %v6169 = vpack.c.b16 %v6135, %v6133
      %v6170 = vpack.c.b16 %v6138, %v6136
      %v6171 = vpack.c.b16 %v6139, %v6137
      %6204 = vmatprep.subr.bf16.mxu0 %v6141
      %6205 = vmatpush1.bf16.msra.mxu0 %v6140
      %6206 = vmatprep.subr.bf16.mxu0 %v6143
      %6207 = vmatpush1.bf16.msra.mxu0 %v6142
      %6208 = vmatprep.subr.bf16.mxu0 %v6145
      %6209 = vmatpush1.bf16.msra.mxu0 %v6144
      %6210 = vmatprep.subr.bf16.mxu0 %v6147
      %6211 = vmatpush1.bf16.msra.mxu0 %v6146
      %6212 = vmatprep.subr.bf16.mxu0 %v6149
      %6213 = vmatpush1.bf16.msra.mxu0 %v6148
      %6214 = vmatprep.subr.bf16.mxu0 %v6151
      %6215 = vmatpush1.bf16.msra.mxu0 %v6150
      %6216 = vmatprep.subr.bf16.mxu0 %v6153
      %6217 = vmatpush1.bf16.msra.mxu0 %v6152
      %6218 = vmatprep.subr.bf16.mxu0 %v6155
      %6219 = vmatpush1.bf16.msra.mxu0 %v6154
      %6220 = vmatprep.subr.bf16.mxu0 %v6157
      %6221 = vmatpush1.bf16.msra.mxu0 %v6156
      %6222 = vmatprep.subr.bf16.mxu0 %v6159
      %6223 = vmatpush1.bf16.msra.mxu0 %v6158
      %6224 = vmatprep.subr.bf16.mxu0 %v6161
      %6225 = vmatpush1.bf16.msra.mxu0 %v6160
      %6226 = vmatprep.subr.bf16.mxu0 %v6163
      %6227 = vmatpush1.bf16.msra.mxu0 %v6162
      %6228 = vmatprep.subr.bf16.mxu0 %v6165
      %6229 = vmatpush1.bf16.msra.mxu0 %v6164
      %6230 = vmatprep.subr.bf16.mxu0 %v6167
      %6231 = vmatpush1.bf16.msra.mxu0 %v6166
      %6232 = vmatprep.subr.bf16.mxu0 %v6169
      %6233 = vmatpush1.bf16.msra.mxu0 %v6168
      %6234 = vmatprep.subr.bf16.mxu0 %v6171
      %6235 = vmatpush1.bf16.msra.mxu0 %v6170
      %6236 = vmatprep.mubr.bf16.mxu0 %v3185
      %6237 = vmatmul.mubr.bf16.gmra.mrb[0].mxu0 %v3184
      %v6238 = vpop.f32.mrb[0].mxu0
      %v6239 = vadd.f32 0.0, %v6238
      %v6240 = vpop.f32.mrb[0].mxu0
      %v6241 = vadd.f32 0.0, %v6240
      %v6242 = vpop.f32.mrb[0].mxu0
      %v6243 = vadd.f32 0.0, %v6242
      %v6244 = vpop.f32.mrb[0].mxu0
      %v6245 = vadd.f32 0.0, %v6244
      %6246 = vmatprep.mubr.bf16.mxu0 %v3187
      %6247 = vmatmul.mubr.bf16.gmra.mrb[0].mxu0 %v3186
      %v6248 = vpop.f32.mrb[0].mxu0
      %v6249 = vadd.f32 0.0, %v6248
      %v6250 = vpop.f32.mrb[0].mxu0
      %v6251 = vadd.f32 0.0, %v6250
      %v6252 = vpop.f32.mrb[0].mxu0
      %v6253 = vadd.f32 0.0, %v6252
      %v6254 = vpop.f32.mrb[0].mxu0
      %v6255 = vadd.f32 0.0, %v6254
      %6256 = vmatprep.mubr.bf16.mxu0 %v3189
      %6257 = vmatmul.mubr.bf16.gmra.mrb[0].mxu0 %v3188
      %v6258 = vpop.f32.mrb[0].mxu0
      %v6259 = vadd.f32 0.0, %v6258
      %v6260 = vpop.f32.mrb[0].mxu0
      %v6261 = vadd.f32 0.0, %v6260
      %v6262 = vpop.f32.mrb[0].mxu0
      %v6263 = vadd.f32 0.0, %v6262
      %v6264 = vpop.f32.mrb[0].mxu0
      %v6265 = vadd.f32 0.0, %v6264
      %6266 = vdwg.mxu0
      %s6267 = scalar_lea.vmem %s17, 16
      %v6268 = vld [vmem:[%s6267] sm:$0x3]
      %v6269 = vpack.c.bf16 %v6243, %v6239
      %v6270 = vpack.c.bf16 %v6245, %v6241
      %v6271 = vpack.c.bf16 %v6253, %v6249
      %v6272 = vpack.c.bf16 %v6255, %v6251
      %v6273 = vpack.c.bf16 %v6263, %v6259
      %v6274 = vpack.c.bf16 %v6265, %v6261
      %v6276 = vsel %vm1190, %v6268, 0
      %6278 = vmatprep.subr.bf16.mxu0 %v6270
      %6279 = vmatpush1.bf16.msra.mxu0 %v6269
      %6280 = vmatprep.subr.bf16.mxu0 %v6272
      %6281 = vmatpush1.bf16.msra.mxu0 %v6271
      %6282 = vmatprep.subr.bf16.mxu0 %v6274
      %6283 = vmatpush1.bf16.msra.mxu0 %v6273
      %6284 = vmatprep.subr.bf16.mxu0 0
      %6285 = vmatpush1.bf16.msra.mxu0 0
      %6286 = vmatprep.subr.bf16.mxu0 0
      %6287 = vmatpush1.bf16.msra.mxu0 0
      %6288 = vmatprep.subr.bf16.mxu0 0
      %6289 = vmatpush1.bf16.msra.mxu0 0
      %6290 = vmatprep.subr.bf16.mxu0 0
      %6291 = vmatpush1.bf16.msra.mxu0 0
      %6292 = vmatprep.subr.bf16.mxu0 0
      %6293 = vmatpush1.bf16.msra.mxu0 0
      %6294 = vmatprep.subr.bf16.mxu0 0
      %6295 = vmatpush1.bf16.msra.mxu0 0
      %6296 = vmatprep.subr.bf16.mxu0 0
      %6297 = vmatpush1.bf16.msra.mxu0 0
      %6298 = vmatprep.subr.bf16.mxu0 0
      %6299 = vmatpush1.bf16.msra.mxu0 0
      %6300 = vmatprep.subr.bf16.mxu0 0
      %6301 = vmatpush1.bf16.msra.mxu0 0
      %6302 = vmatprep.subr.bf16.mxu0 0
      %6303 = vmatpush1.bf16.msra.mxu0 0
      %6304 = vmatprep.subr.bf16.mxu0 0
      %6305 = vmatpush1.bf16.msra.mxu0 0
      %6306 = vmatprep.subr.bf16.mxu0 0
      %6307 = vmatpush1.bf16.msra.mxu0 0
      %6308 = vmatprep.subr.bf16.mxu0 0
      %6309 = vmatpush1.bf16.msra.mxu0 0
      %6310 = vmatprep.mubr.bf16.mxu0 0
      %6311 = vmatmul.mubr.bf16.gmra.mrb[0].mxu0 %v6276
      %v6312 = vpop.f32.mrb[0].mxu0
      %v6313 = vadd.f32 0.0, %v6312
      %v6314 = vpop.f32.mrb[0].mxu0
      %v6315 = vadd.f32 0.0, %v6314
      %v6316 = vpop.f32.mrb[0].mxu0
      %v6317 = vpop.f32.mrb[0].mxu0
      %6318 = vdwg.mxu0
      %v6319 = vadd.f32 %v5961, %v6313
      %v6320 = vadd.f32 %v5962, %v6315
      %s6321 = scalar_lea.vmem %s19, 32
      %v6322 = vld [vmem:[%s6321] sm:$0xf]
      %v6324 = vsel %vm1190, %v6322, 0
      %6326 = vmatprep.subr.bf16.mxu0 %v6270
      %6327 = vmatpush1.bf16.msra.mxu0 %v6269
      %6328 = vmatprep.subr.bf16.mxu0 %v6272
      %6329 = vmatpush1.bf16.msra.mxu0 %v6271
      %6330 = vmatprep.subr.bf16.mxu0 %v6274
      %6331 = vmatpush1.bf16.msra.mxu0 %v6273
      %6332 = vmatprep.subr.bf16.mxu0 0
      %6333 = vmatpush1.bf16.msra.mxu0 0
      %6334 = vmatprep.subr.bf16.mxu0 0
      %6335 = vmatpush1.bf16.msra.mxu0 0
      %6336 = vmatprep.subr.bf16.mxu0 0
      %6337 = vmatpush1.bf16.msra.mxu0 0
      %6338 = vmatprep.subr.bf16.mxu0 0
      %6339 = vmatpush1.bf16.msra.mxu0 0
      %6340 = vmatprep.subr.bf16.mxu0 0
      %6341 = vmatpush1.bf16.msra.mxu0 0
      %6342 = vmatprep.subr.bf16.mxu0 0
      %6343 = vmatpush1.bf16.msra.mxu0 0
      %6344 = vmatprep.subr.bf16.mxu0 0
      %6345 = vmatpush1.bf16.msra.mxu0 0
      %6346 = vmatprep.subr.bf16.mxu0 0
      %6347 = vmatpush1.bf16.msra.mxu0 0
      %6348 = vmatprep.subr.bf16.mxu0 0
      %6349 = vmatpush1.bf16.msra.mxu0 0
      %6350 = vmatprep.subr.bf16.mxu0 0
      %6351 = vmatpush1.bf16.msra.mxu0 0
      %6352 = vmatprep.subr.bf16.mxu0 0
      %6353 = vmatpush1.bf16.msra.mxu0 0
      %6354 = vmatprep.subr.bf16.mxu0 0
      %6355 = vmatpush1.bf16.msra.mxu0 0
      %6356 = vmatprep.subr.bf16.mxu0 0
      %6357 = vmatpush1.bf16.msra.mxu0 0
      %6358 = vmatprep.mubr.bf16.mxu0 0
      %6359 = vmatmul.mubr.bf16.gmra.mrb[0].mxu0 %v6324
      %v6360 = vpop.f32.mrb[0].mxu0
      %v6361 = vadd.f32 0.0, %v6360
      %v6362 = vpop.f32.mrb[0].mxu0
      %v6363 = vadd.f32 0.0, %v6362
      %v6364 = vpop.f32.mrb[0].mxu0
      %v6365 = vpop.f32.mrb[0].mxu0
      %6366 = vdwg.mxu0
      %v6367 = vadd.f32 %v6009, %v6361
      %v6368 = vadd.f32 %v6010, %v6363
      %v6369 = vld [vmem:[%s18] sm:$0xf]
      %6371 = vset.pattern.permute.xlu0 0
      %6372 = vperm.xlu0 %6371, %v6369
      %v6373 = vpop.permute.xlu0 %6372
      %v6375 = vadd.f32 %v6319, %v6373
      %v6376 = vadd.f32 %v6320, %v6373
      %v6377 = vmul.f32 %v6375, 0.5
      %v6378 = vmul.f32 %v6376, 0.5
      %v6379 = vmul.f32 %v6375, 0.044715
      %v6380 = vmul.f32 %v6376, 0.044715
      %v6381 = vmul.f32 %v6379, %v6375
      %v6382 = vmul.f32 %v6380, %v6376
      %v6383 = vmul.f32 %v6381, %v6375
      %v6384 = vmul.f32 %v6382, %v6376
      %v6385 = vadd.f32 %v6375, %v6383
      %v6386 = vadd.f32 %v6376, %v6384
      %v6387 = vmul.f32 %v6385, 0.7978846
      %v6388 = vmul.f32 %v6386, 0.7978846
      %v6389 = vtanh.pop %v6387
      %v6390 = vtanh.pop %v6388
      %v6391 = vadd.f32 %v6389, 1.0
      %v6392 = vadd.f32 %v6390, 1.0
      %v6393 = vmul.f32 %v6377, %v6391
      %v6394 = vmul.f32 %v6378, %v6392
      %v6395 = vpack.c.bf16 %v6393, %v6393
      %v6396 = vpack.c.bf16 %v6394, %v6394
      %6397 = vmatprep.subr.bf16.mxu0 %v3287
      %6398 = vmatpush1.bf16.msra.mxu0 %v3286
      %6399 = vmatprep.subr.bf16.mxu0 %v3289
      %6400 = vmatpush1.bf16.msra.mxu0 %v3288
      %6401 = vmatprep.subr.bf16.mxu0 %v3291
      %6402 = vmatpush1.bf16.msra.mxu0 %v3290
      %6403 = vmatprep.subr.bf16.mxu0 %v3293
      %6404 = vmatpush1.bf16.msra.mxu0 %v3292
      %6405 = vmatprep.subr.bf16.mxu0 %v3295
      %6406 = vmatpush1.bf16.msra.mxu0 %v3294
      %6407 = vmatprep.subr.bf16.mxu0 %v3297
      %6408 = vmatpush1.bf16.msra.mxu0 %v3296
      %6409 = vmatprep.subr.bf16.mxu0 %v3299
      %6410 = vmatpush1.bf16.msra.mxu0 %v3298
      %6411 = vmatprep.subr.bf16.mxu0 %v3301
      %6412 = vmatpush1.bf16.msra.mxu0 %v3300
      %6413 = vmatprep.subr.bf16.mxu0 %v3303
      %6414 = vmatpush1.bf16.msra.mxu0 %v3302
      %6415 = vmatprep.subr.bf16.mxu0 %v3305
      %6416 = vmatpush1.bf16.msra.mxu0 %v3304
      %6417 = vmatprep.subr.bf16.mxu0 %v3307
      %6418 = vmatpush1.bf16.msra.mxu0 %v3306
      %6419 = vmatprep.subr.bf16.mxu0 %v3309
      %6420 = vmatpush1.bf16.msra.mxu0 %v3308
      %6421 = vmatprep.subr.bf16.mxu0 %v3311
      %6422 = vmatpush1.bf16.msra.mxu0 %v3310
      %6423 = vmatprep.subr.bf16.mxu0 %v3313
      %6424 = vmatpush1.bf16.msra.mxu0 %v3312
      %6425 = vmatprep.subr.bf16.mxu0 %v3315
      %6426 = vmatpush1.bf16.msra.mxu0 %v3314
      %6427 = vmatprep.subr.bf16.mxu0 %v3317
      %6428 = vmatpush1.bf16.msra.mxu0 %v3316
      %6429 = vmatprep.mubr.bf16.mxu0 %v6396
      %6430 = vmatmul.mubr.bf16.gmra.mrb[0].mxu0 %v6395
      %v6431 = vpop.f32.mrb[0].mxu0
      %v6432 = vadd.f32 0.0, %v6431
      %v6433 = vpop.f32.mrb[0].mxu0
      %v6434 = vadd.f32 0.0, %v6433
      %v6435 = vpop.f32.mrb[0].mxu0
      %v6436 = vpop.f32.mrb[0].mxu0
      %6437 = vdwg.mxu0
      %v6438 = vld [vmem:[%s20] sm:$0xf]
      %v6439 = vpack.c.bf16 %v6432, %v6432
      %v6440 = vpack.c.bf16 %v6434, %v6434
      %vm6441 = vcmask 31744
      %v6443 = vsel %vm6441, %v6438, 0
      %vm6445 = vcmask 1041408
      %v6447 = vsel %vm6445, %v6439, 0
      %v6450 = vsel %vm6445, %v6440, 0
      %6452 = vmatprep.subr.bf16.mxu0 %v6450
      %6453 = vmatpush1.bf16.msra.mxu0 %v6447
      %6454 = vmatprep.subr.bf16.mxu0 0
      %6455 = vmatpush1.bf16.msra.mxu0 0
      %6456 = vmatprep.subr.bf16.mxu0 0
      %6457 = vmatpush1.bf16.msra.mxu0 0
      %6458 = vmatprep.subr.bf16.mxu0 0
      %6459 = vmatpush1.bf16.msra.mxu0 0
      %6460 = vmatprep.subr.bf16.mxu0 0
      %6461 = vmatpush1.bf16.msra.mxu0 0
      %6462 = vmatprep.subr.bf16.mxu0 0
      %6463 = vmatpush1.bf16.msra.mxu0 0
      %6464 = vmatprep.subr.bf16.mxu0 0
      %6465 = vmatpush1.bf16.msra.mxu0 0
      %6466 = vmatprep.subr.bf16.mxu0 0
      %6467 = vmatpush1.bf16.msra.mxu0 0
      %6468 = vmatprep.subr.bf16.mxu0 0
      %6469 = vmatpush1.bf16.msra.mxu0 0
      %6470 = vmatprep.subr.bf16.mxu0 0
      %6471 = vmatpush1.bf16.msra.mxu0 0
      %6472 = vmatprep.subr.bf16.mxu0 0
      %6473 = vmatpush1.bf16.msra.mxu0 0
      %6474 = vmatprep.subr.bf16.mxu0 0
      %6475 = vmatpush1.bf16.msra.mxu0 0
      %6476 = vmatprep.subr.bf16.mxu0 0
      %6477 = vmatpush1.bf16.msra.mxu0 0
      %6478 = vmatprep.subr.bf16.mxu0 0
      %6479 = vmatpush1.bf16.msra.mxu0 0
      %6480 = vmatprep.subr.bf16.mxu0 0
      %6481 = vmatpush1.bf16.msra.mxu0 0
      %6482 = vmatprep.subr.bf16.mxu0 0
      %6483 = vmatpush1.bf16.msra.mxu0 0
      %6484 = vmatprep.mubr.bf16.mxu0 0
      %6485 = vmatmul.mubr.bf16.gmra.mrb[0].mxu0 %v6443
      %v6486 = vpop.f32.mrb[0].mxu0
      %v6487 = vadd.f32 0.0, %v6486
      %v6488 = vpop.f32.mrb[0].mxu0
      %v6489 = vadd.f32 0.0, %v6488
      %v6490 = vpop.f32.mrb[0].mxu0
      %v6491 = vpop.f32.mrb[0].mxu0
      %6492 = vdwg.mxu0
      %v6493 = vadd.f32 %v6367, %v6487
      %v6494 = vadd.f32 %v6368, %v6489
      %6495 = vmatprep.subr.bf16.mxu0 %v3551
      %6496 = vmatpush1.bf16.msra.mxu0 %v3550
      %6497 = vmatprep.subr.bf16.mxu0 %v3553
      %6498 = vmatpush1.bf16.msra.mxu0 %v3552
      %6499 = vmatprep.subr.bf16.mxu0 %v3555
      %6500 = vmatpush1.bf16.msra.mxu0 %v3554
      %6501 = vmatprep.subr.bf16.mxu0 %v3557
      %6502 = vmatpush1.bf16.msra.mxu0 %v3556
      %6503 = vmatprep.subr.bf16.mxu0 %v3559
      %6504 = vmatpush1.bf16.msra.mxu0 %v3558
      %6505 = vmatprep.subr.bf16.mxu0 %v3561
      %6506 = vmatpush1.bf16.msra.mxu0 %v3560
      %6507 = vmatprep.subr.bf16.mxu0 %v3563
      %6508 = vmatpush1.bf16.msra.mxu0 %v3562
      %6509 = vmatprep.subr.bf16.mxu0 %v3565
      %6510 = vmatpush1.bf16.msra.mxu0 %v3564
      %6511 = vmatprep.subr.bf16.mxu0 %v3567
      %6512 = vmatpush1.bf16.msra.mxu0 %v3566
      %6513 = vmatprep.subr.bf16.mxu0 %v3569
      %6514 = vmatpush1.bf16.msra.mxu0 %v3568
      %6515 = vmatprep.subr.bf16.mxu0 %v3571
      %6516 = vmatpush1.bf16.msra.mxu0 %v3570
      %6517 = vmatprep.subr.bf16.mxu0 %v3573
      %6518 = vmatpush1.bf16.msra.mxu0 %v3572
      %6519 = vmatprep.subr.bf16.mxu0 %v3575
      %6520 = vmatpush1.bf16.msra.mxu0 %v3574
      %6521 = vmatprep.subr.bf16.mxu0 %v3577
      %6522 = vmatpush1.bf16.msra.mxu0 %v3576
      %6523 = vmatprep.subr.bf16.mxu0 %v3579
      %6524 = vmatpush1.bf16.msra.mxu0 %v3578
      %6525 = vmatprep.subr.bf16.mxu0 %v3581
      %6526 = vmatpush1.bf16.msra.mxu0 %v3580
      %6527 = vmatprep.mubr.bf16.mxu0 %v6396
      %6528 = vmatmul.mubr.bf16.gmra.mrb[0].mxu0 %v6395
      %v6529 = vpop.f32.mrb[0].mxu0
      %v6530 = vadd.f32 0.0, %v6529
      %v6531 = vpop.f32.mrb[0].mxu0
      %v6532 = vadd.f32 0.0, %v6531
      %v6533 = vpop.f32.mrb[0].mxu0
      %v6534 = vpop.f32.mrb[0].mxu0
      %6535 = vdwg.mxu0
      %s6536 = scalar_lea.vmem %s20, 4
      %v6537 = vld [vmem:[%s6536] sm:$0xf]
      %v6538 = vpack.c.bf16 %v6530, %v6530
      %v6539 = vpack.c.bf16 %v6532, %v6532
      %v6541 = vsel %vm6441, %v6537, 0
      %v6544 = vsel %vm6445, %v6538, 0
      %v6547 = vsel %vm6445, %v6539, 0
      %6549 = vmatprep.subr.bf16.mxu0 %v6547
      %6550 = vmatpush1.bf16.msra.mxu0 %v6544
      %6551 = vmatprep.subr.bf16.mxu0 0
      %6552 = vmatpush1.bf16.msra.mxu0 0
      %6553 = vmatprep.subr.bf16.mxu0 0
      %6554 = vmatpush1.bf16.msra.mxu0 0
      %6555 = vmatprep.subr.bf16.mxu0 0
      %6556 = vmatpush1.bf16.msra.mxu0 0
      %6557 = vmatprep.subr.bf16.mxu0 0
      %6558 = vmatpush1.bf16.msra.mxu0 0
      %6559 = vmatprep.subr.bf16.mxu0 0
      %6560 = vmatpush1.bf16.msra.mxu0 0
      %6561 = vmatprep.subr.bf16.mxu0 0
      %6562 = vmatpush1.bf16.msra.mxu0 0
      %6563 = vmatprep.subr.bf16.mxu0 0
      %6564 = vmatpush1.bf16.msra.mxu0 0
      %6565 = vmatprep.subr.bf16.mxu0 0
      %6566 = vmatpush1.bf16.msra.mxu0 0
      %6567 = vmatprep.subr.bf16.mxu0 0
      %6568 = vmatpush1.bf16.msra.mxu0 0
      %6569 = vmatprep.subr.bf16.mxu0 0
      %6570 = vmatpush1.bf16.msra.mxu0 0
      %6571 = vmatprep.subr.bf16.mxu0 0
      %6572 = vmatpush1.bf16.msra.mxu0 0
      %6573 = vmatprep.subr.bf16.mxu0 0
      %6574 = vmatpush1.bf16.msra.mxu0 0
      %6575 = vmatprep.subr.bf16.mxu0 0
      %6576 = vmatpush1.bf16.msra.mxu0 0
      %6577 = vmatprep.subr.bf16.mxu0 0
      %6578 = vmatpush1.bf16.msra.mxu0 0
      %6579 = vmatprep.subr.bf16.mxu0 0
      %6580 = vmatpush1.bf16.msra.mxu0 0
      %6581 = vmatprep.mubr.bf16.mxu0 0
      %6582 = vmatmul.mubr.bf16.gmra.mrb[0].mxu0 %v6541
      %v6583 = vpop.f32.mrb[0].mxu0
      %v6584 = vadd.f32 0.0, %v6583
      %v6585 = vpop.f32.mrb[0].mxu0
      %v6586 = vadd.f32 0.0, %v6585
      %v6587 = vpop.f32.mrb[0].mxu0
      %v6588 = vpop.f32.mrb[0].mxu0
      %6589 = vdwg.mxu0
      %v6590 = vadd.f32 %v6493, %v6584
      %v6591 = vadd.f32 %v6494, %v6586
      %6592 = vmatprep.subr.bf16.mxu0 %v3993
      %6593 = vmatpush1.bf16.msra.mxu0 %v3992
      %6594 = vmatprep.subr.bf16.mxu0 %v3995
      %6595 = vmatpush1.bf16.msra.mxu0 %v3994
      %6596 = vmatprep.subr.bf16.mxu0 %v3997
      %6597 = vmatpush1.bf16.msra.mxu0 %v3996
      %6598 = vmatprep.subr.bf16.mxu0 %v3999
      %6599 = vmatpush1.bf16.msra.mxu0 %v3998
      %6600 = vmatprep.subr.bf16.mxu0 %v4001
      %6601 = vmatpush1.bf16.msra.mxu0 %v4000
      %6602 = vmatprep.subr.bf16.mxu0 %v4003
      %6603 = vmatpush1.bf16.msra.mxu0 %v4002
      %6604 = vmatprep.subr.bf16.mxu0 %v4005
      %6605 = vmatpush1.bf16.msra.mxu0 %v4004
      %6606 = vmatprep.subr.bf16.mxu0 %v4007
      %6607 = vmatpush1.bf16.msra.mxu0 %v4006
      %6608 = vmatprep.subr.bf16.mxu0 %v4009
      %6609 = vmatpush1.bf16.msra.mxu0 %v4008
      %6610 = vmatprep.subr.bf16.mxu0 %v4011
      %6611 = vmatpush1.bf16.msra.mxu0 %v4010
      %6612 = vmatprep.subr.bf16.mxu0 %v4013
      %6613 = vmatpush1.bf16.msra.mxu0 %v4012
      %6614 = vmatprep.subr.bf16.mxu0 %v4015
      %6615 = vmatpush1.bf16.msra.mxu0 %v4014
      %6616 = vmatprep.subr.bf16.mxu0 %v4017
      %6617 = vmatpush1.bf16.msra.mxu0 %v4016
      %6618 = vmatprep.subr.bf16.mxu0 %v4019
      %6619 = vmatpush1.bf16.msra.mxu0 %v4018
      %6620 = vmatprep.subr.bf16.mxu0 %v4021
      %6621 = vmatpush1.bf16.msra.mxu0 %v4020
      %6622 = vmatprep.subr.bf16.mxu0 %v4023
      %6623 = vmatpush1.bf16.msra.mxu0 %v4022
      %6624 = vmatprep.mubr.bf16.mxu0 %v6396
      %6625 = vmatmul.mubr.bf16.gmra.mrb[0].mxu0 %v6395
      %v6626 = vpop.f32.mrb[0].mxu0
      %v6627 = vadd.f32 0.0, %v6626
      %v6628 = vpop.f32.mrb[0].mxu0
      %v6629 = vadd.f32 0.0, %v6628
      %v6630 = vpop.f32.mrb[0].mxu0
      %v6631 = vpop.f32.mrb[0].mxu0
      %6632 = vdwg.mxu0
      %s6633 = scalar_lea.vmem %s20, 8
      %v6634 = vld [vmem:[%s6633] sm:$0xf]
      %v6635 = vpack.c.bf16 %v6627, %v6627
      %v6636 = vpack.c.bf16 %v6629, %v6629
      %v6638 = vsel %vm6441, %v6634, 0
      %v6641 = vsel %vm6445, %v6635, 0
      %v6644 = vsel %vm6445, %v6636, 0
      %6646 = vmatprep.subr.bf16.mxu0 %v6644
      %6647 = vmatpush1.bf16.msra.mxu0 %v6641
      %6648 = vmatprep.subr.bf16.mxu0 0
      %6649 = vmatpush1.bf16.msra.mxu0 0
      %6650 = vmatprep.subr.bf16.mxu0 0
      %6651 = vmatpush1.bf16.msra.mxu0 0
      %6652 = vmatprep.subr.bf16.mxu0 0
      %6653 = vmatpush1.bf16.msra.mxu0 0
      %6654 = vmatprep.subr.bf16.mxu0 0
      %6655 = vmatpush1.bf16.msra.mxu0 0
      %6656 = vmatprep.subr.bf16.mxu0 0
      %6657 = vmatpush1.bf16.msra.mxu0 0
      %6658 = vmatprep.subr.bf16.mxu0 0
      %6659 = vmatpush1.bf16.msra.mxu0 0
      %6660 = vmatprep.subr.bf16.mxu0 0
      %6661 = vmatpush1.bf16.msra.mxu0 0
      %6662 = vmatprep.subr.bf16.mxu0 0
      %6663 = vmatpush1.bf16.msra.mxu0 0
      %6664 = vmatprep.subr.bf16.mxu0 0
      %6665 = vmatpush1.bf16.msra.mxu0 0
      %6666 = vmatprep.subr.bf16.mxu0 0
      %6667 = vmatpush1.bf16.msra.mxu0 0
      %6668 = vmatprep.subr.bf16.mxu0 0
      %6669 = vmatpush1.bf16.msra.mxu0 0
      %6670 = vmatprep.subr.bf16.mxu0 0
      %6671 = vmatpush1.bf16.msra.mxu0 0
      %6672 = vmatprep.subr.bf16.mxu0 0
      %6673 = vmatpush1.bf16.msra.mxu0 0
      %6674 = vmatprep.subr.bf16.mxu0 0
      %6675 = vmatpush1.bf16.msra.mxu0 0
      %6676 = vmatprep.subr.bf16.mxu0 0
      %6677 = vmatpush1.bf16.msra.mxu0 0
      %6678 = vmatprep.mubr.bf16.mxu0 0
      %6679 = vmatmul.mubr.bf16.gmra.mrb[0].mxu0 %v6638
      %v6680 = vpop.f32.mrb[0].mxu0
      %v6681 = vadd.f32 0.0, %v6680
      %v6682 = vpop.f32.mrb[0].mxu0
      %v6683 = vadd.f32 0.0, %v6682
      %v6684 = vpop.f32.mrb[0].mxu0
      %v6685 = vpop.f32.mrb[0].mxu0
      %6686 = vdwg.mxu0
      %v6687 = vadd.f32 %v6590, %v6681
      %v6688 = vadd.f32 %v6591, %v6683
      %6689 = vmatprep.subr.bf16.mxu0 %v4351
      %6690 = vmatpush1.bf16.msra.mxu0 %v4350
      %6691 = vmatprep.subr.bf16.mxu0 %v4353
      %6692 = vmatpush1.bf16.msra.mxu0 %v4352
      %6693 = vmatprep.subr.bf16.mxu0 %v4355
      %6694 = vmatpush1.bf16.msra.mxu0 %v4354
      %6695 = vmatprep.subr.bf16.mxu0 %v4357
      %6696 = vmatpush1.bf16.msra.mxu0 %v4356
      %6697 = vmatprep.subr.bf16.mxu0 %v4359
      %6698 = vmatpush1.bf16.msra.mxu0 %v4358
      %6699 = vmatprep.subr.bf16.mxu0 %v4361
      %6700 = vmatpush1.bf16.msra.mxu0 %v4360
      %6701 = vmatprep.subr.bf16.mxu0 %v4363
      %6702 = vmatpush1.bf16.msra.mxu0 %v4362
      %6703 = vmatprep.subr.bf16.mxu0 %v4365
      %6704 = vmatpush1.bf16.msra.mxu0 %v4364
      %6705 = vmatprep.subr.bf16.mxu0 %v4367
      %6706 = vmatpush1.bf16.msra.mxu0 %v4366
      %6707 = vmatprep.subr.bf16.mxu0 %v4369
      %6708 = vmatpush1.bf16.msra.mxu0 %v4368
      %6709 = vmatprep.subr.bf16.mxu0 %v4371
      %6710 = vmatpush1.bf16.msra.mxu0 %v4370
      %6711 = vmatprep.subr.bf16.mxu0 %v4373
      %6712 = vmatpush1.bf16.msra.mxu0 %v4372
      %6713 = vmatprep.subr.bf16.mxu0 %v4375
      %6714 = vmatpush1.bf16.msra.mxu0 %v4374
      %6715 = vmatprep.subr.bf16.mxu0 %v4377
      %6716 = vmatpush1.bf16.msra.mxu0 %v4376
      %6717 = vmatprep.subr.bf16.mxu0 %v4379
      %6718 = vmatpush1.bf16.msra.mxu0 %v4378
      %6719 = vmatprep.subr.bf16.mxu0 %v4381
      %6720 = vmatpush1.bf16.msra.mxu0 %v4380
      %6721 = vmatprep.mubr.bf16.mxu0 %v6396
      %6722 = vmatmul.mubr.bf16.gmra.mrb[0].mxu0 %v6395
      %v6723 = vpop.f32.mrb[0].mxu0
      %v6724 = vadd.f32 0.0, %v6723
      %v6725 = vpop.f32.mrb[0].mxu0
      %v6726 = vadd.f32 0.0, %v6725
      %v6727 = vpop.f32.mrb[0].mxu0
      %v6728 = vpop.f32.mrb[0].mxu0
      %6729 = vdwg.mxu0
      %s6730 = scalar_lea.vmem %s20, 12
      %v6731 = vld [vmem:[%s6730] sm:$0xf]
      %v6732 = vpack.c.bf16 %v6724, %v6724
      %v6733 = vpack.c.bf16 %v6726, %v6726
      %v6735 = vsel %vm6441, %v6731, 0
      %v6738 = vsel %vm6445, %v6732, 0
      %v6741 = vsel %vm6445, %v6733, 0
      %6743 = vmatprep.subr.bf16.mxu0 %v6741
      %6744 = vmatpush1.bf16.msra.mxu0 %v6738
      %6745 = vmatprep.subr.bf16.mxu0 0
      %6746 = vmatpush1.bf16.msra.mxu0 0
      %6747 = vmatprep.subr.bf16.mxu0 0
      %6748 = vmatpush1.bf16.msra.mxu0 0
      %6749 = vmatprep.subr.bf16.mxu0 0
      %6750 = vmatpush1.bf16.msra.mxu0 0
      %6751 = vmatprep.subr.bf16.mxu0 0
      %6752 = vmatpush1.bf16.msra.mxu0 0
      %6753 = vmatprep.subr.bf16.mxu0 0
      %6754 = vmatpush1.bf16.msra.mxu0 0
      %6755 = vmatprep.subr.bf16.mxu0 0
      %6756 = vmatpush1.bf16.msra.mxu0 0
      %6757 = vmatprep.subr.bf16.mxu0 0
      %6758 = vmatpush1.bf16.msra.mxu0 0
      %6759 = vmatprep.subr.bf16.mxu0 0
      %6760 = vmatpush1.bf16.msra.mxu0 0
      %6761 = vmatprep.subr.bf16.mxu0 0
      %6762 = vmatpush1.bf16.msra.mxu0 0
      %6763 = vmatprep.subr.bf16.mxu0 0
      %6764 = vmatpush1.bf16.msra.mxu0 0
      %6765 = vmatprep.subr.bf16.mxu0 0
      %6766 = vmatpush1.bf16.msra.mxu0 0
      %6767 = vmatprep.subr.bf16.mxu0 0
      %6768 = vmatpush1.bf16.msra.mxu0 0
      %6769 = vmatprep.subr.bf16.mxu0 0
      %6770 = vmatpush1.bf16.msra.mxu0 0
      %6771 = vmatprep.subr.bf16.mxu0 0
      %6772 = vmatpush1.bf16.msra.mxu0 0
      %6773 = vmatprep.subr.bf16.mxu0 0
      %6774 = vmatpush1.bf16.msra.mxu0 0
      %6775 = vmatprep.mubr.bf16.mxu0 0
      %6776 = vmatmul.mubr.bf16.gmra.mrb[0].mxu0 %v6735
      %v6777 = vpop.f32.mrb[0].mxu0
      %v6778 = vadd.f32 0.0, %v6777
      %v6779 = vpop.f32.mrb[0].mxu0
      %v6780 = vadd.f32 0.0, %v6779
      %v6781 = vpop.f32.mrb[0].mxu0
      %v6782 = vpop.f32.mrb[0].mxu0
      %6783 = vdwg.mxu0
      %v6784 = vadd.f32 %v6687, %v6778
      %v6785 = vadd.f32 %v6688, %v6780
      %6786 = vmatprep.subr.bf16.mxu0 %v4709
      %6787 = vmatpush1.bf16.msra.mxu0 %v4708
      %6788 = vmatprep.subr.bf16.mxu0 %v4711
      %6789 = vmatpush1.bf16.msra.mxu0 %v4710
      %6790 = vmatprep.subr.bf16.mxu0 %v4713
      %6791 = vmatpush1.bf16.msra.mxu0 %v4712
      %6792 = vmatprep.subr.bf16.mxu0 %v4715
      %6793 = vmatpush1.bf16.msra.mxu0 %v4714
      %6794 = vmatprep.subr.bf16.mxu0 %v4717
      %6795 = vmatpush1.bf16.msra.mxu0 %v4716
      %6796 = vmatprep.subr.bf16.mxu0 %v4719
      %6797 = vmatpush1.bf16.msra.mxu0 %v4718
      %6798 = vmatprep.subr.bf16.mxu0 %v4721
      %6799 = vmatpush1.bf16.msra.mxu0 %v4720
      %6800 = vmatprep.subr.bf16.mxu0 %v4723
      %6801 = vmatpush1.bf16.msra.mxu0 %v4722
      %6802 = vmatprep.subr.bf16.mxu0 %v4725
      %6803 = vmatpush1.bf16.msra.mxu0 %v4724
      %6804 = vmatprep.subr.bf16.mxu0 %v4727
      %6805 = vmatpush1.bf16.msra.mxu0 %v4726
      %6806 = vmatprep.subr.bf16.mxu0 %v4729
      %6807 = vmatpush1.bf16.msra.mxu0 %v4728
      %6808 = vmatprep.subr.bf16.mxu0 %v4731
      %6809 = vmatpush1.bf16.msra.mxu0 %v4730
      %6810 = vmatprep.subr.bf16.mxu0 %v4733
      %6811 = vmatpush1.bf16.msra.mxu0 %v4732
      %6812 = vmatprep.subr.bf16.mxu0 %v4735
      %6813 = vmatpush1.bf16.msra.mxu0 %v4734
      %6814 = vmatprep.subr.bf16.mxu0 %v4737
      %6815 = vmatpush1.bf16.msra.mxu0 %v4736
      %6816 = vmatprep.subr.bf16.mxu0 %v4739
      %6817 = vmatpush1.bf16.msra.mxu0 %v4738
      %6818 = vmatprep.mubr.bf16.mxu0 %v6396
      %6819 = vmatmul.mubr.bf16.gmra.mrb[0].mxu0 %v6395
      %v6820 = vpop.f32.mrb[0].mxu0
      %v6821 = vadd.f32 0.0, %v6820
      %v6822 = vpop.f32.mrb[0].mxu0
      %v6823 = vadd.f32 0.0, %v6822
      %v6824 = vpop.f32.mrb[0].mxu0
      %v6825 = vpop.f32.mrb[0].mxu0
      %6826 = vdwg.mxu0
      %s6827 = scalar_lea.vmem %s20, 16
      %v6828 = vld [vmem:[%s6827] sm:$0xf]
      %v6829 = vpack.c.bf16 %v6821, %v6821
      %v6830 = vpack.c.bf16 %v6823, %v6823
      %v6832 = vsel %vm6441, %v6828, 0
      %v6835 = vsel %vm6445, %v6829, 0
      %v6838 = vsel %vm6445, %v6830, 0
      %6840 = vmatprep.subr.bf16.mxu0 %v6838
      %6841 = vmatpush1.bf16.msra.mxu0 %v6835
      %6842 = vmatprep.subr.bf16.mxu0 0
      %6843 = vmatpush1.bf16.msra.mxu0 0
      %6844 = vmatprep.subr.bf16.mxu0 0
      %6845 = vmatpush1.bf16.msra.mxu0 0
      %6846 = vmatprep.subr.bf16.mxu0 0
      %6847 = vmatpush1.bf16.msra.mxu0 0
      %6848 = vmatprep.subr.bf16.mxu0 0
      %6849 = vmatpush1.bf16.msra.mxu0 0
      %6850 = vmatprep.subr.bf16.mxu0 0
      %6851 = vmatpush1.bf16.msra.mxu0 0
      %6852 = vmatprep.subr.bf16.mxu0 0
      %6853 = vmatpush1.bf16.msra.mxu0 0
      %6854 = vmatprep.subr.bf16.mxu0 0
      %6855 = vmatpush1.bf16.msra.mxu0 0
      %6856 = vmatprep.subr.bf16.mxu0 0
      %6857 = vmatpush1.bf16.msra.mxu0 0
      %6858 = vmatprep.subr.bf16.mxu0 0
      %6859 = vmatpush1.bf16.msra.mxu0 0
      %6860 = vmatprep.subr.bf16.mxu0 0
      %6861 = vmatpush1.bf16.msra.mxu0 0
      %6862 = vmatprep.subr.bf16.mxu0 0
      %6863 = vmatpush1.bf16.msra.mxu0 0
      %6864 = vmatprep.subr.bf16.mxu0 0
      %6865 = vmatpush1.bf16.msra.mxu0 0
      %6866 = vmatprep.subr.bf16.mxu0 0
      %6867 = vmatpush1.bf16.msra.mxu0 0
      %6868 = vmatprep.subr.bf16.mxu0 0
      %6869 = vmatpush1.bf16.msra.mxu0 0
      %6870 = vmatprep.subr.bf16.mxu0 0
      %6871 = vmatpush1.bf16.msra.mxu0 0
      %6872 = vmatprep.mubr.bf16.mxu0 0
      %6873 = vmatmul.mubr.bf16.gmra.mrb[0].mxu0 %v6832
      %v6874 = vpop.f32.mrb[0].mxu0
      %v6875 = vadd.f32 0.0, %v6874
      %v6876 = vpop.f32.mrb[0].mxu0
      %v6877 = vadd.f32 0.0, %v6876
      %v6878 = vpop.f32.mrb[0].mxu0
      %v6879 = vpop.f32.mrb[0].mxu0
      %6880 = vdwg.mxu0
      %v6881 = vadd.f32 %v6784, %v6875
      %v6882 = vadd.f32 %v6785, %v6877
      %6883 = vmatprep.subr.bf16.mxu0 %v5067
      %6884 = vmatpush1.bf16.msra.mxu0 %v5066
      %6885 = vmatprep.subr.bf16.mxu0 %v5069
      %6886 = vmatpush1.bf16.msra.mxu0 %v5068
      %6887 = vmatprep.subr.bf16.mxu0 %v5071
      %6888 = vmatpush1.bf16.msra.mxu0 %v5070
      %6889 = vmatprep.subr.bf16.mxu0 %v5073
      %6890 = vmatpush1.bf16.msra.mxu0 %v5072
      %6891 = vmatprep.subr.bf16.mxu0 %v5075
      %6892 = vmatpush1.bf16.msra.mxu0 %v5074
      %6893 = vmatprep.subr.bf16.mxu0 %v5077
      %6894 = vmatpush1.bf16.msra.mxu0 %v5076
      %6895 = vmatprep.subr.bf16.mxu0 %v5079
      %6896 = vmatpush1.bf16.msra.mxu0 %v5078
      %6897 = vmatprep.subr.bf16.mxu0 %v5081
      %6898 = vmatpush1.bf16.msra.mxu0 %v5080
      %6899 = vmatprep.subr.bf16.mxu0 %v5083
      %6900 = vmatpush1.bf16.msra.mxu0 %v5082
      %6901 = vmatprep.subr.bf16.mxu0 %v5085
      %6902 = vmatpush1.bf16.msra.mxu0 %v5084
      %6903 = vmatprep.subr.bf16.mxu0 %v5087
      %6904 = vmatpush1.bf16.msra.mxu0 %v5086
      %6905 = vmatprep.subr.bf16.mxu0 %v5089
      %6906 = vmatpush1.bf16.msra.mxu0 %v5088
      %6907 = vmatprep.subr.bf16.mxu0 %v5091
      %6908 = vmatpush1.bf16.msra.mxu0 %v5090
      %6909 = vmatprep.subr.bf16.mxu0 %v5093
      %6910 = vmatpush1.bf16.msra.mxu0 %v5092
      %6911 = vmatprep.subr.bf16.mxu0 %v5095
      %6912 = vmatpush1.bf16.msra.mxu0 %v5094
      %6913 = vmatprep.subr.bf16.mxu0 %v5097
      %6914 = vmatpush1.bf16.msra.mxu0 %v5096
      %6915 = vmatprep.mubr.bf16.mxu0 %v6396
      %6916 = vmatmul.mubr.bf16.gmra.mrb[0].mxu0 %v6395
      %v6917 = vpop.f32.mrb[0].mxu0
      %v6918 = vadd.f32 0.0, %v6917
      %v6919 = vpop.f32.mrb[0].mxu0
      %v6920 = vadd.f32 0.0, %v6919
      %v6921 = vpop.f32.mrb[0].mxu0
      %v6922 = vpop.f32.mrb[0].mxu0
      %6923 = vdwg.mxu0
      %s6924 = scalar_lea.vmem %s20, 20
      %v6925 = vld [vmem:[%s6924] sm:$0xf]
      %v6926 = vpack.c.bf16 %v6918, %v6918
      %v6927 = vpack.c.bf16 %v6920, %v6920
      %v6929 = vsel %vm6441, %v6925, 0
      %v6932 = vsel %vm6445, %v6926, 0
      %v6935 = vsel %vm6445, %v6927, 0
      %6937 = vmatprep.subr.bf16.mxu0 %v6935
      %6938 = vmatpush1.bf16.msra.mxu0 %v6932
      %6939 = vmatprep.subr.bf16.mxu0 0
      %6940 = vmatpush1.bf16.msra.mxu0 0
      %6941 = vmatprep.subr.bf16.mxu0 0
      %6942 = vmatpush1.bf16.msra.mxu0 0
      %6943 = vmatprep.subr.bf16.mxu0 0
      %6944 = vmatpush1.bf16.msra.mxu0 0
      %6945 = vmatprep.subr.bf16.mxu0 0
      %6946 = vmatpush1.bf16.msra.mxu0 0
      %6947 = vmatprep.subr.bf16.mxu0 0
      %6948 = vmatpush1.bf16.msra.mxu0 0
      %6949 = vmatprep.subr.bf16.mxu0 0
      %6950 = vmatpush1.bf16.msra.mxu0 0
      %6951 = vmatprep.subr.bf16.mxu0 0
      %6952 = vmatpush1.bf16.msra.mxu0 0
      %6953 = vmatprep.subr.bf16.mxu0 0
      %6954 = vmatpush1.bf16.msra.mxu0 0
      %6955 = vmatprep.subr.bf16.mxu0 0
      %6956 = vmatpush1.bf16.msra.mxu0 0
      %6957 = vmatprep.subr.bf16.mxu0 0
      %6958 = vmatpush1.bf16.msra.mxu0 0
      %6959 = vmatprep.subr.bf16.mxu0 0
      %6960 = vmatpush1.bf16.msra.mxu0 0
      %6961 = vmatprep.subr.bf16.mxu0 0
      %6962 = vmatpush1.bf16.msra.mxu0 0
      %6963 = vmatprep.subr.bf16.mxu0 0
      %6964 = vmatpush1.bf16.msra.mxu0 0
      %6965 = vmatprep.subr.bf16.mxu0 0
      %6966 = vmatpush1.bf16.msra.mxu0 0
      %6967 = vmatprep.subr.bf16.mxu0 0
      %6968 = vmatpush1.bf16.msra.mxu0 0
      %6969 = vmatprep.mubr.bf16.mxu0 0
      %6970 = vmatmul.mubr.bf16.gmra.mrb[0].mxu0 %v6929
      %v6971 = vpop.f32.mrb[0].mxu0
      %v6972 = vadd.f32 0.0, %v6971
      %v6973 = vpop.f32.mrb[0].mxu0
      %v6974 = vadd.f32 0.0, %v6973
      %v6975 = vpop.f32.mrb[0].mxu0
      %v6976 = vpop.f32.mrb[0].mxu0
      %6977 = vdwg.mxu0
      %v6978 = vadd.f32 %v6881, %v6972
      %v6979 = vadd.f32 %v6882, %v6974
      %6980 = vmatprep.subr.bf16.mxu0 %v5425
      %6981 = vmatpush1.bf16.msra.mxu0 %v5424
      %6982 = vmatprep.subr.bf16.mxu0 %v5427
      %6983 = vmatpush1.bf16.msra.mxu0 %v5426
      %6984 = vmatprep.subr.bf16.mxu0 %v5429
      %6985 = vmatpush1.bf16.msra.mxu0 %v5428
      %6986 = vmatprep.subr.bf16.mxu0 %v5431
      %6987 = vmatpush1.bf16.msra.mxu0 %v5430
      %6988 = vmatprep.subr.bf16.mxu0 %v5433
      %6989 = vmatpush1.bf16.msra.mxu0 %v5432
      %6990 = vmatprep.subr.bf16.mxu0 %v5435
      %6991 = vmatpush1.bf16.msra.mxu0 %v5434
      %6992 = vmatprep.subr.bf16.mxu0 %v5437
      %6993 = vmatpush1.bf16.msra.mxu0 %v5436
      %6994 = vmatprep.subr.bf16.mxu0 %v5439
      %6995 = vmatpush1.bf16.msra.mxu0 %v5438
      %6996 = vmatprep.subr.bf16.mxu0 %v5441
      %6997 = vmatpush1.bf16.msra.mxu0 %v5440
      %6998 = vmatprep.subr.bf16.mxu0 %v5443
      %6999 = vmatpush1.bf16.msra.mxu0 %v5442
      %7000 = vmatprep.subr.bf16.mxu0 %v5445
      %7001 = vmatpush1.bf16.msra.mxu0 %v5444
      %7002 = vmatprep.subr.bf16.mxu0 %v5447
      %7003 = vmatpush1.bf16.msra.mxu0 %v5446
      %7004 = vmatprep.subr.bf16.mxu0 %v5449
      %7005 = vmatpush1.bf16.msra.mxu0 %v5448
      %7006 = vmatprep.subr.bf16.mxu0 %v5451
      %7007 = vmatpush1.bf16.msra.mxu0 %v5450
      %7008 = vmatprep.subr.bf16.mxu0 %v5453
      %7009 = vmatpush1.bf16.msra.mxu0 %v5452
      %7010 = vmatprep.subr.bf16.mxu0 %v5455
      %7011 = vmatpush1.bf16.msra.mxu0 %v5454
      %7012 = vmatprep.mubr.bf16.mxu0 %v6396
      %7013 = vmatmul.mubr.bf16.gmra.mrb[0].mxu0 %v6395
      %v7014 = vpop.f32.mrb[0].mxu0
      %v7015 = vadd.f32 0.0, %v7014
      %v7016 = vpop.f32.mrb[0].mxu0
      %v7017 = vadd.f32 0.0, %v7016
      %v7018 = vpop.f32.mrb[0].mxu0
      %v7019 = vpop.f32.mrb[0].mxu0
      %7020 = vdwg.mxu0
      %s7021 = scalar_lea.vmem %s20, 24
      %v7022 = vld [vmem:[%s7021] sm:$0xf]
      %v7023 = vpack.c.bf16 %v7015, %v7015
      %v7024 = vpack.c.bf16 %v7017, %v7017
      %v7026 = vsel %vm6441, %v7022, 0
      %v7029 = vsel %vm6445, %v7023, 0
      %v7032 = vsel %vm6445, %v7024, 0
      %7034 = vmatprep.subr.bf16.mxu0 %v7032
      %7035 = vmatpush1.bf16.msra.mxu0 %v7029
      %7036 = vmatprep.subr.bf16.mxu0 0
      %7037 = vmatpush1.bf16.msra.mxu0 0
      %7038 = vmatprep.subr.bf16.mxu0 0
      %7039 = vmatpush1.bf16.msra.mxu0 0
      %7040 = vmatprep.subr.bf16.mxu0 0
      %7041 = vmatpush1.bf16.msra.mxu0 0
      %7042 = vmatprep.subr.bf16.mxu0 0
      %7043 = vmatpush1.bf16.msra.mxu0 0
      %7044 = vmatprep.subr.bf16.mxu0 0
      %7045 = vmatpush1.bf16.msra.mxu0 0
      %7046 = vmatprep.subr.bf16.mxu0 0
      %7047 = vmatpush1.bf16.msra.mxu0 0
      %7048 = vmatprep.subr.bf16.mxu0 0
      %7049 = vmatpush1.bf16.msra.mxu0 0
      %7050 = vmatprep.subr.bf16.mxu0 0
      %7051 = vmatpush1.bf16.msra.mxu0 0
      %7052 = vmatprep.subr.bf16.mxu0 0
      %7053 = vmatpush1.bf16.msra.mxu0 0
      %7054 = vmatprep.subr.bf16.mxu0 0
      %7055 = vmatpush1.bf16.msra.mxu0 0
      %7056 = vmatprep.subr.bf16.mxu0 0
      %7057 = vmatpush1.bf16.msra.mxu0 0
      %7058 = vmatprep.subr.bf16.mxu0 0
      %7059 = vmatpush1.bf16.msra.mxu0 0
      %7060 = vmatprep.subr.bf16.mxu0 0
      %7061 = vmatpush1.bf16.msra.mxu0 0
      %7062 = vmatprep.subr.bf16.mxu0 0
      %7063 = vmatpush1.bf16.msra.mxu0 0
      %7064 = vmatprep.subr.bf16.mxu0 0
      %7065 = vmatpush1.bf16.msra.mxu0 0
      %7066 = vmatprep.mubr.bf16.mxu0 0
      %7067 = vmatmul.mubr.bf16.gmra.mrb[0].mxu0 %v7026
      %v7068 = vpop.f32.mrb[0].mxu0
      %v7069 = vadd.f32 0.0, %v7068
      %v7070 = vpop.f32.mrb[0].mxu0
      %v7071 = vadd.f32 0.0, %v7070
      %v7072 = vpop.f32.mrb[0].mxu0
      %v7073 = vpop.f32.mrb[0].mxu0
      %7074 = vdwg.mxu0
      %v7075 = vadd.f32 %v6978, %v7069
      %v7076 = vadd.f32 %v6979, %v7071
      %7077 = vmatprep.subr.bf16.mxu0 %v5783
      %7078 = vmatpush1.bf16.msra.mxu0 %v5782
      %7079 = vmatprep.subr.bf16.mxu0 %v5785
      %7080 = vmatpush1.bf16.msra.mxu0 %v5784
      %7081 = vmatprep.subr.bf16.mxu0 %v5787
      %7082 = vmatpush1.bf16.msra.mxu0 %v5786
      %7083 = vmatprep.subr.bf16.mxu0 %v5789
      %7084 = vmatpush1.bf16.msra.mxu0 %v5788
      %7085 = vmatprep.subr.bf16.mxu0 %v5791
      %7086 = vmatpush1.bf16.msra.mxu0 %v5790
      %7087 = vmatprep.subr.bf16.mxu0 %v5793
      %7088 = vmatpush1.bf16.msra.mxu0 %v5792
      %7089 = vmatprep.subr.bf16.mxu0 %v5795
      %7090 = vmatpush1.bf16.msra.mxu0 %v5794
      %7091 = vmatprep.subr.bf16.mxu0 %v5797
      %7092 = vmatpush1.bf16.msra.mxu0 %v5796
      %7093 = vmatprep.subr.bf16.mxu0 %v5799
      %7094 = vmatpush1.bf16.msra.mxu0 %v5798
      %7095 = vmatprep.subr.bf16.mxu0 %v5801
      %7096 = vmatpush1.bf16.msra.mxu0 %v5800
      %7097 = vmatprep.subr.bf16.mxu0 %v5803
      %7098 = vmatpush1.bf16.msra.mxu0 %v5802
      %7099 = vmatprep.subr.bf16.mxu0 %v5805
      %7100 = vmatpush1.bf16.msra.mxu0 %v5804
      %7101 = vmatprep.subr.bf16.mxu0 %v5807
      %7102 = vmatpush1.bf16.msra.mxu0 %v5806
      %7103 = vmatprep.subr.bf16.mxu0 %v5809
      %7104 = vmatpush1.bf16.msra.mxu0 %v5808
      %7105 = vmatprep.subr.bf16.mxu0 %v5811
      %7106 = vmatpush1.bf16.msra.mxu0 %v5810
      %7107 = vmatprep.subr.bf16.mxu0 %v5813
      %7108 = vmatpush1.bf16.msra.mxu0 %v5812
      %7109 = vmatprep.mubr.bf16.mxu0 %v6396
      %7110 = vmatmul.mubr.bf16.gmra.mrb[0].mxu0 %v6395
      %v7111 = vpop.f32.mrb[0].mxu0
      %v7112 = vadd.f32 0.0, %v7111
      %v7113 = vpop.f32.mrb[0].mxu0
      %v7114 = vadd.f32 0.0, %v7113
      %v7115 = vpop.f32.mrb[0].mxu0
      %v7116 = vpop.f32.mrb[0].mxu0
      %7117 = vdwg.mxu0
      %s7118 = scalar_lea.vmem %s20, 28
      %v7119 = vld [vmem:[%s7118] sm:$0xf]
      %v7120 = vpack.c.bf16 %v7112, %v7112
      %v7121 = vpack.c.bf16 %v7114, %v7114
      %v7123 = vsel %vm6441, %v7119, 0
      %v7126 = vsel %vm6445, %v7120, 0
      %v7129 = vsel %vm6445, %v7121, 0
      %7131 = vmatprep.subr.bf16.mxu0 %v7129
      %7132 = vmatpush1.bf16.msra.mxu0 %v7126
      %7133 = vmatprep.subr.bf16.mxu0 0
      %7134 = vmatpush1.bf16.msra.mxu0 0
      %7135 = vmatprep.subr.bf16.mxu0 0
      %7136 = vmatpush1.bf16.msra.mxu0 0
      %7137 = vmatprep.subr.bf16.mxu0 0
      %7138 = vmatpush1.bf16.msra.mxu0 0
      %7139 = vmatprep.subr.bf16.mxu0 0
      %7140 = vmatpush1.bf16.msra.mxu0 0
      %7141 = vmatprep.subr.bf16.mxu0 0
      %7142 = vmatpush1.bf16.msra.mxu0 0
      %7143 = vmatprep.subr.bf16.mxu0 0
      %7144 = vmatpush1.bf16.msra.mxu0 0
      %7145 = vmatprep.subr.bf16.mxu0 0
      %7146 = vmatpush1.bf16.msra.mxu0 0
      %7147 = vmatprep.subr.bf16.mxu0 0
      %7148 = vmatpush1.bf16.msra.mxu0 0
      %7149 = vmatprep.subr.bf16.mxu0 0
      %7150 = vmatpush1.bf16.msra.mxu0 0
      %7151 = vmatprep.subr.bf16.mxu0 0
      %7152 = vmatpush1.bf16.msra.mxu0 0
      %7153 = vmatprep.subr.bf16.mxu0 0
      %7154 = vmatpush1.bf16.msra.mxu0 0
      %7155 = vmatprep.subr.bf16.mxu0 0
      %7156 = vmatpush1.bf16.msra.mxu0 0
      %7157 = vmatprep.subr.bf16.mxu0 0
      %7158 = vmatpush1.bf16.msra.mxu0 0
      %7159 = vmatprep.subr.bf16.mxu0 0
      %7160 = vmatpush1.bf16.msra.mxu0 0
      %7161 = vmatprep.subr.bf16.mxu0 0
      %7162 = vmatpush1.bf16.msra.mxu0 0
      %7163 = vmatprep.mubr.bf16.mxu0 0
      %7164 = vmatmul.mubr.bf16.gmra.mrb[0].mxu0 %v7123
      %v7165 = vpop.f32.mrb[0].mxu0
      %v7166 = vadd.f32 0.0, %v7165
      %v7167 = vpop.f32.mrb[0].mxu0
      %v7168 = vadd.f32 0.0, %v7167
      %v7169 = vpop.f32.mrb[0].mxu0
      %v7170 = vpop.f32.mrb[0].mxu0
      %7171 = vdwg.mxu0
      %v7172 = vadd.f32 %v7075, %v7166
      %v7173 = vadd.f32 %v7076, %v7168
      %7174 = vmatprep.subr.bf16.mxu0 %v6141
      %7175 = vmatpush1.bf16.msra.mxu0 %v6140
      %7176 = vmatprep.subr.bf16.mxu0 %v6143
      %7177 = vmatpush1.bf16.msra.mxu0 %v6142
      %7178 = vmatprep.subr.bf16.mxu0 %v6145
      %7179 = vmatpush1.bf16.msra.mxu0 %v6144
      %7180 = vmatprep.subr.bf16.mxu0 %v6147
      %7181 = vmatpush1.bf16.msra.mxu0 %v6146
      %7182 = vmatprep.subr.bf16.mxu0 %v6149
      %7183 = vmatpush1.bf16.msra.mxu0 %v6148
      %7184 = vmatprep.subr.bf16.mxu0 %v6151
      %7185 = vmatpush1.bf16.msra.mxu0 %v6150
      %7186 = vmatprep.subr.bf16.mxu0 %v6153
      %7187 = vmatpush1.bf16.msra.mxu0 %v6152
      %7188 = vmatprep.subr.bf16.mxu0 %v6155
      %7189 = vmatpush1.bf16.msra.mxu0 %v6154
      %7190 = vmatprep.subr.bf16.mxu0 %v6157
      %7191 = vmatpush1.bf16.msra.mxu0 %v6156
      %7192 = vmatprep.subr.bf16.mxu0 %v6159
      %7193 = vmatpush1.bf16.msra.mxu0 %v6158
      %7194 = vmatprep.subr.bf16.mxu0 %v6161
      %7195 = vmatpush1.bf16.msra.mxu0 %v6160
      %7196 = vmatprep.subr.bf16.mxu0 %v6163
      %7197 = vmatpush1.bf16.msra.mxu0 %v6162
      %7198 = vmatprep.subr.bf16.mxu0 %v6165
      %7199 = vmatpush1.bf16.msra.mxu0 %v6164
      %7200 = vmatprep.subr.bf16.mxu0 %v6167
      %7201 = vmatpush1.bf16.msra.mxu0 %v6166
      %7202 = vmatprep.subr.bf16.mxu0 %v6169
      %7203 = vmatpush1.bf16.msra.mxu0 %v6168
      %7204 = vmatprep.subr.bf16.mxu0 %v6171
      %7205 = vmatpush1.bf16.msra.mxu0 %v6170
      %7206 = vmatprep.mubr.bf16.mxu0 %v6396
      %7207 = vmatmul.mubr.bf16.gmra.mrb[0].mxu0 %v6395
      %v7208 = vpop.f32.mrb[0].mxu0
      %v7209 = vadd.f32 0.0, %v7208
      %v7210 = vpop.f32.mrb[0].mxu0
      %v7211 = vadd.f32 0.0, %v7210
      %v7212 = vpop.f32.mrb[0].mxu0
      %v7213 = vpop.f32.mrb[0].mxu0
      %7214 = vdwg.mxu0
      %s7215 = scalar_lea.vmem %s20, 32
      %v7216 = vld [vmem:[%s7215] sm:$0xf]
      %v7217 = vpack.c.bf16 %v7209, %v7209
      %v7218 = vpack.c.bf16 %v7211, %v7211
      %v7220 = vsel %vm6441, %v7216, 0
      %v7223 = vsel %vm6445, %v7217, 0
      %v7226 = vsel %vm6445, %v7218, 0
      %7228 = vmatprep.subr.bf16.mxu0 %v7226
      %7229 = vmatpush1.bf16.msra.mxu0 %v7223
      %7230 = vmatprep.subr.bf16.mxu0 0
      %7231 = vmatpush1.bf16.msra.mxu0 0
      %7232 = vmatprep.subr.bf16.mxu0 0
      %7233 = vmatpush1.bf16.msra.mxu0 0
      %7234 = vmatprep.subr.bf16.mxu0 0
      %7235 = vmatpush1.bf16.msra.mxu0 0
      %7236 = vmatprep.subr.bf16.mxu0 0
      %7237 = vmatpush1.bf16.msra.mxu0 0
      %7238 = vmatprep.subr.bf16.mxu0 0
      %7239 = vmatpush1.bf16.msra.mxu0 0
      %7240 = vmatprep.subr.bf16.mxu0 0
      %7241 = vmatpush1.bf16.msra.mxu0 0
      %7242 = vmatprep.subr.bf16.mxu0 0
      %7243 = vmatpush1.bf16.msra.mxu0 0
      %7244 = vmatprep.subr.bf16.mxu0 0
      %7245 = vmatpush1.bf16.msra.mxu0 0
      %7246 = vmatprep.subr.bf16.mxu0 0
      %7247 = vmatpush1.bf16.msra.mxu0 0
      %7248 = vmatprep.subr.bf16.mxu0 0
      %7249 = vmatpush1.bf16.msra.mxu0 0
      %7250 = vmatprep.subr.bf16.mxu0 0
      %7251 = vmatpush1.bf16.msra.mxu0 0
      %7252 = vmatprep.subr.bf16.mxu0 0
      %7253 = vmatpush1.bf16.msra.mxu0 0
      %7254 = vmatprep.subr.bf16.mxu0 0
      %7255 = vmatpush1.bf16.msra.mxu0 0
      %7256 = vmatprep.subr.bf16.mxu0 0
      %7257 = vmatpush1.bf16.msra.mxu0 0
      %7258 = vmatprep.subr.bf16.mxu0 0
      %7259 = vmatpush1.bf16.msra.mxu0 0
      %7260 = vmatprep.mubr.bf16.mxu0 0
      %7261 = vmatmul.mubr.bf16.gmra.mrb[0].mxu0 %v7220
      %v7262 = vpop.f32.mrb[0].mxu0
      %v7263 = vadd.f32 0.0, %v7262
      %v7264 = vpop.f32.mrb[0].mxu0
      %v7265 = vadd.f32 0.0, %v7264
      %v7266 = vpop.f32.mrb[0].mxu0
      %v7267 = vpop.f32.mrb[0].mxu0
      %7268 = vdwg.mxu0
      %v7269 = vadd.f32 %v7172, %v7263
      %v7270 = vadd.f32 %v7173, %v7265
      %v7271 = vld [vmem:[%s21] sm:$0xff]
      %7273 = vset.pattern.permute.xlu0 0
      %7274 = vperm.xlu0 %7273, %v7271
      %v7275 = vpop.permute.xlu0 %7274
      %v7277 = vadd.f32 %v7269, %v7275
      %v7278 = vadd.f32 %v7270, %v7275
      %v7279 = vmul.f32 %v7277, 0.5
      %v7280 = vmul.f32 %v7278, 0.5
      %v7281 = vmul.f32 %v7277, 0.044715
      %v7282 = vmul.f32 %v7278, 0.044715
      %v7283 = vmul.f32 %v7281, %v7277
      %v7284 = vmul.f32 %v7282, %v7278
      %v7285 = vmul.f32 %v7283, %v7277
      %v7286 = vmul.f32 %v7284, %v7278
      %v7287 = vadd.f32 %v7277, %v7285
      %v7288 = vadd.f32 %v7278, %v7286
      %v7289 = vmul.f32 %v7287, 0.7978846
      %v7290 = vmul.f32 %v7288, 0.7978846
      %v7291 = vtanh.pop %v7289
      %v7292 = vtanh.pop %v7290
      %v7293 = vadd.f32 %v7291, 1.0
      %v7294 = vadd.f32 %v7292, 1.0
      %v7295 = vmul.f32 %v7279, %v7293
      %v7296 = vmul.f32 %v7280, %v7294
      %v7297 = vld [vmem:[%s22] sm:$0x3]
      %v7298 = vld [vmem:[%s23] sm:$0x3]
      %v7299 = vld [vmem:[%s24] sm:$0x1]
      %v7300 = vadd.f32 %v3124, %v3126
      %7301 = vadd.xlane.f32.xlu0 %v7300
      %v7302 = vpop.xlane.xlu0 %7301
      %v7303 = vadd.f32 %v3128, %v3130
      %7304 = vadd.xlane.f32.xlu0 %v7303
      %v7305 = vpop.xlane.xlu0 %7304
      %v7306 = vadd.f32 %v3134, %v3136
      %7307 = vadd.xlane.f32.xlu0 %v7306
      %v7308 = vpop.xlane.xlu0 %7307
      %v7309 = vadd.f32 %v3138, %v3140
      %7310 = vadd.xlane.f32.xlu0 %v7309
      %v7311 = vpop.xlane.xlu0 %7310
      %v7312 = vadd.f32 %v3144, %v3146
      %7313 = vadd.xlane.f32.xlu0 %v7312
      %v7314 = vpop.xlane.xlu0 %7313
      %v7315 = vadd.f32 %v3148, %v3150
      %7316 = vadd.xlane.f32.xlu0 %v7315
      %v7317 = vpop.xlane.xlu0 %7316
      %v7318 = vrcp.pop 256.0
      %v7319 = vmul.f32 %v7302, %v7318
      %v7320 = vmul.f32 %v7305, %v7318
      %v7321 = vmul.f32 %v7308, %v7318
      %v7322 = vmul.f32 %v7311, %v7318
      %v7323 = vmul.f32 %v7314, %v7318
      %v7324 = vmul.f32 %v7317, %v7318
      %v7325 = vsub.f32 %v3124, %v7319
      %v7326 = vsub.f32 %v3126, %v7319
      %v7327 = vsub.f32 %v3128, %v7320
      %v7328 = vsub.f32 %v3130, %v7320
      %v7329 = vsub.f32 %v3134, %v7321
      %v7330 = vsub.f32 %v3136, %v7321
      %v7331 = vsub.f32 %v3138, %v7322
      %v7332 = vsub.f32 %v3140, %v7322
      %v7333 = vsub.f32 %v3144, %v7323
      %v7334 = vsub.f32 %v3146, %v7323
      %v7335 = vsub.f32 %v3148, %v7324
      %v7336 = vsub.f32 %v3150, %v7324
      %v7337 = vmul.f32 %v7325, %v7325
      %v7338 = vmul.f32 %v7326, %v7326
      %v7339 = vmul.f32 %v7327, %v7327
      %v7340 = vmul.f32 %v7328, %v7328
      %v7341 = vmul.f32 %v7329, %v7329
      %v7342 = vmul.f32 %v7330, %v7330
      %v7343 = vmul.f32 %v7331, %v7331
      %v7344 = vmul.f32 %v7332, %v7332
      %v7345 = vmul.f32 %v7333, %v7333
      %v7346 = vmul.f32 %v7334, %v7334
      %v7347 = vmul.f32 %v7335, %v7335
      %v7348 = vmul.f32 %v7336, %v7336
      %v7349 = vadd.f32 %v7337, %v7338
      %7350 = vadd.xlane.f32.xlu0 %v7349
      %v7351 = vpop.xlane.xlu0 %7350
      %v7352 = vadd.f32 %v7339, %v7340
      %7353 = vadd.xlane.f32.xlu0 %v7352
      %v7354 = vpop.xlane.xlu0 %7353
      %v7355 = vadd.f32 %v7341, %v7342
      %7356 = vadd.xlane.f32.xlu0 %v7355
      %v7357 = vpop.xlane.xlu0 %7356
      %v7358 = vadd.f32 %v7343, %v7344
      %7359 = vadd.xlane.f32.xlu0 %v7358
      %v7360 = vpop.xlane.xlu0 %7359
      %v7361 = vadd.f32 %v7345, %v7346
      %7362 = vadd.xlane.f32.xlu0 %v7361
      %v7363 = vpop.xlane.xlu0 %7362
      %v7364 = vadd.f32 %v7347, %v7348
      %7365 = vadd.xlane.f32.xlu0 %v7364
      %v7366 = vpop.xlane.xlu0 %7365
      %v7367 = vmul.f32 %v7351, %v7318
      %v7368 = vmul.f32 %v7354, %v7318
      %v7369 = vmul.f32 %v7357, %v7318
      %v7370 = vmul.f32 %v7360, %v7318
      %v7371 = vmul.f32 %v7363, %v7318
      %v7372 = vmul.f32 %v7366, %v7318
      %v7373 = vadd.f32 %v7367, 1e-05
      %v7374 = vadd.f32 %v7368, 1e-05
      %v7375 = vadd.f32 %v7369, 1e-05
      %v7376 = vadd.f32 %v7370, 1e-05
      %v7377 = vadd.f32 %v7371, 1e-05
      %v7378 = vadd.f32 %v7372, 1e-05
      %v7379 = vrsqrt.pop %v7373
      %v7380 = vrsqrt.pop %v7374
      %v7381 = vrsqrt.pop %v7375
      %v7382 = vrsqrt.pop %v7376
      %v7383 = vrsqrt.pop %v7377
      %v7384 = vrsqrt.pop %v7378
      %v7385 = vmul.f32 %v7325, %v7379
      %v7386 = vmul.f32 %v7326, %v7379
      %v7387 = vmul.f32 %v7327, %v7380
      %v7388 = vmul.f32 %v7328, %v7380
      %v7389 = vmul.f32 %v7329, %v7381
      %v7390 = vmul.f32 %v7330, %v7381
      %v7391 = vmul.f32 %v7331, %v7382
      %v7392 = vmul.f32 %v7332, %v7382
      %v7393 = vmul.f32 %v7333, %v7383
      %v7394 = vmul.f32 %v7334, %v7383
      %v7395 = vmul.f32 %v7335, %v7384
      %v7396 = vmul.f32 %v7336, %v7384
      %v7398 = vlaneseq
      %v7399 = vshrl.u32 %v7398, 7
      %v7400 = vsub.s32 0, %v7399
      %v7401 = vrot.slane %v7297, %v7400
      %v7402 = vlaneseq
      %v7403 = vshrl.u32 %v7402, 7
      %v7404 = vsub.s32 1, %v7403
      %v7405 = vrot.slane %v7297, %v7404
      %v7408 = vmul.f32 %v7385, %v7401
      %v7409 = vmul.f32 %v7386, %v7405
      %v7410 = vmul.f32 %v7387, %v7401
      %v7411 = vmul.f32 %v7388, %v7405
      %v7412 = vmul.f32 %v7389, %v7401
      %v7413 = vmul.f32 %v7390, %v7405
      %v7414 = vmul.f32 %v7391, %v7401
      %v7415 = vmul.f32 %v7392, %v7405
      %v7416 = vmul.f32 %v7393, %v7401
      %v7417 = vmul.f32 %v7394, %v7405
      %v7418 = vmul.f32 %v7395, %v7401
      %v7419 = vmul.f32 %v7396, %v7405
      %v7421 = vlaneseq
      %v7422 = vshrl.u32 %v7421, 7
      %v7423 = vsub.s32 0, %v7422
      %v7424 = vrot.slane %v7298, %v7423
      %v7425 = vlaneseq
      %v7426 = vshrl.u32 %v7425, 7
      %v7427 = vsub.s32 1, %v7426
      %v7428 = vrot.slane %v7298, %v7427
      %v7431 = vadd.f32 %v7408, %v7424
      %v7432 = vadd.f32 %v7409, %v7428
      %v7433 = vadd.f32 %v7410, %v7424
      %v7434 = vadd.f32 %v7411, %v7428
      %v7435 = vadd.f32 %v7412, %v7424
      %v7436 = vadd.f32 %v7413, %v7428
      %v7437 = vadd.f32 %v7414, %v7424
      %v7438 = vadd.f32 %v7415, %v7428
      %v7439 = vadd.f32 %v7416, %v7424
      %v7440 = vadd.f32 %v7417, %v7428
      %v7441 = vadd.f32 %v7418, %v7424
      %v7442 = vadd.f32 %v7419, %v7428
      %v7443 = vpack.c.bf16 %v7433, %v7431
      %v7444 = vpack.c.bf16 %v7434, %v7432
      %v7445 = vpack.c.bf16 %v7437, %v7435
      %v7446 = vpack.c.bf16 %v7438, %v7436
      %v7447 = vpack.c.bf16 %v7441, %v7439
      %v7448 = vpack.c.bf16 %v7442, %v7440
      %v7449 = vld [vmem:[%s25] sm:$0x1]
      %vm7450 = vcmask 1043456
      %v7451 = vsel %vm7450, %v6393, 0.0
      %v7452 = vsel %vm7450, %v6394, 0.0
      %v7453 = vadd.f32 %v7451, %v7452
      %7454 = vadd.xlane.f32.xlu0 %v7453
      %v7455 = vpop.xlane.xlu0 %7454
      %v7456 = vmul.f32 %v7455, %v7318
      %v7457 = vsub.f32 %v6393, %v7456
      %v7458 = vsub.f32 %v6394, %v7456
      %v7459 = vmul.f32 %v7457, %v7457
      %v7460 = vmul.f32 %v7458, %v7458
      %v7461 = vsel %vm7450, %v7459, 0.0
      %v7462 = vsel %vm7450, %v7460, 0.0
      %v7463 = vadd.f32 %v7461, %v7462
      %7464 = vadd.xlane.f32.xlu0 %v7463
      %v7465 = vpop.xlane.xlu0 %7464
      %v7466 = vmul.f32 %v7465, %v7318
      %v7467 = vadd.f32 %v7466, 1e-05
      %v7468 = vrsqrt.pop %v7467
      %v7469 = vmul.f32 %v7457, %v7468
      %v7470 = vmul.f32 %v7458, %v7468
      %v7471 = vmul.f32 %v7469, %v7401
      %v7472 = vmul.f32 %v7470, %v7405
      %v7473 = vadd.f32 %v7471, %v7424
      %v7474 = vadd.f32 %v7472, %v7428
      %v7475 = vpack.c.bf16 %v7473, %v7473
      %v7476 = vpack.c.bf16 %v7474, %v7474
      %v7478 = vsel %vm6441, %v7449, 0
      %v7481 = vsel %vm6445, %v7475, 0
      %v7484 = vsel %vm6445, %v7476, 0
      %7486 = vmatprep.subr.bf16.mxu0 %v7484
      %7487 = vmatpush1.bf16.msra.mxu0 %v7481
      %7488 = vmatprep.subr.bf16.mxu0 0
      %7489 = vmatpush1.bf16.msra.mxu0 0
      %7490 = vmatprep.subr.bf16.mxu0 0
      %7491 = vmatpush1.bf16.msra.mxu0 0
      %7492 = vmatprep.subr.bf16.mxu0 0
      %7493 = vmatpush1.bf16.msra.mxu0 0
      %7494 = vmatprep.subr.bf16.mxu0 0
      %7495 = vmatpush1.bf16.msra.mxu0 0
      %7496 = vmatprep.subr.bf16.mxu0 0
      %7497 = vmatpush1.bf16.msra.mxu0 0
      %7498 = vmatprep.subr.bf16.mxu0 0
      %7499 = vmatpush1.bf16.msra.mxu0 0
      %7500 = vmatprep.subr.bf16.mxu0 0
      %7501 = vmatpush1.bf16.msra.mxu0 0
      %7502 = vmatprep.subr.bf16.mxu0 0
      %7503 = vmatpush1.bf16.msra.mxu0 0
      %7504 = vmatprep.subr.bf16.mxu0 0
      %7505 = vmatpush1.bf16.msra.mxu0 0
      %7506 = vmatprep.subr.bf16.mxu0 0
      %7507 = vmatpush1.bf16.msra.mxu0 0
      %7508 = vmatprep.subr.bf16.mxu0 0
      %7509 = vmatpush1.bf16.msra.mxu0 0
      %7510 = vmatprep.subr.bf16.mxu0 0
      %7511 = vmatpush1.bf16.msra.mxu0 0
      %7512 = vmatprep.subr.bf16.mxu0 0
      %7513 = vmatpush1.bf16.msra.mxu0 0
      %7514 = vmatprep.subr.bf16.mxu0 0
      %7515 = vmatpush1.bf16.msra.mxu0 0
      %7516 = vmatprep.subr.bf16.mxu0 0
      %7517 = vmatpush1.bf16.msra.mxu0 0
      %7518 = vmatprep.mubr.bf16.mxu0 0
      %7519 = vmatmul.mubr.bf16.gmra.mrb[0].mxu0 %v7478
      %v7520 = vpop.f32.mrb[0].mxu0
      %v7521 = vadd.f32 0.0, %v7520
      %v7522 = vpop.f32.mrb[0].mxu0
      %v7523 = vadd.f32 0.0, %v7522
      %v7524 = vpop.f32.mrb[0].mxu0
      %v7525 = vpop.f32.mrb[0].mxu0
      %7526 = vdwg.mxu0
      %v7528 = vsel %vm1190, %v7299, 0
      %7530 = vmatprep.subr.bf16.mxu0 %v7444
      %7531 = vmatpush1.bf16.msra.mxu0 %v7443
      %7532 = vmatprep.subr.bf16.mxu0 %v7446
      %7533 = vmatpush1.bf16.msra.mxu0 %v7445
      %7534 = vmatprep.subr.bf16.mxu0 %v7448
      %7535 = vmatpush1.bf16.msra.mxu0 %v7447
      %7536 = vmatprep.subr.bf16.mxu0 0
      %7537 = vmatpush1.bf16.msra.mxu0 0
      %7538 = vmatprep.subr.bf16.mxu0 0
      %7539 = vmatpush1.bf16.msra.mxu0 0
      %7540 = vmatprep.subr.bf16.mxu0 0
      %7541 = vmatpush1.bf16.msra.mxu0 0
      %7542 = vmatprep.subr.bf16.mxu0 0
      %7543 = vmatpush1.bf16.msra.mxu0 0
      %7544 = vmatprep.subr.bf16.mxu0 0
      %7545 = vmatpush1.bf16.msra.mxu0 0
      %7546 = vmatprep.subr.bf16.mxu0 0
      %7547 = vmatpush1.bf16.msra.mxu0 0
      %7548 = vmatprep.subr.bf16.mxu0 0
      %7549 = vmatpush1.bf16.msra.mxu0 0
      %7550 = vmatprep.subr.bf16.mxu0 0
      %7551 = vmatpush1.bf16.msra.mxu0 0
      %7552 = vmatprep.subr.bf16.mxu0 0
      %7553 = vmatpush1.bf16.msra.mxu0 0
      %7554 = vmatprep.subr.bf16.mxu0 0
      %7555 = vmatpush1.bf16.msra.mxu0 0
      %7556 = vmatprep.subr.bf16.mxu0 0
      %7557 = vmatpush1.bf16.msra.mxu0 0
      %7558 = vmatprep.subr.bf16.mxu0 0
      %7559 = vmatpush1.bf16.msra.mxu0 0
      %7560 = vmatprep.subr.bf16.mxu0 0
      %7561 = vmatpush1.bf16.msra.mxu0 0
      %7562 = vmatprep.mubr.bf16.mxu0 0
      %7563 = vmatmul.mubr.bf16.gmra.mrb[0].mxu0 %v7528
      %v7564 = vpop.f32.mrb[0].mxu0
      %v7565 = vadd.f32 %v7521, %v7564
      %v7566 = vpop.f32.mrb[0].mxu0
      %v7567 = vadd.f32 %v7523, %v7566
      %v7568 = vpop.f32.mrb[0].mxu0
      %v7569 = vpop.f32.mrb[0].mxu0
      %7570 = vdwg.mxu0
      %v7571 = vld [vmem:[%s26] sm:$0x1]
      %v7572 = vadd.f32 %v7295, %v7296
      %7573 = vadd.xlane.f32.xlu0 %v7572
      %v7574 = vpop.xlane.xlu0 %7573
      %v7575 = vmul.f32 %v7574, %v7318
      %v7576 = vsub.f32 %v7295, %v7575
      %v7577 = vsub.f32 %v7296, %v7575
      %v7578 = vmul.f32 %v7576, %v7576
      %v7579 = vmul.f32 %v7577, %v7577
      %v7580 = vadd.f32 %v7578, %v7579
      %7581 = vadd.xlane.f32.xlu0 %v7580
      %v7582 = vpop.xlane.xlu0 %7581
      %v7583 = vmul.f32 %v7582, %v7318
      %v7584 = vadd.f32 %v7583, 1e-05
      %v7585 = vrsqrt.pop %v7584
      %v7586 = vmul.f32 %v7576, %v7585
      %v7587 = vmul.f32 %v7577, %v7585
      %v7588 = vmul.f32 %v7586, %v7401
      %v7589 = vmul.f32 %v7587, %v7405
      %v7590 = vadd.f32 %v7588, %v7424
      %v7591 = vadd.f32 %v7589, %v7428
      %v7592 = vpack.c.bf16 %v7590, %v7590
      %v7593 = vpack.c.bf16 %v7591, %v7591
      %vm7594 = vcmask 64512
      %v7596 = vsel %vm7594, %v7571, 0
      %v7599 = vsel %vm7450, %v7592, 0
      %v7602 = vsel %vm7450, %v7593, 0
      %7604 = vmatprep.subr.bf16.mxu0 %v7602
      %7605 = vmatpush1.bf16.msra.mxu0 %v7599
      %7606 = vmatprep.subr.bf16.mxu0 0
      %7607 = vmatpush1.bf16.msra.mxu0 0
      %7608 = vmatprep.subr.bf16.mxu0 0
      %7609 = vmatpush1.bf16.msra.mxu0 0
      %7610 = vmatprep.subr.bf16.mxu0 0
      %7611 = vmatpush1.bf16.msra.mxu0 0
      %7612 = vmatprep.subr.bf16.mxu0 0
      %7613 = vmatpush1.bf16.msra.mxu0 0
      %7614 = vmatprep.subr.bf16.mxu0 0
      %7615 = vmatpush1.bf16.msra.mxu0 0
      %7616 = vmatprep.subr.bf16.mxu0 0
      %7617 = vmatpush1.bf16.msra.mxu0 0
      %7618 = vmatprep.subr.bf16.mxu0 0
      %7619 = vmatpush1.bf16.msra.mxu0 0
      %7620 = vmatprep.subr.bf16.mxu0 0
      %7621 = vmatpush1.bf16.msra.mxu0 0
      %7622 = vmatprep.subr.bf16.mxu0 0
      %7623 = vmatpush1.bf16.msra.mxu0 0
      %7624 = vmatprep.subr.bf16.mxu0 0
      %7625 = vmatpush1.bf16.msra.mxu0 0
      %7626 = vmatprep.subr.bf16.mxu0 0
      %7627 = vmatpush1.bf16.msra.mxu0 0
      %7628 = vmatprep.subr.bf16.mxu0 0
      %7629 = vmatpush1.bf16.msra.mxu0 0
      %7630 = vmatprep.subr.bf16.mxu0 0
      %7631 = vmatpush1.bf16.msra.mxu0 0
      %7632 = vmatprep.subr.bf16.mxu0 0
      %7633 = vmatpush1.bf16.msra.mxu0 0
      %7634 = vmatprep.subr.bf16.mxu0 0
      %7635 = vmatpush1.bf16.msra.mxu0 0
      %7636 = vmatprep.mubr.bf16.mxu0 0
      %7637 = vmatmul.mubr.bf16.gmra.mrb[0].mxu0 %v7596
      %v7638 = vpop.f32.mrb[0].mxu0
      %v7639 = vadd.f32 0.0, %v7638
      %v7640 = vpop.f32.mrb[0].mxu0
      %v7641 = vadd.f32 0.0, %v7640
      %v7642 = vpop.f32.mrb[0].mxu0
      %v7643 = vpop.f32.mrb[0].mxu0
      %7644 = vdwg.mxu0
      %v7645 = vadd.f32 %v7565, %v7639
      %v7646 = vadd.f32 %v7567, %v7641
      %v7649 = vcombine.low %v7645, %v7646
      %v7651 = vunpack.c.l.s4 1983009808
      %v7652 = vunpack.c.0.s8 %v7651
      %v7653 = vlaneseq
      %v7654 = vshrl.u32 %v7653, 7
      %v7655 = vsub.s32 %v7652, %v7654
      %v7656 = vrot.slane %v7649, %v7655
      %7658 = vst [vmem:[%s818] sm:$0xf] %v7656
      %p7659 = scmp.lt.s32.totalorder %s38, 1
      %s7660 = scalar_select %p7659, %s38, 1
      %s7661 = smul.addr %s7660, 2
      %s7662 = smul.addr %s7661, 2
      %s7663 = scalar_lea.vmem %s27, %s7662
      // Predicated region
      $region129: #{_lambda_.1} parent=127 // pred_check
        %p7664 = pneg %p628
      $region130: #{_lambda_.1} parent=127 // pred_check_branch
        %7666 = sbr.rel (%p7664) target = $region132
      $region131: #{_lambda_.1} parent=127 // pred_region
        _
      $region132: #{_lambda_.1} parent=127 // pred_fallthru
        _
    $region128: #{_lambda_.1} parent=5 // pred_fallthru
      _
    %p7667 = scmp.le.s32.totalorder 2, %s33
    // Predicated region
    $region133: #{_lambda_.1} parent=5 // pred_check
      %p7668 = pneg %p7667
    $region134: #{_lambda_.1} parent=5 // pred_check_branch
      %7670 = sbr.rel (%p7668) target = $region136
    $region135: #{_lambda_.1} parent=5 // pred_region
      %s7671 = ssub.s32 %s33, 2
      // Predicated region
      $region137: #{_lambda_.1} parent=135 // pred_check
        %p7672 = pneg %p634
      $region138: #{_lambda_.1} parent=135 // pred_check_branch
        %7674 = sbr.rel (%p7672) target = $region140
      $region139: #{_lambda_.1} parent=135 // pred_region
        %p7675 = scmp.lt.s32.totalorder %s39, 1
        %s7676 = scalar_select %p7675, %s39, 1
        %s7677 = smul.addr %s7676, 2
        %s7678 = smul.addr %s7677, 2
        %s7679 = scalar_lea.vmem %s27, %s7678
      $region140: #{_lambda_.1} parent=135 // pred_fallthru
        _
    $region136: #{_lambda_.1} parent=5 // pred_fallthru
      _
  $region6: #{_lambda_.1} parent=0 // loop_footer
    %s37 = sadd.s32 1, %s33
  $region7: #{_lambda_.1} parent=0 // loop_footer_branch
    %32 = sbr.rel target = $region3
  $region8: #{_lambda_.1} parent=0 // loop_exit
    _

</llo_original>
